<compile_context>
chip_gen: v7x
topology: tpu7x:2x2x1
jax: 0.10.0
libtpu: 0.0.40
codegen_flags: <defaults>
</compile_context>

<pallas_src>
import numpy as np
import jax
import jax.numpy as jnp
from jax.experimental import pallas as pl
from jax.experimental.pallas import tpu as pltpu

H, W = 12, 12                       # spatial size of the (1,160,12,12) input
C_IN, C_MID, C_OUT = 160, 160, 192
K = 7                               # tap count of both 1-D convs
PAD = 3
EPS = 1e-3

# Padded extents chosen so every in-kernel slice/reshape keeps the sublane axis a
# multiple of the register tile -> no relayout copies inside the tap loops.
W_PAD = 16                          # leading "W" axis of the kernel layout (12 valid + 4 zero)
H_PAD = 16                          # sublane "H" axis (12 valid + 4 zero)
H_TOT = 24                          # padded H range read by the 16-wide stage-1 windows
W_TOT = W + 2 * PAD                 # 18: sliding range of the stage-2 (1x7) conv
N_VALID = H * W                     # 144 positions feeding the BatchNorm statistics


def _conv_bn_relu_kernel(x_ref, w1_ref, g1_ref, b1_ref, w2_ref, g2_ref, b2_ref,
                         mask_ref, out_ref, ypad_ref):
    inv_n = 1.0 / N_VALID
    mask = mask_ref[...]                                   # (W_PAD*H_PAD, 1) f32, 1 where h < 12

    # ---- stage 1: Conv2d(160->160, k=(7,1)) as 7 accumulated bf16 MXU matmuls ----
    # x_ref is (W_PAD, H_TOT, C_IN) bf16: w on the leading axis, h on sublanes.
    # Each tap loads an aligned-length 16-column window, so the flatten
    # (W_PAD, 16, C) -> (W_PAD*16, C) is a free view (no relayout).
    acc1 = jnp.zeros((W_PAD * H_PAD, C_MID), jnp.float32)
    for kh in range(K):
        lhs = x_ref[:, kh:kh + H_PAD, :].reshape(W_PAD * H_PAD, C_IN)
        acc1 = acc1 + jnp.dot(lhs, w1_ref[kh],
                              preferred_element_type=jnp.float32)

    # Rows with h_out >= 12 read real data through the oversized window; zero them
    # so they feed neither the BN statistics nor stage 2.  (Rows with w >= 12 are
    # already exactly zero because those x planes are zero.)
    acc1 = acc1 * mask

    # BatchNorm2d(160) with batch statistics (single pass), folded scale, ReLU.
    s1 = jnp.sum(acc1, axis=0, keepdims=True)
    q1 = jnp.sum(acc1 * acc1, axis=0, keepdims=True)
    mean1 = s1 * inv_n
    var1 = q1 * inv_n - mean1 * mean1
    scale1 = g1_ref[...] * jax.lax.rsqrt(var1 + EPS)
    shift1 = b1_ref[...] - mean1 * scale1
    y = jnp.maximum(acc1 * scale1 + shift1, 0.0) * mask    # re-mask: shift1 != 0 on pad rows

    # ---- hand y to stage 2 with the sliding W axis on the leading (untiled) dim ----
    # Only the two pad strips are zeroed; the 12 valid planes are full aligned stores.
    y3 = y.reshape(W_PAD, H_PAD, C_MID)
    ypad_ref[0:PAD] = jnp.zeros((PAD, H_PAD, C_MID), jnp.float32)
    ypad_ref[PAD:PAD + W] = y3[0:W]
    ypad_ref[PAD + W:W_TOT] = jnp.zeros((W_TOT - W - PAD, H_PAD, C_MID), jnp.float32)

    # ---- stage 2: Conv2d(160->192, k=(1,7)): leading-axis slides, all aligned ----
    acc2 = jnp.zeros((W * H_PAD, C_OUT), jnp.float32)
    for kw in range(K):
        lhs = ypad_ref[kw:kw + W].reshape(W * H_PAD, C_MID)
        acc2 = acc2 + jnp.dot(lhs, w2_ref[kw].astype(jnp.float32),
                              preferred_element_type=jnp.float32)

    # BatchNorm2d(192) + ReLU.  Rows with h >= 12 are exactly zero in ypad, so the
    # sums only see the 144 valid positions; the garbage rows of the output are
    # sliced away in the wrapper.
    s2 = jnp.sum(acc2, axis=0, keepdims=True)
    q2 = jnp.sum(acc2 * acc2, axis=0, keepdims=True)
    mean2 = s2 * inv_n
    var2 = q2 * inv_n - mean2 * mean2
    scale2 = g2_ref[...] * jax.lax.rsqrt(var2 + EPS)
    shift2 = b2_ref[...] - mean2 * scale2
    out_ref[...] = jnp.maximum(acc2 * scale2 + shift2, 0.0)


def _full_spec(shape):
    return pl.BlockSpec(shape, lambda i: (0,) * len(shape))


@jax.jit
def conv_bn_relu_x2(x_nchw, w1, g1, b1, w2, g2, b2):
    # NCHW (1,160,12,12) -> (W, H, C), zero-pad to the tile-friendly kernel layout
    # and cast the matmul operands to bf16 (weights dominate the HBM traffic of
    # this DMA-bound kernel; accumulation stays f32 inside the kernel).
    x_whc = jnp.transpose(x_nchw[0].astype(jnp.float32), (2, 1, 0))          # (12,12,160)
    x_pad = jnp.pad(x_whc, ((0, W_PAD - W), (PAD, H_TOT - H - PAD), (0, 0)))  # (16,24,160)
    x_bf16 = x_pad.astype(jnp.bfloat16)

    w1b = w1.astype(jnp.bfloat16)                                             # (7,160,160)
    w2b = w2.astype(jnp.bfloat16)                                             # (7,160,192)
    g1b = g1.reshape(1, C_MID).astype(jnp.float32)
    b1b = b1.reshape(1, C_MID).astype(jnp.float32)
    g2b = g2.reshape(1, C_OUT).astype(jnp.float32)
    b2b = b2.reshape(1, C_OUT).astype(jnp.float32)
    # 1.0 on rows whose h index is real (h < 12), 0.0 on the 4 padded h rows.
    vmask = ((jnp.arange(W_PAD * H_PAD) % H_PAD) < H).astype(jnp.float32)[:, None]

    out_flat = pl.pallas_call(
        _conv_bn_relu_kernel,
        out_shape=jax.ShapeDtypeStruct((W * H_PAD, C_OUT), jnp.float32),
        grid=(1,),
        in_specs=[_full_spec(x_bf16.shape), _full_spec(w1b.shape),
                  _full_spec(g1b.shape), _full_spec(b1b.shape),
                  _full_spec(w2b.shape), _full_spec(g2b.shape),
                  _full_spec(b2b.shape), _full_spec(vmask.shape)],
        out_specs=_full_spec((W * H_PAD, C_OUT)),
        scratch_shapes=[pltpu.VMEM((W_TOT, H_PAD, C_MID), jnp.float32)],
        # grid=(1,) on this tiny single-image layer; with batch > 1 a leading
        # "parallel" batch axis would let v7x's second TensorCore share the work.
        compiler_params=pltpu.CompilerParams(dimension_semantics=("arbitrary",)),
    )(x_bf16, w1b, g1b, b1b, w2b, g2b, b2b, vmask)

    # rows are (w, h_padded); drop the 4 padded h columns and go back to NCHW.
    out = out_flat.reshape(W, H_PAD, C_OUT)[:, :H, :]        # (W, H, C)
    return jnp.transpose(out, (2, 1, 0))[None]               # (1, 192, 12, 12)


def _reference(x_nchw, w1, g1, b1, w2, g2, b2):
    """Pure-JAX f32 reference with the module's exact forward semantics."""
    def bn_relu(x, g, b):
        mean = jnp.mean(x, axis=(0, 2, 3), keepdims=True)
        var = jnp.mean((x - mean) ** 2, axis=(0, 2, 3), keepdims=True)
        y = (x - mean) * jax.lax.rsqrt(var + EPS) * g.reshape(1, -1, 1, 1) \
            + b.reshape(1, -1, 1, 1)
        return jnp.maximum(y, 0.0)

    w1_oihw = jnp.transpose(w1, (2, 1, 0))[:, :, :, None]    # (Cout, Cin, 7, 1)
    y = jax.lax.conv_general_dilated(
        x_nchw, w1_oihw, window_strides=(1, 1),
        padding=((PAD, PAD), (0, 0)),
        dimension_numbers=('NCHW', 'OIHW', 'NCHW'))
    y = bn_relu(y, g1, b1)

    w2_oihw = jnp.transpose(w2, (2, 1, 0))[:, :, None, :]    # (Cout, Cin, 1, 7)
    z = jax.lax.conv_general_dilated(
        y, w2_oihw, window_strides=(1, 1),
        padding=((0, 0), (PAD, PAD)),
        dimension_numbers=('NCHW', 'OIHW', 'NCHW'))
    return bn_relu(z, g2, b2)


if __name__ == "__main__":
    key = jax.random.PRNGKey(0)
    kx, k1, k2, kg1, kb1, kg2, kb2 = jax.random.split(key, 7)

    x = jax.random.normal(kx, (1, C_IN, H, W), jnp.float32)           # NCHW input
    w1 = 0.05 * jax.random.normal(k1, (K, C_IN, C_MID), jnp.float32)  # (tap,Cin,Cout)
    w2 = 0.05 * jax.random.normal(k2, (K, C_MID, C_OUT), jnp.float32)
    g1 = 1.0 + 0.1 * jax.random.normal(kg1, (C_MID,), jnp.float32)
    b1 = 0.1 * jax.random.normal(kb1, (C_MID,), jnp.float32)
    g2 = 1.0 + 0.1 * jax.random.normal(kg2, (C_OUT,), jnp.float32)
    b2 = 0.1 * jax.random.normal(kb2, (C_OUT,), jnp.float32)

    out = jax.block_until_ready(conv_bn_relu_x2(x, w1, g1, b1, w2, g2, b2))
    assert out.shape == (1, C_OUT, H, W), out.shape

    # (a) Tight check against a reference that sees the same bf16-rounded operands
    #     the kernel consumes (isolates kernel-implementation error from the
    #     intentional bf16 operand quantization).
    xq = x.astype(jnp.bfloat16).astype(jnp.float32)
    w1q = w1.astype(jnp.bfloat16).astype(jnp.float32)
    w2q = w2.astype(jnp.bfloat16).astype(jnp.float32)
    ref_q = jax.block_until_ready(_reference(xq, w1q, g1, b1, w2q, g2, b2))
    np.testing.assert_allclose(np.asarray(out), np.asarray(ref_q),
                               rtol=2e-3, atol=2e-3)

    # (b) Sanity check against the full-f32 reference: only the bf16 operand
    #     quantization separates the two.
    ref = jax.block_until_ready(_reference(x, w1, g1, b1, w2, g2, b2))
    np.testing.assert_allclose(np.asarray(out), np.asarray(ref),
                               rtol=3e-2, atol=3e-2)
    print("KERNEL_OK")
</pallas_src>

<mosaic_0001>
module attributes {stable_mosaic.version = 11 : i64} {
  func.func @_conv_bn_relu_kernel(%arg0: i32, %arg1: memref<16x24x160xbf16, #tpu.memory_space<vmem>>, %arg2: memref<7x160x160xbf16, #tpu.memory_space<vmem>>, %arg3: memref<1x160xf32, #tpu.memory_space<vmem>>, %arg4: memref<1x160xf32, #tpu.memory_space<vmem>>, %arg5: memref<7x160x192xbf16, #tpu.memory_space<vmem>>, %arg6: memref<1x192xf32, #tpu.memory_space<vmem>>, %arg7: memref<1x192xf32, #tpu.memory_space<vmem>>, %arg8: memref<256x1xf32, #tpu.memory_space<vmem>>, %arg9: memref<192x192xf32, #tpu.memory_space<vmem>>, %arg10: memref<18x16x160xf32, #tpu.memory_space<vmem>>) attributes {dimension_semantics = [#tpu.dimension_semantics<arbitrary>], iteration_bounds = array<i64: 1>, scalar_prefetch = 0 : i64, scratch_operands = 1 : i64, tpu.core_type = #tpu.core_type<tc>, window_params = [{pipeline_mode = #tpu.pipeline_mode<synchronous>, transform_indices = @transform_0, window_bounds = array<i64: 16, 24, 160>}, {pipeline_mode = #tpu.pipeline_mode<synchronous>, transform_indices = @transform_1, window_bounds = array<i64: 7, 160, 160>}, {pipeline_mode = #tpu.pipeline_mode<synchronous>, transform_indices = @transform_2, window_bounds = array<i64: 1, 160>}, {pipeline_mode = #tpu.pipeline_mode<synchronous>, transform_indices = @transform_3, window_bounds = array<i64: 1, 160>}, {pipeline_mode = #tpu.pipeline_mode<synchronous>, transform_indices = @transform_4, window_bounds = array<i64: 7, 160, 192>}, {pipeline_mode = #tpu.pipeline_mode<synchronous>, transform_indices = @transform_5, window_bounds = array<i64: 1, 192>}, {pipeline_mode = #tpu.pipeline_mode<synchronous>, transform_indices = @transform_6, window_bounds = array<i64: 1, 192>}, {pipeline_mode = #tpu.pipeline_mode<synchronous>, transform_indices = @transform_7, window_bounds = array<i64: 256, 1>}, {pipeline_mode = #tpu.pipeline_mode<synchronous>, transform_indices = @transform_8, window_bounds = array<i64: 192, 192>}]} {
    %c0 = arith.constant 0 : index
    %c0_0 = arith.constant 0 : index
    %0 = vector.load %arg8[%c0, %c0_0] : memref<256x1xf32, #tpu.memory_space<vmem>>, vector<256x1xf32>
    %cst = arith.constant 0.000000e+00 : f32
    %1 = vector.broadcast %cst : f32 to vector<256x160xf32>
    %c0_1 = arith.constant 0 : index
    %c0_2 = arith.constant 0 : index
    %c0_3 = arith.constant 0 : index
    %2 = vector.load %arg1[%c0_1, %c0_2, %c0_3] : memref<16x24x160xbf16, #tpu.memory_space<vmem>>, vector<16x16x160xbf16>
    %3 = vector.shape_cast %2 : vector<16x16x160xbf16> to vector<256x160xbf16>
    %c0_4 = arith.constant 0 : index
    %c0_5 = arith.constant 0 : index
    %c0_6 = arith.constant 0 : index
    %4 = vector.load %arg2[%c0_4, %c0_5, %c0_6] : memref<7x160x160xbf16, #tpu.memory_space<vmem>>, vector<1x160x160xbf16>
    %5 = vector.shape_cast %4 : vector<1x160x160xbf16> to vector<160x160xbf16>
    %cst_7 = arith.constant dense<0.000000e+00> : vector<256x160xf32>
    %6 = tpu.matmul %3, %5, %cst_7 {dimension_numbers = #tpu.dot_dimension_numbers<[1], [0], [0], [1], [0, 0, 1, 1], [], []>} : vector<256x160xbf16>, vector<160x160xbf16>, vector<256x160xf32> -> vector<256x160xf32>
    %7 = arith.addf %1, %6 : vector<256x160xf32>
    %c0_8 = arith.constant 0 : index
    %c1 = arith.constant 1 : index
    %c0_9 = arith.constant 0 : index
    %8 = vector.load %arg1[%c0_8, %c1, %c0_9] : memref<16x24x160xbf16, #tpu.memory_space<vmem>>, vector<16x16x160xbf16>
    %9 = vector.shape_cast %8 : vector<16x16x160xbf16> to vector<256x160xbf16>
    %c1_10 = arith.constant 1 : index
    %c0_11 = arith.constant 0 : index
    %c0_12 = arith.constant 0 : index
    %10 = vector.load %arg2[%c1_10, %c0_11, %c0_12] : memref<7x160x160xbf16, #tpu.memory_space<vmem>>, vector<1x160x160xbf16>
    %11 = vector.shape_cast %10 : vector<1x160x160xbf16> to vector<160x160xbf16>
    %cst_13 = arith.constant dense<0.000000e+00> : vector<256x160xf32>
    %12 = tpu.matmul %9, %11, %cst_13 {dimension_numbers = #tpu.dot_dimension_numbers<[1], [0], [0], [1], [0, 0, 1, 1], [], []>} : vector<256x160xbf16>, vector<160x160xbf16>, vector<256x160xf32> -> vector<256x160xf32>
    %13 = arith.addf %7, %12 : vector<256x160xf32>
    %c0_14 = arith.constant 0 : index
    %c2 = arith.constant 2 : index
    %c0_15 = arith.constant 0 : index
    %14 = vector.load %arg1[%c0_14, %c2, %c0_15] : memref<16x24x160xbf16, #tpu.memory_space<vmem>>, vector<16x16x160xbf16>
    %15 = vector.shape_cast %14 : vector<16x16x160xbf16> to vector<256x160xbf16>
    %c2_16 = arith.constant 2 : index
    %c0_17 = arith.constant 0 : index
    %c0_18 = arith.constant 0 : index
    %16 = vector.load %arg2[%c2_16, %c0_17, %c0_18] : memref<7x160x160xbf16, #tpu.memory_space<vmem>>, vector<1x160x160xbf16>
    %17 = vector.shape_cast %16 : vector<1x160x160xbf16> to vector<160x160xbf16>
    %cst_19 = arith.constant dense<0.000000e+00> : vector<256x160xf32>
    %18 = tpu.matmul %15, %17, %cst_19 {dimension_numbers = #tpu.dot_dimension_numbers<[1], [0], [0], [1], [0, 0, 1, 1], [], []>} : vector<256x160xbf16>, vector<160x160xbf16>, vector<256x160xf32> -> vector<256x160xf32>
    %19 = arith.addf %13, %18 : vector<256x160xf32>
    %c0_20 = arith.constant 0 : index
    %c3 = arith.constant 3 : index
    %c0_21 = arith.constant 0 : index
    %20 = vector.load %arg1[%c0_20, %c3, %c0_21] : memref<16x24x160xbf16, #tpu.memory_space<vmem>>, vector<16x16x160xbf16>
    %21 = vector.shape_cast %20 : vector<16x16x160xbf16> to vector<256x160xbf16>
    %c3_22 = arith.constant 3 : index
    %c0_23 = arith.constant 0 : index
    %c0_24 = arith.constant 0 : index
    %22 = vector.load %arg2[%c3_22, %c0_23, %c0_24] : memref<7x160x160xbf16, #tpu.memory_space<vmem>>, vector<1x160x160xbf16>
    %23 = vector.shape_cast %22 : vector<1x160x160xbf16> to vector<160x160xbf16>
    %cst_25 = arith.constant dense<0.000000e+00> : vector<256x160xf32>
    %24 = tpu.matmul %21, %23, %cst_25 {dimension_numbers = #tpu.dot_dimension_numbers<[1], [0], [0], [1], [0, 0, 1, 1], [], []>} : vector<256x160xbf16>, vector<160x160xbf16>, vector<256x160xf32> -> vector<256x160xf32>
    %25 = arith.addf %19, %24 : vector<256x160xf32>
    %c0_26 = arith.constant 0 : index
    %c4 = arith.constant 4 : index
    %c0_27 = arith.constant 0 : index
    %26 = vector.load %arg1[%c0_26, %c4, %c0_27] : memref<16x24x160xbf16, #tpu.memory_space<vmem>>, vector<16x16x160xbf16>
    %27 = vector.shape_cast %26 : vector<16x16x160xbf16> to vector<256x160xbf16>
    %c4_28 = arith.constant 4 : index
    %c0_29 = arith.constant 0 : index
    %c0_30 = arith.constant 0 : index
    %28 = vector.load %arg2[%c4_28, %c0_29, %c0_30] : memref<7x160x160xbf16, #tpu.memory_space<vmem>>, vector<1x160x160xbf16>
    %29 = vector.shape_cast %28 : vector<1x160x160xbf16> to vector<160x160xbf16>
    %cst_31 = arith.constant dense<0.000000e+00> : vector<256x160xf32>
    %30 = tpu.matmul %27, %29, %cst_31 {dimension_numbers = #tpu.dot_dimension_numbers<[1], [0], [0], [1], [0, 0, 1, 1], [], []>} : vector<256x160xbf16>, vector<160x160xbf16>, vector<256x160xf32> -> vector<256x160xf32>
    %31 = arith.addf %25, %30 : vector<256x160xf32>
    %c0_32 = arith.constant 0 : index
    %c5 = arith.constant 5 : index
    %c0_33 = arith.constant 0 : index
    %32 = vector.load %arg1[%c0_32, %c5, %c0_33] : memref<16x24x160xbf16, #tpu.memory_space<vmem>>, vector<16x16x160xbf16>
    %33 = vector.shape_cast %32 : vector<16x16x160xbf16> to vector<256x160xbf16>
    %c5_34 = arith.constant 5 : index
    %c0_35 = arith.constant 0 : index
    %c0_36 = arith.constant 0 : index
    %34 = vector.load %arg2[%c5_34, %c0_35, %c0_36] : memref<7x160x160xbf16, #tpu.memory_space<vmem>>, vector<1x160x160xbf16>
    %35 = vector.shape_cast %34 : vector<1x160x160xbf16> to vector<160x160xbf16>
    %cst_37 = arith.constant dense<0.000000e+00> : vector<256x160xf32>
    %36 = tpu.matmul %33, %35, %cst_37 {dimension_numbers = #tpu.dot_dimension_numbers<[1], [0], [0], [1], [0, 0, 1, 1], [], []>} : vector<256x160xbf16>, vector<160x160xbf16>, vector<256x160xf32> -> vector<256x160xf32>
    %37 = arith.addf %31, %36 : vector<256x160xf32>
    %c0_38 = arith.constant 0 : index
    %c6 = arith.constant 6 : index
    %c0_39 = arith.constant 0 : index
    %38 = vector.load %arg1[%c0_38, %c6, %c0_39] : memref<16x24x160xbf16, #tpu.memory_space<vmem>>, vector<16x16x160xbf16>
    %39 = vector.shape_cast %38 : vector<16x16x160xbf16> to vector<256x160xbf16>
    %c6_40 = arith.constant 6 : index
    %c0_41 = arith.constant 0 : index
    %c0_42 = arith.constant 0 : index
    %40 = vector.load %arg2[%c6_40, %c0_41, %c0_42] : memref<7x160x160xbf16, #tpu.memory_space<vmem>>, vector<1x160x160xbf16>
    %41 = vector.shape_cast %40 : vector<1x160x160xbf16> to vector<160x160xbf16>
    %cst_43 = arith.constant dense<0.000000e+00> : vector<256x160xf32>
    %42 = tpu.matmul %39, %41, %cst_43 {dimension_numbers = #tpu.dot_dimension_numbers<[1], [0], [0], [1], [0, 0, 1, 1], [], []>} : vector<256x160xbf16>, vector<160x160xbf16>, vector<256x160xf32> -> vector<256x160xf32>
    %43 = arith.addf %37, %42 : vector<256x160xf32>
    %44 = vector.broadcast %0 : vector<256x1xf32> to vector<256x160xf32>
    %45 = arith.mulf %43, %44 : vector<256x160xf32>
    %cst_44 = arith.constant dense<0.000000e+00> : vector<160xf32>
    %46 = vector.multi_reduction <add>, %45, %cst_44 [0] : vector<256x160xf32> to vector<160xf32>
    %47 = vector.shape_cast %46 : vector<160xf32> to vector<1x160xf32>
    %48 = arith.mulf %45, %45 : vector<256x160xf32>
    %cst_45 = arith.constant dense<0.000000e+00> : vector<160xf32>
    %49 = vector.multi_reduction <add>, %48, %cst_45 [0] : vector<256x160xf32> to vector<160xf32>
    %50 = vector.shape_cast %49 : vector<160xf32> to vector<1x160xf32>
    %cst_46 = arith.constant 0.0069444445 : f32
    %51 = vector.broadcast %cst_46 : f32 to vector<1x160xf32>
    %52 = arith.mulf %47, %51 : vector<1x160xf32>
    %cst_47 = arith.constant 0.0069444445 : f32
    %53 = vector.broadcast %cst_47 : f32 to vector<1x160xf32>
    %54 = arith.mulf %50, %53 : vector<1x160xf32>
    %55 = arith.mulf %52, %52 : vector<1x160xf32>
    %56 = arith.subf %54, %55 : vector<1x160xf32>
    %c0_48 = arith.constant 0 : index
    %c0_49 = arith.constant 0 : index
    %57 = vector.load %arg3[%c0_48, %c0_49] : memref<1x160xf32, #tpu.memory_space<vmem>>, vector<1x160xf32>
    %cst_50 = arith.constant 1.000000e-03 : f32
    %58 = vector.broadcast %cst_50 : f32 to vector<1x160xf32>
    %59 = arith.addf %56, %58 : vector<1x160xf32>
    %60 = math.rsqrt %59 : vector<1x160xf32>
    %61 = arith.mulf %57, %60 : vector<1x160xf32>
    %c0_51 = arith.constant 0 : index
    %c0_52 = arith.constant 0 : index
    %62 = vector.load %arg4[%c0_51, %c0_52] : memref<1x160xf32, #tpu.memory_space<vmem>>, vector<1x160xf32>
    %63 = arith.mulf %52, %61 : vector<1x160xf32>
    %64 = arith.subf %62, %63 : vector<1x160xf32>
    %65 = vector.broadcast %61 : vector<1x160xf32> to vector<256x160xf32>
    %66 = arith.mulf %45, %65 : vector<256x160xf32>
    %67 = vector.broadcast %64 : vector<1x160xf32> to vector<256x160xf32>
    %68 = arith.addf %66, %67 : vector<256x160xf32>
    %cst_53 = arith.constant 0.000000e+00 : f32
    %69 = vector.broadcast %cst_53 : f32 to vector<256x160xf32>
    %70 = arith.maximumf %68, %69 : vector<256x160xf32>
    %71 = vector.broadcast %0 : vector<256x1xf32> to vector<256x160xf32>
    %72 = arith.mulf %70, %71 : vector<256x160xf32>
    %73 = vector.shape_cast %72 : vector<256x160xf32> to vector<16x16x160xf32>
    %cst_54 = arith.constant 0.000000e+00 : f32
    %74 = vector.broadcast %cst_54 : f32 to vector<3x16x160xf32>
    %c0_55 = arith.constant 0 : index
    %c0_56 = arith.constant 0 : index
    %c0_57 = arith.constant 0 : index
    %75 = vector.load %arg10[%c0_55, %c0_56, %c0_57] : memref<18x16x160xf32, #tpu.memory_space<vmem>>, vector<3x16x160xf32>
    tpu.vector_store %arg10[%c0_55, %c0_56, %c0_57], %74 {strides = array<i32>} : memref<18x16x160xf32, #tpu.memory_space<vmem>>, vector<3x16x160xf32>,
    %76 = vector.extract_strided_slice %73 {offsets = [0, 0, 0], sizes = [12, 16, 160], strides = [1, 1, 1]} : vector<16x16x160xf32> to vector<12x16x160xf32>
    %c3_58 = arith.constant 3 : index
    %c0_59 = arith.constant 0 : index
    %c0_60 = arith.constant 0 : index
    %77 = vector.load %arg10[%c3_58, %c0_59, %c0_60] : memref<18x16x160xf32, #tpu.memory_space<vmem>>, vector<12x16x160xf32>
    tpu.vector_store %arg10[%c3_58, %c0_59, %c0_60], %76 {strides = array<i32>} : memref<18x16x160xf32, #tpu.memory_space<vmem>>, vector<12x16x160xf32>,
    %cst_61 = arith.constant 0.000000e+00 : f32
    %78 = vector.broadcast %cst_61 : f32 to vector<3x16x160xf32>
    %c15 = arith.constant 15 : index
    %c0_62 = arith.constant 0 : index
    %c0_63 = arith.constant 0 : index
    %79 = vector.load %arg10[%c15, %c0_62, %c0_63] : memref<18x16x160xf32, #tpu.memory_space<vmem>>, vector<3x16x160xf32>
    tpu.vector_store %arg10[%c15, %c0_62, %c0_63], %78 {strides = array<i32>} : memref<18x16x160xf32, #tpu.memory_space<vmem>>, vector<3x16x160xf32>,
    %cst_64 = arith.constant 0.000000e+00 : f32
    %80 = vector.broadcast %cst_64 : f32 to vector<192x192xf32>
    %c0_65 = arith.constant 0 : index
    %c0_66 = arith.constant 0 : index
    %c0_67 = arith.constant 0 : index
    %81 = vector.load %arg10[%c0_65, %c0_66, %c0_67] : memref<18x16x160xf32, #tpu.memory_space<vmem>>, vector<12x16x160xf32>
    %82 = vector.shape_cast %81 : vector<12x16x160xf32> to vector<192x160xf32>
    %c0_68 = arith.constant 0 : index
    %c0_69 = arith.constant 0 : index
    %c0_70 = arith.constant 0 : index
    %83 = vector.load %arg5[%c0_68, %c0_69, %c0_70] : memref<7x160x192xbf16, #tpu.memory_space<vmem>>, vector<1x160x192xbf16>
    %84 = vector.shape_cast %83 : vector<1x160x192xbf16> to vector<160x192xbf16>
    %85 = arith.extf %84 : vector<160x192xbf16> to vector<160x192xf32>
    %cst_71 = arith.constant dense<0.000000e+00> : vector<192x192xf32>
    %86 = tpu.matmul %82, %85, %cst_71 {dimension_numbers = #tpu.dot_dimension_numbers<[1], [0], [0], [1], [0, 0, 1, 1], [], []>} : vector<192x160xf32>, vector<160x192xf32>, vector<192x192xf32> -> vector<192x192xf32>
    %87 = arith.addf %80, %86 : vector<192x192xf32>
    %c1_72 = arith.constant 1 : index
    %c0_73 = arith.constant 0 : index
    %c0_74 = arith.constant 0 : index
    %88 = vector.load %arg10[%c1_72, %c0_73, %c0_74] : memref<18x16x160xf32, #tpu.memory_space<vmem>>, vector<12x16x160xf32>
    %89 = vector.shape_cast %88 : vector<12x16x160xf32> to vector<192x160xf32>
    %c1_75 = arith.constant 1 : index
    %c0_76 = arith.constant 0 : index
    %c0_77 = arith.constant 0 : index
    %90 = vector.load %arg5[%c1_75, %c0_76, %c0_77] : memref<7x160x192xbf16, #tpu.memory_space<vmem>>, vector<1x160x192xbf16>
    %91 = vector.shape_cast %90 : vector<1x160x192xbf16> to vector<160x192xbf16>
    %92 = arith.extf %91 : vector<160x192xbf16> to vector<160x192xf32>
    %cst_78 = arith.constant dense<0.000000e+00> : vector<192x192xf32>
    %93 = tpu.matmul %89, %92, %cst_78 {dimension_numbers = #tpu.dot_dimension_numbers<[1], [0], [0], [1], [0, 0, 1, 1], [], []>} : vector<192x160xf32>, vector<160x192xf32>, vector<192x192xf32> -> vector<192x192xf32>
    %94 = arith.addf %87, %93 : vector<192x192xf32>
    %c2_79 = arith.constant 2 : index
    %c0_80 = arith.constant 0 : index
    %c0_81 = arith.constant 0 : index
    %95 = vector.load %arg10[%c2_79, %c0_80, %c0_81] : memref<18x16x160xf32, #tpu.memory_space<vmem>>, vector<12x16x160xf32>
    %96 = vector.shape_cast %95 : vector<12x16x160xf32> to vector<192x160xf32>
    %c2_82 = arith.constant 2 : index
    %c0_83 = arith.constant 0 : index
    %c0_84 = arith.constant 0 : index
    %97 = vector.load %arg5[%c2_82, %c0_83, %c0_84] : memref<7x160x192xbf16, #tpu.memory_space<vmem>>, vector<1x160x192xbf16>
    %98 = vector.shape_cast %97 : vector<1x160x192xbf16> to vector<160x192xbf16>
    %99 = arith.extf %98 : vector<160x192xbf16> to vector<160x192xf32>
    %cst_85 = arith.constant dense<0.000000e+00> : vector<192x192xf32>
    %100 = tpu.matmul %96, %99, %cst_85 {dimension_numbers = #tpu.dot_dimension_numbers<[1], [0], [0], [1], [0, 0, 1, 1], [], []>} : vector<192x160xf32>, vector<160x192xf32>, vector<192x192xf32> -> vector<192x192xf32>
    %101 = arith.addf %94, %100 : vector<192x192xf32>
    %c3_86 = arith.constant 3 : index
    %c0_87 = arith.constant 0 : index
    %c0_88 = arith.constant 0 : index
    %102 = vector.load %arg10[%c3_86, %c0_87, %c0_88] : memref<18x16x160xf32, #tpu.memory_space<vmem>>, vector<12x16x160xf32>
    %103 = vector.shape_cast %102 : vector<12x16x160xf32> to vector<192x160xf32>
    %c3_89 = arith.constant 3 : index
    %c0_90 = arith.constant 0 : index
    %c0_91 = arith.constant 0 : index
    %104 = vector.load %arg5[%c3_89, %c0_90, %c0_91] : memref<7x160x192xbf16, #tpu.memory_space<vmem>>, vector<1x160x192xbf16>
    %105 = vector.shape_cast %104 : vector<1x160x192xbf16> to vector<160x192xbf16>
    %106 = arith.extf %105 : vector<160x192xbf16> to vector<160x192xf32>
    %cst_92 = arith.constant dense<0.000000e+00> : vector<192x192xf32>
    %107 = tpu.matmul %103, %106, %cst_92 {dimension_numbers = #tpu.dot_dimension_numbers<[1], [0], [0], [1], [0, 0, 1, 1], [], []>} : vector<192x160xf32>, vector<160x192xf32>, vector<192x192xf32> -> vector<192x192xf32>
    %108 = arith.addf %101, %107 : vector<192x192xf32>
    %c4_93 = arith.constant 4 : index
    %c0_94 = arith.constant 0 : index
    %c0_95 = arith.constant 0 : index
    %109 = vector.load %arg10[%c4_93, %c0_94, %c0_95] : memref<18x16x160xf32, #tpu.memory_space<vmem>>, vector<12x16x160xf32>
    %110 = vector.shape_cast %109 : vector<12x16x160xf32> to vector<192x160xf32>
    %c4_96 = arith.constant 4 : index
    %c0_97 = arith.constant 0 : index
    %c0_98 = arith.constant 0 : index
    %111 = vector.load %arg5[%c4_96, %c0_97, %c0_98] : memref<7x160x192xbf16, #tpu.memory_space<vmem>>, vector<1x160x192xbf16>
    %112 = vector.shape_cast %111 : vector<1x160x192xbf16> to vector<160x192xbf16>
    %113 = arith.extf %112 : vector<160x192xbf16> to vector<160x192xf32>
    %cst_99 = arith.constant dense<0.000000e+00> : vector<192x192xf32>
    %114 = tpu.matmul %110, %113, %cst_99 {dimension_numbers = #tpu.dot_dimension_numbers<[1], [0], [0], [1], [0, 0, 1, 1], [], []>} : vector<192x160xf32>, vector<160x192xf32>, vector<192x192xf32> -> vector<192x192xf32>
    %115 = arith.addf %108, %114 : vector<192x192xf32>
    %c5_100 = arith.constant 5 : index
    %c0_101 = arith.constant 0 : index
    %c0_102 = arith.constant 0 : index
    %116 = vector.load %arg10[%c5_100, %c0_101, %c0_102] : memref<18x16x160xf32, #tpu.memory_space<vmem>>, vector<12x16x160xf32>
    %117 = vector.shape_cast %116 : vector<12x16x160xf32> to vector<192x160xf32>
    %c5_103 = arith.constant 5 : index
    %c0_104 = arith.constant 0 : index
    %c0_105 = arith.constant 0 : index
    %118 = vector.load %arg5[%c5_103, %c0_104, %c0_105] : memref<7x160x192xbf16, #tpu.memory_space<vmem>>, vector<1x160x192xbf16>
    %119 = vector.shape_cast %118 : vector<1x160x192xbf16> to vector<160x192xbf16>
    %120 = arith.extf %119 : vector<160x192xbf16> to vector<160x192xf32>
    %cst_106 = arith.constant dense<0.000000e+00> : vector<192x192xf32>
    %121 = tpu.matmul %117, %120, %cst_106 {dimension_numbers = #tpu.dot_dimension_numbers<[1], [0], [0], [1], [0, 0, 1, 1], [], []>} : vector<192x160xf32>, vector<160x192xf32>, vector<192x192xf32> -> vector<192x192xf32>
    %122 = arith.addf %115, %121 : vector<192x192xf32>
    %c6_107 = arith.constant 6 : index
    %c0_108 = arith.constant 0 : index
    %c0_109 = arith.constant 0 : index
    %123 = vector.load %arg10[%c6_107, %c0_108, %c0_109] : memref<18x16x160xf32, #tpu.memory_space<vmem>>, vector<12x16x160xf32>
    %124 = vector.shape_cast %123 : vector<12x16x160xf32> to vector<192x160xf32>
    %c6_110 = arith.constant 6 : index
    %c0_111 = arith.constant 0 : index
    %c0_112 = arith.constant 0 : index
    %125 = vector.load %arg5[%c6_110, %c0_111, %c0_112] : memref<7x160x192xbf16, #tpu.memory_space<vmem>>, vector<1x160x192xbf16>
    %126 = vector.shape_cast %125 : vector<1x160x192xbf16> to vector<160x192xbf16>
    %127 = arith.extf %126 : vector<160x192xbf16> to vector<160x192xf32>
    %cst_113 = arith.constant dense<0.000000e+00> : vector<192x192xf32>
    %128 = tpu.matmul %124, %127, %cst_113 {dimension_numbers = #tpu.dot_dimension_numbers<[1], [0], [0], [1], [0, 0, 1, 1], [], []>} : vector<192x160xf32>, vector<160x192xf32>, vector<192x192xf32> -> vector<192x192xf32>
    %129 = arith.addf %122, %128 : vector<192x192xf32>
    %cst_114 = arith.constant dense<0.000000e+00> : vector<192xf32>
    %130 = vector.multi_reduction <add>, %129, %cst_114 [0] : vector<192x192xf32> to vector<192xf32>
    %131 = vector.shape_cast %130 : vector<192xf32> to vector<1x192xf32>
    %132 = arith.mulf %129, %129 : vector<192x192xf32>
    %cst_115 = arith.constant dense<0.000000e+00> : vector<192xf32>
    %133 = vector.multi_reduction <add>, %132, %cst_115 [0] : vector<192x192xf32> to vector<192xf32>
    %134 = vector.shape_cast %133 : vector<192xf32> to vector<1x192xf32>
    %cst_116 = arith.constant 0.0069444445 : f32
    %135 = vector.broadcast %cst_116 : f32 to vector<1x192xf32>
    %136 = arith.mulf %131, %135 : vector<1x192xf32>
    %cst_117 = arith.constant 0.0069444445 : f32
    %137 = vector.broadcast %cst_117 : f32 to vector<1x192xf32>
    %138 = arith.mulf %134, %137 : vector<1x192xf32>
    %139 = arith.mulf %136, %136 : vector<1x192xf32>
    %140 = arith.subf %138, %139 : vector<1x192xf32>
    %c0_118 = arith.constant 0 : index
    %c0_119 = arith.constant 0 : index
    %141 = vector.load %arg6[%c0_118, %c0_119] : memref<1x192xf32, #tpu.memory_space<vmem>>, vector<1x192xf32>
    %cst_120 = arith.constant 1.000000e-03 : f32
    %142 = vector.broadcast %cst_120 : f32 to vector<1x192xf32>
    %143 = arith.addf %140, %142 : vector<1x192xf32>
    %144 = math.rsqrt %143 : vector<1x192xf32>
    %145 = arith.mulf %141, %144 : vector<1x192xf32>
    %c0_121 = arith.constant 0 : index
    %c0_122 = arith.constant 0 : index
    %146 = vector.load %arg7[%c0_121, %c0_122] : memref<1x192xf32, #tpu.memory_space<vmem>>, vector<1x192xf32>
    %147 = arith.mulf %136, %145 : vector<1x192xf32>
    %148 = arith.subf %146, %147 : vector<1x192xf32>
    %149 = vector.broadcast %145 : vector<1x192xf32> to vector<192x192xf32>
    %150 = arith.mulf %129, %149 : vector<192x192xf32>
    %151 = vector.broadcast %148 : vector<1x192xf32> to vector<192x192xf32>
    %152 = arith.addf %150, %151 : vector<192x192xf32>
    %cst_123 = arith.constant 0.000000e+00 : f32
    %153 = vector.broadcast %cst_123 : f32 to vector<192x192xf32>
    %154 = arith.maximumf %152, %153 : vector<192x192xf32>
    %c0_124 = arith.constant 0 : index
    %c0_125 = arith.constant 0 : index
    %155 = vector.load %arg9[%c0_124, %c0_125] : memref<192x192xf32, #tpu.memory_space<vmem>>, vector<192x192xf32>
    tpu.vector_store %arg9[%c0_124, %c0_125], %154 {strides = array<i32>} : memref<192x192xf32, #tpu.memory_space<vmem>>, vector<192x192xf32>,
    return
  }
  func.func @transform_0(%arg0: i32) -> (i32, i32, i32) {
    %c0_i32 = arith.constant 0 : i32
    %c0_i32_0 = arith.constant 0 : i32
    %c0_i32_1 = arith.constant 0 : i32
    %c0_i32_2 = arith.constant 0 : i32
    return %c0_i32, %c0_i32_0, %c0_i32_1 : i32, i32, i32
  }
  func.func @transform_1(%arg0: i32) -> (i32, i32, i32) {
    %c0_i32 = arith.constant 0 : i32
    %c0_i32_0 = arith.constant 0 : i32
    %c0_i32_1 = arith.constant 0 : i32
    %c0_i32_2 = arith.constant 0 : i32
    return %c0_i32, %c0_i32_0, %c0_i32_1 : i32, i32, i32
  }
  func.func @transform_2(%arg0: i32) -> (i32, i32) {
    %c0_i32 = arith.constant 0 : i32
    %c0_i32_0 = arith.constant 0 : i32
    %c0_i32_1 = arith.constant 0 : i32
    return %c0_i32, %c0_i32_0 : i32, i32
  }
  func.func @transform_3(%arg0: i32) -> (i32, i32) {
    %c0_i32 = arith.constant 0 : i32
    %c0_i32_0 = arith.constant 0 : i32
    %c0_i32_1 = arith.constant 0 : i32
    return %c0_i32, %c0_i32_0 : i32, i32
  }
  func.func @transform_4(%arg0: i32) -> (i32, i32, i32) {
    %c0_i32 = arith.constant 0 : i32
    %c0_i32_0 = arith.constant 0 : i32
    %c0_i32_1 = arith.constant 0 : i32
    %c0_i32_2 = arith.constant 0 : i32
    return %c0_i32, %c0_i32_0, %c0_i32_1 : i32, i32, i32
  }
  func.func @transform_5(%arg0: i32) -> (i32, i32) {
    %c0_i32 = arith.constant 0 : i32
    %c0_i32_0 = arith.constant 0 : i32
    %c0_i32_1 = arith.constant 0 : i32
    return %c0_i32, %c0_i32_0 : i32, i32
  }
  func.func @transform_6(%arg0: i32) -> (i32, i32) {
    %c0_i32 = arith.constant 0 : i32
    %c0_i32_0 = arith.constant 0 : i32
    %c0_i32_1 = arith.constant 0 : i32
    return %c0_i32, %c0_i32_0 : i32, i32
  }
  func.func @transform_7(%arg0: i32) -> (i32, i32) {
    %c0_i32 = arith.constant 0 : i32
    %c0_i32_0 = arith.constant 0 : i32
    %c0_i32_1 = arith.constant 0 : i32
    return %c0_i32, %c0_i32_0 : i32, i32
  }
  func.func @transform_8(%arg0: i32) -> (i32, i32) {
    %c0_i32 = arith.constant 0 : i32
    %c0_i32_0 = arith.constant 0 : i32
    %c0_i32_1 = arith.constant 0 : i32
    return %c0_i32, %c0_i32_0 : i32, i32
  }
}

</mosaic_0001>

<llo_original>
// kernel: conv_bn_relu_x2.1
$region0: #{conv_bn_relu_x2.1}
  #allocation0 [shape = 'u32[]', space=smem, size = 0x4, offset = 0x4, fixed_abs, tag = 'smem constant byte address 0x4 - core index']
  #allocation1 [shape = 'u32[144,128]{1,0:T(1,128)}', space=vmem, size = 0x12000, scoped, tag = 'internal scratch']
  #allocation2 [shape = 'f32[18,16,160]{2,1,0:T(8,128)}', space=vmem, size = 0x48000, scoped, tag = 'scratch operand']
  %s0 = inlined_call_operand.vmem [shape: bf16[16,24,160], index: 0, kind: input, shape index: {}]
  %s1 = inlined_call_operand.vmem [shape: bf16[7,160,160], index: 1, kind: input, shape index: {}]
  %s2 = inlined_call_operand.vmem [shape: f32[1,160], index: 2, kind: input, shape index: {}]
  %s3 = inlined_call_operand.vmem [shape: f32[1,160], index: 3, kind: input, shape index: {}]
  %s4 = inlined_call_operand.vmem [shape: bf16[7,160,192], index: 4, kind: input, shape index: {}]
  %s5 = inlined_call_operand.vmem [shape: f32[1,192], index: 5, kind: input, shape index: {}]
  %s6 = inlined_call_operand.vmem [shape: f32[1,192], index: 6, kind: input, shape index: {}]
  %s7 = inlined_call_operand.vmem [shape: f32[256,1], index: 7, kind: input, shape index: {}]
  %s8 = inlined_call_operand.vmem [shape: f32[192,192], index: 8, kind: output, shape index: {}]
  %s9 = sld [smem:[#allocation0]]
  $region42: #{conv_bn_relu_x2.1} parent=0
    _
  %s11 = ssub.s32 1, %s9
  %s12 = scalar_select 0, %s11, %s9
  // Predicated region
  $region2: #{conv_bn_relu_x2.1} parent=0 // pred_check
    _
  $region3: #{conv_bn_relu_x2.1} parent=0 // pred_check_branch
    %14 = sbr.rel (0) target = $region5
  $region4: #{conv_bn_relu_x2.1} parent=0 // pred_region
    _
  $region5: #{conv_bn_relu_x2.1} parent=0 // pred_fallthru
    _
  // Predicated region
  $region6: #{conv_bn_relu_x2.1} parent=0 // pred_check
    _
  $region7: #{conv_bn_relu_x2.1} parent=0 // pred_check_branch
    %16 = sbr.rel (0) target = $region9
  $region8: #{conv_bn_relu_x2.1} parent=0 // pred_region
    _
  $region9: #{conv_bn_relu_x2.1} parent=0 // pred_fallthru
    _
  // Predicated region
  $region10: #{conv_bn_relu_x2.1} parent=0 // pred_check
    _
  $region11: #{conv_bn_relu_x2.1} parent=0 // pred_check_branch
    %18 = sbr.rel (0) target = $region13
  $region12: #{conv_bn_relu_x2.1} parent=0 // pred_region
    _
  $region13: #{conv_bn_relu_x2.1} parent=0 // pred_fallthru
    _
  // Predicated region
  $region14: #{conv_bn_relu_x2.1} parent=0 // pred_check
    _
  $region15: #{conv_bn_relu_x2.1} parent=0 // pred_check_branch
    %20 = sbr.rel (0) target = $region17
  $region16: #{conv_bn_relu_x2.1} parent=0 // pred_region
    _
  $region17: #{conv_bn_relu_x2.1} parent=0 // pred_fallthru
    _
  // Predicated region
  $region18: #{conv_bn_relu_x2.1} parent=0 // pred_check
    _
  $region19: #{conv_bn_relu_x2.1} parent=0 // pred_check_branch
    %22 = sbr.rel (0) target = $region21
  $region20: #{conv_bn_relu_x2.1} parent=0 // pred_region
    _
  $region21: #{conv_bn_relu_x2.1} parent=0 // pred_fallthru
    _
  // Predicated region
  $region22: #{conv_bn_relu_x2.1} parent=0 // pred_check
    _
  $region23: #{conv_bn_relu_x2.1} parent=0 // pred_check_branch
    %24 = sbr.rel (0) target = $region25
  $region24: #{conv_bn_relu_x2.1} parent=0 // pred_region
    _
  $region25: #{conv_bn_relu_x2.1} parent=0 // pred_fallthru
    _
  // Predicated region
  $region26: #{conv_bn_relu_x2.1} parent=0 // pred_check
    _
  $region27: #{conv_bn_relu_x2.1} parent=0 // pred_check_branch
    %26 = sbr.rel (0) target = $region29
  $region28: #{conv_bn_relu_x2.1} parent=0 // pred_region
    _
  $region29: #{conv_bn_relu_x2.1} parent=0 // pred_fallthru
    _
  // Predicated region
  $region30: #{conv_bn_relu_x2.1} parent=0 // pred_check
    _
  $region31: #{conv_bn_relu_x2.1} parent=0 // pred_check_branch
    %28 = sbr.rel (0) target = $region33
  $region32: #{conv_bn_relu_x2.1} parent=0 // pred_region
    _
  $region33: #{conv_bn_relu_x2.1} parent=0 // pred_fallthru
    _
  %v30 = vld [vmem:[%s7] sm:$0xff]
  %v31 = vld [vmem:[%s7 + $0x8] sm:$0xff]
  %v32 = vld [vmem:[%s7 + $0x10] sm:$0xff]
  %v33 = vld [vmem:[%s7 + $0x18] sm:$0xff]
  %v34 = vld [vmem:[%s7 + $0x20] sm:$0xff]
  %v35 = vld [vmem:[%s7 + $0x28] sm:$0xff]
  %v36 = vld [vmem:[%s7 + $0x30] sm:$0xff]
  %v37 = vld [vmem:[%s7 + $0x38] sm:$0xff]
  %v38 = vld [vmem:[%s7 + $0x40] sm:$0xff]
  %v39 = vld [vmem:[%s7 + $0x48] sm:$0xff]
  %v40 = vld [vmem:[%s7 + $0x50] sm:$0xff]
  %v41 = vld [vmem:[%s7 + $0x58] sm:$0xff]
  %v42 = vld [vmem:[%s7 + $0x60] sm:$0xff]
  %v43 = vld [vmem:[%s7 + $0x68] sm:$0xff]
  %v44 = vld [vmem:[%s7 + $0x70] sm:$0xff]
  %v45 = vld [vmem:[%s7 + $0x78] sm:$0xff]
  %v46 = vld [vmem:[%s7 + $0x80] sm:$0xff]
  %v47 = vld [vmem:[%s7 + $0x88] sm:$0xff]
  %v48 = vld [vmem:[%s7 + $0x90] sm:$0xff]
  %v49 = vld [vmem:[%s7 + $0x98] sm:$0xff]
  %v50 = vld [vmem:[%s7 + $0xa0] sm:$0xff]
  %v51 = vld [vmem:[%s7 + $0xa8] sm:$0xff]
  %v52 = vld [vmem:[%s7 + $0xb0] sm:$0xff]
  %v53 = vld [vmem:[%s7 + $0xb8] sm:$0xff]
  %v54 = vld [vmem:[%s7 + $0xc0] sm:$0xff]
  %v55 = vld [vmem:[%s7 + $0xc8] sm:$0xff]
  %v56 = vld [vmem:[%s7 + $0xd0] sm:$0xff]
  %v57 = vld [vmem:[%s7 + $0xd8] sm:$0xff]
  %v58 = vld [vmem:[%s7 + $0xe0] sm:$0xff]
  %v59 = vld [vmem:[%s7 + $0xe8] sm:$0xff]
  %v60 = vld [vmem:[%s7 + $0xf0] sm:$0xff]
  %v61 = vld [vmem:[%s7 + $0xf8] sm:$0xff]
  %v62 = vld [vmem:[%s0] sm:$0xff]
  %v63 = vld [vmem:[%s0 + $0x8] sm:$0xff]
  %v64 = vld [vmem:[%s0 + $0x18] sm:$0xff]
  %v65 = vld [vmem:[%s0 + $0x20] sm:$0xff]
  %v66 = vld [vmem:[%s0 + $0x30] sm:$0xff]
  %v67 = vld [vmem:[%s0 + $0x38] sm:$0xff]
  %v68 = vld [vmem:[%s0 + $0x48] sm:$0xff]
  %v69 = vld [vmem:[%s0 + $0x50] sm:$0xff]
  %v70 = vld [vmem:[%s0 + $0x60] sm:$0xff]
  %v71 = vld [vmem:[%s0 + $0x68] sm:$0xff]
  %v72 = vld [vmem:[%s0 + $0x78] sm:$0xff]
  %v73 = vld [vmem:[%s0 + $0x80] sm:$0xff]
  %v74 = vld [vmem:[%s0 + $0x90] sm:$0xff]
  %v75 = vld [vmem:[%s0 + $0x98] sm:$0xff]
  %v76 = vld [vmem:[%s0 + $0xa8] sm:$0xff]
  %v77 = vld [vmem:[%s0 + $0xb0] sm:$0xff]
  %v78 = vld [vmem:[%s0 + $0xc0] sm:$0xff]
  %v79 = vld [vmem:[%s0 + $0xc8] sm:$0xff]
  %v80 = vld [vmem:[%s0 + $0xd8] sm:$0xff]
  %v81 = vld [vmem:[%s0 + $0xe0] sm:$0xff]
  %v82 = vld [vmem:[%s0 + $0xf0] sm:$0xff]
  %v83 = vld [vmem:[%s0 + $0xf8] sm:$0xff]
  %v84 = vld [vmem:[%s0 + $0x108] sm:$0xff]
  %v85 = vld [vmem:[%s0 + $0x110] sm:$0xff]
  %v86 = vld [vmem:[%s0 + $0x120] sm:$0xff]
  %v87 = vld [vmem:[%s0 + $0x128] sm:$0xff]
  %v88 = vld [vmem:[%s0 + $0x138] sm:$0xff]
  %v89 = vld [vmem:[%s0 + $0x140] sm:$0xff]
  %v90 = vld [vmem:[%s0 + $0x150] sm:$0xff]
  %v91 = vld [vmem:[%s0 + $0x158] sm:$0xff]
  %v92 = vld [vmem:[%s0 + $0x168] sm:$0xff]
  %v93 = vld [vmem:[%s0 + $0x170] sm:$0xff]
  %v94 = vld [vmem:[%s1] sm:$0xff]
  %v95 = vld [vmem:[%s1 + $0x8] sm:$0xff]
  %v96 = vld [vmem:[%s1 + $0x10] sm:$0xff]
  %v97 = vld [vmem:[%s1 + $0x18] sm:$0xff]
  %v98 = vld [vmem:[%s1 + $0x20] sm:$0xff]
  %v99 = vld [vmem:[%s1 + $0x28] sm:$0xff]
  %v100 = vld [vmem:[%s1 + $0x30] sm:$0xff]
  %v101 = vld [vmem:[%s1 + $0x38] sm:$0xff]
  %v102 = vld [vmem:[%s1 + $0x40] sm:$0xff]
  %v103 = vld [vmem:[%s1 + $0x48] sm:$0xff]
  %v104 = vld [vmem:[%s1 + $0x50] sm:$0xff]
  %v105 = vld [vmem:[%s1 + $0x58] sm:$0xff]
  %v106 = vld [vmem:[%s1 + $0x60] sm:$0xff]
  %v107 = vld [vmem:[%s1 + $0x68] sm:$0xff]
  %v108 = vld [vmem:[%s1 + $0x70] sm:$0xff]
  %v109 = vld [vmem:[%s1 + $0x78] sm:$0xff]
  %v110 = vld [vmem:[%s1 + $0x80] sm:$0xff]
  %v111 = vld [vmem:[%s1 + $0x88] sm:$0xff]
  %v112 = vld [vmem:[%s1 + $0x90] sm:$0xff]
  %v113 = vld [vmem:[%s1 + $0x98] sm:$0xff]
  %v114 = vld [vmem:[%s0 + $0x10] sm:$0x11]
  %v115 = vld [vmem:[%s0 + $0x28] sm:$0x11]
  %v116 = vld [vmem:[%s0 + $0x40] sm:$0x11]
  %v117 = vld [vmem:[%s0 + $0x58] sm:$0x11]
  %v118 = vld [vmem:[%s0 + $0x70] sm:$0x11]
  %v119 = vld [vmem:[%s0 + $0x88] sm:$0x11]
  %v120 = vld [vmem:[%s0 + $0xa0] sm:$0x11]
  %v121 = vld [vmem:[%s0 + $0xb8] sm:$0x11]
  %v122 = vld [vmem:[%s0 + $0xd0] sm:$0x11]
  %v123 = vld [vmem:[%s0 + $0xe8] sm:$0x11]
  %v124 = vld [vmem:[%s0 + $0x100] sm:$0x11]
  %v125 = vld [vmem:[%s0 + $0x118] sm:$0x11]
  %v126 = vld [vmem:[%s0 + $0x130] sm:$0x11]
  %v127 = vld [vmem:[%s0 + $0x148] sm:$0x11]
  %v128 = vld [vmem:[%s0 + $0x160] sm:$0x11]
  %v129 = vld [vmem:[%s0 + $0x178] sm:$0x11]
  %vm130 = vsmask.f32 3328
  %vm131 = vsmask.f32 7440
  %vm132 = vmor %vm130, %vm131
  %v134 = vshrl.u32 %v62, 16
  %v136 = vrot.slane %v134, 4
  %v137 = vshll.u32 %v62, 16
  %v139 = vrot.slane %v137, 5
  %v140 = vor.u32 %v136, %v139
  %v141 = vrot.slane %v140, 4
  %v143 = vshll.u32 %v63, 16
  %v145 = vrot.slane %v143, 5
  %v146 = vsel %vm132, %v141, %v145
  %v147 = vshrl.u32 %v63, 16
  %v149 = vrot.slane %v147, 4
  %v150 = vor.u32 %v149, %v145
  %v151 = vrot.slane %v150, 4
  %v153 = vshll.u32 %v114, 16
  %v155 = vrot.slane %v153, 5
  %v156 = vsel %vm132, %v151, %v155
  %v158 = vshrl.u32 %v64, 16
  %v160 = vrot.slane %v158, 4
  %v161 = vshll.u32 %v64, 16
  %v163 = vrot.slane %v161, 5
  %v164 = vor.u32 %v160, %v163
  %v165 = vrot.slane %v164, 4
  %v167 = vshll.u32 %v65, 16
  %v169 = vrot.slane %v167, 5
  %v170 = vsel %vm132, %v165, %v169
  %v171 = vshrl.u32 %v65, 16
  %v173 = vrot.slane %v171, 4
  %v174 = vor.u32 %v173, %v169
  %v175 = vrot.slane %v174, 4
  %v177 = vshll.u32 %v115, 16
  %v179 = vrot.slane %v177, 5
  %v180 = vsel %vm132, %v175, %v179
  %v182 = vshrl.u32 %v66, 16
  %v184 = vrot.slane %v182, 4
  %v185 = vshll.u32 %v66, 16
  %v187 = vrot.slane %v185, 5
  %v188 = vor.u32 %v184, %v187
  %v189 = vrot.slane %v188, 4
  %v191 = vshll.u32 %v67, 16
  %v193 = vrot.slane %v191, 5
  %v194 = vsel %vm132, %v189, %v193
  %v195 = vshrl.u32 %v67, 16
  %v197 = vrot.slane %v195, 4
  %v198 = vor.u32 %v197, %v193
  %v199 = vrot.slane %v198, 4
  %v201 = vshll.u32 %v116, 16
  %v203 = vrot.slane %v201, 5
  %v204 = vsel %vm132, %v199, %v203
  %v206 = vshrl.u32 %v68, 16
  %v208 = vrot.slane %v206, 4
  %v209 = vshll.u32 %v68, 16
  %v211 = vrot.slane %v209, 5
  %v212 = vor.u32 %v208, %v211
  %v213 = vrot.slane %v212, 4
  %v215 = vshll.u32 %v69, 16
  %v217 = vrot.slane %v215, 5
  %v218 = vsel %vm132, %v213, %v217
  %v219 = vshrl.u32 %v69, 16
  %v221 = vrot.slane %v219, 4
  %v222 = vor.u32 %v221, %v217
  %v223 = vrot.slane %v222, 4
  %v225 = vshll.u32 %v117, 16
  %v227 = vrot.slane %v225, 5
  %v228 = vsel %vm132, %v223, %v227
  %v230 = vshrl.u32 %v70, 16
  %v232 = vrot.slane %v230, 4
  %v233 = vshll.u32 %v70, 16
  %v235 = vrot.slane %v233, 5
  %v236 = vor.u32 %v232, %v235
  %v237 = vrot.slane %v236, 4
  %v239 = vshll.u32 %v71, 16
  %v241 = vrot.slane %v239, 5
  %v242 = vsel %vm132, %v237, %v241
  %v243 = vshrl.u32 %v71, 16
  %v245 = vrot.slane %v243, 4
  %v246 = vor.u32 %v245, %v241
  %v247 = vrot.slane %v246, 4
  %v249 = vshll.u32 %v118, 16
  %v251 = vrot.slane %v249, 5
  %v252 = vsel %vm132, %v247, %v251
  %v254 = vshrl.u32 %v72, 16
  %v256 = vrot.slane %v254, 4
  %v257 = vshll.u32 %v72, 16
  %v259 = vrot.slane %v257, 5
  %v260 = vor.u32 %v256, %v259
  %v261 = vrot.slane %v260, 4
  %v263 = vshll.u32 %v73, 16
  %v265 = vrot.slane %v263, 5
  %v266 = vsel %vm132, %v261, %v265
  %v267 = vshrl.u32 %v73, 16
  %v269 = vrot.slane %v267, 4
  %v270 = vor.u32 %v269, %v265
  %v271 = vrot.slane %v270, 4
  %v273 = vshll.u32 %v119, 16
  %v275 = vrot.slane %v273, 5
  %v276 = vsel %vm132, %v271, %v275
  %v278 = vshrl.u32 %v74, 16
  %v280 = vrot.slane %v278, 4
  %v281 = vshll.u32 %v74, 16
  %v283 = vrot.slane %v281, 5
  %v284 = vor.u32 %v280, %v283
  %v285 = vrot.slane %v284, 4
  %v287 = vshll.u32 %v75, 16
  %v289 = vrot.slane %v287, 5
  %v290 = vsel %vm132, %v285, %v289
  %v291 = vshrl.u32 %v75, 16
  %v293 = vrot.slane %v291, 4
  %v294 = vor.u32 %v293, %v289
  %v295 = vrot.slane %v294, 4
  %v297 = vshll.u32 %v120, 16
  %v299 = vrot.slane %v297, 5
  %v300 = vsel %vm132, %v295, %v299
  %v302 = vshrl.u32 %v76, 16
  %v304 = vrot.slane %v302, 4
  %v305 = vshll.u32 %v76, 16
  %v307 = vrot.slane %v305, 5
  %v308 = vor.u32 %v304, %v307
  %v309 = vrot.slane %v308, 4
  %v311 = vshll.u32 %v77, 16
  %v313 = vrot.slane %v311, 5
  %v314 = vsel %vm132, %v309, %v313
  %v315 = vshrl.u32 %v77, 16
  %v317 = vrot.slane %v315, 4
  %v318 = vor.u32 %v317, %v313
  %v319 = vrot.slane %v318, 4
  %v321 = vshll.u32 %v121, 16
  %v323 = vrot.slane %v321, 5
  %v324 = vsel %vm132, %v319, %v323
  %v326 = vshrl.u32 %v78, 16
  %v328 = vrot.slane %v326, 4
  %v329 = vshll.u32 %v78, 16
  %v331 = vrot.slane %v329, 5
  %v332 = vor.u32 %v328, %v331
  %v333 = vrot.slane %v332, 4
  %v335 = vshll.u32 %v79, 16
  %v337 = vrot.slane %v335, 5
  %v338 = vsel %vm132, %v333, %v337
  %v339 = vshrl.u32 %v79, 16
  %v341 = vrot.slane %v339, 4
  %v342 = vor.u32 %v341, %v337
  %v343 = vrot.slane %v342, 4
  %v345 = vshll.u32 %v122, 16
  %v347 = vrot.slane %v345, 5
  %v348 = vsel %vm132, %v343, %v347
  %v350 = vshrl.u32 %v80, 16
  %v352 = vrot.slane %v350, 4
  %v353 = vshll.u32 %v80, 16
  %v355 = vrot.slane %v353, 5
  %v356 = vor.u32 %v352, %v355
  %v357 = vrot.slane %v356, 4
  %v359 = vshll.u32 %v81, 16
  %v361 = vrot.slane %v359, 5
  %v362 = vsel %vm132, %v357, %v361
  %v363 = vshrl.u32 %v81, 16
  %v365 = vrot.slane %v363, 4
  %v366 = vor.u32 %v365, %v361
  %v367 = vrot.slane %v366, 4
  %v369 = vshll.u32 %v123, 16
  %v371 = vrot.slane %v369, 5
  %v372 = vsel %vm132, %v367, %v371
  %v374 = vshrl.u32 %v82, 16
  %v376 = vrot.slane %v374, 4
  %v377 = vshll.u32 %v82, 16
  %v379 = vrot.slane %v377, 5
  %v380 = vor.u32 %v376, %v379
  %v381 = vrot.slane %v380, 4
  %v383 = vshll.u32 %v83, 16
  %v385 = vrot.slane %v383, 5
  %v386 = vsel %vm132, %v381, %v385
  %v387 = vshrl.u32 %v83, 16
  %v389 = vrot.slane %v387, 4
  %v390 = vor.u32 %v389, %v385
  %v391 = vrot.slane %v390, 4
  %v393 = vshll.u32 %v124, 16
  %v395 = vrot.slane %v393, 5
  %v396 = vsel %vm132, %v391, %v395
  %v398 = vshrl.u32 %v84, 16
  %v400 = vrot.slane %v398, 4
  %v401 = vshll.u32 %v84, 16
  %v403 = vrot.slane %v401, 5
  %v404 = vor.u32 %v400, %v403
  %v405 = vrot.slane %v404, 4
  %v407 = vshll.u32 %v85, 16
  %v409 = vrot.slane %v407, 5
  %v410 = vsel %vm132, %v405, %v409
  %v411 = vshrl.u32 %v85, 16
  %v413 = vrot.slane %v411, 4
  %v414 = vor.u32 %v413, %v409
  %v415 = vrot.slane %v414, 4
  %v417 = vshll.u32 %v125, 16
  %v419 = vrot.slane %v417, 5
  %v420 = vsel %vm132, %v415, %v419
  %v422 = vshrl.u32 %v86, 16
  %v424 = vrot.slane %v422, 4
  %v425 = vshll.u32 %v86, 16
  %v427 = vrot.slane %v425, 5
  %v428 = vor.u32 %v424, %v427
  %v429 = vrot.slane %v428, 4
  %v431 = vshll.u32 %v87, 16
  %v433 = vrot.slane %v431, 5
  %v434 = vsel %vm132, %v429, %v433
  %v435 = vshrl.u32 %v87, 16
  %v437 = vrot.slane %v435, 4
  %v438 = vor.u32 %v437, %v433
  %v439 = vrot.slane %v438, 4
  %v441 = vshll.u32 %v126, 16
  %v443 = vrot.slane %v441, 5
  %v444 = vsel %vm132, %v439, %v443
  %v446 = vshrl.u32 %v88, 16
  %v448 = vrot.slane %v446, 4
  %v449 = vshll.u32 %v88, 16
  %v451 = vrot.slane %v449, 5
  %v452 = vor.u32 %v448, %v451
  %v453 = vrot.slane %v452, 4
  %v455 = vshll.u32 %v89, 16
  %v457 = vrot.slane %v455, 5
  %v458 = vsel %vm132, %v453, %v457
  %v459 = vshrl.u32 %v89, 16
  %v461 = vrot.slane %v459, 4
  %v462 = vor.u32 %v461, %v457
  %v463 = vrot.slane %v462, 4
  %v465 = vshll.u32 %v127, 16
  %v467 = vrot.slane %v465, 5
  %v468 = vsel %vm132, %v463, %v467
  %v470 = vshrl.u32 %v90, 16
  %v472 = vrot.slane %v470, 4
  %v473 = vshll.u32 %v90, 16
  %v475 = vrot.slane %v473, 5
  %v476 = vor.u32 %v472, %v475
  %v477 = vrot.slane %v476, 4
  %v479 = vshll.u32 %v91, 16
  %v481 = vrot.slane %v479, 5
  %v482 = vsel %vm132, %v477, %v481
  %v483 = vshrl.u32 %v91, 16
  %v485 = vrot.slane %v483, 4
  %v486 = vor.u32 %v485, %v481
  %v487 = vrot.slane %v486, 4
  %v489 = vshll.u32 %v128, 16
  %v491 = vrot.slane %v489, 5
  %v492 = vsel %vm132, %v487, %v491
  %v494 = vshrl.u32 %v92, 16
  %v496 = vrot.slane %v494, 4
  %v497 = vshll.u32 %v92, 16
  %v499 = vrot.slane %v497, 5
  %v500 = vor.u32 %v496, %v499
  %v501 = vrot.slane %v500, 4
  %v503 = vshll.u32 %v93, 16
  %v505 = vrot.slane %v503, 5
  %v506 = vsel %vm132, %v501, %v505
  %v507 = vshrl.u32 %v93, 16
  %v509 = vrot.slane %v507, 4
  %v510 = vor.u32 %v509, %v505
  %v511 = vrot.slane %v510, 4
  %v513 = vshll.u32 %v129, 16
  %v515 = vrot.slane %v513, 5
  %v516 = vsel %vm132, %v511, %v515
  %s517 = scalar_lea.vmem %s1, 160
  %v518 = vld [vmem:[%s517] sm:$0xff]
  %v519 = vld [vmem:[%s517 + $0x8] sm:$0xff]
  %v520 = vld [vmem:[%s517 + $0x10] sm:$0xff]
  %v521 = vld [vmem:[%s517 + $0x18] sm:$0xff]
  %v522 = vld [vmem:[%s517 + $0x20] sm:$0xff]
  %v523 = vld [vmem:[%s517 + $0x28] sm:$0xff]
  %v524 = vld [vmem:[%s517 + $0x30] sm:$0xff]
  %v525 = vld [vmem:[%s517 + $0x38] sm:$0xff]
  %v526 = vld [vmem:[%s517 + $0x40] sm:$0xff]
  %v527 = vld [vmem:[%s517 + $0x48] sm:$0xff]
  %v528 = vld [vmem:[%s517 + $0x50] sm:$0xff]
  %v529 = vld [vmem:[%s517 + $0x58] sm:$0xff]
  %v530 = vld [vmem:[%s517 + $0x60] sm:$0xff]
  %v531 = vld [vmem:[%s517 + $0x68] sm:$0xff]
  %v532 = vld [vmem:[%s517 + $0x70] sm:$0xff]
  %v533 = vld [vmem:[%s517 + $0x78] sm:$0xff]
  %v534 = vld [vmem:[%s517 + $0x80] sm:$0xff]
  %v535 = vld [vmem:[%s517 + $0x88] sm:$0xff]
  %v536 = vld [vmem:[%s517 + $0x90] sm:$0xff]
  %v537 = vld [vmem:[%s517 + $0x98] sm:$0xff]
  %v538 = vunpack.c.l.b16 %v146
  %v539 = vunpack.c.h.b16 %v146
  %v540 = vunpack.c.l.b16 %v156
  %v541 = vunpack.c.h.b16 %v156
  %v542 = vunpack.c.l.b16 %v170
  %v543 = vunpack.c.h.b16 %v170
  %v544 = vunpack.c.l.b16 %v180
  %v545 = vunpack.c.h.b16 %v180
  %v546 = vunpack.c.l.b16 %v194
  %v547 = vunpack.c.h.b16 %v194
  %v548 = vunpack.c.l.b16 %v204
  %v549 = vunpack.c.h.b16 %v204
  %v550 = vunpack.c.l.b16 %v218
  %v551 = vunpack.c.h.b16 %v218
  %v552 = vunpack.c.l.b16 %v228
  %v553 = vunpack.c.h.b16 %v228
  %v554 = vunpack.c.l.b16 %v242
  %v555 = vunpack.c.h.b16 %v242
  %v556 = vunpack.c.l.b16 %v252
  %v557 = vunpack.c.h.b16 %v252
  %v558 = vunpack.c.l.b16 %v266
  %v559 = vunpack.c.h.b16 %v266
  %v560 = vunpack.c.l.b16 %v276
  %v561 = vunpack.c.h.b16 %v276
  %v562 = vunpack.c.l.b16 %v290
  %v563 = vunpack.c.h.b16 %v290
  %v564 = vunpack.c.l.b16 %v300
  %v565 = vunpack.c.h.b16 %v300
  %v566 = vunpack.c.l.b16 %v314
  %v567 = vunpack.c.h.b16 %v314
  %v568 = vunpack.c.l.b16 %v324
  %v569 = vunpack.c.h.b16 %v324
  %v570 = vunpack.c.l.b16 %v338
  %v571 = vunpack.c.h.b16 %v338
  %v572 = vunpack.c.l.b16 %v348
  %v573 = vunpack.c.h.b16 %v348
  %v574 = vunpack.c.l.b16 %v362
  %v575 = vunpack.c.h.b16 %v362
  %v576 = vunpack.c.l.b16 %v372
  %v577 = vunpack.c.h.b16 %v372
  %v578 = vunpack.c.l.b16 %v386
  %v579 = vunpack.c.h.b16 %v386
  %v580 = vunpack.c.l.b16 %v396
  %v581 = vunpack.c.h.b16 %v396
  %v582 = vunpack.c.l.b16 %v410
  %v583 = vunpack.c.h.b16 %v410
  %v584 = vunpack.c.l.b16 %v420
  %v585 = vunpack.c.h.b16 %v420
  %v586 = vunpack.c.l.b16 %v434
  %v587 = vunpack.c.h.b16 %v434
  %v588 = vunpack.c.l.b16 %v444
  %v589 = vunpack.c.h.b16 %v444
  %v590 = vunpack.c.l.b16 %v458
  %v591 = vunpack.c.h.b16 %v458
  %v592 = vunpack.c.l.b16 %v468
  %v593 = vunpack.c.h.b16 %v468
  %v594 = vunpack.c.l.b16 %v482
  %v595 = vunpack.c.h.b16 %v482
  %v596 = vunpack.c.l.b16 %v492
  %v597 = vunpack.c.h.b16 %v492
  %v598 = vunpack.c.l.b16 %v506
  %v599 = vunpack.c.h.b16 %v506
  %v600 = vunpack.c.l.b16 %v516
  %v601 = vunpack.c.h.b16 %v516
  %v602 = vpack.c.b16 %v540, %v538
  %v603 = vpack.c.b16 %v541, %v539
  %v604 = vpack.c.b16 %v544, %v542
  %v605 = vpack.c.b16 %v545, %v543
  %v606 = vpack.c.b16 %v548, %v546
  %v607 = vpack.c.b16 %v549, %v547
  %v608 = vpack.c.b16 %v552, %v550
  %v609 = vpack.c.b16 %v553, %v551
  %v610 = vpack.c.b16 %v556, %v554
  %v611 = vpack.c.b16 %v557, %v555
  %v612 = vpack.c.b16 %v560, %v558
  %v613 = vpack.c.b16 %v561, %v559
  %v614 = vpack.c.b16 %v564, %v562
  %v615 = vpack.c.b16 %v565, %v563
  %v616 = vpack.c.b16 %v568, %v566
  %v617 = vpack.c.b16 %v569, %v567
  %v618 = vpack.c.b16 %v572, %v570
  %v619 = vpack.c.b16 %v573, %v571
  %v620 = vpack.c.b16 %v576, %v574
  %v621 = vpack.c.b16 %v577, %v575
  %v622 = vpack.c.b16 %v580, %v578
  %v623 = vpack.c.b16 %v581, %v579
  %v624 = vpack.c.b16 %v584, %v582
  %v625 = vpack.c.b16 %v585, %v583
  %v626 = vpack.c.b16 %v588, %v586
  %v627 = vpack.c.b16 %v589, %v587
  %v628 = vpack.c.b16 %v592, %v590
  %v629 = vpack.c.b16 %v593, %v591
  %v630 = vpack.c.b16 %v596, %v594
  %v631 = vpack.c.b16 %v597, %v595
  %v632 = vpack.c.b16 %v600, %v598
  %v633 = vpack.c.b16 %v601, %v599
  %v670 = vunpack.c.l.b16 %v518
  %v671 = vunpack.c.h.b16 %v518
  %v672 = vunpack.c.l.b16 %v519
  %v673 = vunpack.c.h.b16 %v519
  %v674 = vunpack.c.l.b16 %v520
  %v675 = vunpack.c.h.b16 %v520
  %v676 = vunpack.c.l.b16 %v521
  %v677 = vunpack.c.h.b16 %v521
  %v678 = vunpack.c.l.b16 %v522
  %v679 = vunpack.c.h.b16 %v522
  %v680 = vunpack.c.l.b16 %v523
  %v681 = vunpack.c.h.b16 %v523
  %v682 = vunpack.c.l.b16 %v524
  %v683 = vunpack.c.h.b16 %v524
  %v684 = vunpack.c.l.b16 %v525
  %v685 = vunpack.c.h.b16 %v525
  %v686 = vunpack.c.l.b16 %v526
  %v687 = vunpack.c.h.b16 %v526
  %v688 = vunpack.c.l.b16 %v527
  %v689 = vunpack.c.h.b16 %v527
  %v690 = vunpack.c.l.b16 %v528
  %v691 = vunpack.c.h.b16 %v528
  %v692 = vunpack.c.l.b16 %v529
  %v693 = vunpack.c.h.b16 %v529
  %v694 = vunpack.c.l.b16 %v530
  %v695 = vunpack.c.h.b16 %v530
  %v696 = vunpack.c.l.b16 %v531
  %v697 = vunpack.c.h.b16 %v531
  %v698 = vunpack.c.l.b16 %v532
  %v699 = vunpack.c.h.b16 %v532
  %v700 = vunpack.c.l.b16 %v533
  %v701 = vunpack.c.h.b16 %v533
  %v702 = vunpack.c.l.b16 %v534
  %v703 = vunpack.c.h.b16 %v534
  %v704 = vunpack.c.l.b16 %v535
  %v705 = vunpack.c.h.b16 %v535
  %v706 = vunpack.c.l.b16 %v536
  %v707 = vunpack.c.h.b16 %v536
  %v708 = vunpack.c.l.b16 %v537
  %v709 = vunpack.c.h.b16 %v537
  %v710 = vpack.c.b16 %v672, %v670
  %v711 = vpack.c.b16 %v673, %v671
  %v712 = vpack.c.b16 %v676, %v674
  %v713 = vpack.c.b16 %v677, %v675
  %v714 = vpack.c.b16 %v680, %v678
  %v715 = vpack.c.b16 %v681, %v679
  %v716 = vpack.c.b16 %v684, %v682
  %v717 = vpack.c.b16 %v685, %v683
  %v718 = vpack.c.b16 %v688, %v686
  %v719 = vpack.c.b16 %v689, %v687
  %v720 = vpack.c.b16 %v692, %v690
  %v721 = vpack.c.b16 %v693, %v691
  %v722 = vpack.c.b16 %v696, %v694
  %v723 = vpack.c.b16 %v697, %v695
  %v724 = vpack.c.b16 %v700, %v698
  %v725 = vpack.c.b16 %v701, %v699
  %v726 = vpack.c.b16 %v704, %v702
  %v727 = vpack.c.b16 %v705, %v703
  %v728 = vpack.c.b16 %v708, %v706
  %v729 = vpack.c.b16 %v709, %v707
  %vm750 = vcmask 261120
  %v752 = vsel %vm750, %v603, 0
  %v755 = vsel %vm750, %v605, 0
  %v758 = vsel %vm750, %v607, 0
  %v761 = vsel %vm750, %v609, 0
  %v764 = vsel %vm750, %v611, 0
  %v767 = vsel %vm750, %v613, 0
  %v770 = vsel %vm750, %v615, 0
  %v773 = vsel %vm750, %v617, 0
  %v776 = vsel %vm750, %v619, 0
  %v779 = vsel %vm750, %v621, 0
  %v782 = vsel %vm750, %v623, 0
  %v785 = vsel %vm750, %v625, 0
  %v788 = vsel %vm750, %v627, 0
  %v791 = vsel %vm750, %v629, 0
  %v794 = vsel %vm750, %v631, 0
  %v797 = vsel %vm750, %v633, 0
  %799 = vmatprep.subr.bf16.mxu0 %v711
  %800 = vmatpush1.bf16.msra.mxu0 %v710
  %801 = vmatprep.subr.bf16.mxu0 %v713
  %802 = vmatpush1.bf16.msra.mxu0 %v712
  %803 = vmatprep.subr.bf16.mxu0 %v715
  %804 = vmatpush1.bf16.msra.mxu0 %v714
  %805 = vmatprep.subr.bf16.mxu0 %v717
  %806 = vmatpush1.bf16.msra.mxu0 %v716
  %807 = vmatprep.subr.bf16.mxu0 %v719
  %808 = vmatpush1.bf16.msra.mxu0 %v718
  %809 = vmatprep.subr.bf16.mxu0 %v721
  %810 = vmatpush1.bf16.msra.mxu0 %v720
  %811 = vmatprep.subr.bf16.mxu0 %v723
  %812 = vmatpush1.bf16.msra.mxu0 %v722
  %813 = vmatprep.subr.bf16.mxu0 %v725
  %814 = vmatpush1.bf16.msra.mxu0 %v724
  %815 = vmatprep.subr.bf16.mxu0 %v727
  %816 = vmatpush1.bf16.msra.mxu0 %v726
  %817 = vmatprep.subr.bf16.mxu0 %v729
  %818 = vmatpush1.bf16.msra.mxu0 %v728
  %819 = vmatprep.subr.bf16.mxu0 0
  %820 = vmatpush1.bf16.msra.mxu0 0
  %821 = vmatprep.subr.bf16.mxu0 0
  %822 = vmatpush1.bf16.msra.mxu0 0
  %823 = vmatprep.subr.bf16.mxu0 0
  %824 = vmatpush1.bf16.msra.mxu0 0
  %825 = vmatprep.subr.bf16.mxu0 0
  %826 = vmatpush1.bf16.msra.mxu0 0
  %827 = vmatprep.subr.bf16.mxu0 0
  %828 = vmatpush1.bf16.msra.mxu0 0
  %829 = vmatprep.subr.bf16.mxu0 0
  %830 = vmatpush1.bf16.msra.mxu0 0
  %831 = vmatprep.mubr.bf16.mxu0 %v752
  %832 = vmatmul.mubr.bf16.gmra.mrb[0].mxu0 %v602
  %v833 = vpop.f32.mrb[0].mxu0
  %v834 = vadd.f32 0.0, %v833
  %v835 = vpop.f32.mrb[0].mxu0
  %v836 = vadd.f32 0.0, %v835
  %v837 = vpop.f32.mrb[0].mxu0
  %v838 = vadd.f32 0.0, %v837
  %v839 = vpop.f32.mrb[0].mxu0
  %v840 = vadd.f32 0.0, %v839
  %841 = vmatprep.mubr.bf16.mxu0 %v755
  %842 = vmatmul.mubr.bf16.gmra.mrb[0].mxu0 %v604
  %v843 = vpop.f32.mrb[0].mxu0
  %v844 = vadd.f32 0.0, %v843
  %v845 = vpop.f32.mrb[0].mxu0
  %v846 = vadd.f32 0.0, %v845
  %v847 = vpop.f32.mrb[0].mxu0
  %v848 = vadd.f32 0.0, %v847
  %v849 = vpop.f32.mrb[0].mxu0
  %v850 = vadd.f32 0.0, %v849
  %851 = vmatprep.mubr.bf16.mxu0 %v758
  %852 = vmatmul.mubr.bf16.gmra.mrb[0].mxu0 %v606
  %v853 = vpop.f32.mrb[0].mxu0
  %v854 = vadd.f32 0.0, %v853
  %v855 = vpop.f32.mrb[0].mxu0
  %v856 = vadd.f32 0.0, %v855
  %v857 = vpop.f32.mrb[0].mxu0
  %v858 = vadd.f32 0.0, %v857
  %v859 = vpop.f32.mrb[0].mxu0
  %v860 = vadd.f32 0.0, %v859
  %861 = vmatprep.mubr.bf16.mxu0 %v761
  %862 = vmatmul.mubr.bf16.gmra.mrb[0].mxu0 %v608
  %v863 = vpop.f32.mrb[0].mxu0
  %v864 = vadd.f32 0.0, %v863
  %v865 = vpop.f32.mrb[0].mxu0
  %v866 = vadd.f32 0.0, %v865
  %v867 = vpop.f32.mrb[0].mxu0
  %v868 = vadd.f32 0.0, %v867
  %v869 = vpop.f32.mrb[0].mxu0
  %v870 = vadd.f32 0.0, %v869
  %871 = vmatprep.mubr.bf16.mxu0 %v764
  %872 = vmatmul.mubr.bf16.gmra.mrb[0].mxu0 %v610
  %v873 = vpop.f32.mrb[0].mxu0
  %v874 = vadd.f32 0.0, %v873
  %v875 = vpop.f32.mrb[0].mxu0
  %v876 = vadd.f32 0.0, %v875
  %v877 = vpop.f32.mrb[0].mxu0
  %v878 = vadd.f32 0.0, %v877
  %v879 = vpop.f32.mrb[0].mxu0
  %v880 = vadd.f32 0.0, %v879
  %881 = vmatprep.mubr.bf16.mxu0 %v767
  %882 = vmatmul.mubr.bf16.gmra.mrb[0].mxu0 %v612
  %v883 = vpop.f32.mrb[0].mxu0
  %v884 = vadd.f32 0.0, %v883
  %v885 = vpop.f32.mrb[0].mxu0
  %v886 = vadd.f32 0.0, %v885
  %v887 = vpop.f32.mrb[0].mxu0
  %v888 = vadd.f32 0.0, %v887
  %v889 = vpop.f32.mrb[0].mxu0
  %v890 = vadd.f32 0.0, %v889
  %891 = vmatprep.mubr.bf16.mxu0 %v770
  %892 = vmatmul.mubr.bf16.gmra.mrb[0].mxu0 %v614
  %v893 = vpop.f32.mrb[0].mxu0
  %v894 = vadd.f32 0.0, %v893
  %v895 = vpop.f32.mrb[0].mxu0
  %v896 = vadd.f32 0.0, %v895
  %v897 = vpop.f32.mrb[0].mxu0
  %v898 = vadd.f32 0.0, %v897
  %v899 = vpop.f32.mrb[0].mxu0
  %v900 = vadd.f32 0.0, %v899
  %901 = vmatprep.mubr.bf16.mxu0 %v773
  %902 = vmatmul.mubr.bf16.gmra.mrb[0].mxu0 %v616
  %v903 = vpop.f32.mrb[0].mxu0
  %v904 = vadd.f32 0.0, %v903
  %v905 = vpop.f32.mrb[0].mxu0
  %v906 = vadd.f32 0.0, %v905
  %v907 = vpop.f32.mrb[0].mxu0
  %v908 = vadd.f32 0.0, %v907
  %v909 = vpop.f32.mrb[0].mxu0
  %v910 = vadd.f32 0.0, %v909
  %911 = vmatprep.mubr.bf16.mxu0 %v776
  %912 = vmatmul.mubr.bf16.gmra.mrb[0].mxu0 %v618
  %v913 = vpop.f32.mrb[0].mxu0
  %v914 = vadd.f32 0.0, %v913
  %v915 = vpop.f32.mrb[0].mxu0
  %v916 = vadd.f32 0.0, %v915
  %v917 = vpop.f32.mrb[0].mxu0
  %v918 = vadd.f32 0.0, %v917
  %v919 = vpop.f32.mrb[0].mxu0
  %v920 = vadd.f32 0.0, %v919
  %921 = vmatprep.mubr.bf16.mxu0 %v779
  %922 = vmatmul.mubr.bf16.gmra.mrb[0].mxu0 %v620
  %v923 = vpop.f32.mrb[0].mxu0
  %v924 = vadd.f32 0.0, %v923
  %v925 = vpop.f32.mrb[0].mxu0
  %v926 = vadd.f32 0.0, %v925
  %v927 = vpop.f32.mrb[0].mxu0
  %v928 = vadd.f32 0.0, %v927
  %v929 = vpop.f32.mrb[0].mxu0
  %v930 = vadd.f32 0.0, %v929
  %931 = vmatprep.mubr.bf16.mxu0 %v782
  %932 = vmatmul.mubr.bf16.gmra.mrb[0].mxu0 %v622
  %v933 = vpop.f32.mrb[0].mxu0
  %v934 = vadd.f32 0.0, %v933
  %v935 = vpop.f32.mrb[0].mxu0
  %v936 = vadd.f32 0.0, %v935
  %v937 = vpop.f32.mrb[0].mxu0
  %v938 = vadd.f32 0.0, %v937
  %v939 = vpop.f32.mrb[0].mxu0
  %v940 = vadd.f32 0.0, %v939
  %941 = vmatprep.mubr.bf16.mxu0 %v785
  %942 = vmatmul.mubr.bf16.gmra.mrb[0].mxu0 %v624
  %v943 = vpop.f32.mrb[0].mxu0
  %v944 = vadd.f32 0.0, %v943
  %v945 = vpop.f32.mrb[0].mxu0
  %v946 = vadd.f32 0.0, %v945
  %v947 = vpop.f32.mrb[0].mxu0
  %v948 = vadd.f32 0.0, %v947
  %v949 = vpop.f32.mrb[0].mxu0
  %v950 = vadd.f32 0.0, %v949
  %951 = vmatprep.mubr.bf16.mxu0 %v788
  %952 = vmatmul.mubr.bf16.gmra.mrb[0].mxu0 %v626
  %v953 = vpop.f32.mrb[0].mxu0
  %v954 = vadd.f32 0.0, %v953
  %v955 = vpop.f32.mrb[0].mxu0
  %v956 = vadd.f32 0.0, %v955
  %v957 = vpop.f32.mrb[0].mxu0
  %v958 = vadd.f32 0.0, %v957
  %v959 = vpop.f32.mrb[0].mxu0
  %v960 = vadd.f32 0.0, %v959
  %961 = vmatprep.mubr.bf16.mxu0 %v791
  %962 = vmatmul.mubr.bf16.gmra.mrb[0].mxu0 %v628
  %v963 = vpop.f32.mrb[0].mxu0
  %v964 = vadd.f32 0.0, %v963
  %v965 = vpop.f32.mrb[0].mxu0
  %v966 = vadd.f32 0.0, %v965
  %v967 = vpop.f32.mrb[0].mxu0
  %v968 = vadd.f32 0.0, %v967
  %v969 = vpop.f32.mrb[0].mxu0
  %v970 = vadd.f32 0.0, %v969
  %971 = vmatprep.mubr.bf16.mxu0 %v794
  %972 = vmatmul.mubr.bf16.gmra.mrb[0].mxu0 %v630
  %v973 = vpop.f32.mrb[0].mxu0
  %v974 = vadd.f32 0.0, %v973
  %v975 = vpop.f32.mrb[0].mxu0
  %v976 = vadd.f32 0.0, %v975
  %v977 = vpop.f32.mrb[0].mxu0
  %v978 = vadd.f32 0.0, %v977
  %v979 = vpop.f32.mrb[0].mxu0
  %v980 = vadd.f32 0.0, %v979
  %981 = vmatprep.mubr.bf16.mxu0 %v797
  %982 = vmatmul.mubr.bf16.gmra.mrb[0].mxu0 %v632
  %v983 = vpop.f32.mrb[0].mxu0
  %v984 = vadd.f32 0.0, %v983
  %v985 = vpop.f32.mrb[0].mxu0
  %v986 = vadd.f32 0.0, %v985
  %v987 = vpop.f32.mrb[0].mxu0
  %v988 = vadd.f32 0.0, %v987
  %v989 = vpop.f32.mrb[0].mxu0
  %v990 = vadd.f32 0.0, %v989
  %991 = vdwg.mxu0
  %v1024 = vunpack.c.l.b16 %v62
  %v1025 = vunpack.c.h.b16 %v62
  %v1026 = vunpack.c.l.b16 %v63
  %v1027 = vunpack.c.h.b16 %v63
  %v1028 = vunpack.c.l.b16 %v64
  %v1029 = vunpack.c.h.b16 %v64
  %v1030 = vunpack.c.l.b16 %v65
  %v1031 = vunpack.c.h.b16 %v65
  %v1032 = vunpack.c.l.b16 %v66
  %v1033 = vunpack.c.h.b16 %v66
  %v1034 = vunpack.c.l.b16 %v67
  %v1035 = vunpack.c.h.b16 %v67
  %v1036 = vunpack.c.l.b16 %v68
  %v1037 = vunpack.c.h.b16 %v68
  %v1038 = vunpack.c.l.b16 %v69
  %v1039 = vunpack.c.h.b16 %v69
  %v1040 = vunpack.c.l.b16 %v70
  %v1041 = vunpack.c.h.b16 %v70
  %v1042 = vunpack.c.l.b16 %v71
  %v1043 = vunpack.c.h.b16 %v71
  %v1044 = vunpack.c.l.b16 %v72
  %v1045 = vunpack.c.h.b16 %v72
  %v1046 = vunpack.c.l.b16 %v73
  %v1047 = vunpack.c.h.b16 %v73
  %v1048 = vunpack.c.l.b16 %v74
  %v1049 = vunpack.c.h.b16 %v74
  %v1050 = vunpack.c.l.b16 %v75
  %v1051 = vunpack.c.h.b16 %v75
  %v1052 = vunpack.c.l.b16 %v76
  %v1053 = vunpack.c.h.b16 %v76
  %v1054 = vunpack.c.l.b16 %v77
  %v1055 = vunpack.c.h.b16 %v77
  %v1056 = vunpack.c.l.b16 %v78
  %v1057 = vunpack.c.h.b16 %v78
  %v1058 = vunpack.c.l.b16 %v79
  %v1059 = vunpack.c.h.b16 %v79
  %v1060 = vunpack.c.l.b16 %v80
  %v1061 = vunpack.c.h.b16 %v80
  %v1062 = vunpack.c.l.b16 %v81
  %v1063 = vunpack.c.h.b16 %v81
  %v1064 = vunpack.c.l.b16 %v82
  %v1065 = vunpack.c.h.b16 %v82
  %v1066 = vunpack.c.l.b16 %v83
  %v1067 = vunpack.c.h.b16 %v83
  %v1068 = vunpack.c.l.b16 %v84
  %v1069 = vunpack.c.h.b16 %v84
  %v1070 = vunpack.c.l.b16 %v85
  %v1071 = vunpack.c.h.b16 %v85
  %v1072 = vunpack.c.l.b16 %v86
  %v1073 = vunpack.c.h.b16 %v86
  %v1074 = vunpack.c.l.b16 %v87
  %v1075 = vunpack.c.h.b16 %v87
  %v1076 = vunpack.c.l.b16 %v88
  %v1077 = vunpack.c.h.b16 %v88
  %v1078 = vunpack.c.l.b16 %v89
  %v1079 = vunpack.c.h.b16 %v89
  %v1080 = vunpack.c.l.b16 %v90
  %v1081 = vunpack.c.h.b16 %v90
  %v1082 = vunpack.c.l.b16 %v91
  %v1083 = vunpack.c.h.b16 %v91
  %v1084 = vunpack.c.l.b16 %v92
  %v1085 = vunpack.c.h.b16 %v92
  %v1086 = vunpack.c.l.b16 %v93
  %v1087 = vunpack.c.h.b16 %v93
  %v1088 = vpack.c.b16 %v1026, %v1024
  %v1089 = vpack.c.b16 %v1027, %v1025
  %v1090 = vpack.c.b16 %v1030, %v1028
  %v1091 = vpack.c.b16 %v1031, %v1029
  %v1092 = vpack.c.b16 %v1034, %v1032
  %v1093 = vpack.c.b16 %v1035, %v1033
  %v1094 = vpack.c.b16 %v1038, %v1036
  %v1095 = vpack.c.b16 %v1039, %v1037
  %v1096 = vpack.c.b16 %v1042, %v1040
  %v1097 = vpack.c.b16 %v1043, %v1041
  %v1098 = vpack.c.b16 %v1046, %v1044
  %v1099 = vpack.c.b16 %v1047, %v1045
  %v1100 = vpack.c.b16 %v1050, %v1048
  %v1101 = vpack.c.b16 %v1051, %v1049
  %v1102 = vpack.c.b16 %v1054, %v1052
  %v1103 = vpack.c.b16 %v1055, %v1053
  %v1104 = vpack.c.b16 %v1058, %v1056
  %v1105 = vpack.c.b16 %v1059, %v1057
  %v1106 = vpack.c.b16 %v1062, %v1060
  %v1107 = vpack.c.b16 %v1063, %v1061
  %v1108 = vpack.c.b16 %v1066, %v1064
  %v1109 = vpack.c.b16 %v1067, %v1065
  %v1110 = vpack.c.b16 %v1070, %v1068
  %v1111 = vpack.c.b16 %v1071, %v1069
  %v1112 = vpack.c.b16 %v1074, %v1072
  %v1113 = vpack.c.b16 %v1075, %v1073
  %v1114 = vpack.c.b16 %v1078, %v1076
  %v1115 = vpack.c.b16 %v1079, %v1077
  %v1116 = vpack.c.b16 %v1082, %v1080
  %v1117 = vpack.c.b16 %v1083, %v1081
  %v1118 = vpack.c.b16 %v1086, %v1084
  %v1119 = vpack.c.b16 %v1087, %v1085
  %v1156 = vunpack.c.l.b16 %v94
  %v1157 = vunpack.c.h.b16 %v94
  %v1158 = vunpack.c.l.b16 %v95
  %v1159 = vunpack.c.h.b16 %v95
  %v1160 = vunpack.c.l.b16 %v96
  %v1161 = vunpack.c.h.b16 %v96
  %v1162 = vunpack.c.l.b16 %v97
  %v1163 = vunpack.c.h.b16 %v97
  %v1164 = vunpack.c.l.b16 %v98
  %v1165 = vunpack.c.h.b16 %v98
  %v1166 = vunpack.c.l.b16 %v99
  %v1167 = vunpack.c.h.b16 %v99
  %v1168 = vunpack.c.l.b16 %v100
  %v1169 = vunpack.c.h.b16 %v100
  %v1170 = vunpack.c.l.b16 %v101
  %v1171 = vunpack.c.h.b16 %v101
  %v1172 = vunpack.c.l.b16 %v102
  %v1173 = vunpack.c.h.b16 %v102
  %v1174 = vunpack.c.l.b16 %v103
  %v1175 = vunpack.c.h.b16 %v103
  %v1176 = vunpack.c.l.b16 %v104
  %v1177 = vunpack.c.h.b16 %v104
  %v1178 = vunpack.c.l.b16 %v105
  %v1179 = vunpack.c.h.b16 %v105
  %v1180 = vunpack.c.l.b16 %v106
  %v1181 = vunpack.c.h.b16 %v106
  %v1182 = vunpack.c.l.b16 %v107
  %v1183 = vunpack.c.h.b16 %v107
  %v1184 = vunpack.c.l.b16 %v108
  %v1185 = vunpack.c.h.b16 %v108
  %v1186 = vunpack.c.l.b16 %v109
  %v1187 = vunpack.c.h.b16 %v109
  %v1188 = vunpack.c.l.b16 %v110
  %v1189 = vunpack.c.h.b16 %v110
  %v1190 = vunpack.c.l.b16 %v111
  %v1191 = vunpack.c.h.b16 %v111
  %v1192 = vunpack.c.l.b16 %v112
  %v1193 = vunpack.c.h.b16 %v112
  %v1194 = vunpack.c.l.b16 %v113
  %v1195 = vunpack.c.h.b16 %v113
  %v1196 = vpack.c.b16 %v1158, %v1156
  %v1197 = vpack.c.b16 %v1159, %v1157
  %v1198 = vpack.c.b16 %v1162, %v1160
  %v1199 = vpack.c.b16 %v1163, %v1161
  %v1200 = vpack.c.b16 %v1166, %v1164
  %v1201 = vpack.c.b16 %v1167, %v1165
  %v1202 = vpack.c.b16 %v1170, %v1168
  %v1203 = vpack.c.b16 %v1171, %v1169
  %v1204 = vpack.c.b16 %v1174, %v1172
  %v1205 = vpack.c.b16 %v1175, %v1173
  %v1206 = vpack.c.b16 %v1178, %v1176
  %v1207 = vpack.c.b16 %v1179, %v1177
  %v1208 = vpack.c.b16 %v1182, %v1180
  %v1209 = vpack.c.b16 %v1183, %v1181
  %v1210 = vpack.c.b16 %v1186, %v1184
  %v1211 = vpack.c.b16 %v1187, %v1185
  %v1212 = vpack.c.b16 %v1190, %v1188
  %v1213 = vpack.c.b16 %v1191, %v1189
  %v1214 = vpack.c.b16 %v1194, %v1192
  %v1215 = vpack.c.b16 %v1195, %v1193
  %v1237 = vsel %vm750, %v1089, 0
  %v1240 = vsel %vm750, %v1091, 0
  %v1243 = vsel %vm750, %v1093, 0
  %v1246 = vsel %vm750, %v1095, 0
  %v1249 = vsel %vm750, %v1097, 0
  %v1252 = vsel %vm750, %v1099, 0
  %v1255 = vsel %vm750, %v1101, 0
  %v1258 = vsel %vm750, %v1103, 0
  %v1261 = vsel %vm750, %v1105, 0
  %v1264 = vsel %vm750, %v1107, 0
  %v1267 = vsel %vm750, %v1109, 0
  %v1270 = vsel %vm750, %v1111, 0
  %v1273 = vsel %vm750, %v1113, 0
  %v1276 = vsel %vm750, %v1115, 0
  %v1279 = vsel %vm750, %v1117, 0
  %v1282 = vsel %vm750, %v1119, 0
  %1284 = vmatprep.subr.bf16.mxu0 %v1197
  %1285 = vmatpush1.bf16.msra.mxu0 %v1196
  %1286 = vmatprep.subr.bf16.mxu0 %v1199
  %1287 = vmatpush1.bf16.msra.mxu0 %v1198
  %1288 = vmatprep.subr.bf16.mxu0 %v1201
  %1289 = vmatpush1.bf16.msra.mxu0 %v1200
  %1290 = vmatprep.subr.bf16.mxu0 %v1203
  %1291 = vmatpush1.bf16.msra.mxu0 %v1202
  %1292 = vmatprep.subr.bf16.mxu0 %v1205
  %1293 = vmatpush1.bf16.msra.mxu0 %v1204
  %1294 = vmatprep.subr.bf16.mxu0 %v1207
  %1295 = vmatpush1.bf16.msra.mxu0 %v1206
  %1296 = vmatprep.subr.bf16.mxu0 %v1209
  %1297 = vmatpush1.bf16.msra.mxu0 %v1208
  %1298 = vmatprep.subr.bf16.mxu0 %v1211
  %1299 = vmatpush1.bf16.msra.mxu0 %v1210
  %1300 = vmatprep.subr.bf16.mxu0 %v1213
  %1301 = vmatpush1.bf16.msra.mxu0 %v1212
  %1302 = vmatprep.subr.bf16.mxu0 %v1215
  %1303 = vmatpush1.bf16.msra.mxu0 %v1214
  %1304 = vmatprep.subr.bf16.mxu0 0
  %1305 = vmatpush1.bf16.msra.mxu0 0
  %1306 = vmatprep.subr.bf16.mxu0 0
  %1307 = vmatpush1.bf16.msra.mxu0 0
  %1308 = vmatprep.subr.bf16.mxu0 0
  %1309 = vmatpush1.bf16.msra.mxu0 0
  %1310 = vmatprep.subr.bf16.mxu0 0
  %1311 = vmatpush1.bf16.msra.mxu0 0
  %1312 = vmatprep.subr.bf16.mxu0 0
  %1313 = vmatpush1.bf16.msra.mxu0 0
  %1314 = vmatprep.subr.bf16.mxu0 0
  %1315 = vmatpush1.bf16.msra.mxu0 0
  %1316 = vmatprep.mubr.bf16.mxu0 %v1237
  %1317 = vmatmul.mubr.bf16.gmra.mrb[0].mxu0 %v1088
  %v1318 = vpop.f32.mrb[0].mxu0
  %v1319 = vadd.f32 %v834, %v1318
  %v1320 = vpop.f32.mrb[0].mxu0
  %v1321 = vadd.f32 %v836, %v1320
  %v1322 = vpop.f32.mrb[0].mxu0
  %v1323 = vadd.f32 %v838, %v1322
  %v1324 = vpop.f32.mrb[0].mxu0
  %v1325 = vadd.f32 %v840, %v1324
  %1326 = vmatprep.mubr.bf16.mxu0 %v1240
  %1327 = vmatmul.mubr.bf16.gmra.mrb[0].mxu0 %v1090
  %v1328 = vpop.f32.mrb[0].mxu0
  %v1329 = vadd.f32 %v844, %v1328
  %v1330 = vpop.f32.mrb[0].mxu0
  %v1331 = vadd.f32 %v846, %v1330
  %v1332 = vpop.f32.mrb[0].mxu0
  %v1333 = vadd.f32 %v848, %v1332
  %v1334 = vpop.f32.mrb[0].mxu0
  %v1335 = vadd.f32 %v850, %v1334
  %1336 = vmatprep.mubr.bf16.mxu0 %v1243
  %1337 = vmatmul.mubr.bf16.gmra.mrb[0].mxu0 %v1092
  %v1338 = vpop.f32.mrb[0].mxu0
  %v1339 = vadd.f32 %v854, %v1338
  %v1340 = vpop.f32.mrb[0].mxu0
  %v1341 = vadd.f32 %v856, %v1340
  %v1342 = vpop.f32.mrb[0].mxu0
  %v1343 = vadd.f32 %v858, %v1342
  %v1344 = vpop.f32.mrb[0].mxu0
  %v1345 = vadd.f32 %v860, %v1344
  %1346 = vmatprep.mubr.bf16.mxu0 %v1246
  %1347 = vmatmul.mubr.bf16.gmra.mrb[0].mxu0 %v1094
  %v1348 = vpop.f32.mrb[0].mxu0
  %v1349 = vadd.f32 %v864, %v1348
  %v1350 = vpop.f32.mrb[0].mxu0
  %v1351 = vadd.f32 %v866, %v1350
  %v1352 = vpop.f32.mrb[0].mxu0
  %v1353 = vadd.f32 %v868, %v1352
  %v1354 = vpop.f32.mrb[0].mxu0
  %v1355 = vadd.f32 %v870, %v1354
  %1356 = vmatprep.mubr.bf16.mxu0 %v1249
  %1357 = vmatmul.mubr.bf16.gmra.mrb[0].mxu0 %v1096
  %v1358 = vpop.f32.mrb[0].mxu0
  %v1359 = vadd.f32 %v874, %v1358
  %v1360 = vpop.f32.mrb[0].mxu0
  %v1361 = vadd.f32 %v876, %v1360
  %v1362 = vpop.f32.mrb[0].mxu0
  %v1363 = vadd.f32 %v878, %v1362
  %v1364 = vpop.f32.mrb[0].mxu0
  %v1365 = vadd.f32 %v880, %v1364
  %1366 = vmatprep.mubr.bf16.mxu0 %v1252
  %1367 = vmatmul.mubr.bf16.gmra.mrb[0].mxu0 %v1098
  %v1368 = vpop.f32.mrb[0].mxu0
  %v1369 = vadd.f32 %v884, %v1368
  %v1370 = vpop.f32.mrb[0].mxu0
  %v1371 = vadd.f32 %v886, %v1370
  %v1372 = vpop.f32.mrb[0].mxu0
  %v1373 = vadd.f32 %v888, %v1372
  %v1374 = vpop.f32.mrb[0].mxu0
  %v1375 = vadd.f32 %v890, %v1374
  %1376 = vmatprep.mubr.bf16.mxu0 %v1255
  %1377 = vmatmul.mubr.bf16.gmra.mrb[0].mxu0 %v1100
  %v1378 = vpop.f32.mrb[0].mxu0
  %v1379 = vadd.f32 %v894, %v1378
  %v1380 = vpop.f32.mrb[0].mxu0
  %v1381 = vadd.f32 %v896, %v1380
  %v1382 = vpop.f32.mrb[0].mxu0
  %v1383 = vadd.f32 %v898, %v1382
  %v1384 = vpop.f32.mrb[0].mxu0
  %v1385 = vadd.f32 %v900, %v1384
  %1386 = vmatprep.mubr.bf16.mxu0 %v1258
  %1387 = vmatmul.mubr.bf16.gmra.mrb[0].mxu0 %v1102
  %v1388 = vpop.f32.mrb[0].mxu0
  %v1389 = vadd.f32 %v904, %v1388
  %v1390 = vpop.f32.mrb[0].mxu0
  %v1391 = vadd.f32 %v906, %v1390
  %v1392 = vpop.f32.mrb[0].mxu0
  %v1393 = vadd.f32 %v908, %v1392
  %v1394 = vpop.f32.mrb[0].mxu0
  %v1395 = vadd.f32 %v910, %v1394
  %1396 = vmatprep.mubr.bf16.mxu0 %v1261
  %1397 = vmatmul.mubr.bf16.gmra.mrb[0].mxu0 %v1104
  %v1398 = vpop.f32.mrb[0].mxu0
  %v1399 = vadd.f32 %v914, %v1398
  %v1400 = vpop.f32.mrb[0].mxu0
  %v1401 = vadd.f32 %v916, %v1400
  %v1402 = vpop.f32.mrb[0].mxu0
  %v1403 = vadd.f32 %v918, %v1402
  %v1404 = vpop.f32.mrb[0].mxu0
  %v1405 = vadd.f32 %v920, %v1404
  %1406 = vmatprep.mubr.bf16.mxu0 %v1264
  %1407 = vmatmul.mubr.bf16.gmra.mrb[0].mxu0 %v1106
  %v1408 = vpop.f32.mrb[0].mxu0
  %v1409 = vadd.f32 %v924, %v1408
  %v1410 = vpop.f32.mrb[0].mxu0
  %v1411 = vadd.f32 %v926, %v1410
  %v1412 = vpop.f32.mrb[0].mxu0
  %v1413 = vadd.f32 %v928, %v1412
  %v1414 = vpop.f32.mrb[0].mxu0
  %v1415 = vadd.f32 %v930, %v1414
  %1416 = vmatprep.mubr.bf16.mxu0 %v1267
  %1417 = vmatmul.mubr.bf16.gmra.mrb[0].mxu0 %v1108
  %v1418 = vpop.f32.mrb[0].mxu0
  %v1419 = vadd.f32 %v934, %v1418
  %v1420 = vpop.f32.mrb[0].mxu0
  %v1421 = vadd.f32 %v936, %v1420
  %v1422 = vpop.f32.mrb[0].mxu0
  %v1423 = vadd.f32 %v938, %v1422
  %v1424 = vpop.f32.mrb[0].mxu0
  %v1425 = vadd.f32 %v940, %v1424
  %1426 = vmatprep.mubr.bf16.mxu0 %v1270
  %1427 = vmatmul.mubr.bf16.gmra.mrb[0].mxu0 %v1110
  %v1428 = vpop.f32.mrb[0].mxu0
  %v1429 = vadd.f32 %v944, %v1428
  %v1430 = vpop.f32.mrb[0].mxu0
  %v1431 = vadd.f32 %v946, %v1430
  %v1432 = vpop.f32.mrb[0].mxu0
  %v1433 = vadd.f32 %v948, %v1432
  %v1434 = vpop.f32.mrb[0].mxu0
  %v1435 = vadd.f32 %v950, %v1434
  %1436 = vmatprep.mubr.bf16.mxu0 %v1273
  %1437 = vmatmul.mubr.bf16.gmra.mrb[0].mxu0 %v1112
  %v1438 = vpop.f32.mrb[0].mxu0
  %v1439 = vadd.f32 %v954, %v1438
  %v1440 = vpop.f32.mrb[0].mxu0
  %v1441 = vadd.f32 %v956, %v1440
  %v1442 = vpop.f32.mrb[0].mxu0
  %v1443 = vadd.f32 %v958, %v1442
  %v1444 = vpop.f32.mrb[0].mxu0
  %v1445 = vadd.f32 %v960, %v1444
  %1446 = vmatprep.mubr.bf16.mxu0 %v1276
  %1447 = vmatmul.mubr.bf16.gmra.mrb[0].mxu0 %v1114
  %v1448 = vpop.f32.mrb[0].mxu0
  %v1449 = vadd.f32 %v964, %v1448
  %v1450 = vpop.f32.mrb[0].mxu0
  %v1451 = vadd.f32 %v966, %v1450
  %v1452 = vpop.f32.mrb[0].mxu0
  %v1453 = vadd.f32 %v968, %v1452
  %v1454 = vpop.f32.mrb[0].mxu0
  %v1455 = vadd.f32 %v970, %v1454
  %1456 = vmatprep.mubr.bf16.mxu0 %v1279
  %1457 = vmatmul.mubr.bf16.gmra.mrb[0].mxu0 %v1116
  %v1458 = vpop.f32.mrb[0].mxu0
  %v1459 = vadd.f32 %v974, %v1458
  %v1460 = vpop.f32.mrb[0].mxu0
  %v1461 = vadd.f32 %v976, %v1460
  %v1462 = vpop.f32.mrb[0].mxu0
  %v1463 = vadd.f32 %v978, %v1462
  %v1464 = vpop.f32.mrb[0].mxu0
  %v1465 = vadd.f32 %v980, %v1464
  %1466 = vmatprep.mubr.bf16.mxu0 %v1282
  %1467 = vmatmul.mubr.bf16.gmra.mrb[0].mxu0 %v1118
  %v1468 = vpop.f32.mrb[0].mxu0
  %v1469 = vadd.f32 %v984, %v1468
  %v1470 = vpop.f32.mrb[0].mxu0
  %v1471 = vadd.f32 %v986, %v1470
  %v1472 = vpop.f32.mrb[0].mxu0
  %v1473 = vadd.f32 %v988, %v1472
  %v1474 = vpop.f32.mrb[0].mxu0
  %v1475 = vadd.f32 %v990, %v1474
  %1476 = vdwg.mxu0
  %v1477 = vld [vmem:[%s0] sm:$0xee]
  %v1478 = vld [vmem:[%s0 + $0x18] sm:$0xee]
  %v1479 = vld [vmem:[%s0 + $0x30] sm:$0xee]
  %v1480 = vld [vmem:[%s0 + $0x48] sm:$0xee]
  %v1481 = vld [vmem:[%s0 + $0x60] sm:$0xee]
  %v1482 = vld [vmem:[%s0 + $0x78] sm:$0xee]
  %v1483 = vld [vmem:[%s0 + $0x90] sm:$0xee]
  %v1484 = vld [vmem:[%s0 + $0xa8] sm:$0xee]
  %v1485 = vld [vmem:[%s0 + $0xc0] sm:$0xee]
  %v1486 = vld [vmem:[%s0 + $0xd8] sm:$0xee]
  %v1487 = vld [vmem:[%s0 + $0xf0] sm:$0xee]
  %v1488 = vld [vmem:[%s0 + $0x108] sm:$0xee]
  %v1489 = vld [vmem:[%s0 + $0x120] sm:$0xee]
  %v1490 = vld [vmem:[%s0 + $0x138] sm:$0xee]
  %v1491 = vld [vmem:[%s0 + $0x150] sm:$0xee]
  %v1492 = vld [vmem:[%s0 + $0x168] sm:$0xee]
  %vm1525 = vcmask 1042432
  %vm1526 = vcmask 1046532
  %vm1527 = vmor %vm1525, %vm1526
  %v1528 = vrot.slane %v1477, 5
  %v1529 = vrot.slane %v1528, 4
  %v1530 = vrot.slane %v63, 5
  %v1531 = vsel %vm1527, %v1529, %v1530
  %v1532 = vrot.slane %v1530, 4
  %v1533 = vrot.slane %v114, 5
  %v1534 = vsel %vm1527, %v1532, %v1533
  %v1535 = vrot.slane %v1478, 5
  %v1536 = vrot.slane %v1535, 4
  %v1537 = vrot.slane %v65, 5
  %v1538 = vsel %vm1527, %v1536, %v1537
  %v1539 = vrot.slane %v1537, 4
  %v1540 = vrot.slane %v115, 5
  %v1541 = vsel %vm1527, %v1539, %v1540
  %v1542 = vrot.slane %v1479, 5
  %v1543 = vrot.slane %v1542, 4
  %v1544 = vrot.slane %v67, 5
  %v1545 = vsel %vm1527, %v1543, %v1544
  %v1546 = vrot.slane %v1544, 4
  %v1547 = vrot.slane %v116, 5
  %v1548 = vsel %vm1527, %v1546, %v1547
  %v1549 = vrot.slane %v1480, 5
  %v1550 = vrot.slane %v1549, 4
  %v1551 = vrot.slane %v69, 5
  %v1552 = vsel %vm1527, %v1550, %v1551
  %v1553 = vrot.slane %v1551, 4
  %v1554 = vrot.slane %v117, 5
  %v1555 = vsel %vm1527, %v1553, %v1554
  %v1556 = vrot.slane %v1481, 5
  %v1557 = vrot.slane %v1556, 4
  %v1558 = vrot.slane %v71, 5
  %v1559 = vsel %vm1527, %v1557, %v1558
  %v1560 = vrot.slane %v1558, 4
  %v1561 = vrot.slane %v118, 5
  %v1562 = vsel %vm1527, %v1560, %v1561
  %v1563 = vrot.slane %v1482, 5
  %v1564 = vrot.slane %v1563, 4
  %v1565 = vrot.slane %v73, 5
  %v1566 = vsel %vm1527, %v1564, %v1565
  %v1567 = vrot.slane %v1565, 4
  %v1568 = vrot.slane %v119, 5
  %v1569 = vsel %vm1527, %v1567, %v1568
  %v1570 = vrot.slane %v1483, 5
  %v1571 = vrot.slane %v1570, 4
  %v1572 = vrot.slane %v75, 5
  %v1573 = vsel %vm1527, %v1571, %v1572
  %v1574 = vrot.slane %v1572, 4
  %v1575 = vrot.slane %v120, 5
  %v1576 = vsel %vm1527, %v1574, %v1575
  %v1577 = vrot.slane %v1484, 5
  %v1578 = vrot.slane %v1577, 4
  %v1579 = vrot.slane %v77, 5
  %v1580 = vsel %vm1527, %v1578, %v1579
  %v1581 = vrot.slane %v1579, 4
  %v1582 = vrot.slane %v121, 5
  %v1583 = vsel %vm1527, %v1581, %v1582
  %v1584 = vrot.slane %v1485, 5
  %v1585 = vrot.slane %v1584, 4
  %v1586 = vrot.slane %v79, 5
  %v1587 = vsel %vm1527, %v1585, %v1586
  %v1588 = vrot.slane %v1586, 4
  %v1589 = vrot.slane %v122, 5
  %v1590 = vsel %vm1527, %v1588, %v1589
  %v1591 = vrot.slane %v1486, 5
  %v1592 = vrot.slane %v1591, 4
  %v1593 = vrot.slane %v81, 5
  %v1594 = vsel %vm1527, %v1592, %v1593
  %v1595 = vrot.slane %v1593, 4
  %v1596 = vrot.slane %v123, 5
  %v1597 = vsel %vm1527, %v1595, %v1596
  %v1598 = vrot.slane %v1487, 5
  %v1599 = vrot.slane %v1598, 4
  %v1600 = vrot.slane %v83, 5
  %v1601 = vsel %vm1527, %v1599, %v1600
  %v1602 = vrot.slane %v1600, 4
  %v1603 = vrot.slane %v124, 5
  %v1604 = vsel %vm1527, %v1602, %v1603
  %v1605 = vrot.slane %v1488, 5
  %v1606 = vrot.slane %v1605, 4
  %v1607 = vrot.slane %v85, 5
  %v1608 = vsel %vm1527, %v1606, %v1607
  %v1609 = vrot.slane %v1607, 4
  %v1610 = vrot.slane %v125, 5
  %v1611 = vsel %vm1527, %v1609, %v1610
  %v1612 = vrot.slane %v1489, 5
  %v1613 = vrot.slane %v1612, 4
  %v1614 = vrot.slane %v87, 5
  %v1615 = vsel %vm1527, %v1613, %v1614
  %v1616 = vrot.slane %v1614, 4
  %v1617 = vrot.slane %v126, 5
  %v1618 = vsel %vm1527, %v1616, %v1617
  %v1619 = vrot.slane %v1490, 5
  %v1620 = vrot.slane %v1619, 4
  %v1621 = vrot.slane %v89, 5
  %v1622 = vsel %vm1527, %v1620, %v1621
  %v1623 = vrot.slane %v1621, 4
  %v1624 = vrot.slane %v127, 5
  %v1625 = vsel %vm1527, %v1623, %v1624
  %v1626 = vrot.slane %v1491, 5
  %v1627 = vrot.slane %v1626, 4
  %v1628 = vrot.slane %v91, 5
  %v1629 = vsel %vm1527, %v1627, %v1628
  %v1630 = vrot.slane %v1628, 4
  %v1631 = vrot.slane %v128, 5
  %v1632 = vsel %vm1527, %v1630, %v1631
  %v1633 = vrot.slane %v1492, 5
  %v1634 = vrot.slane %v1633, 4
  %v1635 = vrot.slane %v93, 5
  %v1636 = vsel %vm1527, %v1634, %v1635
  %v1637 = vrot.slane %v1635, 4
  %v1638 = vrot.slane %v129, 5
  %v1639 = vsel %vm1527, %v1637, %v1638
  %s1640 = scalar_lea.vmem %s1, 320
  %v1641 = vld [vmem:[%s1640] sm:$0xff]
  %v1642 = vld [vmem:[%s1640 + $0x8] sm:$0xff]
  %v1643 = vld [vmem:[%s1640 + $0x10] sm:$0xff]
  %v1644 = vld [vmem:[%s1640 + $0x18] sm:$0xff]
  %v1645 = vld [vmem:[%s1640 + $0x20] sm:$0xff]
  %v1646 = vld [vmem:[%s1640 + $0x28] sm:$0xff]
  %v1647 = vld [vmem:[%s1640 + $0x30] sm:$0xff]
  %v1648 = vld [vmem:[%s1640 + $0x38] sm:$0xff]
  %v1649 = vld [vmem:[%s1640 + $0x40] sm:$0xff]
  %v1650 = vld [vmem:[%s1640 + $0x48] sm:$0xff]
  %v1651 = vld [vmem:[%s1640 + $0x50] sm:$0xff]
  %v1652 = vld [vmem:[%s1640 + $0x58] sm:$0xff]
  %v1653 = vld [vmem:[%s1640 + $0x60] sm:$0xff]
  %v1654 = vld [vmem:[%s1640 + $0x68] sm:$0xff]
  %v1655 = vld [vmem:[%s1640 + $0x70] sm:$0xff]
  %v1656 = vld [vmem:[%s1640 + $0x78] sm:$0xff]
  %v1657 = vld [vmem:[%s1640 + $0x80] sm:$0xff]
  %v1658 = vld [vmem:[%s1640 + $0x88] sm:$0xff]
  %v1659 = vld [vmem:[%s1640 + $0x90] sm:$0xff]
  %v1660 = vld [vmem:[%s1640 + $0x98] sm:$0xff]
  %v1661 = vunpack.c.l.b16 %v1531
  %v1662 = vunpack.c.h.b16 %v1531
  %v1663 = vunpack.c.l.b16 %v1534
  %v1664 = vunpack.c.h.b16 %v1534
  %v1665 = vunpack.c.l.b16 %v1538
  %v1666 = vunpack.c.h.b16 %v1538
  %v1667 = vunpack.c.l.b16 %v1541
  %v1668 = vunpack.c.h.b16 %v1541
  %v1669 = vunpack.c.l.b16 %v1545
  %v1670 = vunpack.c.h.b16 %v1545
  %v1671 = vunpack.c.l.b16 %v1548
  %v1672 = vunpack.c.h.b16 %v1548
  %v1673 = vunpack.c.l.b16 %v1552
  %v1674 = vunpack.c.h.b16 %v1552
  %v1675 = vunpack.c.l.b16 %v1555
  %v1676 = vunpack.c.h.b16 %v1555
  %v1677 = vunpack.c.l.b16 %v1559
  %v1678 = vunpack.c.h.b16 %v1559
  %v1679 = vunpack.c.l.b16 %v1562
  %v1680 = vunpack.c.h.b16 %v1562
  %v1681 = vunpack.c.l.b16 %v1566
  %v1682 = vunpack.c.h.b16 %v1566
  %v1683 = vunpack.c.l.b16 %v1569
  %v1684 = vunpack.c.h.b16 %v1569
  %v1685 = vunpack.c.l.b16 %v1573
  %v1686 = vunpack.c.h.b16 %v1573
  %v1687 = vunpack.c.l.b16 %v1576
  %v1688 = vunpack.c.h.b16 %v1576
  %v1689 = vunpack.c.l.b16 %v1580
  %v1690 = vunpack.c.h.b16 %v1580
  %v1691 = vunpack.c.l.b16 %v1583
  %v1692 = vunpack.c.h.b16 %v1583
  %v1693 = vunpack.c.l.b16 %v1587
  %v1694 = vunpack.c.h.b16 %v1587
  %v1695 = vunpack.c.l.b16 %v1590
  %v1696 = vunpack.c.h.b16 %v1590
  %v1697 = vunpack.c.l.b16 %v1594
  %v1698 = vunpack.c.h.b16 %v1594
  %v1699 = vunpack.c.l.b16 %v1597
  %v1700 = vunpack.c.h.b16 %v1597
  %v1701 = vunpack.c.l.b16 %v1601
  %v1702 = vunpack.c.h.b16 %v1601
  %v1703 = vunpack.c.l.b16 %v1604
  %v1704 = vunpack.c.h.b16 %v1604
  %v1705 = vunpack.c.l.b16 %v1608
  %v1706 = vunpack.c.h.b16 %v1608
  %v1707 = vunpack.c.l.b16 %v1611
  %v1708 = vunpack.c.h.b16 %v1611
  %v1709 = vunpack.c.l.b16 %v1615
  %v1710 = vunpack.c.h.b16 %v1615
  %v1711 = vunpack.c.l.b16 %v1618
  %v1712 = vunpack.c.h.b16 %v1618
  %v1713 = vunpack.c.l.b16 %v1622
  %v1714 = vunpack.c.h.b16 %v1622
  %v1715 = vunpack.c.l.b16 %v1625
  %v1716 = vunpack.c.h.b16 %v1625
  %v1717 = vunpack.c.l.b16 %v1629
  %v1718 = vunpack.c.h.b16 %v1629
  %v1719 = vunpack.c.l.b16 %v1632
  %v1720 = vunpack.c.h.b16 %v1632
  %v1721 = vunpack.c.l.b16 %v1636
  %v1722 = vunpack.c.h.b16 %v1636
  %v1723 = vunpack.c.l.b16 %v1639
  %v1724 = vunpack.c.h.b16 %v1639
  %v1725 = vpack.c.b16 %v1663, %v1661
  %v1726 = vpack.c.b16 %v1664, %v1662
  %v1727 = vpack.c.b16 %v1667, %v1665
  %v1728 = vpack.c.b16 %v1668, %v1666
  %v1729 = vpack.c.b16 %v1671, %v1669
  %v1730 = vpack.c.b16 %v1672, %v1670
  %v1731 = vpack.c.b16 %v1675, %v1673
  %v1732 = vpack.c.b16 %v1676, %v1674
  %v1733 = vpack.c.b16 %v1679, %v1677
  %v1734 = vpack.c.b16 %v1680, %v1678
  %v1735 = vpack.c.b16 %v1683, %v1681
  %v1736 = vpack.c.b16 %v1684, %v1682
  %v1737 = vpack.c.b16 %v1687, %v1685
  %v1738 = vpack.c.b16 %v1688, %v1686
  %v1739 = vpack.c.b16 %v1691, %v1689
  %v1740 = vpack.c.b16 %v1692, %v1690
  %v1741 = vpack.c.b16 %v1695, %v1693
  %v1742 = vpack.c.b16 %v1696, %v1694
  %v1743 = vpack.c.b16 %v1699, %v1697
  %v1744 = vpack.c.b16 %v1700, %v1698
  %v1745 = vpack.c.b16 %v1703, %v1701
  %v1746 = vpack.c.b16 %v1704, %v1702
  %v1747 = vpack.c.b16 %v1707, %v1705
  %v1748 = vpack.c.b16 %v1708, %v1706
  %v1749 = vpack.c.b16 %v1711, %v1709
  %v1750 = vpack.c.b16 %v1712, %v1710
  %v1751 = vpack.c.b16 %v1715, %v1713
  %v1752 = vpack.c.b16 %v1716, %v1714
  %v1753 = vpack.c.b16 %v1719, %v1717
  %v1754 = vpack.c.b16 %v1720, %v1718
  %v1755 = vpack.c.b16 %v1723, %v1721
  %v1756 = vpack.c.b16 %v1724, %v1722
  %v1793 = vunpack.c.l.b16 %v1641
  %v1794 = vunpack.c.h.b16 %v1641
  %v1795 = vunpack.c.l.b16 %v1642
  %v1796 = vunpack.c.h.b16 %v1642
  %v1797 = vunpack.c.l.b16 %v1643
  %v1798 = vunpack.c.h.b16 %v1643
  %v1799 = vunpack.c.l.b16 %v1644
  %v1800 = vunpack.c.h.b16 %v1644
  %v1801 = vunpack.c.l.b16 %v1645
  %v1802 = vunpack.c.h.b16 %v1645
  %v1803 = vunpack.c.l.b16 %v1646
  %v1804 = vunpack.c.h.b16 %v1646
  %v1805 = vunpack.c.l.b16 %v1647
  %v1806 = vunpack.c.h.b16 %v1647
  %v1807 = vunpack.c.l.b16 %v1648
  %v1808 = vunpack.c.h.b16 %v1648
  %v1809 = vunpack.c.l.b16 %v1649
  %v1810 = vunpack.c.h.b16 %v1649
  %v1811 = vunpack.c.l.b16 %v1650
  %v1812 = vunpack.c.h.b16 %v1650
  %v1813 = vunpack.c.l.b16 %v1651
  %v1814 = vunpack.c.h.b16 %v1651
  %v1815 = vunpack.c.l.b16 %v1652
  %v1816 = vunpack.c.h.b16 %v1652
  %v1817 = vunpack.c.l.b16 %v1653
  %v1818 = vunpack.c.h.b16 %v1653
  %v1819 = vunpack.c.l.b16 %v1654
  %v1820 = vunpack.c.h.b16 %v1654
  %v1821 = vunpack.c.l.b16 %v1655
  %v1822 = vunpack.c.h.b16 %v1655
  %v1823 = vunpack.c.l.b16 %v1656
  %v1824 = vunpack.c.h.b16 %v1656
  %v1825 = vunpack.c.l.b16 %v1657
  %v1826 = vunpack.c.h.b16 %v1657
  %v1827 = vunpack.c.l.b16 %v1658
  %v1828 = vunpack.c.h.b16 %v1658
  %v1829 = vunpack.c.l.b16 %v1659
  %v1830 = vunpack.c.h.b16 %v1659
  %v1831 = vunpack.c.l.b16 %v1660
  %v1832 = vunpack.c.h.b16 %v1660
  %v1833 = vpack.c.b16 %v1795, %v1793
  %v1834 = vpack.c.b16 %v1796, %v1794
  %v1835 = vpack.c.b16 %v1799, %v1797
  %v1836 = vpack.c.b16 %v1800, %v1798
  %v1837 = vpack.c.b16 %v1803, %v1801
  %v1838 = vpack.c.b16 %v1804, %v1802
  %v1839 = vpack.c.b16 %v1807, %v1805
  %v1840 = vpack.c.b16 %v1808, %v1806
  %v1841 = vpack.c.b16 %v1811, %v1809
  %v1842 = vpack.c.b16 %v1812, %v1810
  %v1843 = vpack.c.b16 %v1815, %v1813
  %v1844 = vpack.c.b16 %v1816, %v1814
  %v1845 = vpack.c.b16 %v1819, %v1817
  %v1846 = vpack.c.b16 %v1820, %v1818
  %v1847 = vpack.c.b16 %v1823, %v1821
  %v1848 = vpack.c.b16 %v1824, %v1822
  %v1849 = vpack.c.b16 %v1827, %v1825
  %v1850 = vpack.c.b16 %v1828, %v1826
  %v1851 = vpack.c.b16 %v1831, %v1829
  %v1852 = vpack.c.b16 %v1832, %v1830
  %v1874 = vsel %vm750, %v1726, 0
  %v1877 = vsel %vm750, %v1728, 0
  %v1880 = vsel %vm750, %v1730, 0
  %v1883 = vsel %vm750, %v1732, 0
  %v1886 = vsel %vm750, %v1734, 0
  %v1889 = vsel %vm750, %v1736, 0
  %v1892 = vsel %vm750, %v1738, 0
  %v1895 = vsel %vm750, %v1740, 0
  %v1898 = vsel %vm750, %v1742, 0
  %v1901 = vsel %vm750, %v1744, 0
  %v1904 = vsel %vm750, %v1746, 0
  %v1907 = vsel %vm750, %v1748, 0
  %v1910 = vsel %vm750, %v1750, 0
  %v1913 = vsel %vm750, %v1752, 0
  %v1916 = vsel %vm750, %v1754, 0
  %v1919 = vsel %vm750, %v1756, 0
  %1921 = vmatprep.subr.bf16.mxu0 %v1834
  %1922 = vmatpush1.bf16.msra.mxu0 %v1833
  %1923 = vmatprep.subr.bf16.mxu0 %v1836
  %1924 = vmatpush1.bf16.msra.mxu0 %v1835
  %1925 = vmatprep.subr.bf16.mxu0 %v1838
  %1926 = vmatpush1.bf16.msra.mxu0 %v1837
  %1927 = vmatprep.subr.bf16.mxu0 %v1840
  %1928 = vmatpush1.bf16.msra.mxu0 %v1839
  %1929 = vmatprep.subr.bf16.mxu0 %v1842
  %1930 = vmatpush1.bf16.msra.mxu0 %v1841
  %1931 = vmatprep.subr.bf16.mxu0 %v1844
  %1932 = vmatpush1.bf16.msra.mxu0 %v1843
  %1933 = vmatprep.subr.bf16.mxu0 %v1846
  %1934 = vmatpush1.bf16.msra.mxu0 %v1845
  %1935 = vmatprep.subr.bf16.mxu0 %v1848
  %1936 = vmatpush1.bf16.msra.mxu0 %v1847
  %1937 = vmatprep.subr.bf16.mxu0 %v1850
  %1938 = vmatpush1.bf16.msra.mxu0 %v1849
  %1939 = vmatprep.subr.bf16.mxu0 %v1852
  %1940 = vmatpush1.bf16.msra.mxu0 %v1851
  %1941 = vmatprep.subr.bf16.mxu0 0
  %1942 = vmatpush1.bf16.msra.mxu0 0
  %1943 = vmatprep.subr.bf16.mxu0 0
  %1944 = vmatpush1.bf16.msra.mxu0 0
  %1945 = vmatprep.subr.bf16.mxu0 0
  %1946 = vmatpush1.bf16.msra.mxu0 0
  %1947 = vmatprep.subr.bf16.mxu0 0
  %1948 = vmatpush1.bf16.msra.mxu0 0
  %1949 = vmatprep.subr.bf16.mxu0 0
  %1950 = vmatpush1.bf16.msra.mxu0 0
  %1951 = vmatprep.subr.bf16.mxu0 0
  %1952 = vmatpush1.bf16.msra.mxu0 0
  %1953 = vmatprep.mubr.bf16.mxu0 %v1874
  %1954 = vmatmul.mubr.bf16.gmra.mrb[0].mxu0 %v1725
  %v1955 = vpop.f32.mrb[0].mxu0
  %v1956 = vadd.f32 0.0, %v1955
  %v1957 = vpop.f32.mrb[0].mxu0
  %v1958 = vadd.f32 0.0, %v1957
  %v1959 = vpop.f32.mrb[0].mxu0
  %v1960 = vadd.f32 0.0, %v1959
  %v1961 = vpop.f32.mrb[0].mxu0
  %v1962 = vadd.f32 0.0, %v1961
  %1963 = vmatprep.mubr.bf16.mxu0 %v1877
  %1964 = vmatmul.mubr.bf16.gmra.mrb[0].mxu0 %v1727
  %v1965 = vpop.f32.mrb[0].mxu0
  %v1966 = vadd.f32 0.0, %v1965
  %v1967 = vpop.f32.mrb[0].mxu0
  %v1968 = vadd.f32 0.0, %v1967
  %v1969 = vpop.f32.mrb[0].mxu0
  %v1970 = vadd.f32 0.0, %v1969
  %v1971 = vpop.f32.mrb[0].mxu0
  %v1972 = vadd.f32 0.0, %v1971
  %1973 = vmatprep.mubr.bf16.mxu0 %v1880
  %1974 = vmatmul.mubr.bf16.gmra.mrb[0].mxu0 %v1729
  %v1975 = vpop.f32.mrb[0].mxu0
  %v1976 = vadd.f32 0.0, %v1975
  %v1977 = vpop.f32.mrb[0].mxu0
  %v1978 = vadd.f32 0.0, %v1977
  %v1979 = vpop.f32.mrb[0].mxu0
  %v1980 = vadd.f32 0.0, %v1979
  %v1981 = vpop.f32.mrb[0].mxu0
  %v1982 = vadd.f32 0.0, %v1981
  %1983 = vmatprep.mubr.bf16.mxu0 %v1883
  %1984 = vmatmul.mubr.bf16.gmra.mrb[0].mxu0 %v1731
  %v1985 = vpop.f32.mrb[0].mxu0
  %v1986 = vadd.f32 0.0, %v1985
  %v1987 = vpop.f32.mrb[0].mxu0
  %v1988 = vadd.f32 0.0, %v1987
  %v1989 = vpop.f32.mrb[0].mxu0
  %v1990 = vadd.f32 0.0, %v1989
  %v1991 = vpop.f32.mrb[0].mxu0
  %v1992 = vadd.f32 0.0, %v1991
  %1993 = vmatprep.mubr.bf16.mxu0 %v1886
  %1994 = vmatmul.mubr.bf16.gmra.mrb[0].mxu0 %v1733
  %v1995 = vpop.f32.mrb[0].mxu0
  %v1996 = vadd.f32 0.0, %v1995
  %v1997 = vpop.f32.mrb[0].mxu0
  %v1998 = vadd.f32 0.0, %v1997
  %v1999 = vpop.f32.mrb[0].mxu0
  %v2000 = vadd.f32 0.0, %v1999
  %v2001 = vpop.f32.mrb[0].mxu0
  %v2002 = vadd.f32 0.0, %v2001
  %2003 = vmatprep.mubr.bf16.mxu0 %v1889
  %2004 = vmatmul.mubr.bf16.gmra.mrb[0].mxu0 %v1735
  %v2005 = vpop.f32.mrb[0].mxu0
  %v2006 = vadd.f32 0.0, %v2005
  %v2007 = vpop.f32.mrb[0].mxu0
  %v2008 = vadd.f32 0.0, %v2007
  %v2009 = vpop.f32.mrb[0].mxu0
  %v2010 = vadd.f32 0.0, %v2009
  %v2011 = vpop.f32.mrb[0].mxu0
  %v2012 = vadd.f32 0.0, %v2011
  %2013 = vmatprep.mubr.bf16.mxu0 %v1892
  %2014 = vmatmul.mubr.bf16.gmra.mrb[0].mxu0 %v1737
  %v2015 = vpop.f32.mrb[0].mxu0
  %v2016 = vadd.f32 0.0, %v2015
  %v2017 = vpop.f32.mrb[0].mxu0
  %v2018 = vadd.f32 0.0, %v2017
  %v2019 = vpop.f32.mrb[0].mxu0
  %v2020 = vadd.f32 0.0, %v2019
  %v2021 = vpop.f32.mrb[0].mxu0
  %v2022 = vadd.f32 0.0, %v2021
  %2023 = vmatprep.mubr.bf16.mxu0 %v1895
  %2024 = vmatmul.mubr.bf16.gmra.mrb[0].mxu0 %v1739
  %v2025 = vpop.f32.mrb[0].mxu0
  %v2026 = vadd.f32 0.0, %v2025
  %v2027 = vpop.f32.mrb[0].mxu0
  %v2028 = vadd.f32 0.0, %v2027
  %v2029 = vpop.f32.mrb[0].mxu0
  %v2030 = vadd.f32 0.0, %v2029
  %v2031 = vpop.f32.mrb[0].mxu0
  %v2032 = vadd.f32 0.0, %v2031
  %2033 = vmatprep.mubr.bf16.mxu0 %v1898
  %2034 = vmatmul.mubr.bf16.gmra.mrb[0].mxu0 %v1741
  %v2035 = vpop.f32.mrb[0].mxu0
  %v2036 = vadd.f32 0.0, %v2035
  %v2037 = vpop.f32.mrb[0].mxu0
  %v2038 = vadd.f32 0.0, %v2037
  %v2039 = vpop.f32.mrb[0].mxu0
  %v2040 = vadd.f32 0.0, %v2039
  %v2041 = vpop.f32.mrb[0].mxu0
  %v2042 = vadd.f32 0.0, %v2041
  %2043 = vmatprep.mubr.bf16.mxu0 %v1901
  %2044 = vmatmul.mubr.bf16.gmra.mrb[0].mxu0 %v1743
  %v2045 = vpop.f32.mrb[0].mxu0
  %v2046 = vadd.f32 0.0, %v2045
  %v2047 = vpop.f32.mrb[0].mxu0
  %v2048 = vadd.f32 0.0, %v2047
  %v2049 = vpop.f32.mrb[0].mxu0
  %v2050 = vadd.f32 0.0, %v2049
  %v2051 = vpop.f32.mrb[0].mxu0
  %v2052 = vadd.f32 0.0, %v2051
  %2053 = vmatprep.mubr.bf16.mxu0 %v1904
  %2054 = vmatmul.mubr.bf16.gmra.mrb[0].mxu0 %v1745
  %v2055 = vpop.f32.mrb[0].mxu0
  %v2056 = vadd.f32 0.0, %v2055
  %v2057 = vpop.f32.mrb[0].mxu0
  %v2058 = vadd.f32 0.0, %v2057
  %v2059 = vpop.f32.mrb[0].mxu0
  %v2060 = vadd.f32 0.0, %v2059
  %v2061 = vpop.f32.mrb[0].mxu0
  %v2062 = vadd.f32 0.0, %v2061
  %2063 = vmatprep.mubr.bf16.mxu0 %v1907
  %2064 = vmatmul.mubr.bf16.gmra.mrb[0].mxu0 %v1747
  %v2065 = vpop.f32.mrb[0].mxu0
  %v2066 = vadd.f32 0.0, %v2065
  %v2067 = vpop.f32.mrb[0].mxu0
  %v2068 = vadd.f32 0.0, %v2067
  %v2069 = vpop.f32.mrb[0].mxu0
  %v2070 = vadd.f32 0.0, %v2069
  %v2071 = vpop.f32.mrb[0].mxu0
  %v2072 = vadd.f32 0.0, %v2071
  %2073 = vmatprep.mubr.bf16.mxu0 %v1910
  %2074 = vmatmul.mubr.bf16.gmra.mrb[0].mxu0 %v1749
  %v2075 = vpop.f32.mrb[0].mxu0
  %v2076 = vadd.f32 0.0, %v2075
  %v2077 = vpop.f32.mrb[0].mxu0
  %v2078 = vadd.f32 0.0, %v2077
  %v2079 = vpop.f32.mrb[0].mxu0
  %v2080 = vadd.f32 0.0, %v2079
  %v2081 = vpop.f32.mrb[0].mxu0
  %v2082 = vadd.f32 0.0, %v2081
  %2083 = vmatprep.mubr.bf16.mxu0 %v1913
  %2084 = vmatmul.mubr.bf16.gmra.mrb[0].mxu0 %v1751
  %v2085 = vpop.f32.mrb[0].mxu0
  %v2086 = vadd.f32 0.0, %v2085
  %v2087 = vpop.f32.mrb[0].mxu0
  %v2088 = vadd.f32 0.0, %v2087
  %v2089 = vpop.f32.mrb[0].mxu0
  %v2090 = vadd.f32 0.0, %v2089
  %v2091 = vpop.f32.mrb[0].mxu0
  %v2092 = vadd.f32 0.0, %v2091
  %2093 = vmatprep.mubr.bf16.mxu0 %v1916
  %2094 = vmatmul.mubr.bf16.gmra.mrb[0].mxu0 %v1753
  %v2095 = vpop.f32.mrb[0].mxu0
  %v2096 = vadd.f32 0.0, %v2095
  %v2097 = vpop.f32.mrb[0].mxu0
  %v2098 = vadd.f32 0.0, %v2097
  %v2099 = vpop.f32.mrb[0].mxu0
  %v2100 = vadd.f32 0.0, %v2099
  %v2101 = vpop.f32.mrb[0].mxu0
  %v2102 = vadd.f32 0.0, %v2101
  %2103 = vmatprep.mubr.bf16.mxu0 %v1919
  %2104 = vmatmul.mubr.bf16.gmra.mrb[0].mxu0 %v1755
  %v2105 = vpop.f32.mrb[0].mxu0
  %v2106 = vadd.f32 0.0, %v2105
  %v2107 = vpop.f32.mrb[0].mxu0
  %v2108 = vadd.f32 0.0, %v2107
  %v2109 = vpop.f32.mrb[0].mxu0
  %v2110 = vadd.f32 0.0, %v2109
  %v2111 = vpop.f32.mrb[0].mxu0
  %v2112 = vadd.f32 0.0, %v2111
  %2113 = vdwg.mxu0
  %v2114 = vadd.f32 %v1319, %v1956
  %v2115 = vadd.f32 %v1321, %v1958
  %v2116 = vadd.f32 %v1323, %v1960
  %v2117 = vadd.f32 %v1325, %v1962
  %v2118 = vadd.f32 %v1329, %v1966
  %v2119 = vadd.f32 %v1331, %v1968
  %v2120 = vadd.f32 %v1333, %v1970
  %v2121 = vadd.f32 %v1335, %v1972
  %v2122 = vadd.f32 %v1339, %v1976
  %v2123 = vadd.f32 %v1341, %v1978
  %v2124 = vadd.f32 %v1343, %v1980
  %v2125 = vadd.f32 %v1345, %v1982
  %v2126 = vadd.f32 %v1349, %v1986
  %v2127 = vadd.f32 %v1351, %v1988
  %v2128 = vadd.f32 %v1353, %v1990
  %v2129 = vadd.f32 %v1355, %v1992
  %v2130 = vadd.f32 %v1359, %v1996
  %v2131 = vadd.f32 %v1361, %v1998
  %v2132 = vadd.f32 %v1363, %v2000
  %v2133 = vadd.f32 %v1365, %v2002
  %v2134 = vadd.f32 %v1369, %v2006
  %v2135 = vadd.f32 %v1371, %v2008
  %v2136 = vadd.f32 %v1373, %v2010
  %v2137 = vadd.f32 %v1375, %v2012
  %v2138 = vadd.f32 %v1379, %v2016
  %v2139 = vadd.f32 %v1381, %v2018
  %v2140 = vadd.f32 %v1383, %v2020
  %v2141 = vadd.f32 %v1385, %v2022
  %v2142 = vadd.f32 %v1389, %v2026
  %v2143 = vadd.f32 %v1391, %v2028
  %v2144 = vadd.f32 %v1393, %v2030
  %v2145 = vadd.f32 %v1395, %v2032
  %v2146 = vadd.f32 %v1399, %v2036
  %v2147 = vadd.f32 %v1401, %v2038
  %v2148 = vadd.f32 %v1403, %v2040
  %v2149 = vadd.f32 %v1405, %v2042
  %v2150 = vadd.f32 %v1409, %v2046
  %v2151 = vadd.f32 %v1411, %v2048
  %v2152 = vadd.f32 %v1413, %v2050
  %v2153 = vadd.f32 %v1415, %v2052
  %v2154 = vadd.f32 %v1419, %v2056
  %v2155 = vadd.f32 %v1421, %v2058
  %v2156 = vadd.f32 %v1423, %v2060
  %v2157 = vadd.f32 %v1425, %v2062
  %v2158 = vadd.f32 %v1429, %v2066
  %v2159 = vadd.f32 %v1431, %v2068
  %v2160 = vadd.f32 %v1433, %v2070
  %v2161 = vadd.f32 %v1435, %v2072
  %v2162 = vadd.f32 %v1439, %v2076
  %v2163 = vadd.f32 %v1441, %v2078
  %v2164 = vadd.f32 %v1443, %v2080
  %v2165 = vadd.f32 %v1445, %v2082
  %v2166 = vadd.f32 %v1449, %v2086
  %v2167 = vadd.f32 %v1451, %v2088
  %v2168 = vadd.f32 %v1453, %v2090
  %v2169 = vadd.f32 %v1455, %v2092
  %v2170 = vadd.f32 %v1459, %v2096
  %v2171 = vadd.f32 %v1461, %v2098
  %v2172 = vadd.f32 %v1463, %v2100
  %v2173 = vadd.f32 %v1465, %v2102
  %v2174 = vadd.f32 %v1469, %v2106
  %v2175 = vadd.f32 %v1471, %v2108
  %v2176 = vadd.f32 %v1473, %v2110
  %v2177 = vadd.f32 %v1475, %v2112
  %v2178 = vld [vmem:[%s0 + $0x10] sm:$0x33]
  %v2179 = vld [vmem:[%s0 + $0x28] sm:$0x33]
  %v2180 = vld [vmem:[%s0 + $0x40] sm:$0x33]
  %v2181 = vld [vmem:[%s0 + $0x58] sm:$0x33]
  %v2182 = vld [vmem:[%s0 + $0x70] sm:$0x33]
  %v2183 = vld [vmem:[%s0 + $0x88] sm:$0x33]
  %v2184 = vld [vmem:[%s0 + $0xa0] sm:$0x33]
  %v2185 = vld [vmem:[%s0 + $0xb8] sm:$0x33]
  %v2186 = vld [vmem:[%s0 + $0xd0] sm:$0x33]
  %v2187 = vld [vmem:[%s0 + $0xe8] sm:$0x33]
  %v2188 = vld [vmem:[%s0 + $0x100] sm:$0x33]
  %v2189 = vld [vmem:[%s0 + $0x118] sm:$0x33]
  %v2190 = vld [vmem:[%s0 + $0x130] sm:$0x33]
  %v2191 = vld [vmem:[%s0 + $0x148] sm:$0x33]
  %v2192 = vld [vmem:[%s0 + $0x160] sm:$0x33]
  %v2193 = vld [vmem:[%s0 + $0x178] sm:$0x33]
  %vm2194 = vsmask.f32 2304
  %vm2195 = vsmask.f32 6416
  %vm2196 = vmor %vm2194, %vm2195
  %v2198 = vshrl.u32 %v1477, 16
  %v2200 = vrot.slane %v2198, 5
  %v2201 = vshll.u32 %v1477, 16
  %v2203 = vrot.slane %v2201, 6
  %v2204 = vor.u32 %v2200, %v2203
  %v2205 = vrot.slane %v2204, 4
  %v2206 = vrot.slane %v147, 5
  %v2207 = vrot.slane %v143, 6
  %v2208 = vor.u32 %v2206, %v2207
  %v2209 = vsel %vm2196, %v2205, %v2208
  %v2210 = vrot.slane %v2208, 4
  %v2212 = vshrl.u32 %v2178, 16
  %v2214 = vrot.slane %v2212, 5
  %v2215 = vshll.u32 %v2178, 16
  %v2217 = vrot.slane %v2215, 6
  %v2218 = vor.u32 %v2214, %v2217
  %v2219 = vsel %vm2196, %v2210, %v2218
  %v2221 = vshrl.u32 %v1478, 16
  %v2223 = vrot.slane %v2221, 5
  %v2224 = vshll.u32 %v1478, 16
  %v2226 = vrot.slane %v2224, 6
  %v2227 = vor.u32 %v2223, %v2226
  %v2228 = vrot.slane %v2227, 4
  %v2229 = vrot.slane %v171, 5
  %v2230 = vrot.slane %v167, 6
  %v2231 = vor.u32 %v2229, %v2230
  %v2232 = vsel %vm2196, %v2228, %v2231
  %v2233 = vrot.slane %v2231, 4
  %v2235 = vshrl.u32 %v2179, 16
  %v2237 = vrot.slane %v2235, 5
  %v2238 = vshll.u32 %v2179, 16
  %v2240 = vrot.slane %v2238, 6
  %v2241 = vor.u32 %v2237, %v2240
  %v2242 = vsel %vm2196, %v2233, %v2241
  %v2244 = vshrl.u32 %v1479, 16
  %v2246 = vrot.slane %v2244, 5
  %v2247 = vshll.u32 %v1479, 16
  %v2249 = vrot.slane %v2247, 6
  %v2250 = vor.u32 %v2246, %v2249
  %v2251 = vrot.slane %v2250, 4
  %v2252 = vrot.slane %v195, 5
  %v2253 = vrot.slane %v191, 6
  %v2254 = vor.u32 %v2252, %v2253
  %v2255 = vsel %vm2196, %v2251, %v2254
  %v2256 = vrot.slane %v2254, 4
  %v2258 = vshrl.u32 %v2180, 16
  %v2260 = vrot.slane %v2258, 5
  %v2261 = vshll.u32 %v2180, 16
  %v2263 = vrot.slane %v2261, 6
  %v2264 = vor.u32 %v2260, %v2263
  %v2265 = vsel %vm2196, %v2256, %v2264
  %v2267 = vshrl.u32 %v1480, 16
  %v2269 = vrot.slane %v2267, 5
  %v2270 = vshll.u32 %v1480, 16
  %v2272 = vrot.slane %v2270, 6
  %v2273 = vor.u32 %v2269, %v2272
  %v2274 = vrot.slane %v2273, 4
  %v2275 = vrot.slane %v219, 5
  %v2276 = vrot.slane %v215, 6
  %v2277 = vor.u32 %v2275, %v2276
  %v2278 = vsel %vm2196, %v2274, %v2277
  %v2279 = vrot.slane %v2277, 4
  %v2281 = vshrl.u32 %v2181, 16
  %v2283 = vrot.slane %v2281, 5
  %v2284 = vshll.u32 %v2181, 16
  %v2286 = vrot.slane %v2284, 6
  %v2287 = vor.u32 %v2283, %v2286
  %v2288 = vsel %vm2196, %v2279, %v2287
  %v2290 = vshrl.u32 %v1481, 16
  %v2292 = vrot.slane %v2290, 5
  %v2293 = vshll.u32 %v1481, 16
  %v2295 = vrot.slane %v2293, 6
  %v2296 = vor.u32 %v2292, %v2295
  %v2297 = vrot.slane %v2296, 4
  %v2298 = vrot.slane %v243, 5
  %v2299 = vrot.slane %v239, 6
  %v2300 = vor.u32 %v2298, %v2299
  %v2301 = vsel %vm2196, %v2297, %v2300
  %v2302 = vrot.slane %v2300, 4
  %v2304 = vshrl.u32 %v2182, 16
  %v2306 = vrot.slane %v2304, 5
  %v2307 = vshll.u32 %v2182, 16
  %v2309 = vrot.slane %v2307, 6
  %v2310 = vor.u32 %v2306, %v2309
  %v2311 = vsel %vm2196, %v2302, %v2310
  %v2313 = vshrl.u32 %v1482, 16
  %v2315 = vrot.slane %v2313, 5
  %v2316 = vshll.u32 %v1482, 16
  %v2318 = vrot.slane %v2316, 6
  %v2319 = vor.u32 %v2315, %v2318
  %v2320 = vrot.slane %v2319, 4
  %v2321 = vrot.slane %v267, 5
  %v2322 = vrot.slane %v263, 6
  %v2323 = vor.u32 %v2321, %v2322
  %v2324 = vsel %vm2196, %v2320, %v2323
  %v2325 = vrot.slane %v2323, 4
  %v2327 = vshrl.u32 %v2183, 16
  %v2329 = vrot.slane %v2327, 5
  %v2330 = vshll.u32 %v2183, 16
  %v2332 = vrot.slane %v2330, 6
  %v2333 = vor.u32 %v2329, %v2332
  %v2334 = vsel %vm2196, %v2325, %v2333
  %v2336 = vshrl.u32 %v1483, 16
  %v2338 = vrot.slane %v2336, 5
  %v2339 = vshll.u32 %v1483, 16
  %v2341 = vrot.slane %v2339, 6
  %v2342 = vor.u32 %v2338, %v2341
  %v2343 = vrot.slane %v2342, 4
  %v2344 = vrot.slane %v291, 5
  %v2345 = vrot.slane %v287, 6
  %v2346 = vor.u32 %v2344, %v2345
  %v2347 = vsel %vm2196, %v2343, %v2346
  %v2348 = vrot.slane %v2346, 4
  %v2350 = vshrl.u32 %v2184, 16
  %v2352 = vrot.slane %v2350, 5
  %v2353 = vshll.u32 %v2184, 16
  %v2355 = vrot.slane %v2353, 6
  %v2356 = vor.u32 %v2352, %v2355
  %v2357 = vsel %vm2196, %v2348, %v2356
  %v2359 = vshrl.u32 %v1484, 16
  %v2361 = vrot.slane %v2359, 5
  %v2362 = vshll.u32 %v1484, 16
  %v2364 = vrot.slane %v2362, 6
  %v2365 = vor.u32 %v2361, %v2364
  %v2366 = vrot.slane %v2365, 4
  %v2367 = vrot.slane %v315, 5
  %v2368 = vrot.slane %v311, 6
  %v2369 = vor.u32 %v2367, %v2368
  %v2370 = vsel %vm2196, %v2366, %v2369
  %v2371 = vrot.slane %v2369, 4
  %v2373 = vshrl.u32 %v2185, 16
  %v2375 = vrot.slane %v2373, 5
  %v2376 = vshll.u32 %v2185, 16
  %v2378 = vrot.slane %v2376, 6
  %v2379 = vor.u32 %v2375, %v2378
  %v2380 = vsel %vm2196, %v2371, %v2379
  %v2382 = vshrl.u32 %v1485, 16
  %v2384 = vrot.slane %v2382, 5
  %v2385 = vshll.u32 %v1485, 16
  %v2387 = vrot.slane %v2385, 6
  %v2388 = vor.u32 %v2384, %v2387
  %v2389 = vrot.slane %v2388, 4
  %v2390 = vrot.slane %v339, 5
  %v2391 = vrot.slane %v335, 6
  %v2392 = vor.u32 %v2390, %v2391
  %v2393 = vsel %vm2196, %v2389, %v2392
  %v2394 = vrot.slane %v2392, 4
  %v2396 = vshrl.u32 %v2186, 16
  %v2398 = vrot.slane %v2396, 5
  %v2399 = vshll.u32 %v2186, 16
  %v2401 = vrot.slane %v2399, 6
  %v2402 = vor.u32 %v2398, %v2401
  %v2403 = vsel %vm2196, %v2394, %v2402
  %v2405 = vshrl.u32 %v1486, 16
  %v2407 = vrot.slane %v2405, 5
  %v2408 = vshll.u32 %v1486, 16
  %v2410 = vrot.slane %v2408, 6
  %v2411 = vor.u32 %v2407, %v2410
  %v2412 = vrot.slane %v2411, 4
  %v2413 = vrot.slane %v363, 5
  %v2414 = vrot.slane %v359, 6
  %v2415 = vor.u32 %v2413, %v2414
  %v2416 = vsel %vm2196, %v2412, %v2415
  %v2417 = vrot.slane %v2415, 4
  %v2419 = vshrl.u32 %v2187, 16
  %v2421 = vrot.slane %v2419, 5
  %v2422 = vshll.u32 %v2187, 16
  %v2424 = vrot.slane %v2422, 6
  %v2425 = vor.u32 %v2421, %v2424
  %v2426 = vsel %vm2196, %v2417, %v2425
  %v2428 = vshrl.u32 %v1487, 16
  %v2430 = vrot.slane %v2428, 5
  %v2431 = vshll.u32 %v1487, 16
  %v2433 = vrot.slane %v2431, 6
  %v2434 = vor.u32 %v2430, %v2433
  %v2435 = vrot.slane %v2434, 4
  %v2436 = vrot.slane %v387, 5
  %v2437 = vrot.slane %v383, 6
  %v2438 = vor.u32 %v2436, %v2437
  %v2439 = vsel %vm2196, %v2435, %v2438
  %v2440 = vrot.slane %v2438, 4
  %v2442 = vshrl.u32 %v2188, 16
  %v2444 = vrot.slane %v2442, 5
  %v2445 = vshll.u32 %v2188, 16
  %v2447 = vrot.slane %v2445, 6
  %v2448 = vor.u32 %v2444, %v2447
  %v2449 = vsel %vm2196, %v2440, %v2448
  %v2451 = vshrl.u32 %v1488, 16
  %v2453 = vrot.slane %v2451, 5
  %v2454 = vshll.u32 %v1488, 16
  %v2456 = vrot.slane %v2454, 6
  %v2457 = vor.u32 %v2453, %v2456
  %v2458 = vrot.slane %v2457, 4
  %v2459 = vrot.slane %v411, 5
  %v2460 = vrot.slane %v407, 6
  %v2461 = vor.u32 %v2459, %v2460
  %v2462 = vsel %vm2196, %v2458, %v2461
  %v2463 = vrot.slane %v2461, 4
  %v2465 = vshrl.u32 %v2189, 16
  %v2467 = vrot.slane %v2465, 5
  %v2468 = vshll.u32 %v2189, 16
  %v2470 = vrot.slane %v2468, 6
  %v2471 = vor.u32 %v2467, %v2470
  %v2472 = vsel %vm2196, %v2463, %v2471
  %v2474 = vshrl.u32 %v1489, 16
  %v2476 = vrot.slane %v2474, 5
  %v2477 = vshll.u32 %v1489, 16
  %v2479 = vrot.slane %v2477, 6
  %v2480 = vor.u32 %v2476, %v2479
  %v2481 = vrot.slane %v2480, 4
  %v2482 = vrot.slane %v435, 5
  %v2483 = vrot.slane %v431, 6
  %v2484 = vor.u32 %v2482, %v2483
  %v2485 = vsel %vm2196, %v2481, %v2484
  %v2486 = vrot.slane %v2484, 4
  %v2488 = vshrl.u32 %v2190, 16
  %v2490 = vrot.slane %v2488, 5
  %v2491 = vshll.u32 %v2190, 16
  %v2493 = vrot.slane %v2491, 6
  %v2494 = vor.u32 %v2490, %v2493
  %v2495 = vsel %vm2196, %v2486, %v2494
  %v2497 = vshrl.u32 %v1490, 16
  %v2499 = vrot.slane %v2497, 5
  %v2500 = vshll.u32 %v1490, 16
  %v2502 = vrot.slane %v2500, 6
  %v2503 = vor.u32 %v2499, %v2502
  %v2504 = vrot.slane %v2503, 4
  %v2505 = vrot.slane %v459, 5
  %v2506 = vrot.slane %v455, 6
  %v2507 = vor.u32 %v2505, %v2506
  %v2508 = vsel %vm2196, %v2504, %v2507
  %v2509 = vrot.slane %v2507, 4
  %v2511 = vshrl.u32 %v2191, 16
  %v2513 = vrot.slane %v2511, 5
  %v2514 = vshll.u32 %v2191, 16
  %v2516 = vrot.slane %v2514, 6
  %v2517 = vor.u32 %v2513, %v2516
  %v2518 = vsel %vm2196, %v2509, %v2517
  %v2520 = vshrl.u32 %v1491, 16
  %v2522 = vrot.slane %v2520, 5
  %v2523 = vshll.u32 %v1491, 16
  %v2525 = vrot.slane %v2523, 6
  %v2526 = vor.u32 %v2522, %v2525
  %v2527 = vrot.slane %v2526, 4
  %v2528 = vrot.slane %v483, 5
  %v2529 = vrot.slane %v479, 6
  %v2530 = vor.u32 %v2528, %v2529
  %v2531 = vsel %vm2196, %v2527, %v2530
  %v2532 = vrot.slane %v2530, 4
  %v2534 = vshrl.u32 %v2192, 16
  %v2536 = vrot.slane %v2534, 5
  %v2537 = vshll.u32 %v2192, 16
  %v2539 = vrot.slane %v2537, 6
  %v2540 = vor.u32 %v2536, %v2539
  %v2541 = vsel %vm2196, %v2532, %v2540
  %v2543 = vshrl.u32 %v1492, 16
  %v2545 = vrot.slane %v2543, 5
  %v2546 = vshll.u32 %v1492, 16
  %v2548 = vrot.slane %v2546, 6
  %v2549 = vor.u32 %v2545, %v2548
  %v2550 = vrot.slane %v2549, 4
  %v2551 = vrot.slane %v507, 5
  %v2552 = vrot.slane %v503, 6
  %v2553 = vor.u32 %v2551, %v2552
  %v2554 = vsel %vm2196, %v2550, %v2553
  %v2555 = vrot.slane %v2553, 4
  %v2557 = vshrl.u32 %v2193, 16
  %v2559 = vrot.slane %v2557, 5
  %v2560 = vshll.u32 %v2193, 16
  %v2562 = vrot.slane %v2560, 6
  %v2563 = vor.u32 %v2559, %v2562
  %v2564 = vsel %vm2196, %v2555, %v2563
  %s2565 = scalar_lea.vmem %s1, 480
  %v2566 = vld [vmem:[%s2565] sm:$0xff]
  %v2567 = vld [vmem:[%s2565 + $0x8] sm:$0xff]
  %v2568 = vld [vmem:[%s2565 + $0x10] sm:$0xff]
  %v2569 = vld [vmem:[%s2565 + $0x18] sm:$0xff]
  %v2570 = vld [vmem:[%s2565 + $0x20] sm:$0xff]
  %v2571 = vld [vmem:[%s2565 + $0x28] sm:$0xff]
  %v2572 = vld [vmem:[%s2565 + $0x30] sm:$0xff]
  %v2573 = vld [vmem:[%s2565 + $0x38] sm:$0xff]
  %v2574 = vld [vmem:[%s2565 + $0x40] sm:$0xff]
  %v2575 = vld [vmem:[%s2565 + $0x48] sm:$0xff]
  %v2576 = vld [vmem:[%s2565 + $0x50] sm:$0xff]
  %v2577 = vld [vmem:[%s2565 + $0x58] sm:$0xff]
  %v2578 = vld [vmem:[%s2565 + $0x60] sm:$0xff]
  %v2579 = vld [vmem:[%s2565 + $0x68] sm:$0xff]
  %v2580 = vld [vmem:[%s2565 + $0x70] sm:$0xff]
  %v2581 = vld [vmem:[%s2565 + $0x78] sm:$0xff]
  %v2582 = vld [vmem:[%s2565 + $0x80] sm:$0xff]
  %v2583 = vld [vmem:[%s2565 + $0x88] sm:$0xff]
  %v2584 = vld [vmem:[%s2565 + $0x90] sm:$0xff]
  %v2585 = vld [vmem:[%s2565 + $0x98] sm:$0xff]
  %v2586 = vunpack.c.l.b16 %v2209
  %v2587 = vunpack.c.h.b16 %v2209
  %v2588 = vunpack.c.l.b16 %v2219
  %v2589 = vunpack.c.h.b16 %v2219
  %v2590 = vunpack.c.l.b16 %v2232
  %v2591 = vunpack.c.h.b16 %v2232
  %v2592 = vunpack.c.l.b16 %v2242
  %v2593 = vunpack.c.h.b16 %v2242
  %v2594 = vunpack.c.l.b16 %v2255
  %v2595 = vunpack.c.h.b16 %v2255
  %v2596 = vunpack.c.l.b16 %v2265
  %v2597 = vunpack.c.h.b16 %v2265
  %v2598 = vunpack.c.l.b16 %v2278
  %v2599 = vunpack.c.h.b16 %v2278
  %v2600 = vunpack.c.l.b16 %v2288
  %v2601 = vunpack.c.h.b16 %v2288
  %v2602 = vunpack.c.l.b16 %v2301
  %v2603 = vunpack.c.h.b16 %v2301
  %v2604 = vunpack.c.l.b16 %v2311
  %v2605 = vunpack.c.h.b16 %v2311
  %v2606 = vunpack.c.l.b16 %v2324
  %v2607 = vunpack.c.h.b16 %v2324
  %v2608 = vunpack.c.l.b16 %v2334
  %v2609 = vunpack.c.h.b16 %v2334
  %v2610 = vunpack.c.l.b16 %v2347
  %v2611 = vunpack.c.h.b16 %v2347
  %v2612 = vunpack.c.l.b16 %v2357
  %v2613 = vunpack.c.h.b16 %v2357
  %v2614 = vunpack.c.l.b16 %v2370
  %v2615 = vunpack.c.h.b16 %v2370
  %v2616 = vunpack.c.l.b16 %v2380
  %v2617 = vunpack.c.h.b16 %v2380
  %v2618 = vunpack.c.l.b16 %v2393
  %v2619 = vunpack.c.h.b16 %v2393
  %v2620 = vunpack.c.l.b16 %v2403
  %v2621 = vunpack.c.h.b16 %v2403
  %v2622 = vunpack.c.l.b16 %v2416
  %v2623 = vunpack.c.h.b16 %v2416
  %v2624 = vunpack.c.l.b16 %v2426
  %v2625 = vunpack.c.h.b16 %v2426
  %v2626 = vunpack.c.l.b16 %v2439
  %v2627 = vunpack.c.h.b16 %v2439
  %v2628 = vunpack.c.l.b16 %v2449
  %v2629 = vunpack.c.h.b16 %v2449
  %v2630 = vunpack.c.l.b16 %v2462
  %v2631 = vunpack.c.h.b16 %v2462
  %v2632 = vunpack.c.l.b16 %v2472
  %v2633 = vunpack.c.h.b16 %v2472
  %v2634 = vunpack.c.l.b16 %v2485
  %v2635 = vunpack.c.h.b16 %v2485
  %v2636 = vunpack.c.l.b16 %v2495
  %v2637 = vunpack.c.h.b16 %v2495
  %v2638 = vunpack.c.l.b16 %v2508
  %v2639 = vunpack.c.h.b16 %v2508
  %v2640 = vunpack.c.l.b16 %v2518
  %v2641 = vunpack.c.h.b16 %v2518
  %v2642 = vunpack.c.l.b16 %v2531
  %v2643 = vunpack.c.h.b16 %v2531
  %v2644 = vunpack.c.l.b16 %v2541
  %v2645 = vunpack.c.h.b16 %v2541
  %v2646 = vunpack.c.l.b16 %v2554
  %v2647 = vunpack.c.h.b16 %v2554
  %v2648 = vunpack.c.l.b16 %v2564
  %v2649 = vunpack.c.h.b16 %v2564
  %v2650 = vpack.c.b16 %v2588, %v2586
  %v2651 = vpack.c.b16 %v2589, %v2587
  %v2652 = vpack.c.b16 %v2592, %v2590
  %v2653 = vpack.c.b16 %v2593, %v2591
  %v2654 = vpack.c.b16 %v2596, %v2594
  %v2655 = vpack.c.b16 %v2597, %v2595
  %v2656 = vpack.c.b16 %v2600, %v2598
  %v2657 = vpack.c.b16 %v2601, %v2599
  %v2658 = vpack.c.b16 %v2604, %v2602
  %v2659 = vpack.c.b16 %v2605, %v2603
  %v2660 = vpack.c.b16 %v2608, %v2606
  %v2661 = vpack.c.b16 %v2609, %v2607
  %v2662 = vpack.c.b16 %v2612, %v2610
  %v2663 = vpack.c.b16 %v2613, %v2611
  %v2664 = vpack.c.b16 %v2616, %v2614
  %v2665 = vpack.c.b16 %v2617, %v2615
  %v2666 = vpack.c.b16 %v2620, %v2618
  %v2667 = vpack.c.b16 %v2621, %v2619
  %v2668 = vpack.c.b16 %v2624, %v2622
  %v2669 = vpack.c.b16 %v2625, %v2623
  %v2670 = vpack.c.b16 %v2628, %v2626
  %v2671 = vpack.c.b16 %v2629, %v2627
  %v2672 = vpack.c.b16 %v2632, %v2630
  %v2673 = vpack.c.b16 %v2633, %v2631
  %v2674 = vpack.c.b16 %v2636, %v2634
  %v2675 = vpack.c.b16 %v2637, %v2635
  %v2676 = vpack.c.b16 %v2640, %v2638
  %v2677 = vpack.c.b16 %v2641, %v2639
  %v2678 = vpack.c.b16 %v2644, %v2642
  %v2679 = vpack.c.b16 %v2645, %v2643
  %v2680 = vpack.c.b16 %v2648, %v2646
  %v2681 = vpack.c.b16 %v2649, %v2647
  %v2718 = vunpack.c.l.b16 %v2566
  %v2719 = vunpack.c.h.b16 %v2566
  %v2720 = vunpack.c.l.b16 %v2567
  %v2721 = vunpack.c.h.b16 %v2567
  %v2722 = vunpack.c.l.b16 %v2568
  %v2723 = vunpack.c.h.b16 %v2568
  %v2724 = vunpack.c.l.b16 %v2569
  %v2725 = vunpack.c.h.b16 %v2569
  %v2726 = vunpack.c.l.b16 %v2570
  %v2727 = vunpack.c.h.b16 %v2570
  %v2728 = vunpack.c.l.b16 %v2571
  %v2729 = vunpack.c.h.b16 %v2571
  %v2730 = vunpack.c.l.b16 %v2572
  %v2731 = vunpack.c.h.b16 %v2572
  %v2732 = vunpack.c.l.b16 %v2573
  %v2733 = vunpack.c.h.b16 %v2573
  %v2734 = vunpack.c.l.b16 %v2574
  %v2735 = vunpack.c.h.b16 %v2574
  %v2736 = vunpack.c.l.b16 %v2575
  %v2737 = vunpack.c.h.b16 %v2575
  %v2738 = vunpack.c.l.b16 %v2576
  %v2739 = vunpack.c.h.b16 %v2576
  %v2740 = vunpack.c.l.b16 %v2577
  %v2741 = vunpack.c.h.b16 %v2577
  %v2742 = vunpack.c.l.b16 %v2578
  %v2743 = vunpack.c.h.b16 %v2578
  %v2744 = vunpack.c.l.b16 %v2579
  %v2745 = vunpack.c.h.b16 %v2579
  %v2746 = vunpack.c.l.b16 %v2580
  %v2747 = vunpack.c.h.b16 %v2580
  %v2748 = vunpack.c.l.b16 %v2581
  %v2749 = vunpack.c.h.b16 %v2581
  %v2750 = vunpack.c.l.b16 %v2582
  %v2751 = vunpack.c.h.b16 %v2582
  %v2752 = vunpack.c.l.b16 %v2583
  %v2753 = vunpack.c.h.b16 %v2583
  %v2754 = vunpack.c.l.b16 %v2584
  %v2755 = vunpack.c.h.b16 %v2584
  %v2756 = vunpack.c.l.b16 %v2585
  %v2757 = vunpack.c.h.b16 %v2585
  %v2758 = vpack.c.b16 %v2720, %v2718
  %v2759 = vpack.c.b16 %v2721, %v2719
  %v2760 = vpack.c.b16 %v2724, %v2722
  %v2761 = vpack.c.b16 %v2725, %v2723
  %v2762 = vpack.c.b16 %v2728, %v2726
  %v2763 = vpack.c.b16 %v2729, %v2727
  %v2764 = vpack.c.b16 %v2732, %v2730
  %v2765 = vpack.c.b16 %v2733, %v2731
  %v2766 = vpack.c.b16 %v2736, %v2734
  %v2767 = vpack.c.b16 %v2737, %v2735
  %v2768 = vpack.c.b16 %v2740, %v2738
  %v2769 = vpack.c.b16 %v2741, %v2739
  %v2770 = vpack.c.b16 %v2744, %v2742
  %v2771 = vpack.c.b16 %v2745, %v2743
  %v2772 = vpack.c.b16 %v2748, %v2746
  %v2773 = vpack.c.b16 %v2749, %v2747
  %v2774 = vpack.c.b16 %v2752, %v2750
  %v2775 = vpack.c.b16 %v2753, %v2751
  %v2776 = vpack.c.b16 %v2756, %v2754
  %v2777 = vpack.c.b16 %v2757, %v2755
  %v2799 = vsel %vm750, %v2651, 0
  %v2802 = vsel %vm750, %v2653, 0
  %v2805 = vsel %vm750, %v2655, 0
  %v2808 = vsel %vm750, %v2657, 0
  %v2811 = vsel %vm750, %v2659, 0
  %v2814 = vsel %vm750, %v2661, 0
  %v2817 = vsel %vm750, %v2663, 0
  %v2820 = vsel %vm750, %v2665, 0
  %v2823 = vsel %vm750, %v2667, 0
  %v2826 = vsel %vm750, %v2669, 0
  %v2829 = vsel %vm750, %v2671, 0
  %v2832 = vsel %vm750, %v2673, 0
  %v2835 = vsel %vm750, %v2675, 0
  %v2838 = vsel %vm750, %v2677, 0
  %v2841 = vsel %vm750, %v2679, 0
  %v2844 = vsel %vm750, %v2681, 0
  %2846 = vmatprep.subr.bf16.mxu0 %v2759
  %2847 = vmatpush1.bf16.msra.mxu0 %v2758
  %2848 = vmatprep.subr.bf16.mxu0 %v2761
  %2849 = vmatpush1.bf16.msra.mxu0 %v2760
  %2850 = vmatprep.subr.bf16.mxu0 %v2763
  %2851 = vmatpush1.bf16.msra.mxu0 %v2762
  %2852 = vmatprep.subr.bf16.mxu0 %v2765
  %2853 = vmatpush1.bf16.msra.mxu0 %v2764
  %2854 = vmatprep.subr.bf16.mxu0 %v2767
  %2855 = vmatpush1.bf16.msra.mxu0 %v2766
  %2856 = vmatprep.subr.bf16.mxu0 %v2769
  %2857 = vmatpush1.bf16.msra.mxu0 %v2768
  %2858 = vmatprep.subr.bf16.mxu0 %v2771
  %2859 = vmatpush1.bf16.msra.mxu0 %v2770
  %2860 = vmatprep.subr.bf16.mxu0 %v2773
  %2861 = vmatpush1.bf16.msra.mxu0 %v2772
  %2862 = vmatprep.subr.bf16.mxu0 %v2775
  %2863 = vmatpush1.bf16.msra.mxu0 %v2774
  %2864 = vmatprep.subr.bf16.mxu0 %v2777
  %2865 = vmatpush1.bf16.msra.mxu0 %v2776
  %2866 = vmatprep.subr.bf16.mxu0 0
  %2867 = vmatpush1.bf16.msra.mxu0 0
  %2868 = vmatprep.subr.bf16.mxu0 0
  %2869 = vmatpush1.bf16.msra.mxu0 0
  %2870 = vmatprep.subr.bf16.mxu0 0
  %2871 = vmatpush1.bf16.msra.mxu0 0
  %2872 = vmatprep.subr.bf16.mxu0 0
  %2873 = vmatpush1.bf16.msra.mxu0 0
  %2874 = vmatprep.subr.bf16.mxu0 0
  %2875 = vmatpush1.bf16.msra.mxu0 0
  %2876 = vmatprep.subr.bf16.mxu0 0
  %2877 = vmatpush1.bf16.msra.mxu0 0
  %2878 = vmatprep.mubr.bf16.mxu0 %v2799
  %2879 = vmatmul.mubr.bf16.gmra.mrb[0].mxu0 %v2650
  %v2880 = vpop.f32.mrb[0].mxu0
  %v2881 = vadd.f32 0.0, %v2880
  %v2882 = vpop.f32.mrb[0].mxu0
  %v2883 = vadd.f32 0.0, %v2882
  %v2884 = vpop.f32.mrb[0].mxu0
  %v2885 = vadd.f32 0.0, %v2884
  %v2886 = vpop.f32.mrb[0].mxu0
  %v2887 = vadd.f32 0.0, %v2886
  %2888 = vmatprep.mubr.bf16.mxu0 %v2802
  %2889 = vmatmul.mubr.bf16.gmra.mrb[0].mxu0 %v2652
  %v2890 = vpop.f32.mrb[0].mxu0
  %v2891 = vadd.f32 0.0, %v2890
  %v2892 = vpop.f32.mrb[0].mxu0
  %v2893 = vadd.f32 0.0, %v2892
  %v2894 = vpop.f32.mrb[0].mxu0
  %v2895 = vadd.f32 0.0, %v2894
  %v2896 = vpop.f32.mrb[0].mxu0
  %v2897 = vadd.f32 0.0, %v2896
  %2898 = vmatprep.mubr.bf16.mxu0 %v2805
  %2899 = vmatmul.mubr.bf16.gmra.mrb[0].mxu0 %v2654
  %v2900 = vpop.f32.mrb[0].mxu0
  %v2901 = vadd.f32 0.0, %v2900
  %v2902 = vpop.f32.mrb[0].mxu0
  %v2903 = vadd.f32 0.0, %v2902
  %v2904 = vpop.f32.mrb[0].mxu0
  %v2905 = vadd.f32 0.0, %v2904
  %v2906 = vpop.f32.mrb[0].mxu0
  %v2907 = vadd.f32 0.0, %v2906
  %2908 = vmatprep.mubr.bf16.mxu0 %v2808
  %2909 = vmatmul.mubr.bf16.gmra.mrb[0].mxu0 %v2656
  %v2910 = vpop.f32.mrb[0].mxu0
  %v2911 = vadd.f32 0.0, %v2910
  %v2912 = vpop.f32.mrb[0].mxu0
  %v2913 = vadd.f32 0.0, %v2912
  %v2914 = vpop.f32.mrb[0].mxu0
  %v2915 = vadd.f32 0.0, %v2914
  %v2916 = vpop.f32.mrb[0].mxu0
  %v2917 = vadd.f32 0.0, %v2916
  %2918 = vmatprep.mubr.bf16.mxu0 %v2811
  %2919 = vmatmul.mubr.bf16.gmra.mrb[0].mxu0 %v2658
  %v2920 = vpop.f32.mrb[0].mxu0
  %v2921 = vadd.f32 0.0, %v2920
  %v2922 = vpop.f32.mrb[0].mxu0
  %v2923 = vadd.f32 0.0, %v2922
  %v2924 = vpop.f32.mrb[0].mxu0
  %v2925 = vadd.f32 0.0, %v2924
  %v2926 = vpop.f32.mrb[0].mxu0
  %v2927 = vadd.f32 0.0, %v2926
  %2928 = vmatprep.mubr.bf16.mxu0 %v2814
  %2929 = vmatmul.mubr.bf16.gmra.mrb[0].mxu0 %v2660
  %v2930 = vpop.f32.mrb[0].mxu0
  %v2931 = vadd.f32 0.0, %v2930
  %v2932 = vpop.f32.mrb[0].mxu0
  %v2933 = vadd.f32 0.0, %v2932
  %v2934 = vpop.f32.mrb[0].mxu0
  %v2935 = vadd.f32 0.0, %v2934
  %v2936 = vpop.f32.mrb[0].mxu0
  %v2937 = vadd.f32 0.0, %v2936
  %2938 = vmatprep.mubr.bf16.mxu0 %v2817
  %2939 = vmatmul.mubr.bf16.gmra.mrb[0].mxu0 %v2662
  %v2940 = vpop.f32.mrb[0].mxu0
  %v2941 = vadd.f32 0.0, %v2940
  %v2942 = vpop.f32.mrb[0].mxu0
  %v2943 = vadd.f32 0.0, %v2942
  %v2944 = vpop.f32.mrb[0].mxu0
  %v2945 = vadd.f32 0.0, %v2944
  %v2946 = vpop.f32.mrb[0].mxu0
  %v2947 = vadd.f32 0.0, %v2946
  %2948 = vmatprep.mubr.bf16.mxu0 %v2820
  %2949 = vmatmul.mubr.bf16.gmra.mrb[0].mxu0 %v2664
  %v2950 = vpop.f32.mrb[0].mxu0
  %v2951 = vadd.f32 0.0, %v2950
  %v2952 = vpop.f32.mrb[0].mxu0
  %v2953 = vadd.f32 0.0, %v2952
  %v2954 = vpop.f32.mrb[0].mxu0
  %v2955 = vadd.f32 0.0, %v2954
  %v2956 = vpop.f32.mrb[0].mxu0
  %v2957 = vadd.f32 0.0, %v2956
  %2958 = vmatprep.mubr.bf16.mxu0 %v2823
  %2959 = vmatmul.mubr.bf16.gmra.mrb[0].mxu0 %v2666
  %v2960 = vpop.f32.mrb[0].mxu0
  %v2961 = vadd.f32 0.0, %v2960
  %v2962 = vpop.f32.mrb[0].mxu0
  %v2963 = vadd.f32 0.0, %v2962
  %v2964 = vpop.f32.mrb[0].mxu0
  %v2965 = vadd.f32 0.0, %v2964
  %v2966 = vpop.f32.mrb[0].mxu0
  %v2967 = vadd.f32 0.0, %v2966
  %2968 = vmatprep.mubr.bf16.mxu0 %v2826
  %2969 = vmatmul.mubr.bf16.gmra.mrb[0].mxu0 %v2668
  %v2970 = vpop.f32.mrb[0].mxu0
  %v2971 = vadd.f32 0.0, %v2970
  %v2972 = vpop.f32.mrb[0].mxu0
  %v2973 = vadd.f32 0.0, %v2972
  %v2974 = vpop.f32.mrb[0].mxu0
  %v2975 = vadd.f32 0.0, %v2974
  %v2976 = vpop.f32.mrb[0].mxu0
  %v2977 = vadd.f32 0.0, %v2976
  %2978 = vmatprep.mubr.bf16.mxu0 %v2829
  %2979 = vmatmul.mubr.bf16.gmra.mrb[0].mxu0 %v2670
  %v2980 = vpop.f32.mrb[0].mxu0
  %v2981 = vadd.f32 0.0, %v2980
  %v2982 = vpop.f32.mrb[0].mxu0
  %v2983 = vadd.f32 0.0, %v2982
  %v2984 = vpop.f32.mrb[0].mxu0
  %v2985 = vadd.f32 0.0, %v2984
  %v2986 = vpop.f32.mrb[0].mxu0
  %v2987 = vadd.f32 0.0, %v2986
  %2988 = vmatprep.mubr.bf16.mxu0 %v2832
  %2989 = vmatmul.mubr.bf16.gmra.mrb[0].mxu0 %v2672
  %v2990 = vpop.f32.mrb[0].mxu0
  %v2991 = vadd.f32 0.0, %v2990
  %v2992 = vpop.f32.mrb[0].mxu0
  %v2993 = vadd.f32 0.0, %v2992
  %v2994 = vpop.f32.mrb[0].mxu0
  %v2995 = vadd.f32 0.0, %v2994
  %v2996 = vpop.f32.mrb[0].mxu0
  %v2997 = vadd.f32 0.0, %v2996
  %2998 = vmatprep.mubr.bf16.mxu0 %v2835
  %2999 = vmatmul.mubr.bf16.gmra.mrb[0].mxu0 %v2674
  %v3000 = vpop.f32.mrb[0].mxu0
  %v3001 = vadd.f32 0.0, %v3000
  %v3002 = vpop.f32.mrb[0].mxu0
  %v3003 = vadd.f32 0.0, %v3002
  %v3004 = vpop.f32.mrb[0].mxu0
  %v3005 = vadd.f32 0.0, %v3004
  %v3006 = vpop.f32.mrb[0].mxu0
  %v3007 = vadd.f32 0.0, %v3006
  %3008 = vmatprep.mubr.bf16.mxu0 %v2838
  %3009 = vmatmul.mubr.bf16.gmra.mrb[0].mxu0 %v2676
  %v3010 = vpop.f32.mrb[0].mxu0
  %v3011 = vadd.f32 0.0, %v3010
  %v3012 = vpop.f32.mrb[0].mxu0
  %v3013 = vadd.f32 0.0, %v3012
  %v3014 = vpop.f32.mrb[0].mxu0
  %v3015 = vadd.f32 0.0, %v3014
  %v3016 = vpop.f32.mrb[0].mxu0
  %v3017 = vadd.f32 0.0, %v3016
  %3018 = vmatprep.mubr.bf16.mxu0 %v2841
  %3019 = vmatmul.mubr.bf16.gmra.mrb[0].mxu0 %v2678
  %v3020 = vpop.f32.mrb[0].mxu0
  %v3021 = vadd.f32 0.0, %v3020
  %v3022 = vpop.f32.mrb[0].mxu0
  %v3023 = vadd.f32 0.0, %v3022
  %v3024 = vpop.f32.mrb[0].mxu0
  %v3025 = vadd.f32 0.0, %v3024
  %v3026 = vpop.f32.mrb[0].mxu0
  %v3027 = vadd.f32 0.0, %v3026
  %3028 = vmatprep.mubr.bf16.mxu0 %v2844
  %3029 = vmatmul.mubr.bf16.gmra.mrb[0].mxu0 %v2680
  %v3030 = vpop.f32.mrb[0].mxu0
  %v3031 = vadd.f32 0.0, %v3030
  %v3032 = vpop.f32.mrb[0].mxu0
  %v3033 = vadd.f32 0.0, %v3032
  %v3034 = vpop.f32.mrb[0].mxu0
  %v3035 = vadd.f32 0.0, %v3034
  %v3036 = vpop.f32.mrb[0].mxu0
  %v3037 = vadd.f32 0.0, %v3036
  %3038 = vdwg.mxu0
  %v3039 = vadd.f32 %v2114, %v2881
  %v3040 = vadd.f32 %v2115, %v2883
  %v3041 = vadd.f32 %v2116, %v2885
  %v3042 = vadd.f32 %v2117, %v2887
  %v3043 = vadd.f32 %v2118, %v2891
  %v3044 = vadd.f32 %v2119, %v2893
  %v3045 = vadd.f32 %v2120, %v2895
  %v3046 = vadd.f32 %v2121, %v2897
  %v3047 = vadd.f32 %v2122, %v2901
  %v3048 = vadd.f32 %v2123, %v2903
  %v3049 = vadd.f32 %v2124, %v2905
  %v3050 = vadd.f32 %v2125, %v2907
  %v3051 = vadd.f32 %v2126, %v2911
  %v3052 = vadd.f32 %v2127, %v2913
  %v3053 = vadd.f32 %v2128, %v2915
  %v3054 = vadd.f32 %v2129, %v2917
  %v3055 = vadd.f32 %v2130, %v2921
  %v3056 = vadd.f32 %v2131, %v2923
  %v3057 = vadd.f32 %v2132, %v2925
  %v3058 = vadd.f32 %v2133, %v2927
  %v3059 = vadd.f32 %v2134, %v2931
  %v3060 = vadd.f32 %v2135, %v2933
  %v3061 = vadd.f32 %v2136, %v2935
  %v3062 = vadd.f32 %v2137, %v2937
  %v3063 = vadd.f32 %v2138, %v2941
  %v3064 = vadd.f32 %v2139, %v2943
  %v3065 = vadd.f32 %v2140, %v2945
  %v3066 = vadd.f32 %v2141, %v2947
  %v3067 = vadd.f32 %v2142, %v2951
  %v3068 = vadd.f32 %v2143, %v2953
  %v3069 = vadd.f32 %v2144, %v2955
  %v3070 = vadd.f32 %v2145, %v2957
  %v3071 = vadd.f32 %v2146, %v2961
  %v3072 = vadd.f32 %v2147, %v2963
  %v3073 = vadd.f32 %v2148, %v2965
  %v3074 = vadd.f32 %v2149, %v2967
  %v3075 = vadd.f32 %v2150, %v2971
  %v3076 = vadd.f32 %v2151, %v2973
  %v3077 = vadd.f32 %v2152, %v2975
  %v3078 = vadd.f32 %v2153, %v2977
  %v3079 = vadd.f32 %v2154, %v2981
  %v3080 = vadd.f32 %v2155, %v2983
  %v3081 = vadd.f32 %v2156, %v2985
  %v3082 = vadd.f32 %v2157, %v2987
  %v3083 = vadd.f32 %v2158, %v2991
  %v3084 = vadd.f32 %v2159, %v2993
  %v3085 = vadd.f32 %v2160, %v2995
  %v3086 = vadd.f32 %v2161, %v2997
  %v3087 = vadd.f32 %v2162, %v3001
  %v3088 = vadd.f32 %v2163, %v3003
  %v3089 = vadd.f32 %v2164, %v3005
  %v3090 = vadd.f32 %v2165, %v3007
  %v3091 = vadd.f32 %v2166, %v3011
  %v3092 = vadd.f32 %v2167, %v3013
  %v3093 = vadd.f32 %v2168, %v3015
  %v3094 = vadd.f32 %v2169, %v3017
  %v3095 = vadd.f32 %v2170, %v3021
  %v3096 = vadd.f32 %v2171, %v3023
  %v3097 = vadd.f32 %v2172, %v3025
  %v3098 = vadd.f32 %v2173, %v3027
  %v3099 = vadd.f32 %v2174, %v3031
  %v3100 = vadd.f32 %v2175, %v3033
  %v3101 = vadd.f32 %v2176, %v3035
  %v3102 = vadd.f32 %v2177, %v3037
  %v3103 = vld [vmem:[%s0] sm:$0xcc]
  %v3104 = vld [vmem:[%s0 + $0x18] sm:$0xcc]
  %v3105 = vld [vmem:[%s0 + $0x30] sm:$0xcc]
  %v3106 = vld [vmem:[%s0 + $0x48] sm:$0xcc]
  %v3107 = vld [vmem:[%s0 + $0x60] sm:$0xcc]
  %v3108 = vld [vmem:[%s0 + $0x78] sm:$0xcc]
  %v3109 = vld [vmem:[%s0 + $0x90] sm:$0xcc]
  %v3110 = vld [vmem:[%s0 + $0xa8] sm:$0xcc]
  %v3111 = vld [vmem:[%s0 + $0xc0] sm:$0xcc]
  %v3112 = vld [vmem:[%s0 + $0xd8] sm:$0xcc]
  %v3113 = vld [vmem:[%s0 + $0xf0] sm:$0xcc]
  %v3114 = vld [vmem:[%s0 + $0x108] sm:$0xcc]
  %v3115 = vld [vmem:[%s0 + $0x120] sm:$0xcc]
  %v3116 = vld [vmem:[%s0 + $0x138] sm:$0xcc]
  %v3117 = vld [vmem:[%s0 + $0x150] sm:$0xcc]
  %v3118 = vld [vmem:[%s0 + $0x168] sm:$0xcc]
  %vm3151 = vcmask 1041408
  %vm3152 = vcmask 1045508
  %vm3153 = vmor %vm3151, %vm3152
  %v3154 = vrot.slane %v3103, 6
  %v3155 = vrot.slane %v3154, 4
  %v3156 = vrot.slane %v63, 6
  %v3157 = vsel %vm3153, %v3155, %v3156
  %v3158 = vrot.slane %v3156, 4
  %v3159 = vrot.slane %v2178, 6
  %v3160 = vsel %vm3153, %v3158, %v3159
  %v3161 = vrot.slane %v3104, 6
  %v3162 = vrot.slane %v3161, 4
  %v3163 = vrot.slane %v65, 6
  %v3164 = vsel %vm3153, %v3162, %v3163
  %v3165 = vrot.slane %v3163, 4
  %v3166 = vrot.slane %v2179, 6
  %v3167 = vsel %vm3153, %v3165, %v3166
  %v3168 = vrot.slane %v3105, 6
  %v3169 = vrot.slane %v3168, 4
  %v3170 = vrot.slane %v67, 6
  %v3171 = vsel %vm3153, %v3169, %v3170
  %v3172 = vrot.slane %v3170, 4
  %v3173 = vrot.slane %v2180, 6
  %v3174 = vsel %vm3153, %v3172, %v3173
  %v3175 = vrot.slane %v3106, 6
  %v3176 = vrot.slane %v3175, 4
  %v3177 = vrot.slane %v69, 6
  %v3178 = vsel %vm3153, %v3176, %v3177
  %v3179 = vrot.slane %v3177, 4
  %v3180 = vrot.slane %v2181, 6
  %v3181 = vsel %vm3153, %v3179, %v3180
  %v3182 = vrot.slane %v3107, 6
  %v3183 = vrot.slane %v3182, 4
  %v3184 = vrot.slane %v71, 6
  %v3185 = vsel %vm3153, %v3183, %v3184
  %v3186 = vrot.slane %v3184, 4
  %v3187 = vrot.slane %v2182, 6
  %v3188 = vsel %vm3153, %v3186, %v3187
  %v3189 = vrot.slane %v3108, 6
  %v3190 = vrot.slane %v3189, 4
  %v3191 = vrot.slane %v73, 6
  %v3192 = vsel %vm3153, %v3190, %v3191
  %v3193 = vrot.slane %v3191, 4
  %v3194 = vrot.slane %v2183, 6
  %v3195 = vsel %vm3153, %v3193, %v3194
  %v3196 = vrot.slane %v3109, 6
  %v3197 = vrot.slane %v3196, 4
  %v3198 = vrot.slane %v75, 6
  %v3199 = vsel %vm3153, %v3197, %v3198
  %v3200 = vrot.slane %v3198, 4
  %v3201 = vrot.slane %v2184, 6
  %v3202 = vsel %vm3153, %v3200, %v3201
  %v3203 = vrot.slane %v3110, 6
  %v3204 = vrot.slane %v3203, 4
  %v3205 = vrot.slane %v77, 6
  %v3206 = vsel %vm3153, %v3204, %v3205
  %v3207 = vrot.slane %v3205, 4
  %v3208 = vrot.slane %v2185, 6
  %v3209 = vsel %vm3153, %v3207, %v3208
  %v3210 = vrot.slane %v3111, 6
  %v3211 = vrot.slane %v3210, 4
  %v3212 = vrot.slane %v79, 6
  %v3213 = vsel %vm3153, %v3211, %v3212
  %v3214 = vrot.slane %v3212, 4
  %v3215 = vrot.slane %v2186, 6
  %v3216 = vsel %vm3153, %v3214, %v3215
  %v3217 = vrot.slane %v3112, 6
  %v3218 = vrot.slane %v3217, 4
  %v3219 = vrot.slane %v81, 6
  %v3220 = vsel %vm3153, %v3218, %v3219
  %v3221 = vrot.slane %v3219, 4
  %v3222 = vrot.slane %v2187, 6
  %v3223 = vsel %vm3153, %v3221, %v3222
  %v3224 = vrot.slane %v3113, 6
  %v3225 = vrot.slane %v3224, 4
  %v3226 = vrot.slane %v83, 6
  %v3227 = vsel %vm3153, %v3225, %v3226
  %v3228 = vrot.slane %v3226, 4
  %v3229 = vrot.slane %v2188, 6
  %v3230 = vsel %vm3153, %v3228, %v3229
  %v3231 = vrot.slane %v3114, 6
  %v3232 = vrot.slane %v3231, 4
  %v3233 = vrot.slane %v85, 6
  %v3234 = vsel %vm3153, %v3232, %v3233
  %v3235 = vrot.slane %v3233, 4
  %v3236 = vrot.slane %v2189, 6
  %v3237 = vsel %vm3153, %v3235, %v3236
  %v3238 = vrot.slane %v3115, 6
  %v3239 = vrot.slane %v3238, 4
  %v3240 = vrot.slane %v87, 6
  %v3241 = vsel %vm3153, %v3239, %v3240
  %v3242 = vrot.slane %v3240, 4
  %v3243 = vrot.slane %v2190, 6
  %v3244 = vsel %vm3153, %v3242, %v3243
  %v3245 = vrot.slane %v3116, 6
  %v3246 = vrot.slane %v3245, 4
  %v3247 = vrot.slane %v89, 6
  %v3248 = vsel %vm3153, %v3246, %v3247
  %v3249 = vrot.slane %v3247, 4
  %v3250 = vrot.slane %v2191, 6
  %v3251 = vsel %vm3153, %v3249, %v3250
  %v3252 = vrot.slane %v3117, 6
  %v3253 = vrot.slane %v3252, 4
  %v3254 = vrot.slane %v91, 6
  %v3255 = vsel %vm3153, %v3253, %v3254
  %v3256 = vrot.slane %v3254, 4
  %v3257 = vrot.slane %v2192, 6
  %v3258 = vsel %vm3153, %v3256, %v3257
  %v3259 = vrot.slane %v3118, 6
  %v3260 = vrot.slane %v3259, 4
  %v3261 = vrot.slane %v93, 6
  %v3262 = vsel %vm3153, %v3260, %v3261
  %v3263 = vrot.slane %v3261, 4
  %v3264 = vrot.slane %v2193, 6
  %v3265 = vsel %vm3153, %v3263, %v3264
  %s3266 = scalar_lea.vmem %s1, 640
  %v3267 = vld [vmem:[%s3266] sm:$0xff]
  %v3268 = vld [vmem:[%s3266 + $0x8] sm:$0xff]
  %v3269 = vld [vmem:[%s3266 + $0x10] sm:$0xff]
  %v3270 = vld [vmem:[%s3266 + $0x18] sm:$0xff]
  %v3271 = vld [vmem:[%s3266 + $0x20] sm:$0xff]
  %v3272 = vld [vmem:[%s3266 + $0x28] sm:$0xff]
  %v3273 = vld [vmem:[%s3266 + $0x30] sm:$0xff]
  %v3274 = vld [vmem:[%s3266 + $0x38] sm:$0xff]
  %v3275 = vld [vmem:[%s3266 + $0x40] sm:$0xff]
  %v3276 = vld [vmem:[%s3266 + $0x48] sm:$0xff]
  %v3277 = vld [vmem:[%s3266 + $0x50] sm:$0xff]
  %v3278 = vld [vmem:[%s3266 + $0x58] sm:$0xff]
  %v3279 = vld [vmem:[%s3266 + $0x60] sm:$0xff]
  %v3280 = vld [vmem:[%s3266 + $0x68] sm:$0xff]
  %v3281 = vld [vmem:[%s3266 + $0x70] sm:$0xff]
  %v3282 = vld [vmem:[%s3266 + $0x78] sm:$0xff]
  %v3283 = vld [vmem:[%s3266 + $0x80] sm:$0xff]
  %v3284 = vld [vmem:[%s3266 + $0x88] sm:$0xff]
  %v3285 = vld [vmem:[%s3266 + $0x90] sm:$0xff]
  %v3286 = vld [vmem:[%s3266 + $0x98] sm:$0xff]
  %v3287 = vunpack.c.l.b16 %v3157
  %v3288 = vunpack.c.h.b16 %v3157
  %v3289 = vunpack.c.l.b16 %v3160
  %v3290 = vunpack.c.h.b16 %v3160
  %v3291 = vunpack.c.l.b16 %v3164
  %v3292 = vunpack.c.h.b16 %v3164
  %v3293 = vunpack.c.l.b16 %v3167
  %v3294 = vunpack.c.h.b16 %v3167
  %v3295 = vunpack.c.l.b16 %v3171
  %v3296 = vunpack.c.h.b16 %v3171
  %v3297 = vunpack.c.l.b16 %v3174
  %v3298 = vunpack.c.h.b16 %v3174
  %v3299 = vunpack.c.l.b16 %v3178
  %v3300 = vunpack.c.h.b16 %v3178
  %v3301 = vunpack.c.l.b16 %v3181
  %v3302 = vunpack.c.h.b16 %v3181
  %v3303 = vunpack.c.l.b16 %v3185
  %v3304 = vunpack.c.h.b16 %v3185
  %v3305 = vunpack.c.l.b16 %v3188
  %v3306 = vunpack.c.h.b16 %v3188
  %v3307 = vunpack.c.l.b16 %v3192
  %v3308 = vunpack.c.h.b16 %v3192
  %v3309 = vunpack.c.l.b16 %v3195
  %v3310 = vunpack.c.h.b16 %v3195
  %v3311 = vunpack.c.l.b16 %v3199
  %v3312 = vunpack.c.h.b16 %v3199
  %v3313 = vunpack.c.l.b16 %v3202
  %v3314 = vunpack.c.h.b16 %v3202
  %v3315 = vunpack.c.l.b16 %v3206
  %v3316 = vunpack.c.h.b16 %v3206
  %v3317 = vunpack.c.l.b16 %v3209
  %v3318 = vunpack.c.h.b16 %v3209
  %v3319 = vunpack.c.l.b16 %v3213
  %v3320 = vunpack.c.h.b16 %v3213
  %v3321 = vunpack.c.l.b16 %v3216
  %v3322 = vunpack.c.h.b16 %v3216
  %v3323 = vunpack.c.l.b16 %v3220
  %v3324 = vunpack.c.h.b16 %v3220
  %v3325 = vunpack.c.l.b16 %v3223
  %v3326 = vunpack.c.h.b16 %v3223
  %v3327 = vunpack.c.l.b16 %v3227
  %v3328 = vunpack.c.h.b16 %v3227
  %v3329 = vunpack.c.l.b16 %v3230
  %v3330 = vunpack.c.h.b16 %v3230
  %v3331 = vunpack.c.l.b16 %v3234
  %v3332 = vunpack.c.h.b16 %v3234
  %v3333 = vunpack.c.l.b16 %v3237
  %v3334 = vunpack.c.h.b16 %v3237
  %v3335 = vunpack.c.l.b16 %v3241
  %v3336 = vunpack.c.h.b16 %v3241
  %v3337 = vunpack.c.l.b16 %v3244
  %v3338 = vunpack.c.h.b16 %v3244
  %v3339 = vunpack.c.l.b16 %v3248
  %v3340 = vunpack.c.h.b16 %v3248
  %v3341 = vunpack.c.l.b16 %v3251
  %v3342 = vunpack.c.h.b16 %v3251
  %v3343 = vunpack.c.l.b16 %v3255
  %v3344 = vunpack.c.h.b16 %v3255
  %v3345 = vunpack.c.l.b16 %v3258
  %v3346 = vunpack.c.h.b16 %v3258
  %v3347 = vunpack.c.l.b16 %v3262
  %v3348 = vunpack.c.h.b16 %v3262
  %v3349 = vunpack.c.l.b16 %v3265
  %v3350 = vunpack.c.h.b16 %v3265
  %v3351 = vpack.c.b16 %v3289, %v3287
  %v3352 = vpack.c.b16 %v3290, %v3288
  %v3353 = vpack.c.b16 %v3293, %v3291
  %v3354 = vpack.c.b16 %v3294, %v3292
  %v3355 = vpack.c.b16 %v3297, %v3295
  %v3356 = vpack.c.b16 %v3298, %v3296
  %v3357 = vpack.c.b16 %v3301, %v3299
  %v3358 = vpack.c.b16 %v3302, %v3300
  %v3359 = vpack.c.b16 %v3305, %v3303
  %v3360 = vpack.c.b16 %v3306, %v3304
  %v3361 = vpack.c.b16 %v3309, %v3307
  %v3362 = vpack.c.b16 %v3310, %v3308
  %v3363 = vpack.c.b16 %v3313, %v3311
  %v3364 = vpack.c.b16 %v3314, %v3312
  %v3365 = vpack.c.b16 %v3317, %v3315
  %v3366 = vpack.c.b16 %v3318, %v3316
  %v3367 = vpack.c.b16 %v3321, %v3319
  %v3368 = vpack.c.b16 %v3322, %v3320
  %v3369 = vpack.c.b16 %v3325, %v3323
  %v3370 = vpack.c.b16 %v3326, %v3324
  %v3371 = vpack.c.b16 %v3329, %v3327
  %v3372 = vpack.c.b16 %v3330, %v3328
  %v3373 = vpack.c.b16 %v3333, %v3331
  %v3374 = vpack.c.b16 %v3334, %v3332
  %v3375 = vpack.c.b16 %v3337, %v3335
  %v3376 = vpack.c.b16 %v3338, %v3336
  %v3377 = vpack.c.b16 %v3341, %v3339
  %v3378 = vpack.c.b16 %v3342, %v3340
  %v3379 = vpack.c.b16 %v3345, %v3343
  %v3380 = vpack.c.b16 %v3346, %v3344
  %v3381 = vpack.c.b16 %v3349, %v3347
  %v3382 = vpack.c.b16 %v3350, %v3348
  %v3419 = vunpack.c.l.b16 %v3267
  %v3420 = vunpack.c.h.b16 %v3267
  %v3421 = vunpack.c.l.b16 %v3268
  %v3422 = vunpack.c.h.b16 %v3268
  %v3423 = vunpack.c.l.b16 %v3269
  %v3424 = vunpack.c.h.b16 %v3269
  %v3425 = vunpack.c.l.b16 %v3270
  %v3426 = vunpack.c.h.b16 %v3270
  %v3427 = vunpack.c.l.b16 %v3271
  %v3428 = vunpack.c.h.b16 %v3271
  %v3429 = vunpack.c.l.b16 %v3272
  %v3430 = vunpack.c.h.b16 %v3272
  %v3431 = vunpack.c.l.b16 %v3273
  %v3432 = vunpack.c.h.b16 %v3273
  %v3433 = vunpack.c.l.b16 %v3274
  %v3434 = vunpack.c.h.b16 %v3274
  %v3435 = vunpack.c.l.b16 %v3275
  %v3436 = vunpack.c.h.b16 %v3275
  %v3437 = vunpack.c.l.b16 %v3276
  %v3438 = vunpack.c.h.b16 %v3276
  %v3439 = vunpack.c.l.b16 %v3277
  %v3440 = vunpack.c.h.b16 %v3277
  %v3441 = vunpack.c.l.b16 %v3278
  %v3442 = vunpack.c.h.b16 %v3278
  %v3443 = vunpack.c.l.b16 %v3279
  %v3444 = vunpack.c.h.b16 %v3279
  %v3445 = vunpack.c.l.b16 %v3280
  %v3446 = vunpack.c.h.b16 %v3280
  %v3447 = vunpack.c.l.b16 %v3281
  %v3448 = vunpack.c.h.b16 %v3281
  %v3449 = vunpack.c.l.b16 %v3282
  %v3450 = vunpack.c.h.b16 %v3282
  %v3451 = vunpack.c.l.b16 %v3283
  %v3452 = vunpack.c.h.b16 %v3283
  %v3453 = vunpack.c.l.b16 %v3284
  %v3454 = vunpack.c.h.b16 %v3284
  %v3455 = vunpack.c.l.b16 %v3285
  %v3456 = vunpack.c.h.b16 %v3285
  %v3457 = vunpack.c.l.b16 %v3286
  %v3458 = vunpack.c.h.b16 %v3286
  %v3459 = vpack.c.b16 %v3421, %v3419
  %v3460 = vpack.c.b16 %v3422, %v3420
  %v3461 = vpack.c.b16 %v3425, %v3423
  %v3462 = vpack.c.b16 %v3426, %v3424
  %v3463 = vpack.c.b16 %v3429, %v3427
  %v3464 = vpack.c.b16 %v3430, %v3428
  %v3465 = vpack.c.b16 %v3433, %v3431
  %v3466 = vpack.c.b16 %v3434, %v3432
  %v3467 = vpack.c.b16 %v3437, %v3435
  %v3468 = vpack.c.b16 %v3438, %v3436
  %v3469 = vpack.c.b16 %v3441, %v3439
  %v3470 = vpack.c.b16 %v3442, %v3440
  %v3471 = vpack.c.b16 %v3445, %v3443
  %v3472 = vpack.c.b16 %v3446, %v3444
  %v3473 = vpack.c.b16 %v3449, %v3447
  %v3474 = vpack.c.b16 %v3450, %v3448
  %v3475 = vpack.c.b16 %v3453, %v3451
  %v3476 = vpack.c.b16 %v3454, %v3452
  %v3477 = vpack.c.b16 %v3457, %v3455
  %v3478 = vpack.c.b16 %v3458, %v3456
  %v3500 = vsel %vm750, %v3352, 0
  %v3503 = vsel %vm750, %v3354, 0
  %v3506 = vsel %vm750, %v3356, 0
  %v3509 = vsel %vm750, %v3358, 0
  %v3512 = vsel %vm750, %v3360, 0
  %v3515 = vsel %vm750, %v3362, 0
  %v3518 = vsel %vm750, %v3364, 0
  %v3521 = vsel %vm750, %v3366, 0
  %v3524 = vsel %vm750, %v3368, 0
  %v3527 = vsel %vm750, %v3370, 0
  %v3530 = vsel %vm750, %v3372, 0
  %v3533 = vsel %vm750, %v3374, 0
  %v3536 = vsel %vm750, %v3376, 0
  %v3539 = vsel %vm750, %v3378, 0
  %v3542 = vsel %vm750, %v3380, 0
  %v3545 = vsel %vm750, %v3382, 0
  %3547 = vmatprep.subr.bf16.mxu0 %v3460
  %3548 = vmatpush1.bf16.msra.mxu0 %v3459
  %3549 = vmatprep.subr.bf16.mxu0 %v3462
  %3550 = vmatpush1.bf16.msra.mxu0 %v3461
  %3551 = vmatprep.subr.bf16.mxu0 %v3464
  %3552 = vmatpush1.bf16.msra.mxu0 %v3463
  %3553 = vmatprep.subr.bf16.mxu0 %v3466
  %3554 = vmatpush1.bf16.msra.mxu0 %v3465
  %3555 = vmatprep.subr.bf16.mxu0 %v3468
  %3556 = vmatpush1.bf16.msra.mxu0 %v3467
  %3557 = vmatprep.subr.bf16.mxu0 %v3470
  %3558 = vmatpush1.bf16.msra.mxu0 %v3469
  %3559 = vmatprep.subr.bf16.mxu0 %v3472
  %3560 = vmatpush1.bf16.msra.mxu0 %v3471
  %3561 = vmatprep.subr.bf16.mxu0 %v3474
  %3562 = vmatpush1.bf16.msra.mxu0 %v3473
  %3563 = vmatprep.subr.bf16.mxu0 %v3476
  %3564 = vmatpush1.bf16.msra.mxu0 %v3475
  %3565 = vmatprep.subr.bf16.mxu0 %v3478
  %3566 = vmatpush1.bf16.msra.mxu0 %v3477
  %3567 = vmatprep.subr.bf16.mxu0 0
  %3568 = vmatpush1.bf16.msra.mxu0 0
  %3569 = vmatprep.subr.bf16.mxu0 0
  %3570 = vmatpush1.bf16.msra.mxu0 0
  %3571 = vmatprep.subr.bf16.mxu0 0
  %3572 = vmatpush1.bf16.msra.mxu0 0
  %3573 = vmatprep.subr.bf16.mxu0 0
  %3574 = vmatpush1.bf16.msra.mxu0 0
  %3575 = vmatprep.subr.bf16.mxu0 0
  %3576 = vmatpush1.bf16.msra.mxu0 0
  %3577 = vmatprep.subr.bf16.mxu0 0
  %3578 = vmatpush1.bf16.msra.mxu0 0
  %3579 = vmatprep.mubr.bf16.mxu0 %v3500
  %3580 = vmatmul.mubr.bf16.gmra.mrb[0].mxu0 %v3351
  %v3581 = vpop.f32.mrb[0].mxu0
  %v3582 = vadd.f32 0.0, %v3581
  %v3583 = vpop.f32.mrb[0].mxu0
  %v3584 = vadd.f32 0.0, %v3583
  %v3585 = vpop.f32.mrb[0].mxu0
  %v3586 = vadd.f32 0.0, %v3585
  %v3587 = vpop.f32.mrb[0].mxu0
  %v3588 = vadd.f32 0.0, %v3587
  %3589 = vmatprep.mubr.bf16.mxu0 %v3503
  %3590 = vmatmul.mubr.bf16.gmra.mrb[0].mxu0 %v3353
  %v3591 = vpop.f32.mrb[0].mxu0
  %v3592 = vadd.f32 0.0, %v3591
  %v3593 = vpop.f32.mrb[0].mxu0
  %v3594 = vadd.f32 0.0, %v3593
  %v3595 = vpop.f32.mrb[0].mxu0
  %v3596 = vadd.f32 0.0, %v3595
  %v3597 = vpop.f32.mrb[0].mxu0
  %v3598 = vadd.f32 0.0, %v3597
  %3599 = vmatprep.mubr.bf16.mxu0 %v3506
  %3600 = vmatmul.mubr.bf16.gmra.mrb[0].mxu0 %v3355
  %v3601 = vpop.f32.mrb[0].mxu0
  %v3602 = vadd.f32 0.0, %v3601
  %v3603 = vpop.f32.mrb[0].mxu0
  %v3604 = vadd.f32 0.0, %v3603
  %v3605 = vpop.f32.mrb[0].mxu0
  %v3606 = vadd.f32 0.0, %v3605
  %v3607 = vpop.f32.mrb[0].mxu0
  %v3608 = vadd.f32 0.0, %v3607
  %3609 = vmatprep.mubr.bf16.mxu0 %v3509
  %3610 = vmatmul.mubr.bf16.gmra.mrb[0].mxu0 %v3357
  %v3611 = vpop.f32.mrb[0].mxu0
  %v3612 = vadd.f32 0.0, %v3611
  %v3613 = vpop.f32.mrb[0].mxu0
  %v3614 = vadd.f32 0.0, %v3613
  %v3615 = vpop.f32.mrb[0].mxu0
  %v3616 = vadd.f32 0.0, %v3615
  %v3617 = vpop.f32.mrb[0].mxu0
  %v3618 = vadd.f32 0.0, %v3617
  %3619 = vmatprep.mubr.bf16.mxu0 %v3512
  %3620 = vmatmul.mubr.bf16.gmra.mrb[0].mxu0 %v3359
  %v3621 = vpop.f32.mrb[0].mxu0
  %v3622 = vadd.f32 0.0, %v3621
  %v3623 = vpop.f32.mrb[0].mxu0
  %v3624 = vadd.f32 0.0, %v3623
  %v3625 = vpop.f32.mrb[0].mxu0
  %v3626 = vadd.f32 0.0, %v3625
  %v3627 = vpop.f32.mrb[0].mxu0
  %v3628 = vadd.f32 0.0, %v3627
  %3629 = vmatprep.mubr.bf16.mxu0 %v3515
  %3630 = vmatmul.mubr.bf16.gmra.mrb[0].mxu0 %v3361
  %v3631 = vpop.f32.mrb[0].mxu0
  %v3632 = vadd.f32 0.0, %v3631
  %v3633 = vpop.f32.mrb[0].mxu0
  %v3634 = vadd.f32 0.0, %v3633
  %v3635 = vpop.f32.mrb[0].mxu0
  %v3636 = vadd.f32 0.0, %v3635
  %v3637 = vpop.f32.mrb[0].mxu0
  %v3638 = vadd.f32 0.0, %v3637
  %3639 = vmatprep.mubr.bf16.mxu0 %v3518
  %3640 = vmatmul.mubr.bf16.gmra.mrb[0].mxu0 %v3363
  %v3641 = vpop.f32.mrb[0].mxu0
  %v3642 = vadd.f32 0.0, %v3641
  %v3643 = vpop.f32.mrb[0].mxu0
  %v3644 = vadd.f32 0.0, %v3643
  %v3645 = vpop.f32.mrb[0].mxu0
  %v3646 = vadd.f32 0.0, %v3645
  %v3647 = vpop.f32.mrb[0].mxu0
  %v3648 = vadd.f32 0.0, %v3647
  %3649 = vmatprep.mubr.bf16.mxu0 %v3521
  %3650 = vmatmul.mubr.bf16.gmra.mrb[0].mxu0 %v3365
  %v3651 = vpop.f32.mrb[0].mxu0
  %v3652 = vadd.f32 0.0, %v3651
  %v3653 = vpop.f32.mrb[0].mxu0
  %v3654 = vadd.f32 0.0, %v3653
  %v3655 = vpop.f32.mrb[0].mxu0
  %v3656 = vadd.f32 0.0, %v3655
  %v3657 = vpop.f32.mrb[0].mxu0
  %v3658 = vadd.f32 0.0, %v3657
  %3659 = vmatprep.mubr.bf16.mxu0 %v3524
  %3660 = vmatmul.mubr.bf16.gmra.mrb[0].mxu0 %v3367
  %v3661 = vpop.f32.mrb[0].mxu0
  %v3662 = vadd.f32 0.0, %v3661
  %v3663 = vpop.f32.mrb[0].mxu0
  %v3664 = vadd.f32 0.0, %v3663
  %v3665 = vpop.f32.mrb[0].mxu0
  %v3666 = vadd.f32 0.0, %v3665
  %v3667 = vpop.f32.mrb[0].mxu0
  %v3668 = vadd.f32 0.0, %v3667
  %3669 = vmatprep.mubr.bf16.mxu0 %v3527
  %3670 = vmatmul.mubr.bf16.gmra.mrb[0].mxu0 %v3369
  %v3671 = vpop.f32.mrb[0].mxu0
  %v3672 = vadd.f32 0.0, %v3671
  %v3673 = vpop.f32.mrb[0].mxu0
  %v3674 = vadd.f32 0.0, %v3673
  %v3675 = vpop.f32.mrb[0].mxu0
  %v3676 = vadd.f32 0.0, %v3675
  %v3677 = vpop.f32.mrb[0].mxu0
  %v3678 = vadd.f32 0.0, %v3677
  %3679 = vmatprep.mubr.bf16.mxu0 %v3530
  %3680 = vmatmul.mubr.bf16.gmra.mrb[0].mxu0 %v3371
  %v3681 = vpop.f32.mrb[0].mxu0
  %v3682 = vadd.f32 0.0, %v3681
  %v3683 = vpop.f32.mrb[0].mxu0
  %v3684 = vadd.f32 0.0, %v3683
  %v3685 = vpop.f32.mrb[0].mxu0
  %v3686 = vadd.f32 0.0, %v3685
  %v3687 = vpop.f32.mrb[0].mxu0
  %v3688 = vadd.f32 0.0, %v3687
  %3689 = vmatprep.mubr.bf16.mxu0 %v3533
  %3690 = vmatmul.mubr.bf16.gmra.mrb[0].mxu0 %v3373
  %v3691 = vpop.f32.mrb[0].mxu0
  %v3692 = vadd.f32 0.0, %v3691
  %v3693 = vpop.f32.mrb[0].mxu0
  %v3694 = vadd.f32 0.0, %v3693
  %v3695 = vpop.f32.mrb[0].mxu0
  %v3696 = vadd.f32 0.0, %v3695
  %v3697 = vpop.f32.mrb[0].mxu0
  %v3698 = vadd.f32 0.0, %v3697
  %3699 = vmatprep.mubr.bf16.mxu0 %v3536
  %3700 = vmatmul.mubr.bf16.gmra.mrb[0].mxu0 %v3375
  %v3701 = vpop.f32.mrb[0].mxu0
  %v3702 = vadd.f32 0.0, %v3701
  %v3703 = vpop.f32.mrb[0].mxu0
  %v3704 = vadd.f32 0.0, %v3703
  %v3705 = vpop.f32.mrb[0].mxu0
  %v3706 = vadd.f32 0.0, %v3705
  %v3707 = vpop.f32.mrb[0].mxu0
  %v3708 = vadd.f32 0.0, %v3707
  %3709 = vmatprep.mubr.bf16.mxu0 %v3539
  %3710 = vmatmul.mubr.bf16.gmra.mrb[0].mxu0 %v3377
  %v3711 = vpop.f32.mrb[0].mxu0
  %v3712 = vadd.f32 0.0, %v3711
  %v3713 = vpop.f32.mrb[0].mxu0
  %v3714 = vadd.f32 0.0, %v3713
  %v3715 = vpop.f32.mrb[0].mxu0
  %v3716 = vadd.f32 0.0, %v3715
  %v3717 = vpop.f32.mrb[0].mxu0
  %v3718 = vadd.f32 0.0, %v3717
  %3719 = vmatprep.mubr.bf16.mxu0 %v3542
  %3720 = vmatmul.mubr.bf16.gmra.mrb[0].mxu0 %v3379
  %v3721 = vpop.f32.mrb[0].mxu0
  %v3722 = vadd.f32 0.0, %v3721
  %v3723 = vpop.f32.mrb[0].mxu0
  %v3724 = vadd.f32 0.0, %v3723
  %v3725 = vpop.f32.mrb[0].mxu0
  %v3726 = vadd.f32 0.0, %v3725
  %v3727 = vpop.f32.mrb[0].mxu0
  %v3728 = vadd.f32 0.0, %v3727
  %3729 = vmatprep.mubr.bf16.mxu0 %v3545
  %3730 = vmatmul.mubr.bf16.gmra.mrb[0].mxu0 %v3381
  %v3731 = vpop.f32.mrb[0].mxu0
  %v3732 = vadd.f32 0.0, %v3731
  %v3733 = vpop.f32.mrb[0].mxu0
  %v3734 = vadd.f32 0.0, %v3733
  %v3735 = vpop.f32.mrb[0].mxu0
  %v3736 = vadd.f32 0.0, %v3735
  %v3737 = vpop.f32.mrb[0].mxu0
  %v3738 = vadd.f32 0.0, %v3737
  %3739 = vdwg.mxu0
  %v3740 = vadd.f32 %v3039, %v3582
  %v3741 = vadd.f32 %v3040, %v3584
  %v3742 = vadd.f32 %v3041, %v3586
  %v3743 = vadd.f32 %v3042, %v3588
  %v3744 = vadd.f32 %v3043, %v3592
  %v3745 = vadd.f32 %v3044, %v3594
  %v3746 = vadd.f32 %v3045, %v3596
  %v3747 = vadd.f32 %v3046, %v3598
  %v3748 = vadd.f32 %v3047, %v3602
  %v3749 = vadd.f32 %v3048, %v3604
  %v3750 = vadd.f32 %v3049, %v3606
  %v3751 = vadd.f32 %v3050, %v3608
  %v3752 = vadd.f32 %v3051, %v3612
  %v3753 = vadd.f32 %v3052, %v3614
  %v3754 = vadd.f32 %v3053, %v3616
  %v3755 = vadd.f32 %v3054, %v3618
  %v3756 = vadd.f32 %v3055, %v3622
  %v3757 = vadd.f32 %v3056, %v3624
  %v3758 = vadd.f32 %v3057, %v3626
  %v3759 = vadd.f32 %v3058, %v3628
  %v3760 = vadd.f32 %v3059, %v3632
  %v3761 = vadd.f32 %v3060, %v3634
  %v3762 = vadd.f32 %v3061, %v3636
  %v3763 = vadd.f32 %v3062, %v3638
  %v3764 = vadd.f32 %v3063, %v3642
  %v3765 = vadd.f32 %v3064, %v3644
  %v3766 = vadd.f32 %v3065, %v3646
  %v3767 = vadd.f32 %v3066, %v3648
  %v3768 = vadd.f32 %v3067, %v3652
  %v3769 = vadd.f32 %v3068, %v3654
  %v3770 = vadd.f32 %v3069, %v3656
  %v3771 = vadd.f32 %v3070, %v3658
  %v3772 = vadd.f32 %v3071, %v3662
  %v3773 = vadd.f32 %v3072, %v3664
  %v3774 = vadd.f32 %v3073, %v3666
  %v3775 = vadd.f32 %v3074, %v3668
  %v3776 = vadd.f32 %v3075, %v3672
  %v3777 = vadd.f32 %v3076, %v3674
  %v3778 = vadd.f32 %v3077, %v3676
  %v3779 = vadd.f32 %v3078, %v3678
  %v3780 = vadd.f32 %v3079, %v3682
  %v3781 = vadd.f32 %v3080, %v3684
  %v3782 = vadd.f32 %v3081, %v3686
  %v3783 = vadd.f32 %v3082, %v3688
  %v3784 = vadd.f32 %v3083, %v3692
  %v3785 = vadd.f32 %v3084, %v3694
  %v3786 = vadd.f32 %v3085, %v3696
  %v3787 = vadd.f32 %v3086, %v3698
  %v3788 = vadd.f32 %v3087, %v3702
  %v3789 = vadd.f32 %v3088, %v3704
  %v3790 = vadd.f32 %v3089, %v3706
  %v3791 = vadd.f32 %v3090, %v3708
  %v3792 = vadd.f32 %v3091, %v3712
  %v3793 = vadd.f32 %v3092, %v3714
  %v3794 = vadd.f32 %v3093, %v3716
  %v3795 = vadd.f32 %v3094, %v3718
  %v3796 = vadd.f32 %v3095, %v3722
  %v3797 = vadd.f32 %v3096, %v3724
  %v3798 = vadd.f32 %v3097, %v3726
  %v3799 = vadd.f32 %v3098, %v3728
  %v3800 = vadd.f32 %v3099, %v3732
  %v3801 = vadd.f32 %v3100, %v3734
  %v3802 = vadd.f32 %v3101, %v3736
  %v3803 = vadd.f32 %v3102, %v3738
  %v3804 = vld [vmem:[%s0 + $0x10] sm:$0x77]
  %v3805 = vld [vmem:[%s0 + $0x28] sm:$0x77]
  %v3806 = vld [vmem:[%s0 + $0x40] sm:$0x77]
  %v3807 = vld [vmem:[%s0 + $0x58] sm:$0x77]
  %v3808 = vld [vmem:[%s0 + $0x70] sm:$0x77]
  %v3809 = vld [vmem:[%s0 + $0x88] sm:$0x77]
  %v3810 = vld [vmem:[%s0 + $0xa0] sm:$0x77]
  %v3811 = vld [vmem:[%s0 + $0xb8] sm:$0x77]
  %v3812 = vld [vmem:[%s0 + $0xd0] sm:$0x77]
  %v3813 = vld [vmem:[%s0 + $0xe8] sm:$0x77]
  %v3814 = vld [vmem:[%s0 + $0x100] sm:$0x77]
  %v3815 = vld [vmem:[%s0 + $0x118] sm:$0x77]
  %v3816 = vld [vmem:[%s0 + $0x130] sm:$0x77]
  %v3817 = vld [vmem:[%s0 + $0x148] sm:$0x77]
  %v3818 = vld [vmem:[%s0 + $0x160] sm:$0x77]
  %v3819 = vld [vmem:[%s0 + $0x178] sm:$0x77]
  %vm3820 = vsmask.f32 1280
  %vm3821 = vsmask.f32 5392
  %vm3822 = vmor %vm3820, %vm3821
  %v3824 = vshrl.u32 %v3103, 16
  %v3826 = vrot.slane %v3824, 6
  %v3827 = vshll.u32 %v3103, 16
  %v3829 = vrot.slane %v3827, 7
  %v3830 = vor.u32 %v3826, %v3829
  %v3831 = vrot.slane %v3830, 4
  %v3832 = vrot.slane %v147, 6
  %v3833 = vrot.slane %v143, 7
  %v3834 = vor.u32 %v3832, %v3833
  %v3835 = vsel %vm3822, %v3831, %v3834
  %v3836 = vrot.slane %v3834, 4
  %v3838 = vshrl.u32 %v3804, 16
  %v3840 = vrot.slane %v3838, 6
  %v3841 = vshll.u32 %v3804, 16
  %v3843 = vrot.slane %v3841, 7
  %v3844 = vor.u32 %v3840, %v3843
  %v3845 = vsel %vm3822, %v3836, %v3844
  %v3847 = vshrl.u32 %v3104, 16
  %v3849 = vrot.slane %v3847, 6
  %v3850 = vshll.u32 %v3104, 16
  %v3852 = vrot.slane %v3850, 7
  %v3853 = vor.u32 %v3849, %v3852
  %v3854 = vrot.slane %v3853, 4
  %v3855 = vrot.slane %v171, 6
  %v3856 = vrot.slane %v167, 7
  %v3857 = vor.u32 %v3855, %v3856
  %v3858 = vsel %vm3822, %v3854, %v3857
  %v3859 = vrot.slane %v3857, 4
  %v3861 = vshrl.u32 %v3805, 16
  %v3863 = vrot.slane %v3861, 6
  %v3864 = vshll.u32 %v3805, 16
  %v3866 = vrot.slane %v3864, 7
  %v3867 = vor.u32 %v3863, %v3866
  %v3868 = vsel %vm3822, %v3859, %v3867
  %v3870 = vshrl.u32 %v3105, 16
  %v3872 = vrot.slane %v3870, 6
  %v3873 = vshll.u32 %v3105, 16
  %v3875 = vrot.slane %v3873, 7
  %v3876 = vor.u32 %v3872, %v3875
  %v3877 = vrot.slane %v3876, 4
  %v3878 = vrot.slane %v195, 6
  %v3879 = vrot.slane %v191, 7
  %v3880 = vor.u32 %v3878, %v3879
  %v3881 = vsel %vm3822, %v3877, %v3880
  %v3882 = vrot.slane %v3880, 4
  %v3884 = vshrl.u32 %v3806, 16
  %v3886 = vrot.slane %v3884, 6
  %v3887 = vshll.u32 %v3806, 16
  %v3889 = vrot.slane %v3887, 7
  %v3890 = vor.u32 %v3886, %v3889
  %v3891 = vsel %vm3822, %v3882, %v3890
  %v3893 = vshrl.u32 %v3106, 16
  %v3895 = vrot.slane %v3893, 6
  %v3896 = vshll.u32 %v3106, 16
  %v3898 = vrot.slane %v3896, 7
  %v3899 = vor.u32 %v3895, %v3898
  %v3900 = vrot.slane %v3899, 4
  %v3901 = vrot.slane %v219, 6
  %v3902 = vrot.slane %v215, 7
  %v3903 = vor.u32 %v3901, %v3902
  %v3904 = vsel %vm3822, %v3900, %v3903
  %v3905 = vrot.slane %v3903, 4
  %v3907 = vshrl.u32 %v3807, 16
  %v3909 = vrot.slane %v3907, 6
  %v3910 = vshll.u32 %v3807, 16
  %v3912 = vrot.slane %v3910, 7
  %v3913 = vor.u32 %v3909, %v3912
  %v3914 = vsel %vm3822, %v3905, %v3913
  %v3916 = vshrl.u32 %v3107, 16
  %v3918 = vrot.slane %v3916, 6
  %v3919 = vshll.u32 %v3107, 16
  %v3921 = vrot.slane %v3919, 7
  %v3922 = vor.u32 %v3918, %v3921
  %v3923 = vrot.slane %v3922, 4
  %v3924 = vrot.slane %v243, 6
  %v3925 = vrot.slane %v239, 7
  %v3926 = vor.u32 %v3924, %v3925
  %v3927 = vsel %vm3822, %v3923, %v3926
  %v3928 = vrot.slane %v3926, 4
  %v3930 = vshrl.u32 %v3808, 16
  %v3932 = vrot.slane %v3930, 6
  %v3933 = vshll.u32 %v3808, 16
  %v3935 = vrot.slane %v3933, 7
  %v3936 = vor.u32 %v3932, %v3935
  %v3937 = vsel %vm3822, %v3928, %v3936
  %v3939 = vshrl.u32 %v3108, 16
  %v3941 = vrot.slane %v3939, 6
  %v3942 = vshll.u32 %v3108, 16
  %v3944 = vrot.slane %v3942, 7
  %v3945 = vor.u32 %v3941, %v3944
  %v3946 = vrot.slane %v3945, 4
  %v3947 = vrot.slane %v267, 6
  %v3948 = vrot.slane %v263, 7
  %v3949 = vor.u32 %v3947, %v3948
  %v3950 = vsel %vm3822, %v3946, %v3949
  %v3951 = vrot.slane %v3949, 4
  %v3953 = vshrl.u32 %v3809, 16
  %v3955 = vrot.slane %v3953, 6
  %v3956 = vshll.u32 %v3809, 16
  %v3958 = vrot.slane %v3956, 7
  %v3959 = vor.u32 %v3955, %v3958
  %v3960 = vsel %vm3822, %v3951, %v3959
  %v3962 = vshrl.u32 %v3109, 16
  %v3964 = vrot.slane %v3962, 6
  %v3965 = vshll.u32 %v3109, 16
  %v3967 = vrot.slane %v3965, 7
  %v3968 = vor.u32 %v3964, %v3967
  %v3969 = vrot.slane %v3968, 4
  %v3970 = vrot.slane %v291, 6
  %v3971 = vrot.slane %v287, 7
  %v3972 = vor.u32 %v3970, %v3971
  %v3973 = vsel %vm3822, %v3969, %v3972
  %v3974 = vrot.slane %v3972, 4
  %v3976 = vshrl.u32 %v3810, 16
  %v3978 = vrot.slane %v3976, 6
  %v3979 = vshll.u32 %v3810, 16
  %v3981 = vrot.slane %v3979, 7
  %v3982 = vor.u32 %v3978, %v3981
  %v3983 = vsel %vm3822, %v3974, %v3982
  %v3985 = vshrl.u32 %v3110, 16
  %v3987 = vrot.slane %v3985, 6
  %v3988 = vshll.u32 %v3110, 16
  %v3990 = vrot.slane %v3988, 7
  %v3991 = vor.u32 %v3987, %v3990
  %v3992 = vrot.slane %v3991, 4
  %v3993 = vrot.slane %v315, 6
  %v3994 = vrot.slane %v311, 7
  %v3995 = vor.u32 %v3993, %v3994
  %v3996 = vsel %vm3822, %v3992, %v3995
  %v3997 = vrot.slane %v3995, 4
  %v3999 = vshrl.u32 %v3811, 16
  %v4001 = vrot.slane %v3999, 6
  %v4002 = vshll.u32 %v3811, 16
  %v4004 = vrot.slane %v4002, 7
  %v4005 = vor.u32 %v4001, %v4004
  %v4006 = vsel %vm3822, %v3997, %v4005
  %v4008 = vshrl.u32 %v3111, 16
  %v4010 = vrot.slane %v4008, 6
  %v4011 = vshll.u32 %v3111, 16
  %v4013 = vrot.slane %v4011, 7
  %v4014 = vor.u32 %v4010, %v4013
  %v4015 = vrot.slane %v4014, 4
  %v4016 = vrot.slane %v339, 6
  %v4017 = vrot.slane %v335, 7
  %v4018 = vor.u32 %v4016, %v4017
  %v4019 = vsel %vm3822, %v4015, %v4018
  %v4020 = vrot.slane %v4018, 4
  %v4022 = vshrl.u32 %v3812, 16
  %v4024 = vrot.slane %v4022, 6
  %v4025 = vshll.u32 %v3812, 16
  %v4027 = vrot.slane %v4025, 7
  %v4028 = vor.u32 %v4024, %v4027
  %v4029 = vsel %vm3822, %v4020, %v4028
  %v4031 = vshrl.u32 %v3112, 16
  %v4033 = vrot.slane %v4031, 6
  %v4034 = vshll.u32 %v3112, 16
  %v4036 = vrot.slane %v4034, 7
  %v4037 = vor.u32 %v4033, %v4036
  %v4038 = vrot.slane %v4037, 4
  %v4039 = vrot.slane %v363, 6
  %v4040 = vrot.slane %v359, 7
  %v4041 = vor.u32 %v4039, %v4040
  %v4042 = vsel %vm3822, %v4038, %v4041
  %v4043 = vrot.slane %v4041, 4
  %v4045 = vshrl.u32 %v3813, 16
  %v4047 = vrot.slane %v4045, 6
  %v4048 = vshll.u32 %v3813, 16
  %v4050 = vrot.slane %v4048, 7
  %v4051 = vor.u32 %v4047, %v4050
  %v4052 = vsel %vm3822, %v4043, %v4051
  %v4054 = vshrl.u32 %v3113, 16
  %v4056 = vrot.slane %v4054, 6
  %v4057 = vshll.u32 %v3113, 16
  %v4059 = vrot.slane %v4057, 7
  %v4060 = vor.u32 %v4056, %v4059
  %v4061 = vrot.slane %v4060, 4
  %v4062 = vrot.slane %v387, 6
  %v4063 = vrot.slane %v383, 7
  %v4064 = vor.u32 %v4062, %v4063
  %v4065 = vsel %vm3822, %v4061, %v4064
  %v4066 = vrot.slane %v4064, 4
  %v4068 = vshrl.u32 %v3814, 16
  %v4070 = vrot.slane %v4068, 6
  %v4071 = vshll.u32 %v3814, 16
  %v4073 = vrot.slane %v4071, 7
  %v4074 = vor.u32 %v4070, %v4073
  %v4075 = vsel %vm3822, %v4066, %v4074
  %v4077 = vshrl.u32 %v3114, 16
  %v4079 = vrot.slane %v4077, 6
  %v4080 = vshll.u32 %v3114, 16
  %v4082 = vrot.slane %v4080, 7
  %v4083 = vor.u32 %v4079, %v4082
  %v4084 = vrot.slane %v4083, 4
  %v4085 = vrot.slane %v411, 6
  %v4086 = vrot.slane %v407, 7
  %v4087 = vor.u32 %v4085, %v4086
  %v4088 = vsel %vm3822, %v4084, %v4087
  %v4089 = vrot.slane %v4087, 4
  %v4091 = vshrl.u32 %v3815, 16
  %v4093 = vrot.slane %v4091, 6
  %v4094 = vshll.u32 %v3815, 16
  %v4096 = vrot.slane %v4094, 7
  %v4097 = vor.u32 %v4093, %v4096
  %v4098 = vsel %vm3822, %v4089, %v4097
  %v4100 = vshrl.u32 %v3115, 16
  %v4102 = vrot.slane %v4100, 6
  %v4103 = vshll.u32 %v3115, 16
  %v4105 = vrot.slane %v4103, 7
  %v4106 = vor.u32 %v4102, %v4105
  %v4107 = vrot.slane %v4106, 4
  %v4108 = vrot.slane %v435, 6
  %v4109 = vrot.slane %v431, 7
  %v4110 = vor.u32 %v4108, %v4109
  %v4111 = vsel %vm3822, %v4107, %v4110
  %v4112 = vrot.slane %v4110, 4
  %v4114 = vshrl.u32 %v3816, 16
  %v4116 = vrot.slane %v4114, 6
  %v4117 = vshll.u32 %v3816, 16
  %v4119 = vrot.slane %v4117, 7
  %v4120 = vor.u32 %v4116, %v4119
  %v4121 = vsel %vm3822, %v4112, %v4120
  %v4123 = vshrl.u32 %v3116, 16
  %v4125 = vrot.slane %v4123, 6
  %v4126 = vshll.u32 %v3116, 16
  %v4128 = vrot.slane %v4126, 7
  %v4129 = vor.u32 %v4125, %v4128
  %v4130 = vrot.slane %v4129, 4
  %v4131 = vrot.slane %v459, 6
  %v4132 = vrot.slane %v455, 7
  %v4133 = vor.u32 %v4131, %v4132
  %v4134 = vsel %vm3822, %v4130, %v4133
  %v4135 = vrot.slane %v4133, 4
  %v4137 = vshrl.u32 %v3817, 16
  %v4139 = vrot.slane %v4137, 6
  %v4140 = vshll.u32 %v3817, 16
  %v4142 = vrot.slane %v4140, 7
  %v4143 = vor.u32 %v4139, %v4142
  %v4144 = vsel %vm3822, %v4135, %v4143
  %v4146 = vshrl.u32 %v3117, 16
  %v4148 = vrot.slane %v4146, 6
  %v4149 = vshll.u32 %v3117, 16
  %v4151 = vrot.slane %v4149, 7
  %v4152 = vor.u32 %v4148, %v4151
  %v4153 = vrot.slane %v4152, 4
  %v4154 = vrot.slane %v483, 6
  %v4155 = vrot.slane %v479, 7
  %v4156 = vor.u32 %v4154, %v4155
  %v4157 = vsel %vm3822, %v4153, %v4156
  %v4158 = vrot.slane %v4156, 4
  %v4160 = vshrl.u32 %v3818, 16
  %v4162 = vrot.slane %v4160, 6
  %v4163 = vshll.u32 %v3818, 16
  %v4165 = vrot.slane %v4163, 7
  %v4166 = vor.u32 %v4162, %v4165
  %v4167 = vsel %vm3822, %v4158, %v4166
  %v4169 = vshrl.u32 %v3118, 16
  %v4171 = vrot.slane %v4169, 6
  %v4172 = vshll.u32 %v3118, 16
  %v4174 = vrot.slane %v4172, 7
  %v4175 = vor.u32 %v4171, %v4174
  %v4176 = vrot.slane %v4175, 4
  %v4177 = vrot.slane %v507, 6
  %v4178 = vrot.slane %v503, 7
  %v4179 = vor.u32 %v4177, %v4178
  %v4180 = vsel %vm3822, %v4176, %v4179
  %v4181 = vrot.slane %v4179, 4
  %v4183 = vshrl.u32 %v3819, 16
  %v4185 = vrot.slane %v4183, 6
  %v4186 = vshll.u32 %v3819, 16
  %v4188 = vrot.slane %v4186, 7
  %v4189 = vor.u32 %v4185, %v4188
  %v4190 = vsel %vm3822, %v4181, %v4189
  %s4191 = scalar_lea.vmem %s1, 800
  %v4192 = vld [vmem:[%s4191] sm:$0xff]
  %v4193 = vld [vmem:[%s4191 + $0x8] sm:$0xff]
  %v4194 = vld [vmem:[%s4191 + $0x10] sm:$0xff]
  %v4195 = vld [vmem:[%s4191 + $0x18] sm:$0xff]
  %v4196 = vld [vmem:[%s4191 + $0x20] sm:$0xff]
  %v4197 = vld [vmem:[%s4191 + $0x28] sm:$0xff]
  %v4198 = vld [vmem:[%s4191 + $0x30] sm:$0xff]
  %v4199 = vld [vmem:[%s4191 + $0x38] sm:$0xff]
  %v4200 = vld [vmem:[%s4191 + $0x40] sm:$0xff]
  %v4201 = vld [vmem:[%s4191 + $0x48] sm:$0xff]
  %v4202 = vld [vmem:[%s4191 + $0x50] sm:$0xff]
  %v4203 = vld [vmem:[%s4191 + $0x58] sm:$0xff]
  %v4204 = vld [vmem:[%s4191 + $0x60] sm:$0xff]
  %v4205 = vld [vmem:[%s4191 + $0x68] sm:$0xff]
  %v4206 = vld [vmem:[%s4191 + $0x70] sm:$0xff]
  %v4207 = vld [vmem:[%s4191 + $0x78] sm:$0xff]
  %v4208 = vld [vmem:[%s4191 + $0x80] sm:$0xff]
  %v4209 = vld [vmem:[%s4191 + $0x88] sm:$0xff]
  %v4210 = vld [vmem:[%s4191 + $0x90] sm:$0xff]
  %v4211 = vld [vmem:[%s4191 + $0x98] sm:$0xff]
  %v4212 = vunpack.c.l.b16 %v3835
  %v4213 = vunpack.c.h.b16 %v3835
  %v4214 = vunpack.c.l.b16 %v3845
  %v4215 = vunpack.c.h.b16 %v3845
  %v4216 = vunpack.c.l.b16 %v3858
  %v4217 = vunpack.c.h.b16 %v3858
  %v4218 = vunpack.c.l.b16 %v3868
  %v4219 = vunpack.c.h.b16 %v3868
  %v4220 = vunpack.c.l.b16 %v3881
  %v4221 = vunpack.c.h.b16 %v3881
  %v4222 = vunpack.c.l.b16 %v3891
  %v4223 = vunpack.c.h.b16 %v3891
  %v4224 = vunpack.c.l.b16 %v3904
  %v4225 = vunpack.c.h.b16 %v3904
  %v4226 = vunpack.c.l.b16 %v3914
  %v4227 = vunpack.c.h.b16 %v3914
  %v4228 = vunpack.c.l.b16 %v3927
  %v4229 = vunpack.c.h.b16 %v3927
  %v4230 = vunpack.c.l.b16 %v3937
  %v4231 = vunpack.c.h.b16 %v3937
  %v4232 = vunpack.c.l.b16 %v3950
  %v4233 = vunpack.c.h.b16 %v3950
  %v4234 = vunpack.c.l.b16 %v3960
  %v4235 = vunpack.c.h.b16 %v3960
  %v4236 = vunpack.c.l.b16 %v3973
  %v4237 = vunpack.c.h.b16 %v3973
  %v4238 = vunpack.c.l.b16 %v3983
  %v4239 = vunpack.c.h.b16 %v3983
  %v4240 = vunpack.c.l.b16 %v3996
  %v4241 = vunpack.c.h.b16 %v3996
  %v4242 = vunpack.c.l.b16 %v4006
  %v4243 = vunpack.c.h.b16 %v4006
  %v4244 = vunpack.c.l.b16 %v4019
  %v4245 = vunpack.c.h.b16 %v4019
  %v4246 = vunpack.c.l.b16 %v4029
  %v4247 = vunpack.c.h.b16 %v4029
  %v4248 = vunpack.c.l.b16 %v4042
  %v4249 = vunpack.c.h.b16 %v4042
  %v4250 = vunpack.c.l.b16 %v4052
  %v4251 = vunpack.c.h.b16 %v4052
  %v4252 = vunpack.c.l.b16 %v4065
  %v4253 = vunpack.c.h.b16 %v4065
  %v4254 = vunpack.c.l.b16 %v4075
  %v4255 = vunpack.c.h.b16 %v4075
  %v4256 = vunpack.c.l.b16 %v4088
  %v4257 = vunpack.c.h.b16 %v4088
  %v4258 = vunpack.c.l.b16 %v4098
  %v4259 = vunpack.c.h.b16 %v4098
  %v4260 = vunpack.c.l.b16 %v4111
  %v4261 = vunpack.c.h.b16 %v4111
  %v4262 = vunpack.c.l.b16 %v4121
  %v4263 = vunpack.c.h.b16 %v4121
  %v4264 = vunpack.c.l.b16 %v4134
  %v4265 = vunpack.c.h.b16 %v4134
  %v4266 = vunpack.c.l.b16 %v4144
  %v4267 = vunpack.c.h.b16 %v4144
  %v4268 = vunpack.c.l.b16 %v4157
  %v4269 = vunpack.c.h.b16 %v4157
  %v4270 = vunpack.c.l.b16 %v4167
  %v4271 = vunpack.c.h.b16 %v4167
  %v4272 = vunpack.c.l.b16 %v4180
  %v4273 = vunpack.c.h.b16 %v4180
  %v4274 = vunpack.c.l.b16 %v4190
  %v4275 = vunpack.c.h.b16 %v4190
  %v4276 = vpack.c.b16 %v4214, %v4212
  %v4277 = vpack.c.b16 %v4215, %v4213
  %v4278 = vpack.c.b16 %v4218, %v4216
  %v4279 = vpack.c.b16 %v4219, %v4217
  %v4280 = vpack.c.b16 %v4222, %v4220
  %v4281 = vpack.c.b16 %v4223, %v4221
  %v4282 = vpack.c.b16 %v4226, %v4224
  %v4283 = vpack.c.b16 %v4227, %v4225
  %v4284 = vpack.c.b16 %v4230, %v4228
  %v4285 = vpack.c.b16 %v4231, %v4229
  %v4286 = vpack.c.b16 %v4234, %v4232
  %v4287 = vpack.c.b16 %v4235, %v4233
  %v4288 = vpack.c.b16 %v4238, %v4236
  %v4289 = vpack.c.b16 %v4239, %v4237
  %v4290 = vpack.c.b16 %v4242, %v4240
  %v4291 = vpack.c.b16 %v4243, %v4241
  %v4292 = vpack.c.b16 %v4246, %v4244
  %v4293 = vpack.c.b16 %v4247, %v4245
  %v4294 = vpack.c.b16 %v4250, %v4248
  %v4295 = vpack.c.b16 %v4251, %v4249
  %v4296 = vpack.c.b16 %v4254, %v4252
  %v4297 = vpack.c.b16 %v4255, %v4253
  %v4298 = vpack.c.b16 %v4258, %v4256
  %v4299 = vpack.c.b16 %v4259, %v4257
  %v4300 = vpack.c.b16 %v4262, %v4260
  %v4301 = vpack.c.b16 %v4263, %v4261
  %v4302 = vpack.c.b16 %v4266, %v4264
  %v4303 = vpack.c.b16 %v4267, %v4265
  %v4304 = vpack.c.b16 %v4270, %v4268
  %v4305 = vpack.c.b16 %v4271, %v4269
  %v4306 = vpack.c.b16 %v4274, %v4272
  %v4307 = vpack.c.b16 %v4275, %v4273
  %v4344 = vunpack.c.l.b16 %v4192
  %v4345 = vunpack.c.h.b16 %v4192
  %v4346 = vunpack.c.l.b16 %v4193
  %v4347 = vunpack.c.h.b16 %v4193
  %v4348 = vunpack.c.l.b16 %v4194
  %v4349 = vunpack.c.h.b16 %v4194
  %v4350 = vunpack.c.l.b16 %v4195
  %v4351 = vunpack.c.h.b16 %v4195
  %v4352 = vunpack.c.l.b16 %v4196
  %v4353 = vunpack.c.h.b16 %v4196
  %v4354 = vunpack.c.l.b16 %v4197
  %v4355 = vunpack.c.h.b16 %v4197
  %v4356 = vunpack.c.l.b16 %v4198
  %v4357 = vunpack.c.h.b16 %v4198
  %v4358 = vunpack.c.l.b16 %v4199
  %v4359 = vunpack.c.h.b16 %v4199
  %v4360 = vunpack.c.l.b16 %v4200
  %v4361 = vunpack.c.h.b16 %v4200
  %v4362 = vunpack.c.l.b16 %v4201
  %v4363 = vunpack.c.h.b16 %v4201
  %v4364 = vunpack.c.l.b16 %v4202
  %v4365 = vunpack.c.h.b16 %v4202
  %v4366 = vunpack.c.l.b16 %v4203
  %v4367 = vunpack.c.h.b16 %v4203
  %v4368 = vunpack.c.l.b16 %v4204
  %v4369 = vunpack.c.h.b16 %v4204
  %v4370 = vunpack.c.l.b16 %v4205
  %v4371 = vunpack.c.h.b16 %v4205
  %v4372 = vunpack.c.l.b16 %v4206
  %v4373 = vunpack.c.h.b16 %v4206
  %v4374 = vunpack.c.l.b16 %v4207
  %v4375 = vunpack.c.h.b16 %v4207
  %v4376 = vunpack.c.l.b16 %v4208
  %v4377 = vunpack.c.h.b16 %v4208
  %v4378 = vunpack.c.l.b16 %v4209
  %v4379 = vunpack.c.h.b16 %v4209
  %v4380 = vunpack.c.l.b16 %v4210
  %v4381 = vunpack.c.h.b16 %v4210
  %v4382 = vunpack.c.l.b16 %v4211
  %v4383 = vunpack.c.h.b16 %v4211
  %v4384 = vpack.c.b16 %v4346, %v4344
  %v4385 = vpack.c.b16 %v4347, %v4345
  %v4386 = vpack.c.b16 %v4350, %v4348
  %v4387 = vpack.c.b16 %v4351, %v4349
  %v4388 = vpack.c.b16 %v4354, %v4352
  %v4389 = vpack.c.b16 %v4355, %v4353
  %v4390 = vpack.c.b16 %v4358, %v4356
  %v4391 = vpack.c.b16 %v4359, %v4357
  %v4392 = vpack.c.b16 %v4362, %v4360
  %v4393 = vpack.c.b16 %v4363, %v4361
  %v4394 = vpack.c.b16 %v4366, %v4364
  %v4395 = vpack.c.b16 %v4367, %v4365
  %v4396 = vpack.c.b16 %v4370, %v4368
  %v4397 = vpack.c.b16 %v4371, %v4369
  %v4398 = vpack.c.b16 %v4374, %v4372
  %v4399 = vpack.c.b16 %v4375, %v4373
  %v4400 = vpack.c.b16 %v4378, %v4376
  %v4401 = vpack.c.b16 %v4379, %v4377
  %v4402 = vpack.c.b16 %v4382, %v4380
  %v4403 = vpack.c.b16 %v4383, %v4381
  %v4425 = vsel %vm750, %v4277, 0
  %v4428 = vsel %vm750, %v4279, 0
  %v4431 = vsel %vm750, %v4281, 0
  %v4434 = vsel %vm750, %v4283, 0
  %v4437 = vsel %vm750, %v4285, 0
  %v4440 = vsel %vm750, %v4287, 0
  %v4443 = vsel %vm750, %v4289, 0
  %v4446 = vsel %vm750, %v4291, 0
  %v4449 = vsel %vm750, %v4293, 0
  %v4452 = vsel %vm750, %v4295, 0
  %v4455 = vsel %vm750, %v4297, 0
  %v4458 = vsel %vm750, %v4299, 0
  %v4461 = vsel %vm750, %v4301, 0
  %v4464 = vsel %vm750, %v4303, 0
  %v4467 = vsel %vm750, %v4305, 0
  %v4470 = vsel %vm750, %v4307, 0
  %4472 = vmatprep.subr.bf16.mxu0 %v4385
  %4473 = vmatpush1.bf16.msra.mxu0 %v4384
  %4474 = vmatprep.subr.bf16.mxu0 %v4387
  %4475 = vmatpush1.bf16.msra.mxu0 %v4386
  %4476 = vmatprep.subr.bf16.mxu0 %v4389
  %4477 = vmatpush1.bf16.msra.mxu0 %v4388
  %4478 = vmatprep.subr.bf16.mxu0 %v4391
  %4479 = vmatpush1.bf16.msra.mxu0 %v4390
  %4480 = vmatprep.subr.bf16.mxu0 %v4393
  %4481 = vmatpush1.bf16.msra.mxu0 %v4392
  %4482 = vmatprep.subr.bf16.mxu0 %v4395
  %4483 = vmatpush1.bf16.msra.mxu0 %v4394
  %4484 = vmatprep.subr.bf16.mxu0 %v4397
  %4485 = vmatpush1.bf16.msra.mxu0 %v4396
  %4486 = vmatprep.subr.bf16.mxu0 %v4399
  %4487 = vmatpush1.bf16.msra.mxu0 %v4398
  %4488 = vmatprep.subr.bf16.mxu0 %v4401
  %4489 = vmatpush1.bf16.msra.mxu0 %v4400
  %4490 = vmatprep.subr.bf16.mxu0 %v4403
  %4491 = vmatpush1.bf16.msra.mxu0 %v4402
  %4492 = vmatprep.subr.bf16.mxu0 0
  %4493 = vmatpush1.bf16.msra.mxu0 0
  %4494 = vmatprep.subr.bf16.mxu0 0
  %4495 = vmatpush1.bf16.msra.mxu0 0
  %4496 = vmatprep.subr.bf16.mxu0 0
  %4497 = vmatpush1.bf16.msra.mxu0 0
  %4498 = vmatprep.subr.bf16.mxu0 0
  %4499 = vmatpush1.bf16.msra.mxu0 0
  %4500 = vmatprep.subr.bf16.mxu0 0
  %4501 = vmatpush1.bf16.msra.mxu0 0
  %4502 = vmatprep.subr.bf16.mxu0 0
  %4503 = vmatpush1.bf16.msra.mxu0 0
  %4504 = vmatprep.mubr.bf16.mxu0 %v4425
  %4505 = vmatmul.mubr.bf16.gmra.mrb[0].mxu0 %v4276
  %v4506 = vpop.f32.mrb[0].mxu0
  %v4507 = vadd.f32 0.0, %v4506
  %v4508 = vpop.f32.mrb[0].mxu0
  %v4509 = vadd.f32 0.0, %v4508
  %v4510 = vpop.f32.mrb[0].mxu0
  %v4511 = vadd.f32 0.0, %v4510
  %v4512 = vpop.f32.mrb[0].mxu0
  %v4513 = vadd.f32 0.0, %v4512
  %4514 = vmatprep.mubr.bf16.mxu0 %v4428
  %4515 = vmatmul.mubr.bf16.gmra.mrb[0].mxu0 %v4278
  %v4516 = vpop.f32.mrb[0].mxu0
  %v4517 = vadd.f32 0.0, %v4516
  %v4518 = vpop.f32.mrb[0].mxu0
  %v4519 = vadd.f32 0.0, %v4518
  %v4520 = vpop.f32.mrb[0].mxu0
  %v4521 = vadd.f32 0.0, %v4520
  %v4522 = vpop.f32.mrb[0].mxu0
  %v4523 = vadd.f32 0.0, %v4522
  %4524 = vmatprep.mubr.bf16.mxu0 %v4431
  %4525 = vmatmul.mubr.bf16.gmra.mrb[0].mxu0 %v4280
  %v4526 = vpop.f32.mrb[0].mxu0
  %v4527 = vadd.f32 0.0, %v4526
  %v4528 = vpop.f32.mrb[0].mxu0
  %v4529 = vadd.f32 0.0, %v4528
  %v4530 = vpop.f32.mrb[0].mxu0
  %v4531 = vadd.f32 0.0, %v4530
  %v4532 = vpop.f32.mrb[0].mxu0
  %v4533 = vadd.f32 0.0, %v4532
  %4534 = vmatprep.mubr.bf16.mxu0 %v4434
  %4535 = vmatmul.mubr.bf16.gmra.mrb[0].mxu0 %v4282
  %v4536 = vpop.f32.mrb[0].mxu0
  %v4537 = vadd.f32 0.0, %v4536
  %v4538 = vpop.f32.mrb[0].mxu0
  %v4539 = vadd.f32 0.0, %v4538
  %v4540 = vpop.f32.mrb[0].mxu0
  %v4541 = vadd.f32 0.0, %v4540
  %v4542 = vpop.f32.mrb[0].mxu0
  %v4543 = vadd.f32 0.0, %v4542
  %4544 = vmatprep.mubr.bf16.mxu0 %v4437
  %4545 = vmatmul.mubr.bf16.gmra.mrb[0].mxu0 %v4284
  %v4546 = vpop.f32.mrb[0].mxu0
  %v4547 = vadd.f32 0.0, %v4546
  %v4548 = vpop.f32.mrb[0].mxu0
  %v4549 = vadd.f32 0.0, %v4548
  %v4550 = vpop.f32.mrb[0].mxu0
  %v4551 = vadd.f32 0.0, %v4550
  %v4552 = vpop.f32.mrb[0].mxu0
  %v4553 = vadd.f32 0.0, %v4552
  %4554 = vmatprep.mubr.bf16.mxu0 %v4440
  %4555 = vmatmul.mubr.bf16.gmra.mrb[0].mxu0 %v4286
  %v4556 = vpop.f32.mrb[0].mxu0
  %v4557 = vadd.f32 0.0, %v4556
  %v4558 = vpop.f32.mrb[0].mxu0
  %v4559 = vadd.f32 0.0, %v4558
  %v4560 = vpop.f32.mrb[0].mxu0
  %v4561 = vadd.f32 0.0, %v4560
  %v4562 = vpop.f32.mrb[0].mxu0
  %v4563 = vadd.f32 0.0, %v4562
  %4564 = vmatprep.mubr.bf16.mxu0 %v4443
  %4565 = vmatmul.mubr.bf16.gmra.mrb[0].mxu0 %v4288
  %v4566 = vpop.f32.mrb[0].mxu0
  %v4567 = vadd.f32 0.0, %v4566
  %v4568 = vpop.f32.mrb[0].mxu0
  %v4569 = vadd.f32 0.0, %v4568
  %v4570 = vpop.f32.mrb[0].mxu0
  %v4571 = vadd.f32 0.0, %v4570
  %v4572 = vpop.f32.mrb[0].mxu0
  %v4573 = vadd.f32 0.0, %v4572
  %4574 = vmatprep.mubr.bf16.mxu0 %v4446
  %4575 = vmatmul.mubr.bf16.gmra.mrb[0].mxu0 %v4290
  %v4576 = vpop.f32.mrb[0].mxu0
  %v4577 = vadd.f32 0.0, %v4576
  %v4578 = vpop.f32.mrb[0].mxu0
  %v4579 = vadd.f32 0.0, %v4578
  %v4580 = vpop.f32.mrb[0].mxu0
  %v4581 = vadd.f32 0.0, %v4580
  %v4582 = vpop.f32.mrb[0].mxu0
  %v4583 = vadd.f32 0.0, %v4582
  %4584 = vmatprep.mubr.bf16.mxu0 %v4449
  %4585 = vmatmul.mubr.bf16.gmra.mrb[0].mxu0 %v4292
  %v4586 = vpop.f32.mrb[0].mxu0
  %v4587 = vadd.f32 0.0, %v4586
  %v4588 = vpop.f32.mrb[0].mxu0
  %v4589 = vadd.f32 0.0, %v4588
  %v4590 = vpop.f32.mrb[0].mxu0
  %v4591 = vadd.f32 0.0, %v4590
  %v4592 = vpop.f32.mrb[0].mxu0
  %v4593 = vadd.f32 0.0, %v4592
  %4594 = vmatprep.mubr.bf16.mxu0 %v4452
  %4595 = vmatmul.mubr.bf16.gmra.mrb[0].mxu0 %v4294
  %v4596 = vpop.f32.mrb[0].mxu0
  %v4597 = vadd.f32 0.0, %v4596
  %v4598 = vpop.f32.mrb[0].mxu0
  %v4599 = vadd.f32 0.0, %v4598
  %v4600 = vpop.f32.mrb[0].mxu0
  %v4601 = vadd.f32 0.0, %v4600
  %v4602 = vpop.f32.mrb[0].mxu0
  %v4603 = vadd.f32 0.0, %v4602
  %4604 = vmatprep.mubr.bf16.mxu0 %v4455
  %4605 = vmatmul.mubr.bf16.gmra.mrb[0].mxu0 %v4296
  %v4606 = vpop.f32.mrb[0].mxu0
  %v4607 = vadd.f32 0.0, %v4606
  %v4608 = vpop.f32.mrb[0].mxu0
  %v4609 = vadd.f32 0.0, %v4608
  %v4610 = vpop.f32.mrb[0].mxu0
  %v4611 = vadd.f32 0.0, %v4610
  %v4612 = vpop.f32.mrb[0].mxu0
  %v4613 = vadd.f32 0.0, %v4612
  %4614 = vmatprep.mubr.bf16.mxu0 %v4458
  %4615 = vmatmul.mubr.bf16.gmra.mrb[0].mxu0 %v4298
  %v4616 = vpop.f32.mrb[0].mxu0
  %v4617 = vadd.f32 0.0, %v4616
  %v4618 = vpop.f32.mrb[0].mxu0
  %v4619 = vadd.f32 0.0, %v4618
  %v4620 = vpop.f32.mrb[0].mxu0
  %v4621 = vadd.f32 0.0, %v4620
  %v4622 = vpop.f32.mrb[0].mxu0
  %v4623 = vadd.f32 0.0, %v4622
  %4624 = vmatprep.mubr.bf16.mxu0 %v4461
  %4625 = vmatmul.mubr.bf16.gmra.mrb[0].mxu0 %v4300
  %v4626 = vpop.f32.mrb[0].mxu0
  %v4627 = vadd.f32 0.0, %v4626
  %v4628 = vpop.f32.mrb[0].mxu0
  %v4629 = vadd.f32 0.0, %v4628
  %v4630 = vpop.f32.mrb[0].mxu0
  %v4631 = vadd.f32 0.0, %v4630
  %v4632 = vpop.f32.mrb[0].mxu0
  %v4633 = vadd.f32 0.0, %v4632
  %4634 = vmatprep.mubr.bf16.mxu0 %v4464
  %4635 = vmatmul.mubr.bf16.gmra.mrb[0].mxu0 %v4302
  %v4636 = vpop.f32.mrb[0].mxu0
  %v4637 = vadd.f32 0.0, %v4636
  %v4638 = vpop.f32.mrb[0].mxu0
  %v4639 = vadd.f32 0.0, %v4638
  %v4640 = vpop.f32.mrb[0].mxu0
  %v4641 = vadd.f32 0.0, %v4640
  %v4642 = vpop.f32.mrb[0].mxu0
  %v4643 = vadd.f32 0.0, %v4642
  %4644 = vmatprep.mubr.bf16.mxu0 %v4467
  %4645 = vmatmul.mubr.bf16.gmra.mrb[0].mxu0 %v4304
  %v4646 = vpop.f32.mrb[0].mxu0
  %v4647 = vadd.f32 0.0, %v4646
  %v4648 = vpop.f32.mrb[0].mxu0
  %v4649 = vadd.f32 0.0, %v4648
  %v4650 = vpop.f32.mrb[0].mxu0
  %v4651 = vadd.f32 0.0, %v4650
  %v4652 = vpop.f32.mrb[0].mxu0
  %v4653 = vadd.f32 0.0, %v4652
  %4654 = vmatprep.mubr.bf16.mxu0 %v4470
  %4655 = vmatmul.mubr.bf16.gmra.mrb[0].mxu0 %v4306
  %v4656 = vpop.f32.mrb[0].mxu0
  %v4657 = vadd.f32 0.0, %v4656
  %v4658 = vpop.f32.mrb[0].mxu0
  %v4659 = vadd.f32 0.0, %v4658
  %v4660 = vpop.f32.mrb[0].mxu0
  %v4661 = vadd.f32 0.0, %v4660
  %v4662 = vpop.f32.mrb[0].mxu0
  %v4663 = vadd.f32 0.0, %v4662
  %4664 = vdwg.mxu0
  %v4665 = vadd.f32 %v3740, %v4507
  %v4666 = vadd.f32 %v3741, %v4509
  %v4667 = vadd.f32 %v3742, %v4511
  %v4668 = vadd.f32 %v3743, %v4513
  %v4669 = vadd.f32 %v3744, %v4517
  %v4670 = vadd.f32 %v3745, %v4519
  %v4671 = vadd.f32 %v3746, %v4521
  %v4672 = vadd.f32 %v3747, %v4523
  %v4673 = vadd.f32 %v3748, %v4527
  %v4674 = vadd.f32 %v3749, %v4529
  %v4675 = vadd.f32 %v3750, %v4531
  %v4676 = vadd.f32 %v3751, %v4533
  %v4677 = vadd.f32 %v3752, %v4537
  %v4678 = vadd.f32 %v3753, %v4539
  %v4679 = vadd.f32 %v3754, %v4541
  %v4680 = vadd.f32 %v3755, %v4543
  %v4681 = vadd.f32 %v3756, %v4547
  %v4682 = vadd.f32 %v3757, %v4549
  %v4683 = vadd.f32 %v3758, %v4551
  %v4684 = vadd.f32 %v3759, %v4553
  %v4685 = vadd.f32 %v3760, %v4557
  %v4686 = vadd.f32 %v3761, %v4559
  %v4687 = vadd.f32 %v3762, %v4561
  %v4688 = vadd.f32 %v3763, %v4563
  %v4689 = vadd.f32 %v3764, %v4567
  %v4690 = vadd.f32 %v3765, %v4569
  %v4691 = vadd.f32 %v3766, %v4571
  %v4692 = vadd.f32 %v3767, %v4573
  %v4693 = vadd.f32 %v3768, %v4577
  %v4694 = vadd.f32 %v3769, %v4579
  %v4695 = vadd.f32 %v3770, %v4581
  %v4696 = vadd.f32 %v3771, %v4583
  %v4697 = vadd.f32 %v3772, %v4587
  %v4698 = vadd.f32 %v3773, %v4589
  %v4699 = vadd.f32 %v3774, %v4591
  %v4700 = vadd.f32 %v3775, %v4593
  %v4701 = vadd.f32 %v3776, %v4597
  %v4702 = vadd.f32 %v3777, %v4599
  %v4703 = vadd.f32 %v3778, %v4601
  %v4704 = vadd.f32 %v3779, %v4603
  %v4705 = vadd.f32 %v3780, %v4607
  %v4706 = vadd.f32 %v3781, %v4609
  %v4707 = vadd.f32 %v3782, %v4611
  %v4708 = vadd.f32 %v3783, %v4613
  %v4709 = vadd.f32 %v3784, %v4617
  %v4710 = vadd.f32 %v3785, %v4619
  %v4711 = vadd.f32 %v3786, %v4621
  %v4712 = vadd.f32 %v3787, %v4623
  %v4713 = vadd.f32 %v3788, %v4627
  %v4714 = vadd.f32 %v3789, %v4629
  %v4715 = vadd.f32 %v3790, %v4631
  %v4716 = vadd.f32 %v3791, %v4633
  %v4717 = vadd.f32 %v3792, %v4637
  %v4718 = vadd.f32 %v3793, %v4639
  %v4719 = vadd.f32 %v3794, %v4641
  %v4720 = vadd.f32 %v3795, %v4643
  %v4721 = vadd.f32 %v3796, %v4647
  %v4722 = vadd.f32 %v3797, %v4649
  %v4723 = vadd.f32 %v3798, %v4651
  %v4724 = vadd.f32 %v3799, %v4653
  %v4725 = vadd.f32 %v3800, %v4657
  %v4726 = vadd.f32 %v3801, %v4659
  %v4727 = vadd.f32 %v3802, %v4661
  %v4728 = vadd.f32 %v3803, %v4663
  %v4729 = vld [vmem:[%s0] sm:$0x88]
  %v4730 = vld [vmem:[%s0 + $0x18] sm:$0x88]
  %v4731 = vld [vmem:[%s0 + $0x30] sm:$0x88]
  %v4732 = vld [vmem:[%s0 + $0x48] sm:$0x88]
  %v4733 = vld [vmem:[%s0 + $0x60] sm:$0x88]
  %v4734 = vld [vmem:[%s0 + $0x78] sm:$0x88]
  %v4735 = vld [vmem:[%s0 + $0x90] sm:$0x88]
  %v4736 = vld [vmem:[%s0 + $0xa8] sm:$0x88]
  %v4737 = vld [vmem:[%s0 + $0xc0] sm:$0x88]
  %v4738 = vld [vmem:[%s0 + $0xd8] sm:$0x88]
  %v4739 = vld [vmem:[%s0 + $0xf0] sm:$0x88]
  %v4740 = vld [vmem:[%s0 + $0x108] sm:$0x88]
  %v4741 = vld [vmem:[%s0 + $0x120] sm:$0x88]
  %v4742 = vld [vmem:[%s0 + $0x138] sm:$0x88]
  %v4743 = vld [vmem:[%s0 + $0x150] sm:$0x88]
  %v4744 = vld [vmem:[%s0 + $0x168] sm:$0x88]
  %vm4777 = vcmask 1040384
  %vm4778 = vcmask 1044484
  %vm4779 = vmor %vm4777, %vm4778
  %v4780 = vrot.slane %v4729, 7
  %v4781 = vrot.slane %v4780, 4
  %v4782 = vrot.slane %v63, 7
  %v4783 = vsel %vm4779, %v4781, %v4782
  %v4784 = vrot.slane %v4782, 4
  %v4785 = vrot.slane %v3804, 7
  %v4786 = vsel %vm4779, %v4784, %v4785
  %v4787 = vrot.slane %v4730, 7
  %v4788 = vrot.slane %v4787, 4
  %v4789 = vrot.slane %v65, 7
  %v4790 = vsel %vm4779, %v4788, %v4789
  %v4791 = vrot.slane %v4789, 4
  %v4792 = vrot.slane %v3805, 7
  %v4793 = vsel %vm4779, %v4791, %v4792
  %v4794 = vrot.slane %v4731, 7
  %v4795 = vrot.slane %v4794, 4
  %v4796 = vrot.slane %v67, 7
  %v4797 = vsel %vm4779, %v4795, %v4796
  %v4798 = vrot.slane %v4796, 4
  %v4799 = vrot.slane %v3806, 7
  %v4800 = vsel %vm4779, %v4798, %v4799
  %v4801 = vrot.slane %v4732, 7
  %v4802 = vrot.slane %v4801, 4
  %v4803 = vrot.slane %v69, 7
  %v4804 = vsel %vm4779, %v4802, %v4803
  %v4805 = vrot.slane %v4803, 4
  %v4806 = vrot.slane %v3807, 7
  %v4807 = vsel %vm4779, %v4805, %v4806
  %v4808 = vrot.slane %v4733, 7
  %v4809 = vrot.slane %v4808, 4
  %v4810 = vrot.slane %v71, 7
  %v4811 = vsel %vm4779, %v4809, %v4810
  %v4812 = vrot.slane %v4810, 4
  %v4813 = vrot.slane %v3808, 7
  %v4814 = vsel %vm4779, %v4812, %v4813
  %v4815 = vrot.slane %v4734, 7
  %v4816 = vrot.slane %v4815, 4
  %v4817 = vrot.slane %v73, 7
  %v4818 = vsel %vm4779, %v4816, %v4817
  %v4819 = vrot.slane %v4817, 4
  %v4820 = vrot.slane %v3809, 7
  %v4821 = vsel %vm4779, %v4819, %v4820
  %v4822 = vrot.slane %v4735, 7
  %v4823 = vrot.slane %v4822, 4
  %v4824 = vrot.slane %v75, 7
  %v4825 = vsel %vm4779, %v4823, %v4824
  %v4826 = vrot.slane %v4824, 4
  %v4827 = vrot.slane %v3810, 7
  %v4828 = vsel %vm4779, %v4826, %v4827
  %v4829 = vrot.slane %v4736, 7
  %v4830 = vrot.slane %v4829, 4
  %v4831 = vrot.slane %v77, 7
  %v4832 = vsel %vm4779, %v4830, %v4831
  %v4833 = vrot.slane %v4831, 4
  %v4834 = vrot.slane %v3811, 7
  %v4835 = vsel %vm4779, %v4833, %v4834
  %v4836 = vrot.slane %v4737, 7
  %v4837 = vrot.slane %v4836, 4
  %v4838 = vrot.slane %v79, 7
  %v4839 = vsel %vm4779, %v4837, %v4838
  %v4840 = vrot.slane %v4838, 4
  %v4841 = vrot.slane %v3812, 7
  %v4842 = vsel %vm4779, %v4840, %v4841
  %v4843 = vrot.slane %v4738, 7
  %v4844 = vrot.slane %v4843, 4
  %v4845 = vrot.slane %v81, 7
  %v4846 = vsel %vm4779, %v4844, %v4845
  %v4847 = vrot.slane %v4845, 4
  %v4848 = vrot.slane %v3813, 7
  %v4849 = vsel %vm4779, %v4847, %v4848
  %v4850 = vrot.slane %v4739, 7
  %v4851 = vrot.slane %v4850, 4
  %v4852 = vrot.slane %v83, 7
  %v4853 = vsel %vm4779, %v4851, %v4852
  %v4854 = vrot.slane %v4852, 4
  %v4855 = vrot.slane %v3814, 7
  %v4856 = vsel %vm4779, %v4854, %v4855
  %v4857 = vrot.slane %v4740, 7
  %v4858 = vrot.slane %v4857, 4
  %v4859 = vrot.slane %v85, 7
  %v4860 = vsel %vm4779, %v4858, %v4859
  %v4861 = vrot.slane %v4859, 4
  %v4862 = vrot.slane %v3815, 7
  %v4863 = vsel %vm4779, %v4861, %v4862
  %v4864 = vrot.slane %v4741, 7
  %v4865 = vrot.slane %v4864, 4
  %v4866 = vrot.slane %v87, 7
  %v4867 = vsel %vm4779, %v4865, %v4866
  %v4868 = vrot.slane %v4866, 4
  %v4869 = vrot.slane %v3816, 7
  %v4870 = vsel %vm4779, %v4868, %v4869
  %v4871 = vrot.slane %v4742, 7
  %v4872 = vrot.slane %v4871, 4
  %v4873 = vrot.slane %v89, 7
  %v4874 = vsel %vm4779, %v4872, %v4873
  %v4875 = vrot.slane %v4873, 4
  %v4876 = vrot.slane %v3817, 7
  %v4877 = vsel %vm4779, %v4875, %v4876
  %v4878 = vrot.slane %v4743, 7
  %v4879 = vrot.slane %v4878, 4
  %v4880 = vrot.slane %v91, 7
  %v4881 = vsel %vm4779, %v4879, %v4880
  %v4882 = vrot.slane %v4880, 4
  %v4883 = vrot.slane %v3818, 7
  %v4884 = vsel %vm4779, %v4882, %v4883
  %v4885 = vrot.slane %v4744, 7
  %v4886 = vrot.slane %v4885, 4
  %v4887 = vrot.slane %v93, 7
  %v4888 = vsel %vm4779, %v4886, %v4887
  %v4889 = vrot.slane %v4887, 4
  %v4890 = vrot.slane %v3819, 7
  %v4891 = vsel %vm4779, %v4889, %v4890
  %s4892 = scalar_lea.vmem %s1, 960
  %v4893 = vld [vmem:[%s4892] sm:$0xff]
  %v4894 = vld [vmem:[%s4892 + $0x8] sm:$0xff]
  %v4895 = vld [vmem:[%s4892 + $0x10] sm:$0xff]
  %v4896 = vld [vmem:[%s4892 + $0x18] sm:$0xff]
  %v4897 = vld [vmem:[%s4892 + $0x20] sm:$0xff]
  %v4898 = vld [vmem:[%s4892 + $0x28] sm:$0xff]
  %v4899 = vld [vmem:[%s4892 + $0x30] sm:$0xff]
  %v4900 = vld [vmem:[%s4892 + $0x38] sm:$0xff]
  %v4901 = vld [vmem:[%s4892 + $0x40] sm:$0xff]
  %v4902 = vld [vmem:[%s4892 + $0x48] sm:$0xff]
  %v4903 = vld [vmem:[%s4892 + $0x50] sm:$0xff]
  %v4904 = vld [vmem:[%s4892 + $0x58] sm:$0xff]
  %v4905 = vld [vmem:[%s4892 + $0x60] sm:$0xff]
  %v4906 = vld [vmem:[%s4892 + $0x68] sm:$0xff]
  %v4907 = vld [vmem:[%s4892 + $0x70] sm:$0xff]
  %v4908 = vld [vmem:[%s4892 + $0x78] sm:$0xff]
  %v4909 = vld [vmem:[%s4892 + $0x80] sm:$0xff]
  %v4910 = vld [vmem:[%s4892 + $0x88] sm:$0xff]
  %v4911 = vld [vmem:[%s4892 + $0x90] sm:$0xff]
  %v4912 = vld [vmem:[%s4892 + $0x98] sm:$0xff]
  %v4913 = vunpack.c.l.b16 %v4783
  %v4914 = vunpack.c.h.b16 %v4783
  %v4915 = vunpack.c.l.b16 %v4786
  %v4916 = vunpack.c.h.b16 %v4786
  %v4917 = vunpack.c.l.b16 %v4790
  %v4918 = vunpack.c.h.b16 %v4790
  %v4919 = vunpack.c.l.b16 %v4793
  %v4920 = vunpack.c.h.b16 %v4793
  %v4921 = vunpack.c.l.b16 %v4797
  %v4922 = vunpack.c.h.b16 %v4797
  %v4923 = vunpack.c.l.b16 %v4800
  %v4924 = vunpack.c.h.b16 %v4800
  %v4925 = vunpack.c.l.b16 %v4804
  %v4926 = vunpack.c.h.b16 %v4804
  %v4927 = vunpack.c.l.b16 %v4807
  %v4928 = vunpack.c.h.b16 %v4807
  %v4929 = vunpack.c.l.b16 %v4811
  %v4930 = vunpack.c.h.b16 %v4811
  %v4931 = vunpack.c.l.b16 %v4814
  %v4932 = vunpack.c.h.b16 %v4814
  %v4933 = vunpack.c.l.b16 %v4818
  %v4934 = vunpack.c.h.b16 %v4818
  %v4935 = vunpack.c.l.b16 %v4821
  %v4936 = vunpack.c.h.b16 %v4821
  %v4937 = vunpack.c.l.b16 %v4825
  %v4938 = vunpack.c.h.b16 %v4825
  %v4939 = vunpack.c.l.b16 %v4828
  %v4940 = vunpack.c.h.b16 %v4828
  %v4941 = vunpack.c.l.b16 %v4832
  %v4942 = vunpack.c.h.b16 %v4832
  %v4943 = vunpack.c.l.b16 %v4835
  %v4944 = vunpack.c.h.b16 %v4835
  %v4945 = vunpack.c.l.b16 %v4839
  %v4946 = vunpack.c.h.b16 %v4839
  %v4947 = vunpack.c.l.b16 %v4842
  %v4948 = vunpack.c.h.b16 %v4842
  %v4949 = vunpack.c.l.b16 %v4846
  %v4950 = vunpack.c.h.b16 %v4846
  %v4951 = vunpack.c.l.b16 %v4849
  %v4952 = vunpack.c.h.b16 %v4849
  %v4953 = vunpack.c.l.b16 %v4853
  %v4954 = vunpack.c.h.b16 %v4853
  %v4955 = vunpack.c.l.b16 %v4856
  %v4956 = vunpack.c.h.b16 %v4856
  %v4957 = vunpack.c.l.b16 %v4860
  %v4958 = vunpack.c.h.b16 %v4860
  %v4959 = vunpack.c.l.b16 %v4863
  %v4960 = vunpack.c.h.b16 %v4863
  %v4961 = vunpack.c.l.b16 %v4867
  %v4962 = vunpack.c.h.b16 %v4867
  %v4963 = vunpack.c.l.b16 %v4870
  %v4964 = vunpack.c.h.b16 %v4870
  %v4965 = vunpack.c.l.b16 %v4874
  %v4966 = vunpack.c.h.b16 %v4874
  %v4967 = vunpack.c.l.b16 %v4877
  %v4968 = vunpack.c.h.b16 %v4877
  %v4969 = vunpack.c.l.b16 %v4881
  %v4970 = vunpack.c.h.b16 %v4881
  %v4971 = vunpack.c.l.b16 %v4884
  %v4972 = vunpack.c.h.b16 %v4884
  %v4973 = vunpack.c.l.b16 %v4888
  %v4974 = vunpack.c.h.b16 %v4888
  %v4975 = vunpack.c.l.b16 %v4891
  %v4976 = vunpack.c.h.b16 %v4891
  %v4977 = vpack.c.b16 %v4915, %v4913
  %v4978 = vpack.c.b16 %v4916, %v4914
  %v4979 = vpack.c.b16 %v4919, %v4917
  %v4980 = vpack.c.b16 %v4920, %v4918
  %v4981 = vpack.c.b16 %v4923, %v4921
  %v4982 = vpack.c.b16 %v4924, %v4922
  %v4983 = vpack.c.b16 %v4927, %v4925
  %v4984 = vpack.c.b16 %v4928, %v4926
  %v4985 = vpack.c.b16 %v4931, %v4929
  %v4986 = vpack.c.b16 %v4932, %v4930
  %v4987 = vpack.c.b16 %v4935, %v4933
  %v4988 = vpack.c.b16 %v4936, %v4934
  %v4989 = vpack.c.b16 %v4939, %v4937
  %v4990 = vpack.c.b16 %v4940, %v4938
  %v4991 = vpack.c.b16 %v4943, %v4941
  %v4992 = vpack.c.b16 %v4944, %v4942
  %v4993 = vpack.c.b16 %v4947, %v4945
  %v4994 = vpack.c.b16 %v4948, %v4946
  %v4995 = vpack.c.b16 %v4951, %v4949
  %v4996 = vpack.c.b16 %v4952, %v4950
  %v4997 = vpack.c.b16 %v4955, %v4953
  %v4998 = vpack.c.b16 %v4956, %v4954
  %v4999 = vpack.c.b16 %v4959, %v4957
  %v5000 = vpack.c.b16 %v4960, %v4958
  %v5001 = vpack.c.b16 %v4963, %v4961
  %v5002 = vpack.c.b16 %v4964, %v4962
  %v5003 = vpack.c.b16 %v4967, %v4965
  %v5004 = vpack.c.b16 %v4968, %v4966
  %v5005 = vpack.c.b16 %v4971, %v4969
  %v5006 = vpack.c.b16 %v4972, %v4970
  %v5007 = vpack.c.b16 %v4975, %v4973
  %v5008 = vpack.c.b16 %v4976, %v4974
  %v5045 = vunpack.c.l.b16 %v4893
  %v5046 = vunpack.c.h.b16 %v4893
  %v5047 = vunpack.c.l.b16 %v4894
  %v5048 = vunpack.c.h.b16 %v4894
  %v5049 = vunpack.c.l.b16 %v4895
  %v5050 = vunpack.c.h.b16 %v4895
  %v5051 = vunpack.c.l.b16 %v4896
  %v5052 = vunpack.c.h.b16 %v4896
  %v5053 = vunpack.c.l.b16 %v4897
  %v5054 = vunpack.c.h.b16 %v4897
  %v5055 = vunpack.c.l.b16 %v4898
  %v5056 = vunpack.c.h.b16 %v4898
  %v5057 = vunpack.c.l.b16 %v4899
  %v5058 = vunpack.c.h.b16 %v4899
  %v5059 = vunpack.c.l.b16 %v4900
  %v5060 = vunpack.c.h.b16 %v4900
  %v5061 = vunpack.c.l.b16 %v4901
  %v5062 = vunpack.c.h.b16 %v4901
  %v5063 = vunpack.c.l.b16 %v4902
  %v5064 = vunpack.c.h.b16 %v4902
  %v5065 = vunpack.c.l.b16 %v4903
  %v5066 = vunpack.c.h.b16 %v4903
  %v5067 = vunpack.c.l.b16 %v4904
  %v5068 = vunpack.c.h.b16 %v4904
  %v5069 = vunpack.c.l.b16 %v4905
  %v5070 = vunpack.c.h.b16 %v4905
  %v5071 = vunpack.c.l.b16 %v4906
  %v5072 = vunpack.c.h.b16 %v4906
  %v5073 = vunpack.c.l.b16 %v4907
  %v5074 = vunpack.c.h.b16 %v4907
  %v5075 = vunpack.c.l.b16 %v4908
  %v5076 = vunpack.c.h.b16 %v4908
  %v5077 = vunpack.c.l.b16 %v4909
  %v5078 = vunpack.c.h.b16 %v4909
  %v5079 = vunpack.c.l.b16 %v4910
  %v5080 = vunpack.c.h.b16 %v4910
  %v5081 = vunpack.c.l.b16 %v4911
  %v5082 = vunpack.c.h.b16 %v4911
  %v5083 = vunpack.c.l.b16 %v4912
  %v5084 = vunpack.c.h.b16 %v4912
  %v5085 = vpack.c.b16 %v5047, %v5045
  %v5086 = vpack.c.b16 %v5048, %v5046
  %v5087 = vpack.c.b16 %v5051, %v5049
  %v5088 = vpack.c.b16 %v5052, %v5050
  %v5089 = vpack.c.b16 %v5055, %v5053
  %v5090 = vpack.c.b16 %v5056, %v5054
  %v5091 = vpack.c.b16 %v5059, %v5057
  %v5092 = vpack.c.b16 %v5060, %v5058
  %v5093 = vpack.c.b16 %v5063, %v5061
  %v5094 = vpack.c.b16 %v5064, %v5062
  %v5095 = vpack.c.b16 %v5067, %v5065
  %v5096 = vpack.c.b16 %v5068, %v5066
  %v5097 = vpack.c.b16 %v5071, %v5069
  %v5098 = vpack.c.b16 %v5072, %v5070
  %v5099 = vpack.c.b16 %v5075, %v5073
  %v5100 = vpack.c.b16 %v5076, %v5074
  %v5101 = vpack.c.b16 %v5079, %v5077
  %v5102 = vpack.c.b16 %v5080, %v5078
  %v5103 = vpack.c.b16 %v5083, %v5081
  %v5104 = vpack.c.b16 %v5084, %v5082
  %v5126 = vsel %vm750, %v4978, 0
  %v5129 = vsel %vm750, %v4980, 0
  %v5132 = vsel %vm750, %v4982, 0
  %v5135 = vsel %vm750, %v4984, 0
  %v5138 = vsel %vm750, %v4986, 0
  %v5141 = vsel %vm750, %v4988, 0
  %v5144 = vsel %vm750, %v4990, 0
  %v5147 = vsel %vm750, %v4992, 0
  %v5150 = vsel %vm750, %v4994, 0
  %v5153 = vsel %vm750, %v4996, 0
  %v5156 = vsel %vm750, %v4998, 0
  %v5159 = vsel %vm750, %v5000, 0
  %v5162 = vsel %vm750, %v5002, 0
  %v5165 = vsel %vm750, %v5004, 0
  %v5168 = vsel %vm750, %v5006, 0
  %v5171 = vsel %vm750, %v5008, 0
  %5173 = vmatprep.subr.bf16.mxu0 %v5086
  %5174 = vmatpush1.bf16.msra.mxu0 %v5085
  %5175 = vmatprep.subr.bf16.mxu0 %v5088
  %5176 = vmatpush1.bf16.msra.mxu0 %v5087
  %5177 = vmatprep.subr.bf16.mxu0 %v5090
  %5178 = vmatpush1.bf16.msra.mxu0 %v5089
  %5179 = vmatprep.subr.bf16.mxu0 %v5092
  %5180 = vmatpush1.bf16.msra.mxu0 %v5091
  %5181 = vmatprep.subr.bf16.mxu0 %v5094
  %5182 = vmatpush1.bf16.msra.mxu0 %v5093
  %5183 = vmatprep.subr.bf16.mxu0 %v5096
  %5184 = vmatpush1.bf16.msra.mxu0 %v5095
  %5185 = vmatprep.subr.bf16.mxu0 %v5098
  %5186 = vmatpush1.bf16.msra.mxu0 %v5097
  %5187 = vmatprep.subr.bf16.mxu0 %v5100
  %5188 = vmatpush1.bf16.msra.mxu0 %v5099
  %5189 = vmatprep.subr.bf16.mxu0 %v5102
  %5190 = vmatpush1.bf16.msra.mxu0 %v5101
  %5191 = vmatprep.subr.bf16.mxu0 %v5104
  %5192 = vmatpush1.bf16.msra.mxu0 %v5103
  %5193 = vmatprep.subr.bf16.mxu0 0
  %5194 = vmatpush1.bf16.msra.mxu0 0
  %5195 = vmatprep.subr.bf16.mxu0 0
  %5196 = vmatpush1.bf16.msra.mxu0 0
  %5197 = vmatprep.subr.bf16.mxu0 0
  %5198 = vmatpush1.bf16.msra.mxu0 0
  %5199 = vmatprep.subr.bf16.mxu0 0
  %5200 = vmatpush1.bf16.msra.mxu0 0
  %5201 = vmatprep.subr.bf16.mxu0 0
  %5202 = vmatpush1.bf16.msra.mxu0 0
  %5203 = vmatprep.subr.bf16.mxu0 0
  %5204 = vmatpush1.bf16.msra.mxu0 0
  %5205 = vmatprep.mubr.bf16.mxu0 %v5126
  %5206 = vmatmul.mubr.bf16.gmra.mrb[0].mxu0 %v4977
  %v5207 = vpop.f32.mrb[0].mxu0
  %v5208 = vadd.f32 0.0, %v5207
  %v5209 = vpop.f32.mrb[0].mxu0
  %v5210 = vadd.f32 0.0, %v5209
  %v5211 = vpop.f32.mrb[0].mxu0
  %v5212 = vadd.f32 0.0, %v5211
  %v5213 = vpop.f32.mrb[0].mxu0
  %v5214 = vadd.f32 0.0, %v5213
  %5215 = vmatprep.mubr.bf16.mxu0 %v5129
  %5216 = vmatmul.mubr.bf16.gmra.mrb[0].mxu0 %v4979
  %v5217 = vpop.f32.mrb[0].mxu0
  %v5218 = vadd.f32 0.0, %v5217
  %v5219 = vpop.f32.mrb[0].mxu0
  %v5220 = vadd.f32 0.0, %v5219
  %v5221 = vpop.f32.mrb[0].mxu0
  %v5222 = vadd.f32 0.0, %v5221
  %v5223 = vpop.f32.mrb[0].mxu0
  %v5224 = vadd.f32 0.0, %v5223
  %5225 = vmatprep.mubr.bf16.mxu0 %v5132
  %5226 = vmatmul.mubr.bf16.gmra.mrb[0].mxu0 %v4981
  %v5227 = vpop.f32.mrb[0].mxu0
  %v5228 = vadd.f32 0.0, %v5227
  %v5229 = vpop.f32.mrb[0].mxu0
  %v5230 = vadd.f32 0.0, %v5229
  %v5231 = vpop.f32.mrb[0].mxu0
  %v5232 = vadd.f32 0.0, %v5231
  %v5233 = vpop.f32.mrb[0].mxu0
  %v5234 = vadd.f32 0.0, %v5233
  %5235 = vmatprep.mubr.bf16.mxu0 %v5135
  %5236 = vmatmul.mubr.bf16.gmra.mrb[0].mxu0 %v4983
  %v5237 = vpop.f32.mrb[0].mxu0
  %v5238 = vadd.f32 0.0, %v5237
  %v5239 = vpop.f32.mrb[0].mxu0
  %v5240 = vadd.f32 0.0, %v5239
  %v5241 = vpop.f32.mrb[0].mxu0
  %v5242 = vadd.f32 0.0, %v5241
  %v5243 = vpop.f32.mrb[0].mxu0
  %v5244 = vadd.f32 0.0, %v5243
  %5245 = vmatprep.mubr.bf16.mxu0 %v5138
  %5246 = vmatmul.mubr.bf16.gmra.mrb[0].mxu0 %v4985
  %v5247 = vpop.f32.mrb[0].mxu0
  %v5248 = vadd.f32 0.0, %v5247
  %v5249 = vpop.f32.mrb[0].mxu0
  %v5250 = vadd.f32 0.0, %v5249
  %v5251 = vpop.f32.mrb[0].mxu0
  %v5252 = vadd.f32 0.0, %v5251
  %v5253 = vpop.f32.mrb[0].mxu0
  %v5254 = vadd.f32 0.0, %v5253
  %5255 = vmatprep.mubr.bf16.mxu0 %v5141
  %5256 = vmatmul.mubr.bf16.gmra.mrb[0].mxu0 %v4987
  %v5257 = vpop.f32.mrb[0].mxu0
  %v5258 = vadd.f32 0.0, %v5257
  %v5259 = vpop.f32.mrb[0].mxu0
  %v5260 = vadd.f32 0.0, %v5259
  %v5261 = vpop.f32.mrb[0].mxu0
  %v5262 = vadd.f32 0.0, %v5261
  %v5263 = vpop.f32.mrb[0].mxu0
  %v5264 = vadd.f32 0.0, %v5263
  %5265 = vmatprep.mubr.bf16.mxu0 %v5144
  %5266 = vmatmul.mubr.bf16.gmra.mrb[0].mxu0 %v4989
  %v5267 = vpop.f32.mrb[0].mxu0
  %v5268 = vadd.f32 0.0, %v5267
  %v5269 = vpop.f32.mrb[0].mxu0
  %v5270 = vadd.f32 0.0, %v5269
  %v5271 = vpop.f32.mrb[0].mxu0
  %v5272 = vadd.f32 0.0, %v5271
  %v5273 = vpop.f32.mrb[0].mxu0
  %v5274 = vadd.f32 0.0, %v5273
  %5275 = vmatprep.mubr.bf16.mxu0 %v5147
  %5276 = vmatmul.mubr.bf16.gmra.mrb[0].mxu0 %v4991
  %v5277 = vpop.f32.mrb[0].mxu0
  %v5278 = vadd.f32 0.0, %v5277
  %v5279 = vpop.f32.mrb[0].mxu0
  %v5280 = vadd.f32 0.0, %v5279
  %v5281 = vpop.f32.mrb[0].mxu0
  %v5282 = vadd.f32 0.0, %v5281
  %v5283 = vpop.f32.mrb[0].mxu0
  %v5284 = vadd.f32 0.0, %v5283
  %5285 = vmatprep.mubr.bf16.mxu0 %v5150
  %5286 = vmatmul.mubr.bf16.gmra.mrb[0].mxu0 %v4993
  %v5287 = vpop.f32.mrb[0].mxu0
  %v5288 = vadd.f32 0.0, %v5287
  %v5289 = vpop.f32.mrb[0].mxu0
  %v5290 = vadd.f32 0.0, %v5289
  %v5291 = vpop.f32.mrb[0].mxu0
  %v5292 = vadd.f32 0.0, %v5291
  %v5293 = vpop.f32.mrb[0].mxu0
  %v5294 = vadd.f32 0.0, %v5293
  %5295 = vmatprep.mubr.bf16.mxu0 %v5153
  %5296 = vmatmul.mubr.bf16.gmra.mrb[0].mxu0 %v4995
  %v5297 = vpop.f32.mrb[0].mxu0
  %v5298 = vadd.f32 0.0, %v5297
  %v5299 = vpop.f32.mrb[0].mxu0
  %v5300 = vadd.f32 0.0, %v5299
  %v5301 = vpop.f32.mrb[0].mxu0
  %v5302 = vadd.f32 0.0, %v5301
  %v5303 = vpop.f32.mrb[0].mxu0
  %v5304 = vadd.f32 0.0, %v5303
  %5305 = vmatprep.mubr.bf16.mxu0 %v5156
  %5306 = vmatmul.mubr.bf16.gmra.mrb[0].mxu0 %v4997
  %v5307 = vpop.f32.mrb[0].mxu0
  %v5308 = vadd.f32 0.0, %v5307
  %v5309 = vpop.f32.mrb[0].mxu0
  %v5310 = vadd.f32 0.0, %v5309
  %v5311 = vpop.f32.mrb[0].mxu0
  %v5312 = vadd.f32 0.0, %v5311
  %v5313 = vpop.f32.mrb[0].mxu0
  %v5314 = vadd.f32 0.0, %v5313
  %5315 = vmatprep.mubr.bf16.mxu0 %v5159
  %5316 = vmatmul.mubr.bf16.gmra.mrb[0].mxu0 %v4999
  %v5317 = vpop.f32.mrb[0].mxu0
  %v5318 = vadd.f32 0.0, %v5317
  %v5319 = vpop.f32.mrb[0].mxu0
  %v5320 = vadd.f32 0.0, %v5319
  %v5321 = vpop.f32.mrb[0].mxu0
  %v5322 = vadd.f32 0.0, %v5321
  %v5323 = vpop.f32.mrb[0].mxu0
  %v5324 = vadd.f32 0.0, %v5323
  %5325 = vmatprep.mubr.bf16.mxu0 %v5162
  %5326 = vmatmul.mubr.bf16.gmra.mrb[0].mxu0 %v5001
  %v5327 = vpop.f32.mrb[0].mxu0
  %v5328 = vadd.f32 0.0, %v5327
  %v5329 = vpop.f32.mrb[0].mxu0
  %v5330 = vadd.f32 0.0, %v5329
  %v5331 = vpop.f32.mrb[0].mxu0
  %v5332 = vadd.f32 0.0, %v5331
  %v5333 = vpop.f32.mrb[0].mxu0
  %v5334 = vadd.f32 0.0, %v5333
  %5335 = vmatprep.mubr.bf16.mxu0 %v5165
  %5336 = vmatmul.mubr.bf16.gmra.mrb[0].mxu0 %v5003
  %v5337 = vpop.f32.mrb[0].mxu0
  %v5338 = vadd.f32 0.0, %v5337
  %v5339 = vpop.f32.mrb[0].mxu0
  %v5340 = vadd.f32 0.0, %v5339
  %v5341 = vpop.f32.mrb[0].mxu0
  %v5342 = vadd.f32 0.0, %v5341
  %v5343 = vpop.f32.mrb[0].mxu0
  %v5344 = vadd.f32 0.0, %v5343
  %5345 = vmatprep.mubr.bf16.mxu0 %v5168
  %5346 = vmatmul.mubr.bf16.gmra.mrb[0].mxu0 %v5005
  %v5347 = vpop.f32.mrb[0].mxu0
  %v5348 = vadd.f32 0.0, %v5347
  %v5349 = vpop.f32.mrb[0].mxu0
  %v5350 = vadd.f32 0.0, %v5349
  %v5351 = vpop.f32.mrb[0].mxu0
  %v5352 = vadd.f32 0.0, %v5351
  %v5353 = vpop.f32.mrb[0].mxu0
  %v5354 = vadd.f32 0.0, %v5353
  %5355 = vmatprep.mubr.bf16.mxu0 %v5171
  %5356 = vmatmul.mubr.bf16.gmra.mrb[0].mxu0 %v5007
  %v5357 = vpop.f32.mrb[0].mxu0
  %v5358 = vadd.f32 0.0, %v5357
  %v5359 = vpop.f32.mrb[0].mxu0
  %v5360 = vadd.f32 0.0, %v5359
  %v5361 = vpop.f32.mrb[0].mxu0
  %v5362 = vadd.f32 0.0, %v5361
  %v5363 = vpop.f32.mrb[0].mxu0
  %v5364 = vadd.f32 0.0, %v5363
  %5365 = vdwg.mxu0
  %v5366 = vadd.f32 %v4665, %v5208
  %v5367 = vadd.f32 %v4666, %v5210
  %v5368 = vadd.f32 %v4667, %v5212
  %v5369 = vadd.f32 %v4668, %v5214
  %v5370 = vadd.f32 %v4669, %v5218
  %v5371 = vadd.f32 %v4670, %v5220
  %v5372 = vadd.f32 %v4671, %v5222
  %v5373 = vadd.f32 %v4672, %v5224
  %v5374 = vadd.f32 %v4673, %v5228
  %v5375 = vadd.f32 %v4674, %v5230
  %v5376 = vadd.f32 %v4675, %v5232
  %v5377 = vadd.f32 %v4676, %v5234
  %v5378 = vadd.f32 %v4677, %v5238
  %v5379 = vadd.f32 %v4678, %v5240
  %v5380 = vadd.f32 %v4679, %v5242
  %v5381 = vadd.f32 %v4680, %v5244
  %v5382 = vadd.f32 %v4681, %v5248
  %v5383 = vadd.f32 %v4682, %v5250
  %v5384 = vadd.f32 %v4683, %v5252
  %v5385 = vadd.f32 %v4684, %v5254
  %v5386 = vadd.f32 %v4685, %v5258
  %v5387 = vadd.f32 %v4686, %v5260
  %v5388 = vadd.f32 %v4687, %v5262
  %v5389 = vadd.f32 %v4688, %v5264
  %v5390 = vadd.f32 %v4689, %v5268
  %v5391 = vadd.f32 %v4690, %v5270
  %v5392 = vadd.f32 %v4691, %v5272
  %v5393 = vadd.f32 %v4692, %v5274
  %v5394 = vadd.f32 %v4693, %v5278
  %v5395 = vadd.f32 %v4694, %v5280
  %v5396 = vadd.f32 %v4695, %v5282
  %v5397 = vadd.f32 %v4696, %v5284
  %v5398 = vadd.f32 %v4697, %v5288
  %v5399 = vadd.f32 %v4698, %v5290
  %v5400 = vadd.f32 %v4699, %v5292
  %v5401 = vadd.f32 %v4700, %v5294
  %v5402 = vadd.f32 %v4701, %v5298
  %v5403 = vadd.f32 %v4702, %v5300
  %v5404 = vadd.f32 %v4703, %v5302
  %v5405 = vadd.f32 %v4704, %v5304
  %v5406 = vadd.f32 %v4705, %v5308
  %v5407 = vadd.f32 %v4706, %v5310
  %v5408 = vadd.f32 %v4707, %v5312
  %v5409 = vadd.f32 %v4708, %v5314
  %v5410 = vadd.f32 %v4709, %v5318
  %v5411 = vadd.f32 %v4710, %v5320
  %v5412 = vadd.f32 %v4711, %v5322
  %v5413 = vadd.f32 %v4712, %v5324
  %v5414 = vadd.f32 %v4713, %v5328
  %v5415 = vadd.f32 %v4714, %v5330
  %v5416 = vadd.f32 %v4715, %v5332
  %v5417 = vadd.f32 %v4716, %v5334
  %v5418 = vadd.f32 %v4717, %v5338
  %v5419 = vadd.f32 %v4718, %v5340
  %v5420 = vadd.f32 %v4719, %v5342
  %v5421 = vadd.f32 %v4720, %v5344
  %v5422 = vadd.f32 %v4721, %v5348
  %v5423 = vadd.f32 %v4722, %v5350
  %v5424 = vadd.f32 %v4723, %v5352
  %v5425 = vadd.f32 %v4724, %v5354
  %v5426 = vadd.f32 %v4725, %v5358
  %v5427 = vadd.f32 %v4726, %v5360
  %v5428 = vadd.f32 %v4727, %v5362
  %v5429 = vadd.f32 %v4728, %v5364
  %5431 = vset.pattern.permute.xlu0 0
  %5432 = vperm.xlu0 %5431, %v30
  %v5433 = vpop.permute.xlu0 %5432
  %5436 = vset.pattern.permute.xlu0 0
  %5437 = vperm.xlu0 %5436, %v31
  %v5438 = vpop.permute.xlu0 %5437
  %5441 = vset.pattern.permute.xlu0 0
  %5442 = vperm.xlu0 %5441, %v32
  %v5443 = vpop.permute.xlu0 %5442
  %5446 = vset.pattern.permute.xlu0 0
  %5447 = vperm.xlu0 %5446, %v33
  %v5448 = vpop.permute.xlu0 %5447
  %5451 = vset.pattern.permute.xlu0 0
  %5452 = vperm.xlu0 %5451, %v34
  %v5453 = vpop.permute.xlu0 %5452
  %5456 = vset.pattern.permute.xlu0 0
  %5457 = vperm.xlu0 %5456, %v35
  %v5458 = vpop.permute.xlu0 %5457
  %5461 = vset.pattern.permute.xlu0 0
  %5462 = vperm.xlu0 %5461, %v36
  %v5463 = vpop.permute.xlu0 %5462
  %5466 = vset.pattern.permute.xlu0 0
  %5467 = vperm.xlu0 %5466, %v37
  %v5468 = vpop.permute.xlu0 %5467
  %5471 = vset.pattern.permute.xlu0 0
  %5472 = vperm.xlu0 %5471, %v38
  %v5473 = vpop.permute.xlu0 %5472
  %5476 = vset.pattern.permute.xlu0 0
  %5477 = vperm.xlu0 %5476, %v39
  %v5478 = vpop.permute.xlu0 %5477
  %5481 = vset.pattern.permute.xlu0 0
  %5482 = vperm.xlu0 %5481, %v40
  %v5483 = vpop.permute.xlu0 %5482
  %5486 = vset.pattern.permute.xlu0 0
  %5487 = vperm.xlu0 %5486, %v41
  %v5488 = vpop.permute.xlu0 %5487
  %5491 = vset.pattern.permute.xlu0 0
  %5492 = vperm.xlu0 %5491, %v42
  %v5493 = vpop.permute.xlu0 %5492
  %5496 = vset.pattern.permute.xlu0 0
  %5497 = vperm.xlu0 %5496, %v43
  %v5498 = vpop.permute.xlu0 %5497
  %5501 = vset.pattern.permute.xlu0 0
  %5502 = vperm.xlu0 %5501, %v44
  %v5503 = vpop.permute.xlu0 %5502
  %5506 = vset.pattern.permute.xlu0 0
  %5507 = vperm.xlu0 %5506, %v45
  %v5508 = vpop.permute.xlu0 %5507
  %5511 = vset.pattern.permute.xlu0 0
  %5512 = vperm.xlu0 %5511, %v46
  %v5513 = vpop.permute.xlu0 %5512
  %5516 = vset.pattern.permute.xlu0 0
  %5517 = vperm.xlu0 %5516, %v47
  %v5518 = vpop.permute.xlu0 %5517
  %5521 = vset.pattern.permute.xlu0 0
  %5522 = vperm.xlu0 %5521, %v48
  %v5523 = vpop.permute.xlu0 %5522
  %5526 = vset.pattern.permute.xlu0 0
  %5527 = vperm.xlu0 %5526, %v49
  %v5528 = vpop.permute.xlu0 %5527
  %5531 = vset.pattern.permute.xlu0 0
  %5532 = vperm.xlu0 %5531, %v50
  %v5533 = vpop.permute.xlu0 %5532
  %5536 = vset.pattern.permute.xlu0 0
  %5537 = vperm.xlu0 %5536, %v51
  %v5538 = vpop.permute.xlu0 %5537
  %5541 = vset.pattern.permute.xlu0 0
  %5542 = vperm.xlu0 %5541, %v52
  %v5543 = vpop.permute.xlu0 %5542
  %5546 = vset.pattern.permute.xlu0 0
  %5547 = vperm.xlu0 %5546, %v53
  %v5548 = vpop.permute.xlu0 %5547
  %5551 = vset.pattern.permute.xlu0 0
  %5552 = vperm.xlu0 %5551, %v54
  %v5553 = vpop.permute.xlu0 %5552
  %5556 = vset.pattern.permute.xlu0 0
  %5557 = vperm.xlu0 %5556, %v55
  %v5558 = vpop.permute.xlu0 %5557
  %5561 = vset.pattern.permute.xlu0 0
  %5562 = vperm.xlu0 %5561, %v56
  %v5563 = vpop.permute.xlu0 %5562
  %5566 = vset.pattern.permute.xlu0 0
  %5567 = vperm.xlu0 %5566, %v57
  %v5568 = vpop.permute.xlu0 %5567
  %5571 = vset.pattern.permute.xlu0 0
  %5572 = vperm.xlu0 %5571, %v58
  %v5573 = vpop.permute.xlu0 %5572
  %5576 = vset.pattern.permute.xlu0 0
  %5577 = vperm.xlu0 %5576, %v59
  %v5578 = vpop.permute.xlu0 %5577
  %5581 = vset.pattern.permute.xlu0 0
  %5582 = vperm.xlu0 %5581, %v60
  %v5583 = vpop.permute.xlu0 %5582
  %5586 = vset.pattern.permute.xlu0 0
  %5587 = vperm.xlu0 %5586, %v61
  %v5588 = vpop.permute.xlu0 %5587
  %v5590 = vmul.f32 %v5366, %v5433
  %v5591 = vmul.f32 %v5367, %v5433
  %v5592 = vmul.f32 %v5368, %v5438
  %v5593 = vmul.f32 %v5369, %v5438
  %v5594 = vmul.f32 %v5370, %v5443
  %v5595 = vmul.f32 %v5371, %v5443
  %v5596 = vmul.f32 %v5372, %v5448
  %v5597 = vmul.f32 %v5373, %v5448
  %v5598 = vmul.f32 %v5374, %v5453
  %v5599 = vmul.f32 %v5375, %v5453
  %v5600 = vmul.f32 %v5376, %v5458
  %v5601 = vmul.f32 %v5377, %v5458
  %v5602 = vmul.f32 %v5378, %v5463
  %v5603 = vmul.f32 %v5379, %v5463
  %v5604 = vmul.f32 %v5380, %v5468
  %v5605 = vmul.f32 %v5381, %v5468
  %v5606 = vmul.f32 %v5382, %v5473
  %v5607 = vmul.f32 %v5383, %v5473
  %v5608 = vmul.f32 %v5384, %v5478
  %v5609 = vmul.f32 %v5385, %v5478
  %v5610 = vmul.f32 %v5386, %v5483
  %v5611 = vmul.f32 %v5387, %v5483
  %v5612 = vmul.f32 %v5388, %v5488
  %v5613 = vmul.f32 %v5389, %v5488
  %v5614 = vmul.f32 %v5390, %v5493
  %v5615 = vmul.f32 %v5391, %v5493
  %v5616 = vmul.f32 %v5392, %v5498
  %v5617 = vmul.f32 %v5393, %v5498
  %v5618 = vmul.f32 %v5394, %v5503
  %v5619 = vmul.f32 %v5395, %v5503
  %v5620 = vmul.f32 %v5396, %v5508
  %v5621 = vmul.f32 %v5397, %v5508
  %v5622 = vmul.f32 %v5398, %v5513
  %v5623 = vmul.f32 %v5399, %v5513
  %v5624 = vmul.f32 %v5400, %v5518
  %v5625 = vmul.f32 %v5401, %v5518
  %v5626 = vmul.f32 %v5402, %v5523
  %v5627 = vmul.f32 %v5403, %v5523
  %v5628 = vmul.f32 %v5404, %v5528
  %v5629 = vmul.f32 %v5405, %v5528
  %v5630 = vmul.f32 %v5406, %v5533
  %v5631 = vmul.f32 %v5407, %v5533
  %v5632 = vmul.f32 %v5408, %v5538
  %v5633 = vmul.f32 %v5409, %v5538
  %v5634 = vmul.f32 %v5410, %v5543
  %v5635 = vmul.f32 %v5411, %v5543
  %v5636 = vmul.f32 %v5412, %v5548
  %v5637 = vmul.f32 %v5413, %v5548
  %v5638 = vmul.f32 %v5414, %v5553
  %v5639 = vmul.f32 %v5415, %v5553
  %v5640 = vmul.f32 %v5416, %v5558
  %v5641 = vmul.f32 %v5417, %v5558
  %v5642 = vmul.f32 %v5418, %v5563
  %v5643 = vmul.f32 %v5419, %v5563
  %v5644 = vmul.f32 %v5420, %v5568
  %v5645 = vmul.f32 %v5421, %v5568
  %v5646 = vmul.f32 %v5422, %v5573
  %v5647 = vmul.f32 %v5423, %v5573
  %v5648 = vmul.f32 %v5424, %v5578
  %v5649 = vmul.f32 %v5425, %v5578
  %v5650 = vmul.f32 %v5426, %v5583
  %v5651 = vmul.f32 %v5427, %v5583
  %v5652 = vmul.f32 %v5428, %v5588
  %v5653 = vmul.f32 %v5429, %v5588
  %v5654 = vadd.f32 %v5590, %v5592
  %v5655 = vadd.f32 %v5654, %v5594
  %v5656 = vadd.f32 %v5655, %v5596
  %v5657 = vadd.f32 %v5656, %v5598
  %v5658 = vadd.f32 %v5657, %v5600
  %v5659 = vadd.f32 %v5658, %v5602
  %v5660 = vadd.f32 %v5659, %v5604
  %v5661 = vadd.f32 %v5660, %v5606
  %v5662 = vadd.f32 %v5661, %v5608
  %v5663 = vadd.f32 %v5662, %v5610
  %v5664 = vadd.f32 %v5663, %v5612
  %v5665 = vadd.f32 %v5664, %v5614
  %v5666 = vadd.f32 %v5665, %v5616
  %v5667 = vadd.f32 %v5666, %v5618
  %v5668 = vadd.f32 %v5667, %v5620
  %v5669 = vadd.f32 %v5668, %v5622
  %v5670 = vadd.f32 %v5669, %v5624
  %v5671 = vadd.f32 %v5670, %v5626
  %v5672 = vadd.f32 %v5671, %v5628
  %v5673 = vadd.f32 %v5672, %v5630
  %v5674 = vadd.f32 %v5673, %v5632
  %v5675 = vadd.f32 %v5674, %v5634
  %v5676 = vadd.f32 %v5675, %v5636
  %v5677 = vadd.f32 %v5676, %v5638
  %v5678 = vadd.f32 %v5677, %v5640
  %v5679 = vadd.f32 %v5678, %v5642
  %v5680 = vadd.f32 %v5679, %v5644
  %v5681 = vadd.f32 %v5680, %v5646
  %v5682 = vadd.f32 %v5681, %v5648
  %v5683 = vadd.f32 %v5682, %v5650
  %v5684 = vadd.f32 %v5683, %v5652
  %v5685 = vrot.slane %v5684, 4
  %v5686 = vadd.f32 %v5684, %v5685
  %v5687 = vrot.slane %v5686, 2
  %v5688 = vadd.f32 %v5686, %v5687
  %v5689 = vrot.slane %v5688, 1
  %v5690 = vadd.f32 %v5688, %v5689
  %v5691 = vsel %vm750, %v5591, 0.0
  %v5692 = vsel %vm750, %v5593, 0.0
  %v5693 = vadd.f32 %v5691, %v5692
  %v5694 = vsel %vm750, %v5595, 0.0
  %v5695 = vadd.f32 %v5693, %v5694
  %v5696 = vsel %vm750, %v5597, 0.0
  %v5697 = vadd.f32 %v5695, %v5696
  %v5698 = vsel %vm750, %v5599, 0.0
  %v5699 = vadd.f32 %v5697, %v5698
  %v5700 = vsel %vm750, %v5601, 0.0
  %v5701 = vadd.f32 %v5699, %v5700
  %v5702 = vsel %vm750, %v5603, 0.0
  %v5703 = vadd.f32 %v5701, %v5702
  %v5704 = vsel %vm750, %v5605, 0.0
  %v5705 = vadd.f32 %v5703, %v5704
  %v5706 = vsel %vm750, %v5607, 0.0
  %v5707 = vadd.f32 %v5705, %v5706
  %v5708 = vsel %vm750, %v5609, 0.0
  %v5709 = vadd.f32 %v5707, %v5708
  %v5710 = vsel %vm750, %v5611, 0.0
  %v5711 = vadd.f32 %v5709, %v5710
  %v5712 = vsel %vm750, %v5613, 0.0
  %v5713 = vadd.f32 %v5711, %v5712
  %v5714 = vsel %vm750, %v5615, 0.0
  %v5715 = vadd.f32 %v5713, %v5714
  %v5716 = vsel %vm750, %v5617, 0.0
  %v5717 = vadd.f32 %v5715, %v5716
  %v5718 = vsel %vm750, %v5619, 0.0
  %v5719 = vadd.f32 %v5717, %v5718
  %v5720 = vsel %vm750, %v5621, 0.0
  %v5721 = vadd.f32 %v5719, %v5720
  %v5722 = vsel %vm750, %v5623, 0.0
  %v5723 = vadd.f32 %v5721, %v5722
  %v5724 = vsel %vm750, %v5625, 0.0
  %v5725 = vadd.f32 %v5723, %v5724
  %v5726 = vsel %vm750, %v5627, 0.0
  %v5727 = vadd.f32 %v5725, %v5726
  %v5728 = vsel %vm750, %v5629, 0.0
  %v5729 = vadd.f32 %v5727, %v5728
  %v5730 = vsel %vm750, %v5631, 0.0
  %v5731 = vadd.f32 %v5729, %v5730
  %v5732 = vsel %vm750, %v5633, 0.0
  %v5733 = vadd.f32 %v5731, %v5732
  %v5734 = vsel %vm750, %v5635, 0.0
  %v5735 = vadd.f32 %v5733, %v5734
  %v5736 = vsel %vm750, %v5637, 0.0
  %v5737 = vadd.f32 %v5735, %v5736
  %v5738 = vsel %vm750, %v5639, 0.0
  %v5739 = vadd.f32 %v5737, %v5738
  %v5740 = vsel %vm750, %v5641, 0.0
  %v5741 = vadd.f32 %v5739, %v5740
  %v5742 = vsel %vm750, %v5643, 0.0
  %v5743 = vadd.f32 %v5741, %v5742
  %v5744 = vsel %vm750, %v5645, 0.0
  %v5745 = vadd.f32 %v5743, %v5744
  %v5746 = vsel %vm750, %v5647, 0.0
  %v5747 = vadd.f32 %v5745, %v5746
  %v5748 = vsel %vm750, %v5649, 0.0
  %v5749 = vadd.f32 %v5747, %v5748
  %v5750 = vsel %vm750, %v5651, 0.0
  %v5751 = vadd.f32 %v5749, %v5750
  %v5752 = vsel %vm750, %v5653, 0.0
  %v5753 = vadd.f32 %v5751, %v5752
  %v5754 = vrot.slane %v5753, 4
  %v5755 = vadd.f32 %v5753, %v5754
  %v5756 = vrot.slane %v5755, 2
  %v5757 = vadd.f32 %v5755, %v5756
  %v5758 = vrot.slane %v5757, 1
  %v5759 = vadd.f32 %v5757, %v5758
  %v5760 = vmul.f32 %v5590, %v5590
  %v5761 = vmul.f32 %v5591, %v5591
  %v5762 = vmul.f32 %v5592, %v5592
  %v5763 = vmul.f32 %v5593, %v5593
  %v5764 = vmul.f32 %v5594, %v5594
  %v5765 = vmul.f32 %v5595, %v5595
  %v5766 = vmul.f32 %v5596, %v5596
  %v5767 = vmul.f32 %v5597, %v5597
  %v5768 = vmul.f32 %v5598, %v5598
  %v5769 = vmul.f32 %v5599, %v5599
  %v5770 = vmul.f32 %v5600, %v5600
  %v5771 = vmul.f32 %v5601, %v5601
  %v5772 = vmul.f32 %v5602, %v5602
  %v5773 = vmul.f32 %v5603, %v5603
  %v5774 = vmul.f32 %v5604, %v5604
  %v5775 = vmul.f32 %v5605, %v5605
  %v5776 = vmul.f32 %v5606, %v5606
  %v5777 = vmul.f32 %v5607, %v5607
  %v5778 = vmul.f32 %v5608, %v5608
  %v5779 = vmul.f32 %v5609, %v5609
  %v5780 = vmul.f32 %v5610, %v5610
  %v5781 = vmul.f32 %v5611, %v5611
  %v5782 = vmul.f32 %v5612, %v5612
  %v5783 = vmul.f32 %v5613, %v5613
  %v5784 = vmul.f32 %v5614, %v5614
  %v5785 = vmul.f32 %v5615, %v5615
  %v5786 = vmul.f32 %v5616, %v5616
  %v5787 = vmul.f32 %v5617, %v5617
  %v5788 = vmul.f32 %v5618, %v5618
  %v5789 = vmul.f32 %v5619, %v5619
  %v5790 = vmul.f32 %v5620, %v5620
  %v5791 = vmul.f32 %v5621, %v5621
  %v5792 = vmul.f32 %v5622, %v5622
  %v5793 = vmul.f32 %v5623, %v5623
  %v5794 = vmul.f32 %v5624, %v5624
  %v5795 = vmul.f32 %v5625, %v5625
  %v5796 = vmul.f32 %v5626, %v5626
  %v5797 = vmul.f32 %v5627, %v5627
  %v5798 = vmul.f32 %v5628, %v5628
  %v5799 = vmul.f32 %v5629, %v5629
  %v5800 = vmul.f32 %v5630, %v5630
  %v5801 = vmul.f32 %v5631, %v5631
  %v5802 = vmul.f32 %v5632, %v5632
  %v5803 = vmul.f32 %v5633, %v5633
  %v5804 = vmul.f32 %v5634, %v5634
  %v5805 = vmul.f32 %v5635, %v5635
  %v5806 = vmul.f32 %v5636, %v5636
  %v5807 = vmul.f32 %v5637, %v5637
  %v5808 = vmul.f32 %v5638, %v5638
  %v5809 = vmul.f32 %v5639, %v5639
  %v5810 = vmul.f32 %v5640, %v5640
  %v5811 = vmul.f32 %v5641, %v5641
  %v5812 = vmul.f32 %v5642, %v5642
  %v5813 = vmul.f32 %v5643, %v5643
  %v5814 = vmul.f32 %v5644, %v5644
  %v5815 = vmul.f32 %v5645, %v5645
  %v5816 = vmul.f32 %v5646, %v5646
  %v5817 = vmul.f32 %v5647, %v5647
  %v5818 = vmul.f32 %v5648, %v5648
  %v5819 = vmul.f32 %v5649, %v5649
  %v5820 = vmul.f32 %v5650, %v5650
  %v5821 = vmul.f32 %v5651, %v5651
  %v5822 = vmul.f32 %v5652, %v5652
  %v5823 = vmul.f32 %v5653, %v5653
  %v5824 = vadd.f32 %v5760, %v5762
  %v5825 = vadd.f32 %v5824, %v5764
  %v5826 = vadd.f32 %v5825, %v5766
  %v5827 = vadd.f32 %v5826, %v5768
  %v5828 = vadd.f32 %v5827, %v5770
  %v5829 = vadd.f32 %v5828, %v5772
  %v5830 = vadd.f32 %v5829, %v5774
  %v5831 = vadd.f32 %v5830, %v5776
  %v5832 = vadd.f32 %v5831, %v5778
  %v5833 = vadd.f32 %v5832, %v5780
  %v5834 = vadd.f32 %v5833, %v5782
  %v5835 = vadd.f32 %v5834, %v5784
  %v5836 = vadd.f32 %v5835, %v5786
  %v5837 = vadd.f32 %v5836, %v5788
  %v5838 = vadd.f32 %v5837, %v5790
  %v5839 = vadd.f32 %v5838, %v5792
  %v5840 = vadd.f32 %v5839, %v5794
  %v5841 = vadd.f32 %v5840, %v5796
  %v5842 = vadd.f32 %v5841, %v5798
  %v5843 = vadd.f32 %v5842, %v5800
  %v5844 = vadd.f32 %v5843, %v5802
  %v5845 = vadd.f32 %v5844, %v5804
  %v5846 = vadd.f32 %v5845, %v5806
  %v5847 = vadd.f32 %v5846, %v5808
  %v5848 = vadd.f32 %v5847, %v5810
  %v5849 = vadd.f32 %v5848, %v5812
  %v5850 = vadd.f32 %v5849, %v5814
  %v5851 = vadd.f32 %v5850, %v5816
  %v5852 = vadd.f32 %v5851, %v5818
  %v5853 = vadd.f32 %v5852, %v5820
  %v5854 = vadd.f32 %v5853, %v5822
  %v5855 = vrot.slane %v5854, 4
  %v5856 = vadd.f32 %v5854, %v5855
  %v5857 = vrot.slane %v5856, 2
  %v5858 = vadd.f32 %v5856, %v5857
  %v5859 = vrot.slane %v5858, 1
  %v5860 = vadd.f32 %v5858, %v5859
  %v5861 = vsel %vm750, %v5761, 0.0
  %v5862 = vsel %vm750, %v5763, 0.0
  %v5863 = vadd.f32 %v5861, %v5862
  %v5864 = vsel %vm750, %v5765, 0.0
  %v5865 = vadd.f32 %v5863, %v5864
  %v5866 = vsel %vm750, %v5767, 0.0
  %v5867 = vadd.f32 %v5865, %v5866
  %v5868 = vsel %vm750, %v5769, 0.0
  %v5869 = vadd.f32 %v5867, %v5868
  %v5870 = vsel %vm750, %v5771, 0.0
  %v5871 = vadd.f32 %v5869, %v5870
  %v5872 = vsel %vm750, %v5773, 0.0
  %v5873 = vadd.f32 %v5871, %v5872
  %v5874 = vsel %vm750, %v5775, 0.0
  %v5875 = vadd.f32 %v5873, %v5874
  %v5876 = vsel %vm750, %v5777, 0.0
  %v5877 = vadd.f32 %v5875, %v5876
  %v5878 = vsel %vm750, %v5779, 0.0
  %v5879 = vadd.f32 %v5877, %v5878
  %v5880 = vsel %vm750, %v5781, 0.0
  %v5881 = vadd.f32 %v5879, %v5880
  %v5882 = vsel %vm750, %v5783, 0.0
  %v5883 = vadd.f32 %v5881, %v5882
  %v5884 = vsel %vm750, %v5785, 0.0
  %v5885 = vadd.f32 %v5883, %v5884
  %v5886 = vsel %vm750, %v5787, 0.0
  %v5887 = vadd.f32 %v5885, %v5886
  %v5888 = vsel %vm750, %v5789, 0.0
  %v5889 = vadd.f32 %v5887, %v5888
  %v5890 = vsel %vm750, %v5791, 0.0
  %v5891 = vadd.f32 %v5889, %v5890
  %v5892 = vsel %vm750, %v5793, 0.0
  %v5893 = vadd.f32 %v5891, %v5892
  %v5894 = vsel %vm750, %v5795, 0.0
  %v5895 = vadd.f32 %v5893, %v5894
  %v5896 = vsel %vm750, %v5797, 0.0
  %v5897 = vadd.f32 %v5895, %v5896
  %v5898 = vsel %vm750, %v5799, 0.0
  %v5899 = vadd.f32 %v5897, %v5898
  %v5900 = vsel %vm750, %v5801, 0.0
  %v5901 = vadd.f32 %v5899, %v5900
  %v5902 = vsel %vm750, %v5803, 0.0
  %v5903 = vadd.f32 %v5901, %v5902
  %v5904 = vsel %vm750, %v5805, 0.0
  %v5905 = vadd.f32 %v5903, %v5904
  %v5906 = vsel %vm750, %v5807, 0.0
  %v5907 = vadd.f32 %v5905, %v5906
  %v5908 = vsel %vm750, %v5809, 0.0
  %v5909 = vadd.f32 %v5907, %v5908
  %v5910 = vsel %vm750, %v5811, 0.0
  %v5911 = vadd.f32 %v5909, %v5910
  %v5912 = vsel %vm750, %v5813, 0.0
  %v5913 = vadd.f32 %v5911, %v5912
  %v5914 = vsel %vm750, %v5815, 0.0
  %v5915 = vadd.f32 %v5913, %v5914
  %v5916 = vsel %vm750, %v5817, 0.0
  %v5917 = vadd.f32 %v5915, %v5916
  %v5918 = vsel %vm750, %v5819, 0.0
  %v5919 = vadd.f32 %v5917, %v5918
  %v5920 = vsel %vm750, %v5821, 0.0
  %v5921 = vadd.f32 %v5919, %v5920
  %v5922 = vsel %vm750, %v5823, 0.0
  %v5923 = vadd.f32 %v5921, %v5922
  %v5924 = vrot.slane %v5923, 4
  %v5925 = vadd.f32 %v5923, %v5924
  %v5926 = vrot.slane %v5925, 2
  %v5927 = vadd.f32 %v5925, %v5926
  %v5928 = vrot.slane %v5927, 1
  %v5929 = vadd.f32 %v5927, %v5928
  %v5930 = vmul.f32 %v5690, 0.0069444445
  %v5931 = vmul.f32 %v5759, 0.0069444445
  %v5932 = vmul.f32 %v5860, 0.0069444445
  %v5933 = vmul.f32 %v5929, 0.0069444445
  %v5934 = vmul.f32 %v5930, %v5930
  %v5935 = vmul.f32 %v5931, %v5931
  %v5936 = vsub.f32 %v5932, %v5934
  %v5937 = vsub.f32 %v5933, %v5935
  %v5938 = vld [vmem:[%s2] sm:$0x3]
  %v5939 = vadd.f32 %v5936, 0.001
  %v5940 = vadd.f32 %v5937, 0.001
  %v5941 = vrsqrt.pop %v5939
  %v5942 = vrsqrt.pop %v5940
  %v5945 = vcombine.low %v5941, %v5942
  %v5947 = vunpack.c.l.s4 1966171168
  %v5948 = vunpack.c.0.s8 %v5947
  %v5949 = vlaneseq
  %v5950 = vshrl.u32 %v5949, 7
  %v5951 = vsub.s32 %v5948, %v5950
  %v5952 = vrot.slane %v5945, %v5951
  %v5954 = vunpack.c.l.s4 1966171168
  %v5955 = vunpack.c.0.s8 %v5954
  %v5956 = vlaneseq
  %v5957 = vshrl.u32 %v5956, 7
  %v5958 = vsub.s32 %v5955, %v5957
  %v5959 = vrot.slane %v5952, %v5958
  %v5961 = vmul.f32 %v5938, %v5959
  %v5962 = vld [vmem:[%s3] sm:$0x3]
  %v5964 = vlaneseq
  %v5965 = vshrl.u32 %v5964, 7
  %v5966 = vsub.s32 0, %v5965
  %v5967 = vrot.slane %v5961, %v5966
  %v5968 = vlaneseq
  %v5969 = vshrl.u32 %v5968, 7
  %v5970 = vsub.s32 1, %v5969
  %v5971 = vrot.slane %v5961, %v5970
  %v5974 = vmul.f32 %v5930, %v5967
  %v5975 = vmul.f32 %v5931, %v5971
  %v5978 = vcombine.low %v5974, %v5975
  %v5980 = vunpack.c.l.s4 1966171168
  %v5981 = vunpack.c.0.s8 %v5980
  %v5982 = vlaneseq
  %v5983 = vshrl.u32 %v5982, 7
  %v5984 = vsub.s32 %v5981, %v5983
  %v5985 = vrot.slane %v5978, %v5984
  %v5987 = vunpack.c.l.s4 1966171168
  %v5988 = vunpack.c.0.s8 %v5987
  %v5989 = vlaneseq
  %v5990 = vshrl.u32 %v5989, 7
  %v5991 = vsub.s32 %v5988, %v5990
  %v5992 = vrot.slane %v5985, %v5991
  %v5994 = vsub.f32 %v5962, %v5992
  %v5995 = vmul.f32 %v5590, %v5967
  %v5996 = vmul.f32 %v5591, %v5971
  %v5997 = vmul.f32 %v5592, %v5967
  %v5998 = vmul.f32 %v5593, %v5971
  %v5999 = vmul.f32 %v5594, %v5967
  %v6000 = vmul.f32 %v5595, %v5971
  %v6001 = vmul.f32 %v5596, %v5967
  %v6002 = vmul.f32 %v5597, %v5971
  %v6003 = vmul.f32 %v5598, %v5967
  %v6004 = vmul.f32 %v5599, %v5971
  %v6005 = vmul.f32 %v5600, %v5967
  %v6006 = vmul.f32 %v5601, %v5971
  %v6007 = vmul.f32 %v5602, %v5967
  %v6008 = vmul.f32 %v5603, %v5971
  %v6009 = vmul.f32 %v5604, %v5967
  %v6010 = vmul.f32 %v5605, %v5971
  %v6011 = vmul.f32 %v5606, %v5967
  %v6012 = vmul.f32 %v5607, %v5971
  %v6013 = vmul.f32 %v5608, %v5967
  %v6014 = vmul.f32 %v5609, %v5971
  %v6015 = vmul.f32 %v5610, %v5967
  %v6016 = vmul.f32 %v5611, %v5971
  %v6017 = vmul.f32 %v5612, %v5967
  %v6018 = vmul.f32 %v5613, %v5971
  %v6019 = vmul.f32 %v5614, %v5967
  %v6020 = vmul.f32 %v5615, %v5971
  %v6021 = vmul.f32 %v5616, %v5967
  %v6022 = vmul.f32 %v5617, %v5971
  %v6023 = vmul.f32 %v5618, %v5967
  %v6024 = vmul.f32 %v5619, %v5971
  %v6025 = vmul.f32 %v5620, %v5967
  %v6026 = vmul.f32 %v5621, %v5971
  %v6027 = vmul.f32 %v5622, %v5967
  %v6028 = vmul.f32 %v5623, %v5971
  %v6029 = vmul.f32 %v5624, %v5967
  %v6030 = vmul.f32 %v5625, %v5971
  %v6031 = vmul.f32 %v5626, %v5967
  %v6032 = vmul.f32 %v5627, %v5971
  %v6033 = vmul.f32 %v5628, %v5967
  %v6034 = vmul.f32 %v5629, %v5971
  %v6035 = vmul.f32 %v5630, %v5967
  %v6036 = vmul.f32 %v5631, %v5971
  %v6037 = vmul.f32 %v5632, %v5967
  %v6038 = vmul.f32 %v5633, %v5971
  %v6039 = vmul.f32 %v5634, %v5967
  %v6040 = vmul.f32 %v5635, %v5971
  %v6041 = vmul.f32 %v5636, %v5967
  %v6042 = vmul.f32 %v5637, %v5971
  %v6044 = vlaneseq
  %v6045 = vshrl.u32 %v6044, 7
  %v6046 = vsub.s32 0, %v6045
  %v6047 = vrot.slane %v5994, %v6046
  %v6048 = vlaneseq
  %v6049 = vshrl.u32 %v6048, 7
  %v6050 = vsub.s32 1, %v6049
  %v6051 = vrot.slane %v5994, %v6050
  %v6054 = vadd.f32 %v5995, %v6047
  %v6055 = vadd.f32 %v5996, %v6051
  %v6056 = vadd.f32 %v5997, %v6047
  %v6057 = vadd.f32 %v5998, %v6051
  %v6058 = vadd.f32 %v5999, %v6047
  %v6059 = vadd.f32 %v6000, %v6051
  %v6060 = vadd.f32 %v6001, %v6047
  %v6061 = vadd.f32 %v6002, %v6051
  %v6062 = vadd.f32 %v6003, %v6047
  %v6063 = vadd.f32 %v6004, %v6051
  %v6064 = vadd.f32 %v6005, %v6047
  %v6065 = vadd.f32 %v6006, %v6051
  %v6066 = vadd.f32 %v6007, %v6047
  %v6067 = vadd.f32 %v6008, %v6051
  %v6068 = vadd.f32 %v6009, %v6047
  %v6069 = vadd.f32 %v6010, %v6051
  %v6070 = vadd.f32 %v6011, %v6047
  %v6071 = vadd.f32 %v6012, %v6051
  %v6072 = vadd.f32 %v6013, %v6047
  %v6073 = vadd.f32 %v6014, %v6051
  %v6074 = vadd.f32 %v6015, %v6047
  %v6075 = vadd.f32 %v6016, %v6051
  %v6076 = vadd.f32 %v6017, %v6047
  %v6077 = vadd.f32 %v6018, %v6051
  %v6078 = vadd.f32 %v6019, %v6047
  %v6079 = vadd.f32 %v6020, %v6051
  %v6080 = vadd.f32 %v6021, %v6047
  %v6081 = vadd.f32 %v6022, %v6051
  %v6082 = vadd.f32 %v6023, %v6047
  %v6083 = vadd.f32 %v6024, %v6051
  %v6084 = vadd.f32 %v6025, %v6047
  %v6085 = vadd.f32 %v6026, %v6051
  %v6086 = vadd.f32 %v6027, %v6047
  %v6087 = vadd.f32 %v6028, %v6051
  %v6088 = vadd.f32 %v6029, %v6047
  %v6089 = vadd.f32 %v6030, %v6051
  %v6090 = vadd.f32 %v6031, %v6047
  %v6091 = vadd.f32 %v6032, %v6051
  %v6092 = vadd.f32 %v6033, %v6047
  %v6093 = vadd.f32 %v6034, %v6051
  %v6094 = vadd.f32 %v6035, %v6047
  %v6095 = vadd.f32 %v6036, %v6051
  %v6096 = vadd.f32 %v6037, %v6047
  %v6097 = vadd.f32 %v6038, %v6051
  %v6098 = vadd.f32 %v6039, %v6047
  %v6099 = vadd.f32 %v6040, %v6051
  %v6100 = vadd.f32 %v6041, %v6047
  %v6101 = vadd.f32 %v6042, %v6051
  %v6102 = vmax.f32 %v6054, 0.0
  %v6103 = vmax.f32 %v6055, 0.0
  %v6104 = vmax.f32 %v6056, 0.0
  %v6105 = vmax.f32 %v6057, 0.0
  %v6106 = vmax.f32 %v6058, 0.0
  %v6107 = vmax.f32 %v6059, 0.0
  %v6108 = vmax.f32 %v6060, 0.0
  %v6109 = vmax.f32 %v6061, 0.0
  %v6110 = vmax.f32 %v6062, 0.0
  %v6111 = vmax.f32 %v6063, 0.0
  %v6112 = vmax.f32 %v6064, 0.0
  %v6113 = vmax.f32 %v6065, 0.0
  %v6114 = vmax.f32 %v6066, 0.0
  %v6115 = vmax.f32 %v6067, 0.0
  %v6116 = vmax.f32 %v6068, 0.0
  %v6117 = vmax.f32 %v6069, 0.0
  %v6118 = vmax.f32 %v6070, 0.0
  %v6119 = vmax.f32 %v6071, 0.0
  %v6120 = vmax.f32 %v6072, 0.0
  %v6121 = vmax.f32 %v6073, 0.0
  %v6122 = vmax.f32 %v6074, 0.0
  %v6123 = vmax.f32 %v6075, 0.0
  %v6124 = vmax.f32 %v6076, 0.0
  %v6125 = vmax.f32 %v6077, 0.0
  %v6126 = vmax.f32 %v6078, 0.0
  %v6127 = vmax.f32 %v6079, 0.0
  %v6128 = vmax.f32 %v6080, 0.0
  %v6129 = vmax.f32 %v6081, 0.0
  %v6130 = vmax.f32 %v6082, 0.0
  %v6131 = vmax.f32 %v6083, 0.0
  %v6132 = vmax.f32 %v6084, 0.0
  %v6133 = vmax.f32 %v6085, 0.0
  %v6134 = vmax.f32 %v6086, 0.0
  %v6135 = vmax.f32 %v6087, 0.0
  %v6136 = vmax.f32 %v6088, 0.0
  %v6137 = vmax.f32 %v6089, 0.0
  %v6138 = vmax.f32 %v6090, 0.0
  %v6139 = vmax.f32 %v6091, 0.0
  %v6140 = vmax.f32 %v6092, 0.0
  %v6141 = vmax.f32 %v6093, 0.0
  %v6142 = vmax.f32 %v6094, 0.0
  %v6143 = vmax.f32 %v6095, 0.0
  %v6144 = vmax.f32 %v6096, 0.0
  %v6145 = vmax.f32 %v6097, 0.0
  %v6146 = vmax.f32 %v6098, 0.0
  %v6147 = vmax.f32 %v6099, 0.0
  %v6148 = vmax.f32 %v6100, 0.0
  %v6149 = vmax.f32 %v6101, 0.0
  %v6150 = vmul.f32 %v6102, %v5433
  %v6151 = vmul.f32 %v6103, %v5433
  %v6152 = vmul.f32 %v6104, %v5438
  %v6153 = vmul.f32 %v6105, %v5438
  %v6154 = vmul.f32 %v6106, %v5443
  %v6155 = vmul.f32 %v6107, %v5443
  %v6156 = vmul.f32 %v6108, %v5448
  %v6157 = vmul.f32 %v6109, %v5448
  %v6158 = vmul.f32 %v6110, %v5453
  %v6159 = vmul.f32 %v6111, %v5453
  %v6160 = vmul.f32 %v6112, %v5458
  %v6161 = vmul.f32 %v6113, %v5458
  %v6162 = vmul.f32 %v6114, %v5463
  %v6163 = vmul.f32 %v6115, %v5463
  %v6164 = vmul.f32 %v6116, %v5468
  %v6165 = vmul.f32 %v6117, %v5468
  %v6166 = vmul.f32 %v6118, %v5473
  %v6167 = vmul.f32 %v6119, %v5473
  %v6168 = vmul.f32 %v6120, %v5478
  %v6169 = vmul.f32 %v6121, %v5478
  %v6170 = vmul.f32 %v6122, %v5483
  %v6171 = vmul.f32 %v6123, %v5483
  %v6172 = vmul.f32 %v6124, %v5488
  %v6173 = vmul.f32 %v6125, %v5488
  %v6174 = vmul.f32 %v6126, %v5493
  %v6175 = vmul.f32 %v6127, %v5493
  %v6176 = vmul.f32 %v6128, %v5498
  %v6177 = vmul.f32 %v6129, %v5498
  %v6178 = vmul.f32 %v6130, %v5503
  %v6179 = vmul.f32 %v6131, %v5503
  %v6180 = vmul.f32 %v6132, %v5508
  %v6181 = vmul.f32 %v6133, %v5508
  %v6182 = vmul.f32 %v6134, %v5513
  %v6183 = vmul.f32 %v6135, %v5513
  %v6184 = vmul.f32 %v6136, %v5518
  %v6185 = vmul.f32 %v6137, %v5518
  %v6186 = vmul.f32 %v6138, %v5523
  %v6187 = vmul.f32 %v6139, %v5523
  %v6188 = vmul.f32 %v6140, %v5528
  %v6189 = vmul.f32 %v6141, %v5528
  %v6190 = vmul.f32 %v6142, %v5533
  %v6191 = vmul.f32 %v6143, %v5533
  %v6192 = vmul.f32 %v6144, %v5538
  %v6193 = vmul.f32 %v6145, %v5538
  %v6194 = vmul.f32 %v6146, %v5543
  %v6195 = vmul.f32 %v6147, %v5543
  %v6196 = vmul.f32 %v6148, %v5548
  %v6197 = vmul.f32 %v6149, %v5548
  %6198 = vst [vmem:[#allocation2] sm:$0xff] 0.0
  %6199 = vst.msk [vmem:[#allocation2 + $0x8] sm:$0xff] %vm750, 0.0
  %6200 = vst [vmem:[#allocation2 + $0x10] sm:$0xff] 0.0
  %6201 = vst.msk [vmem:[#allocation2 + $0x18] sm:$0xff] %vm750, 0.0
  %6202 = vst [vmem:[#allocation2 + $0x20] sm:$0xff] 0.0
  %6203 = vst.msk [vmem:[#allocation2 + $0x28] sm:$0xff] %vm750, 0.0
  %6204 = vst [vmem:[#allocation2 + $0x30] sm:$0xff] 0.0
  %6205 = vst.msk [vmem:[#allocation2 + $0x38] sm:$0xff] %vm750, 0.0
  %6206 = vst [vmem:[#allocation2 + $0x40] sm:$0xff] 0.0
  %6207 = vst.msk [vmem:[#allocation2 + $0x48] sm:$0xff] %vm750, 0.0
  %6208 = vst [vmem:[#allocation2 + $0x50] sm:$0xff] 0.0
  %6209 = vst.msk [vmem:[#allocation2 + $0x58] sm:$0xff] %vm750, 0.0
  %s6210 = scalar_lea.vmem [#allocation2], 96
  %6211 = vst [vmem:[%s6210] sm:$0xff] %v6150
  %6212 = vst.msk [vmem:[%s6210 + $0x8] sm:$0xff] %vm750, %v6151
  %6213 = vst [vmem:[%s6210 + $0x10] sm:$0xff] %v6152
  %6214 = vst.msk [vmem:[%s6210 + $0x18] sm:$0xff] %vm750, %v6153
  %6215 = vst [vmem:[%s6210 + $0x20] sm:$0xff] %v6154
  %6216 = vst.msk [vmem:[%s6210 + $0x28] sm:$0xff] %vm750, %v6155
  %6217 = vst [vmem:[%s6210 + $0x30] sm:$0xff] %v6156
  %6218 = vst.msk [vmem:[%s6210 + $0x38] sm:$0xff] %vm750, %v6157
  %6219 = vst [vmem:[%s6210 + $0x40] sm:$0xff] %v6158
  %6220 = vst.msk [vmem:[%s6210 + $0x48] sm:$0xff] %vm750, %v6159
  %6221 = vst [vmem:[%s6210 + $0x50] sm:$0xff] %v6160
  %6222 = vst.msk [vmem:[%s6210 + $0x58] sm:$0xff] %vm750, %v6161
  %6223 = vst [vmem:[%s6210 + $0x60] sm:$0xff] %v6162
  %6224 = vst.msk [vmem:[%s6210 + $0x68] sm:$0xff] %vm750, %v6163
  %6225 = vst [vmem:[%s6210 + $0x70] sm:$0xff] %v6164
  %6226 = vst.msk [vmem:[%s6210 + $0x78] sm:$0xff] %vm750, %v6165
  %6227 = vst [vmem:[%s6210 + $0x80] sm:$0xff] %v6166
  %6228 = vst.msk [vmem:[%s6210 + $0x88] sm:$0xff] %vm750, %v6167
  %6229 = vst [vmem:[%s6210 + $0x90] sm:$0xff] %v6168
  %6230 = vst.msk [vmem:[%s6210 + $0x98] sm:$0xff] %vm750, %v6169
  %6231 = vst [vmem:[%s6210 + $0xa0] sm:$0xff] %v6170
  %6232 = vst.msk [vmem:[%s6210 + $0xa8] sm:$0xff] %vm750, %v6171
  %6233 = vst [vmem:[%s6210 + $0xb0] sm:$0xff] %v6172
  %6234 = vst.msk [vmem:[%s6210 + $0xb8] sm:$0xff] %vm750, %v6173
  %6235 = vst [vmem:[%s6210 + $0xc0] sm:$0xff] %v6174
  %6236 = vst.msk [vmem:[%s6210 + $0xc8] sm:$0xff] %vm750, %v6175
  %6237 = vst [vmem:[%s6210 + $0xd0] sm:$0xff] %v6176
  %6238 = vst.msk [vmem:[%s6210 + $0xd8] sm:$0xff] %vm750, %v6177
  %6239 = vst [vmem:[%s6210 + $0xe0] sm:$0xff] %v6178
  %6240 = vst.msk [vmem:[%s6210 + $0xe8] sm:$0xff] %vm750, %v6179
  %6241 = vst [vmem:[%s6210 + $0xf0] sm:$0xff] %v6180
  %6242 = vst.msk [vmem:[%s6210 + $0xf8] sm:$0xff] %vm750, %v6181
  %6243 = vst [vmem:[%s6210 + $0x100] sm:$0xff] %v6182
  %6244 = vst.msk [vmem:[%s6210 + $0x108] sm:$0xff] %vm750, %v6183
  %6245 = vst [vmem:[%s6210 + $0x110] sm:$0xff] %v6184
  %6246 = vst.msk [vmem:[%s6210 + $0x118] sm:$0xff] %vm750, %v6185
  %6247 = vst [vmem:[%s6210 + $0x120] sm:$0xff] %v6186
  %6248 = vst.msk [vmem:[%s6210 + $0x128] sm:$0xff] %vm750, %v6187
  %6249 = vst [vmem:[%s6210 + $0x130] sm:$0xff] %v6188
  %6250 = vst.msk [vmem:[%s6210 + $0x138] sm:$0xff] %vm750, %v6189
  %6251 = vst [vmem:[%s6210 + $0x140] sm:$0xff] %v6190
  %6252 = vst.msk [vmem:[%s6210 + $0x148] sm:$0xff] %vm750, %v6191
  %6253 = vst [vmem:[%s6210 + $0x150] sm:$0xff] %v6192
  %6254 = vst.msk [vmem:[%s6210 + $0x158] sm:$0xff] %vm750, %v6193
  %6255 = vst [vmem:[%s6210 + $0x160] sm:$0xff] %v6194
  %6256 = vst.msk [vmem:[%s6210 + $0x168] sm:$0xff] %vm750, %v6195
  %6257 = vst [vmem:[%s6210 + $0x170] sm:$0xff] %v6196
  %6258 = vst.msk [vmem:[%s6210 + $0x178] sm:$0xff] %vm750, %v6197
  %s6259 = scalar_lea.vmem [#allocation2], 480
  %6260 = vst [vmem:[%s6259] sm:$0xff] 0.0
  %6261 = vst.msk [vmem:[%s6259 + $0x8] sm:$0xff] %vm750, 0.0
  %6262 = vst [vmem:[%s6259 + $0x10] sm:$0xff] 0.0
  %6263 = vst.msk [vmem:[%s6259 + $0x18] sm:$0xff] %vm750, 0.0
  %6264 = vst [vmem:[%s6259 + $0x20] sm:$0xff] 0.0
  %6265 = vst.msk [vmem:[%s6259 + $0x28] sm:$0xff] %vm750, 0.0
  %6266 = vst [vmem:[%s6259 + $0x30] sm:$0xff] 0.0
  %6267 = vst.msk [vmem:[%s6259 + $0x38] sm:$0xff] %vm750, 0.0
  %6268 = vst [vmem:[%s6259 + $0x40] sm:$0xff] 0.0
  %6269 = vst.msk [vmem:[%s6259 + $0x48] sm:$0xff] %vm750, 0.0
  %6270 = vst [vmem:[%s6259 + $0x50] sm:$0xff] 0.0
  %6271 = vst.msk [vmem:[%s6259 + $0x58] sm:$0xff] %vm750, 0.0
  %v6272 = vld [vmem:[#allocation2] sm:$0xff]
  %v6273 = vld [vmem:[#allocation2 + $0x8] sm:$0xff]
  %v6274 = vld [vmem:[#allocation2 + $0x10] sm:$0xff]
  %v6275 = vld [vmem:[#allocation2 + $0x18] sm:$0xff]
  %v6276 = vld [vmem:[#allocation2 + $0x20] sm:$0xff]
  %v6277 = vld [vmem:[#allocation2 + $0x28] sm:$0xff]
  %v6278 = vld [vmem:[#allocation2 + $0x30] sm:$0xff]
  %v6279 = vld [vmem:[#allocation2 + $0x38] sm:$0xff]
  %v6280 = vld [vmem:[#allocation2 + $0x40] sm:$0xff]
  %v6281 = vld [vmem:[#allocation2 + $0x48] sm:$0xff]
  %v6282 = vld [vmem:[#allocation2 + $0x50] sm:$0xff]
  %v6283 = vld [vmem:[#allocation2 + $0x58] sm:$0xff]
  %v6284 = vld [vmem:[#allocation2 + $0x60] sm:$0xff]
  %v6285 = vld [vmem:[#allocation2 + $0x68] sm:$0xff]
  %v6286 = vld [vmem:[#allocation2 + $0x70] sm:$0xff]
  %v6287 = vld [vmem:[#allocation2 + $0x78] sm:$0xff]
  %v6288 = vld [vmem:[#allocation2 + $0x80] sm:$0xff]
  %v6289 = vld [vmem:[#allocation2 + $0x88] sm:$0xff]
  %v6290 = vld [vmem:[#allocation2 + $0x90] sm:$0xff]
  %v6291 = vld [vmem:[#allocation2 + $0x98] sm:$0xff]
  %v6292 = vld [vmem:[#allocation2 + $0xa0] sm:$0xff]
  %v6293 = vld [vmem:[#allocation2 + $0xa8] sm:$0xff]
  %v6294 = vld [vmem:[#allocation2 + $0xb0] sm:$0xff]
  %v6295 = vld [vmem:[#allocation2 + $0xb8] sm:$0xff]
  %v6296 = vld [vmem:[#allocation2 + $0xc0] sm:$0xff]
  %v6297 = vld [vmem:[#allocation2 + $0xc8] sm:$0xff]
  %v6298 = vld [vmem:[#allocation2 + $0xd0] sm:$0xff]
  %v6299 = vld [vmem:[#allocation2 + $0xd8] sm:$0xff]
  %v6300 = vld [vmem:[#allocation2 + $0xe0] sm:$0xff]
  %v6301 = vld [vmem:[#allocation2 + $0xe8] sm:$0xff]
  %v6302 = vld [vmem:[#allocation2 + $0xf0] sm:$0xff]
  %v6303 = vld [vmem:[#allocation2 + $0xf8] sm:$0xff]
  %v6304 = vld [vmem:[#allocation2 + $0x100] sm:$0xff]
  %v6305 = vld [vmem:[#allocation2 + $0x108] sm:$0xff]
  %v6306 = vld [vmem:[#allocation2 + $0x110] sm:$0xff]
  %v6307 = vld [vmem:[#allocation2 + $0x118] sm:$0xff]
  %v6308 = vld [vmem:[#allocation2 + $0x120] sm:$0xff]
  %v6309 = vld [vmem:[#allocation2 + $0x128] sm:$0xff]
  %v6310 = vld [vmem:[#allocation2 + $0x130] sm:$0xff]
  %v6311 = vld [vmem:[#allocation2 + $0x138] sm:$0xff]
  %v6312 = vld [vmem:[#allocation2 + $0x140] sm:$0xff]
  %v6313 = vld [vmem:[#allocation2 + $0x148] sm:$0xff]
  %v6314 = vld [vmem:[#allocation2 + $0x150] sm:$0xff]
  %v6315 = vld [vmem:[#allocation2 + $0x158] sm:$0xff]
  %v6316 = vld [vmem:[#allocation2 + $0x160] sm:$0xff]
  %v6317 = vld [vmem:[#allocation2 + $0x168] sm:$0xff]
  %v6318 = vld [vmem:[#allocation2 + $0x170] sm:$0xff]
  %v6319 = vld [vmem:[#allocation2 + $0x178] sm:$0xff]
  %v6320 = vld [vmem:[%s4] sm:$0xff]
  %v6321 = vld [vmem:[%s4 + $0x8] sm:$0xff]
  %v6322 = vld [vmem:[%s4 + $0x10] sm:$0xff]
  %v6323 = vld [vmem:[%s4 + $0x18] sm:$0xff]
  %v6324 = vld [vmem:[%s4 + $0x20] sm:$0xff]
  %v6325 = vld [vmem:[%s4 + $0x28] sm:$0xff]
  %v6326 = vld [vmem:[%s4 + $0x30] sm:$0xff]
  %v6327 = vld [vmem:[%s4 + $0x38] sm:$0xff]
  %v6328 = vld [vmem:[%s4 + $0x40] sm:$0xff]
  %v6329 = vld [vmem:[%s4 + $0x48] sm:$0xff]
  %v6330 = vld [vmem:[%s4 + $0x50] sm:$0xff]
  %v6331 = vld [vmem:[%s4 + $0x58] sm:$0xff]
  %v6332 = vld [vmem:[%s4 + $0x60] sm:$0xff]
  %v6333 = vld [vmem:[%s4 + $0x68] sm:$0xff]
  %v6334 = vld [vmem:[%s4 + $0x70] sm:$0xff]
  %v6335 = vld [vmem:[%s4 + $0x78] sm:$0xff]
  %v6336 = vld [vmem:[%s4 + $0x80] sm:$0xff]
  %v6337 = vld [vmem:[%s4 + $0x88] sm:$0xff]
  %v6338 = vld [vmem:[%s4 + $0x90] sm:$0xff]
  %v6339 = vld [vmem:[%s4 + $0x98] sm:$0xff]
  %v6340 = vunpack.c.l.bf16 %v6320
  %v6341 = vunpack.c.h.bf16 %v6320
  %v6342 = vunpack.c.l.bf16 %v6321
  %v6343 = vunpack.c.h.bf16 %v6321
  %v6344 = vunpack.c.l.bf16 %v6322
  %v6345 = vunpack.c.h.bf16 %v6322
  %v6346 = vunpack.c.l.bf16 %v6323
  %v6347 = vunpack.c.h.bf16 %v6323
  %v6348 = vunpack.c.l.bf16 %v6324
  %v6349 = vunpack.c.h.bf16 %v6324
  %v6350 = vunpack.c.l.bf16 %v6325
  %v6351 = vunpack.c.h.bf16 %v6325
  %v6352 = vunpack.c.l.bf16 %v6326
  %v6353 = vunpack.c.h.bf16 %v6326
  %v6354 = vunpack.c.l.bf16 %v6327
  %v6355 = vunpack.c.h.bf16 %v6327
  %v6356 = vunpack.c.l.bf16 %v6328
  %v6357 = vunpack.c.h.bf16 %v6328
  %v6358 = vunpack.c.l.bf16 %v6329
  %v6359 = vunpack.c.h.bf16 %v6329
  %v6360 = vunpack.c.l.bf16 %v6330
  %v6361 = vunpack.c.h.bf16 %v6330
  %v6362 = vunpack.c.l.bf16 %v6331
  %v6363 = vunpack.c.h.bf16 %v6331
  %v6364 = vunpack.c.l.bf16 %v6332
  %v6365 = vunpack.c.h.bf16 %v6332
  %v6366 = vunpack.c.l.bf16 %v6333
  %v6367 = vunpack.c.h.bf16 %v6333
  %v6368 = vunpack.c.l.bf16 %v6334
  %v6369 = vunpack.c.h.bf16 %v6334
  %v6370 = vunpack.c.l.bf16 %v6335
  %v6371 = vunpack.c.h.bf16 %v6335
  %v6372 = vunpack.c.l.bf16 %v6336
  %v6373 = vunpack.c.h.bf16 %v6336
  %v6374 = vunpack.c.l.bf16 %v6337
  %v6375 = vunpack.c.h.bf16 %v6337
  %v6376 = vunpack.c.l.bf16 %v6338
  %v6377 = vunpack.c.h.bf16 %v6338
  %v6378 = vunpack.c.l.bf16 %v6339
  %v6379 = vunpack.c.h.bf16 %v6339
  %s6380 = scalar_lea.vmem [#allocation2], 32
  %v6381 = vld [vmem:[%s6380] sm:$0xff]
  %v6382 = vld [vmem:[%s6380 + $0x8] sm:$0xff]
  %v6383 = vld [vmem:[%s6380 + $0x10] sm:$0xff]
  %v6384 = vld [vmem:[%s6380 + $0x18] sm:$0xff]
  %v6385 = vld [vmem:[%s6380 + $0x20] sm:$0xff]
  %v6386 = vld [vmem:[%s6380 + $0x28] sm:$0xff]
  %v6387 = vld [vmem:[%s6380 + $0x30] sm:$0xff]
  %v6388 = vld [vmem:[%s6380 + $0x38] sm:$0xff]
  %v6389 = vld [vmem:[%s6380 + $0x40] sm:$0xff]
  %v6390 = vld [vmem:[%s6380 + $0x48] sm:$0xff]
  %v6391 = vld [vmem:[%s6380 + $0x50] sm:$0xff]
  %v6392 = vld [vmem:[%s6380 + $0x58] sm:$0xff]
  %v6393 = vld [vmem:[%s6380 + $0x60] sm:$0xff]
  %v6394 = vld [vmem:[%s6380 + $0x68] sm:$0xff]
  %v6395 = vld [vmem:[%s6380 + $0x70] sm:$0xff]
  %v6396 = vld [vmem:[%s6380 + $0x78] sm:$0xff]
  %v6397 = vld [vmem:[%s6380 + $0x80] sm:$0xff]
  %v6398 = vld [vmem:[%s6380 + $0x88] sm:$0xff]
  %v6399 = vld [vmem:[%s6380 + $0x90] sm:$0xff]
  %v6400 = vld [vmem:[%s6380 + $0x98] sm:$0xff]
  %v6401 = vld [vmem:[%s6380 + $0xa0] sm:$0xff]
  %v6402 = vld [vmem:[%s6380 + $0xa8] sm:$0xff]
  %v6403 = vld [vmem:[%s6380 + $0xb0] sm:$0xff]
  %v6404 = vld [vmem:[%s6380 + $0xb8] sm:$0xff]
  %v6405 = vld [vmem:[%s6380 + $0xc0] sm:$0xff]
  %v6406 = vld [vmem:[%s6380 + $0xc8] sm:$0xff]
  %v6407 = vld [vmem:[%s6380 + $0xd0] sm:$0xff]
  %v6408 = vld [vmem:[%s6380 + $0xd8] sm:$0xff]
  %v6409 = vld [vmem:[%s6380 + $0xe0] sm:$0xff]
  %v6410 = vld [vmem:[%s6380 + $0xe8] sm:$0xff]
  %v6411 = vld [vmem:[%s6380 + $0xf0] sm:$0xff]
  %v6412 = vld [vmem:[%s6380 + $0xf8] sm:$0xff]
  %v6413 = vld [vmem:[%s6380 + $0x100] sm:$0xff]
  %v6414 = vld [vmem:[%s6380 + $0x108] sm:$0xff]
  %v6415 = vld [vmem:[%s6380 + $0x110] sm:$0xff]
  %v6416 = vld [vmem:[%s6380 + $0x118] sm:$0xff]
  %v6417 = vld [vmem:[%s6380 + $0x120] sm:$0xff]
  %v6418 = vld [vmem:[%s6380 + $0x128] sm:$0xff]
  %v6419 = vld [vmem:[%s6380 + $0x130] sm:$0xff]
  %v6420 = vld [vmem:[%s6380 + $0x138] sm:$0xff]
  %v6421 = vld [vmem:[%s6380 + $0x140] sm:$0xff]
  %v6422 = vld [vmem:[%s6380 + $0x148] sm:$0xff]
  %v6423 = vld [vmem:[%s6380 + $0x150] sm:$0xff]
  %v6424 = vld [vmem:[%s6380 + $0x158] sm:$0xff]
  %v6425 = vld [vmem:[%s6380 + $0x160] sm:$0xff]
  %v6426 = vld [vmem:[%s6380 + $0x168] sm:$0xff]
  %v6427 = vld [vmem:[%s6380 + $0x170] sm:$0xff]
  %v6428 = vld [vmem:[%s6380 + $0x178] sm:$0xff]
  %s6429 = scalar_lea.vmem %s4, 160
  %v6430 = vld [vmem:[%s6429] sm:$0xff]
  %v6431 = vld [vmem:[%s6429 + $0x8] sm:$0xff]
  %v6432 = vld [vmem:[%s6429 + $0x10] sm:$0xff]
  %v6433 = vld [vmem:[%s6429 + $0x18] sm:$0xff]
  %v6434 = vld [vmem:[%s6429 + $0x20] sm:$0xff]
  %v6435 = vld [vmem:[%s6429 + $0x28] sm:$0xff]
  %v6436 = vld [vmem:[%s6429 + $0x30] sm:$0xff]
  %v6437 = vld [vmem:[%s6429 + $0x38] sm:$0xff]
  %v6438 = vld [vmem:[%s6429 + $0x40] sm:$0xff]
  %v6439 = vld [vmem:[%s6429 + $0x48] sm:$0xff]
  %v6440 = vld [vmem:[%s6429 + $0x50] sm:$0xff]
  %v6441 = vld [vmem:[%s6429 + $0x58] sm:$0xff]
  %v6442 = vld [vmem:[%s6429 + $0x60] sm:$0xff]
  %v6443 = vld [vmem:[%s6429 + $0x68] sm:$0xff]
  %v6444 = vld [vmem:[%s6429 + $0x70] sm:$0xff]
  %v6445 = vld [vmem:[%s6429 + $0x78] sm:$0xff]
  %v6446 = vld [vmem:[%s6429 + $0x80] sm:$0xff]
  %v6447 = vld [vmem:[%s6429 + $0x88] sm:$0xff]
  %v6448 = vld [vmem:[%s6429 + $0x90] sm:$0xff]
  %v6449 = vld [vmem:[%s6429 + $0x98] sm:$0xff]
  %v6450 = vunpack.c.l.bf16 %v6430
  %v6451 = vunpack.c.h.bf16 %v6430
  %v6452 = vunpack.c.l.bf16 %v6431
  %v6453 = vunpack.c.h.bf16 %v6431
  %v6454 = vunpack.c.l.bf16 %v6432
  %v6455 = vunpack.c.h.bf16 %v6432
  %v6456 = vunpack.c.l.bf16 %v6433
  %v6457 = vunpack.c.h.bf16 %v6433
  %v6458 = vunpack.c.l.bf16 %v6434
  %v6459 = vunpack.c.h.bf16 %v6434
  %v6460 = vunpack.c.l.bf16 %v6435
  %v6461 = vunpack.c.h.bf16 %v6435
  %v6462 = vunpack.c.l.bf16 %v6436
  %v6463 = vunpack.c.h.bf16 %v6436
  %v6464 = vunpack.c.l.bf16 %v6437
  %v6465 = vunpack.c.h.bf16 %v6437
  %v6466 = vunpack.c.l.bf16 %v6438
  %v6467 = vunpack.c.h.bf16 %v6438
  %v6468 = vunpack.c.l.bf16 %v6439
  %v6469 = vunpack.c.h.bf16 %v6439
  %v6470 = vunpack.c.l.bf16 %v6440
  %v6471 = vunpack.c.h.bf16 %v6440
  %v6472 = vunpack.c.l.bf16 %v6441
  %v6473 = vunpack.c.h.bf16 %v6441
  %v6474 = vunpack.c.l.bf16 %v6442
  %v6475 = vunpack.c.h.bf16 %v6442
  %v6476 = vunpack.c.l.bf16 %v6443
  %v6477 = vunpack.c.h.bf16 %v6443
  %v6478 = vunpack.c.l.bf16 %v6444
  %v6479 = vunpack.c.h.bf16 %v6444
  %v6480 = vunpack.c.l.bf16 %v6445
  %v6481 = vunpack.c.h.bf16 %v6445
  %v6482 = vunpack.c.l.bf16 %v6446
  %v6483 = vunpack.c.h.bf16 %v6446
  %v6484 = vunpack.c.l.bf16 %v6447
  %v6485 = vunpack.c.h.bf16 %v6447
  %v6486 = vunpack.c.l.bf16 %v6448
  %v6487 = vunpack.c.h.bf16 %v6448
  %v6488 = vunpack.c.l.bf16 %v6449
  %v6489 = vunpack.c.h.bf16 %v6449
  %v6491 = vsel %vm750, %v6382, 0
  %v6494 = vsel %vm750, %v6384, 0
  %v6497 = vsel %vm750, %v6386, 0
  %v6500 = vsel %vm750, %v6388, 0
  %v6503 = vsel %vm750, %v6390, 0
  %v6506 = vsel %vm750, %v6392, 0
  %v6509 = vsel %vm750, %v6394, 0
  %v6512 = vsel %vm750, %v6396, 0
  %v6515 = vsel %vm750, %v6398, 0
  %v6518 = vsel %vm750, %v6400, 0
  %v6521 = vsel %vm750, %v6402, 0
  %v6524 = vsel %vm750, %v6404, 0
  %v6527 = vsel %vm750, %v6406, 0
  %v6530 = vsel %vm750, %v6408, 0
  %v6533 = vsel %vm750, %v6410, 0
  %v6536 = vsel %vm750, %v6412, 0
  %v6539 = vsel %vm750, %v6414, 0
  %v6542 = vsel %vm750, %v6416, 0
  %v6545 = vsel %vm750, %v6418, 0
  %v6548 = vsel %vm750, %v6420, 0
  %v6551 = vsel %vm750, %v6422, 0
  %v6554 = vsel %vm750, %v6424, 0
  %v6557 = vsel %vm750, %v6426, 0
  %v6560 = vsel %vm750, %v6428, 0
  %6562 = vmatprep.subr.mxu0 %v6451
  %6563 = vmatpush1.msra.mxu0 %v6450
  %6564 = vmatprep.subr.mxu0 %v6453
  %6565 = vmatpush1.msra.mxu0 %v6452
  %6566 = vmatprep.subr.mxu0 %v6455
  %6567 = vmatpush1.msra.mxu0 %v6454
  %6568 = vmatprep.subr.mxu0 %v6457
  %6569 = vmatpush1.msra.mxu0 %v6456
  %6570 = vmatprep.subr.mxu0 %v6459
  %6571 = vmatpush1.msra.mxu0 %v6458
  %6572 = vmatprep.subr.mxu0 %v6461
  %6573 = vmatpush1.msra.mxu0 %v6460
  %6574 = vmatprep.subr.mxu0 %v6463
  %6575 = vmatpush1.msra.mxu0 %v6462
  %6576 = vmatprep.subr.mxu0 %v6465
  %6577 = vmatpush1.msra.mxu0 %v6464
  %6578 = vmatprep.subr.mxu0 %v6467
  %6579 = vmatpush1.msra.mxu0 %v6466
  %6580 = vmatprep.subr.mxu0 %v6469
  %6581 = vmatpush1.msra.mxu0 %v6468
  %6582 = vmatprep.subr.mxu0 %v6471
  %6583 = vmatpush1.msra.mxu0 %v6470
  %6584 = vmatprep.subr.mxu0 %v6473
  %6585 = vmatpush1.msra.mxu0 %v6472
  %6586 = vmatprep.subr.mxu0 %v6475
  %6587 = vmatpush1.msra.mxu0 %v6474
  %6588 = vmatprep.subr.mxu0 %v6477
  %6589 = vmatpush1.msra.mxu0 %v6476
  %6590 = vmatprep.subr.mxu0 %v6479
  %6591 = vmatpush1.msra.mxu0 %v6478
  %6592 = vmatprep.subr.mxu0 %v6481
  %6593 = vmatpush1.msra.mxu0 %v6480
  %6594 = vmatprep.subr.mxu0 %v6483
  %6595 = vmatpush1.msra.mxu0 %v6482
  %6596 = vmatprep.subr.mxu0 %v6485
  %6597 = vmatpush1.msra.mxu0 %v6484
  %6598 = vmatprep.subr.mxu0 %v6487
  %6599 = vmatpush1.msra.mxu0 %v6486
  %6600 = vmatprep.subr.mxu0 %v6489
  %6601 = vmatpush1.msra.mxu0 %v6488
  %6602 = vmatprep.subr.mxu0 0.0
  %6603 = vmatpush1.msra.mxu0 0.0
  %6604 = vmatprep.subr.mxu0 0.0
  %6605 = vmatpush1.msra.mxu0 0.0
  %6606 = vmatprep.subr.mxu0 0.0
  %6607 = vmatpush1.msra.mxu0 0.0
  %6608 = vmatprep.subr.mxu0 0.0
  %6609 = vmatpush1.msra.mxu0 0.0
  %6610 = vmatprep.subr.mxu0 0.0
  %6611 = vmatpush1.msra.mxu0 0.0
  %6612 = vmatprep.subr.mxu0 0.0
  %6613 = vmatpush1.msra.mxu0 0.0
  %6614 = vmatprep.subr.mxu0 0.0
  %6615 = vmatpush1.msra.mxu0 0.0
  %6616 = vmatprep.subr.mxu0 0.0
  %6617 = vmatpush1.msra.mxu0 0.0
  %6618 = vmatprep.subr.mxu0 0.0
  %6619 = vmatpush1.msra.mxu0 0.0
  %6620 = vmatprep.subr.mxu0 0.0
  %6621 = vmatpush1.msra.mxu0 0.0
  %6622 = vmatprep.subr.mxu0 0.0
  %6623 = vmatpush1.msra.mxu0 0.0
  %6624 = vmatprep.subr.mxu0 0.0
  %6625 = vmatpush1.msra.mxu0 0.0
  %6626 = vmatprep.mubr.f32.mxu0 %v6491
  %6627 = vmatmul.mubr.f32.gmra.mrb[0].mxu0 %v6381
  %v6628 = vpop.f32.mrb[0].mxu0
  %v6629 = vadd.f32 0.0, %v6628
  %v6630 = vpop.f32.mrb[0].mxu0
  %v6631 = vadd.f32 0.0, %v6630
  %6632 = vmatprep.mubr.f32.mxu0 %v6494
  %6633 = vmatmul.mubr.f32.gmra.mrb[0].mxu0 %v6383
  %v6634 = vpop.f32.mrb[0].mxu0
  %v6635 = vadd.f32 0.0, %v6634
  %v6636 = vpop.f32.mrb[0].mxu0
  %v6637 = vadd.f32 0.0, %v6636
  %6638 = vmatprep.mubr.f32.mxu0 %v6497
  %6639 = vmatmul.mubr.f32.gmra.mrb[0].mxu0 %v6385
  %v6640 = vpop.f32.mrb[0].mxu0
  %v6641 = vadd.f32 0.0, %v6640
  %v6642 = vpop.f32.mrb[0].mxu0
  %v6643 = vadd.f32 0.0, %v6642
  %6644 = vmatprep.mubr.f32.mxu0 %v6500
  %6645 = vmatmul.mubr.f32.gmra.mrb[0].mxu0 %v6387
  %v6646 = vpop.f32.mrb[0].mxu0
  %v6647 = vadd.f32 0.0, %v6646
  %v6648 = vpop.f32.mrb[0].mxu0
  %v6649 = vadd.f32 0.0, %v6648
  %6650 = vmatprep.mubr.f32.mxu0 %v6503
  %6651 = vmatmul.mubr.f32.gmra.mrb[0].mxu0 %v6389
  %v6652 = vpop.f32.mrb[0].mxu0
  %v6653 = vadd.f32 0.0, %v6652
  %v6654 = vpop.f32.mrb[0].mxu0
  %v6655 = vadd.f32 0.0, %v6654
  %6656 = vmatprep.mubr.f32.mxu0 %v6506
  %6657 = vmatmul.mubr.f32.gmra.mrb[0].mxu0 %v6391
  %v6658 = vpop.f32.mrb[0].mxu0
  %v6659 = vadd.f32 0.0, %v6658
  %v6660 = vpop.f32.mrb[0].mxu0
  %v6661 = vadd.f32 0.0, %v6660
  %6662 = vmatprep.mubr.f32.mxu0 %v6509
  %6663 = vmatmul.mubr.f32.gmra.mrb[0].mxu0 %v6393
  %v6664 = vpop.f32.mrb[0].mxu0
  %v6665 = vadd.f32 0.0, %v6664
  %v6666 = vpop.f32.mrb[0].mxu0
  %v6667 = vadd.f32 0.0, %v6666
  %6668 = vmatprep.mubr.f32.mxu0 %v6512
  %6669 = vmatmul.mubr.f32.gmra.mrb[0].mxu0 %v6395
  %v6670 = vpop.f32.mrb[0].mxu0
  %v6671 = vadd.f32 0.0, %v6670
  %v6672 = vpop.f32.mrb[0].mxu0
  %v6673 = vadd.f32 0.0, %v6672
  %6674 = vmatprep.mubr.f32.mxu0 %v6515
  %6675 = vmatmul.mubr.f32.gmra.mrb[0].mxu0 %v6397
  %v6676 = vpop.f32.mrb[0].mxu0
  %v6677 = vadd.f32 0.0, %v6676
  %v6678 = vpop.f32.mrb[0].mxu0
  %v6679 = vadd.f32 0.0, %v6678
  %6680 = vmatprep.mubr.f32.mxu0 %v6518
  %6681 = vmatmul.mubr.f32.gmra.mrb[0].mxu0 %v6399
  %v6682 = vpop.f32.mrb[0].mxu0
  %v6683 = vadd.f32 0.0, %v6682
  %v6684 = vpop.f32.mrb[0].mxu0
  %v6685 = vadd.f32 0.0, %v6684
  %6686 = vmatprep.mubr.f32.mxu0 %v6521
  %6687 = vmatmul.mubr.f32.gmra.mrb[0].mxu0 %v6401
  %v6688 = vpop.f32.mrb[0].mxu0
  %v6689 = vadd.f32 0.0, %v6688
  %v6690 = vpop.f32.mrb[0].mxu0
  %v6691 = vadd.f32 0.0, %v6690
  %6692 = vmatprep.mubr.f32.mxu0 %v6524
  %6693 = vmatmul.mubr.f32.gmra.mrb[0].mxu0 %v6403
  %v6694 = vpop.f32.mrb[0].mxu0
  %v6695 = vadd.f32 0.0, %v6694
  %v6696 = vpop.f32.mrb[0].mxu0
  %v6697 = vadd.f32 0.0, %v6696
  %6698 = vmatprep.mubr.f32.mxu0 %v6527
  %6699 = vmatmul.mubr.f32.gmra.mrb[0].mxu0 %v6405
  %v6700 = vpop.f32.mrb[0].mxu0
  %v6701 = vadd.f32 0.0, %v6700
  %v6702 = vpop.f32.mrb[0].mxu0
  %v6703 = vadd.f32 0.0, %v6702
  %6704 = vmatprep.mubr.f32.mxu0 %v6530
  %6705 = vmatmul.mubr.f32.gmra.mrb[0].mxu0 %v6407
  %v6706 = vpop.f32.mrb[0].mxu0
  %v6707 = vadd.f32 0.0, %v6706
  %v6708 = vpop.f32.mrb[0].mxu0
  %v6709 = vadd.f32 0.0, %v6708
  %6710 = vmatprep.mubr.f32.mxu0 %v6533
  %6711 = vmatmul.mubr.f32.gmra.mrb[0].mxu0 %v6409
  %v6712 = vpop.f32.mrb[0].mxu0
  %v6713 = vadd.f32 0.0, %v6712
  %v6714 = vpop.f32.mrb[0].mxu0
  %v6715 = vadd.f32 0.0, %v6714
  %6716 = vmatprep.mubr.f32.mxu0 %v6536
  %6717 = vmatmul.mubr.f32.gmra.mrb[0].mxu0 %v6411
  %v6718 = vpop.f32.mrb[0].mxu0
  %v6719 = vadd.f32 0.0, %v6718
  %v6720 = vpop.f32.mrb[0].mxu0
  %v6721 = vadd.f32 0.0, %v6720
  %6722 = vmatprep.mubr.f32.mxu0 %v6539
  %6723 = vmatmul.mubr.f32.gmra.mrb[0].mxu0 %v6413
  %v6724 = vpop.f32.mrb[0].mxu0
  %v6725 = vadd.f32 0.0, %v6724
  %v6726 = vpop.f32.mrb[0].mxu0
  %v6727 = vadd.f32 0.0, %v6726
  %6728 = vmatprep.mubr.f32.mxu0 %v6542
  %6729 = vmatmul.mubr.f32.gmra.mrb[0].mxu0 %v6415
  %v6730 = vpop.f32.mrb[0].mxu0
  %v6731 = vadd.f32 0.0, %v6730
  %v6732 = vpop.f32.mrb[0].mxu0
  %v6733 = vadd.f32 0.0, %v6732
  %6734 = vmatprep.mubr.f32.mxu0 %v6545
  %6735 = vmatmul.mubr.f32.gmra.mrb[0].mxu0 %v6417
  %v6736 = vpop.f32.mrb[0].mxu0
  %v6737 = vadd.f32 0.0, %v6736
  %v6738 = vpop.f32.mrb[0].mxu0
  %v6739 = vadd.f32 0.0, %v6738
  %6740 = vmatprep.mubr.f32.mxu0 %v6548
  %6741 = vmatmul.mubr.f32.gmra.mrb[0].mxu0 %v6419
  %v6742 = vpop.f32.mrb[0].mxu0
  %v6743 = vadd.f32 0.0, %v6742
  %v6744 = vpop.f32.mrb[0].mxu0
  %v6745 = vadd.f32 0.0, %v6744
  %6746 = vmatprep.mubr.f32.mxu0 %v6551
  %6747 = vmatmul.mubr.f32.gmra.mrb[0].mxu0 %v6421
  %v6748 = vpop.f32.mrb[0].mxu0
  %v6749 = vadd.f32 0.0, %v6748
  %v6750 = vpop.f32.mrb[0].mxu0
  %v6751 = vadd.f32 0.0, %v6750
  %6752 = vmatprep.mubr.f32.mxu0 %v6554
  %6753 = vmatmul.mubr.f32.gmra.mrb[0].mxu0 %v6423
  %v6754 = vpop.f32.mrb[0].mxu0
  %v6755 = vadd.f32 0.0, %v6754
  %v6756 = vpop.f32.mrb[0].mxu0
  %v6757 = vadd.f32 0.0, %v6756
  %6758 = vmatprep.mubr.f32.mxu0 %v6557
  %6759 = vmatmul.mubr.f32.gmra.mrb[0].mxu0 %v6425
  %v6760 = vpop.f32.mrb[0].mxu0
  %v6761 = vadd.f32 0.0, %v6760
  %v6762 = vpop.f32.mrb[0].mxu0
  %v6763 = vadd.f32 0.0, %v6762
  %6764 = vmatprep.mubr.f32.mxu0 %v6560
  %6765 = vmatmul.mubr.f32.gmra.mrb[0].mxu0 %v6427
  %v6766 = vpop.f32.mrb[0].mxu0
  %v6767 = vadd.f32 0.0, %v6766
  %v6768 = vpop.f32.mrb[0].mxu0
  %v6769 = vadd.f32 0.0, %v6768
  %6770 = vdwg.mxu0
  %v6772 = vsel %vm750, %v6273, 0
  %v6775 = vsel %vm750, %v6275, 0
  %v6778 = vsel %vm750, %v6277, 0
  %v6781 = vsel %vm750, %v6279, 0
  %v6784 = vsel %vm750, %v6281, 0
  %v6787 = vsel %vm750, %v6283, 0
  %v6790 = vsel %vm750, %v6285, 0
  %v6793 = vsel %vm750, %v6287, 0
  %v6796 = vsel %vm750, %v6289, 0
  %v6799 = vsel %vm750, %v6291, 0
  %v6802 = vsel %vm750, %v6293, 0
  %v6805 = vsel %vm750, %v6295, 0
  %v6808 = vsel %vm750, %v6297, 0
  %v6811 = vsel %vm750, %v6299, 0
  %v6814 = vsel %vm750, %v6301, 0
  %v6817 = vsel %vm750, %v6303, 0
  %v6820 = vsel %vm750, %v6305, 0
  %v6823 = vsel %vm750, %v6307, 0
  %v6826 = vsel %vm750, %v6309, 0
  %v6829 = vsel %vm750, %v6311, 0
  %v6832 = vsel %vm750, %v6313, 0
  %v6835 = vsel %vm750, %v6315, 0
  %v6838 = vsel %vm750, %v6317, 0
  %v6841 = vsel %vm750, %v6319, 0
  %6843 = vmatprep.subr.mxu0 %v6341
  %6844 = vmatpush1.msra.mxu0 %v6340
  %6845 = vmatprep.subr.mxu0 %v6343
  %6846 = vmatpush1.msra.mxu0 %v6342
  %6847 = vmatprep.subr.mxu0 %v6345
  %6848 = vmatpush1.msra.mxu0 %v6344
  %6849 = vmatprep.subr.mxu0 %v6347
  %6850 = vmatpush1.msra.mxu0 %v6346
  %6851 = vmatprep.subr.mxu0 %v6349
  %6852 = vmatpush1.msra.mxu0 %v6348
  %6853 = vmatprep.subr.mxu0 %v6351
  %6854 = vmatpush1.msra.mxu0 %v6350
  %6855 = vmatprep.subr.mxu0 %v6353
  %6856 = vmatpush1.msra.mxu0 %v6352
  %6857 = vmatprep.subr.mxu0 %v6355
  %6858 = vmatpush1.msra.mxu0 %v6354
  %6859 = vmatprep.subr.mxu0 %v6357
  %6860 = vmatpush1.msra.mxu0 %v6356
  %6861 = vmatprep.subr.mxu0 %v6359
  %6862 = vmatpush1.msra.mxu0 %v6358
  %6863 = vmatprep.subr.mxu0 %v6361
  %6864 = vmatpush1.msra.mxu0 %v6360
  %6865 = vmatprep.subr.mxu0 %v6363
  %6866 = vmatpush1.msra.mxu0 %v6362
  %6867 = vmatprep.subr.mxu0 %v6365
  %6868 = vmatpush1.msra.mxu0 %v6364
  %6869 = vmatprep.subr.mxu0 %v6367
  %6870 = vmatpush1.msra.mxu0 %v6366
  %6871 = vmatprep.subr.mxu0 %v6369
  %6872 = vmatpush1.msra.mxu0 %v6368
  %6873 = vmatprep.subr.mxu0 %v6371
  %6874 = vmatpush1.msra.mxu0 %v6370
  %6875 = vmatprep.subr.mxu0 %v6373
  %6876 = vmatpush1.msra.mxu0 %v6372
  %6877 = vmatprep.subr.mxu0 %v6375
  %6878 = vmatpush1.msra.mxu0 %v6374
  %6879 = vmatprep.subr.mxu0 %v6377
  %6880 = vmatpush1.msra.mxu0 %v6376
  %6881 = vmatprep.subr.mxu0 %v6379
  %6882 = vmatpush1.msra.mxu0 %v6378
  %6883 = vmatprep.subr.mxu0 0.0
  %6884 = vmatpush1.msra.mxu0 0.0
  %6885 = vmatprep.subr.mxu0 0.0
  %6886 = vmatpush1.msra.mxu0 0.0
  %6887 = vmatprep.subr.mxu0 0.0
  %6888 = vmatpush1.msra.mxu0 0.0
  %6889 = vmatprep.subr.mxu0 0.0
  %6890 = vmatpush1.msra.mxu0 0.0
  %6891 = vmatprep.subr.mxu0 0.0
  %6892 = vmatpush1.msra.mxu0 0.0
  %6893 = vmatprep.subr.mxu0 0.0
  %6894 = vmatpush1.msra.mxu0 0.0
  %6895 = vmatprep.subr.mxu0 0.0
  %6896 = vmatpush1.msra.mxu0 0.0
  %6897 = vmatprep.subr.mxu0 0.0
  %6898 = vmatpush1.msra.mxu0 0.0
  %6899 = vmatprep.subr.mxu0 0.0
  %6900 = vmatpush1.msra.mxu0 0.0
  %6901 = vmatprep.subr.mxu0 0.0
  %6902 = vmatpush1.msra.mxu0 0.0
  %6903 = vmatprep.subr.mxu0 0.0
  %6904 = vmatpush1.msra.mxu0 0.0
  %6905 = vmatprep.subr.mxu0 0.0
  %6906 = vmatpush1.msra.mxu0 0.0
  %6907 = vmatprep.mubr.f32.mxu0 %v6772
  %6908 = vmatmul.mubr.f32.gmra.mrb[0].mxu0 %v6272
  %v6909 = vpop.f32.mrb[0].mxu0
  %v6910 = vadd.f32 %v6629, %v6909
  %v6911 = vpop.f32.mrb[0].mxu0
  %v6912 = vadd.f32 %v6631, %v6911
  %6913 = vmatprep.mubr.f32.mxu0 %v6775
  %6914 = vmatmul.mubr.f32.gmra.mrb[0].mxu0 %v6274
  %v6915 = vpop.f32.mrb[0].mxu0
  %v6916 = vadd.f32 %v6635, %v6915
  %v6917 = vpop.f32.mrb[0].mxu0
  %v6918 = vadd.f32 %v6637, %v6917
  %6919 = vmatprep.mubr.f32.mxu0 %v6778
  %6920 = vmatmul.mubr.f32.gmra.mrb[0].mxu0 %v6276
  %v6921 = vpop.f32.mrb[0].mxu0
  %v6922 = vadd.f32 %v6641, %v6921
  %v6923 = vpop.f32.mrb[0].mxu0
  %v6924 = vadd.f32 %v6643, %v6923
  %6925 = vmatprep.mubr.f32.mxu0 %v6781
  %6926 = vmatmul.mubr.f32.gmra.mrb[0].mxu0 %v6278
  %v6927 = vpop.f32.mrb[0].mxu0
  %v6928 = vadd.f32 %v6647, %v6927
  %v6929 = vpop.f32.mrb[0].mxu0
  %v6930 = vadd.f32 %v6649, %v6929
  %6931 = vmatprep.mubr.f32.mxu0 %v6784
  %6932 = vmatmul.mubr.f32.gmra.mrb[0].mxu0 %v6280
  %v6933 = vpop.f32.mrb[0].mxu0
  %v6934 = vadd.f32 %v6653, %v6933
  %v6935 = vpop.f32.mrb[0].mxu0
  %v6936 = vadd.f32 %v6655, %v6935
  %6937 = vmatprep.mubr.f32.mxu0 %v6787
  %6938 = vmatmul.mubr.f32.gmra.mrb[0].mxu0 %v6282
  %v6939 = vpop.f32.mrb[0].mxu0
  %v6940 = vadd.f32 %v6659, %v6939
  %v6941 = vpop.f32.mrb[0].mxu0
  %v6942 = vadd.f32 %v6661, %v6941
  %6943 = vmatprep.mubr.f32.mxu0 %v6790
  %6944 = vmatmul.mubr.f32.gmra.mrb[0].mxu0 %v6284
  %v6945 = vpop.f32.mrb[0].mxu0
  %v6946 = vadd.f32 %v6665, %v6945
  %v6947 = vpop.f32.mrb[0].mxu0
  %v6948 = vadd.f32 %v6667, %v6947
  %6949 = vmatprep.mubr.f32.mxu0 %v6793
  %6950 = vmatmul.mubr.f32.gmra.mrb[0].mxu0 %v6286
  %v6951 = vpop.f32.mrb[0].mxu0
  %v6952 = vadd.f32 %v6671, %v6951
  %v6953 = vpop.f32.mrb[0].mxu0
  %v6954 = vadd.f32 %v6673, %v6953
  %6955 = vmatprep.mubr.f32.mxu0 %v6796
  %6956 = vmatmul.mubr.f32.gmra.mrb[0].mxu0 %v6288
  %v6957 = vpop.f32.mrb[0].mxu0
  %v6958 = vadd.f32 %v6677, %v6957
  %v6959 = vpop.f32.mrb[0].mxu0
  %v6960 = vadd.f32 %v6679, %v6959
  %6961 = vmatprep.mubr.f32.mxu0 %v6799
  %6962 = vmatmul.mubr.f32.gmra.mrb[0].mxu0 %v6290
  %v6963 = vpop.f32.mrb[0].mxu0
  %v6964 = vadd.f32 %v6683, %v6963
  %v6965 = vpop.f32.mrb[0].mxu0
  %v6966 = vadd.f32 %v6685, %v6965
  %6967 = vmatprep.mubr.f32.mxu0 %v6802
  %6968 = vmatmul.mubr.f32.gmra.mrb[0].mxu0 %v6292
  %v6969 = vpop.f32.mrb[0].mxu0
  %v6970 = vadd.f32 %v6689, %v6969
  %v6971 = vpop.f32.mrb[0].mxu0
  %v6972 = vadd.f32 %v6691, %v6971
  %6973 = vmatprep.mubr.f32.mxu0 %v6805
  %6974 = vmatmul.mubr.f32.gmra.mrb[0].mxu0 %v6294
  %v6975 = vpop.f32.mrb[0].mxu0
  %v6976 = vadd.f32 %v6695, %v6975
  %v6977 = vpop.f32.mrb[0].mxu0
  %v6978 = vadd.f32 %v6697, %v6977
  %6979 = vmatprep.mubr.f32.mxu0 %v6808
  %6980 = vmatmul.mubr.f32.gmra.mrb[0].mxu0 %v6296
  %v6981 = vpop.f32.mrb[0].mxu0
  %v6982 = vadd.f32 %v6701, %v6981
  %v6983 = vpop.f32.mrb[0].mxu0
  %v6984 = vadd.f32 %v6703, %v6983
  %6985 = vmatprep.mubr.f32.mxu0 %v6811
  %6986 = vmatmul.mubr.f32.gmra.mrb[0].mxu0 %v6298
  %v6987 = vpop.f32.mrb[0].mxu0
  %v6988 = vadd.f32 %v6707, %v6987
  %v6989 = vpop.f32.mrb[0].mxu0
  %v6990 = vadd.f32 %v6709, %v6989
  %6991 = vmatprep.mubr.f32.mxu0 %v6814
  %6992 = vmatmul.mubr.f32.gmra.mrb[0].mxu0 %v6300
  %v6993 = vpop.f32.mrb[0].mxu0
  %v6994 = vadd.f32 %v6713, %v6993
  %v6995 = vpop.f32.mrb[0].mxu0
  %v6996 = vadd.f32 %v6715, %v6995
  %6997 = vmatprep.mubr.f32.mxu0 %v6817
  %6998 = vmatmul.mubr.f32.gmra.mrb[0].mxu0 %v6302
  %v6999 = vpop.f32.mrb[0].mxu0
  %v7000 = vadd.f32 %v6719, %v6999
  %v7001 = vpop.f32.mrb[0].mxu0
  %v7002 = vadd.f32 %v6721, %v7001
  %7003 = vmatprep.mubr.f32.mxu0 %v6820
  %7004 = vmatmul.mubr.f32.gmra.mrb[0].mxu0 %v6304
  %v7005 = vpop.f32.mrb[0].mxu0
  %v7006 = vadd.f32 %v6725, %v7005
  %v7007 = vpop.f32.mrb[0].mxu0
  %v7008 = vadd.f32 %v6727, %v7007
  %7009 = vmatprep.mubr.f32.mxu0 %v6823
  %7010 = vmatmul.mubr.f32.gmra.mrb[0].mxu0 %v6306
  %v7011 = vpop.f32.mrb[0].mxu0
  %v7012 = vadd.f32 %v6731, %v7011
  %v7013 = vpop.f32.mrb[0].mxu0
  %v7014 = vadd.f32 %v6733, %v7013
  %7015 = vmatprep.mubr.f32.mxu0 %v6826
  %7016 = vmatmul.mubr.f32.gmra.mrb[0].mxu0 %v6308
  %v7017 = vpop.f32.mrb[0].mxu0
  %v7018 = vadd.f32 %v6737, %v7017
  %v7019 = vpop.f32.mrb[0].mxu0
  %v7020 = vadd.f32 %v6739, %v7019
  %7021 = vmatprep.mubr.f32.mxu0 %v6829
  %7022 = vmatmul.mubr.f32.gmra.mrb[0].mxu0 %v6310
  %v7023 = vpop.f32.mrb[0].mxu0
  %v7024 = vadd.f32 %v6743, %v7023
  %v7025 = vpop.f32.mrb[0].mxu0
  %v7026 = vadd.f32 %v6745, %v7025
  %7027 = vmatprep.mubr.f32.mxu0 %v6832
  %7028 = vmatmul.mubr.f32.gmra.mrb[0].mxu0 %v6312
  %v7029 = vpop.f32.mrb[0].mxu0
  %v7030 = vadd.f32 %v6749, %v7029
  %v7031 = vpop.f32.mrb[0].mxu0
  %v7032 = vadd.f32 %v6751, %v7031
  %7033 = vmatprep.mubr.f32.mxu0 %v6835
  %7034 = vmatmul.mubr.f32.gmra.mrb[0].mxu0 %v6314
  %v7035 = vpop.f32.mrb[0].mxu0
  %v7036 = vadd.f32 %v6755, %v7035
  %v7037 = vpop.f32.mrb[0].mxu0
  %v7038 = vadd.f32 %v6757, %v7037
  %7039 = vmatprep.mubr.f32.mxu0 %v6838
  %7040 = vmatmul.mubr.f32.gmra.mrb[0].mxu0 %v6316
  %v7041 = vpop.f32.mrb[0].mxu0
  %v7042 = vadd.f32 %v6761, %v7041
  %v7043 = vpop.f32.mrb[0].mxu0
  %v7044 = vadd.f32 %v6763, %v7043
  %7045 = vmatprep.mubr.f32.mxu0 %v6841
  %7046 = vmatmul.mubr.f32.gmra.mrb[0].mxu0 %v6318
  %v7047 = vpop.f32.mrb[0].mxu0
  %v7048 = vadd.f32 %v6767, %v7047
  %v7049 = vpop.f32.mrb[0].mxu0
  %v7050 = vadd.f32 %v6769, %v7049
  %7051 = vdwg.mxu0
  %s7052 = scalar_lea.vmem [#allocation2], 64
  %v7053 = vld [vmem:[%s7052] sm:$0xff]
  %v7054 = vld [vmem:[%s7052 + $0x8] sm:$0xff]
  %v7055 = vld [vmem:[%s7052 + $0x10] sm:$0xff]
  %v7056 = vld [vmem:[%s7052 + $0x18] sm:$0xff]
  %v7057 = vld [vmem:[%s7052 + $0x20] sm:$0xff]
  %v7058 = vld [vmem:[%s7052 + $0x28] sm:$0xff]
  %v7059 = vld [vmem:[%s7052 + $0x30] sm:$0xff]
  %v7060 = vld [vmem:[%s7052 + $0x38] sm:$0xff]
  %v7061 = vld [vmem:[%s7052 + $0x40] sm:$0xff]
  %v7062 = vld [vmem:[%s7052 + $0x48] sm:$0xff]
  %v7063 = vld [vmem:[%s7052 + $0x50] sm:$0xff]
  %v7064 = vld [vmem:[%s7052 + $0x58] sm:$0xff]
  %v7065 = vld [vmem:[%s7052 + $0x60] sm:$0xff]
  %v7066 = vld [vmem:[%s7052 + $0x68] sm:$0xff]
  %v7067 = vld [vmem:[%s7052 + $0x70] sm:$0xff]
  %v7068 = vld [vmem:[%s7052 + $0x78] sm:$0xff]
  %v7069 = vld [vmem:[%s7052 + $0x80] sm:$0xff]
  %v7070 = vld [vmem:[%s7052 + $0x88] sm:$0xff]
  %v7071 = vld [vmem:[%s7052 + $0x90] sm:$0xff]
  %v7072 = vld [vmem:[%s7052 + $0x98] sm:$0xff]
  %v7073 = vld [vmem:[%s7052 + $0xa0] sm:$0xff]
  %v7074 = vld [vmem:[%s7052 + $0xa8] sm:$0xff]
  %v7075 = vld [vmem:[%s7052 + $0xb0] sm:$0xff]
  %v7076 = vld [vmem:[%s7052 + $0xb8] sm:$0xff]
  %v7077 = vld [vmem:[%s7052 + $0xc0] sm:$0xff]
  %v7078 = vld [vmem:[%s7052 + $0xc8] sm:$0xff]
  %v7079 = vld [vmem:[%s7052 + $0xd0] sm:$0xff]
  %v7080 = vld [vmem:[%s7052 + $0xd8] sm:$0xff]
  %v7081 = vld [vmem:[%s7052 + $0xe0] sm:$0xff]
  %v7082 = vld [vmem:[%s7052 + $0xe8] sm:$0xff]
  %v7083 = vld [vmem:[%s7052 + $0xf0] sm:$0xff]
  %v7084 = vld [vmem:[%s7052 + $0xf8] sm:$0xff]
  %v7085 = vld [vmem:[%s7052 + $0x100] sm:$0xff]
  %v7086 = vld [vmem:[%s7052 + $0x108] sm:$0xff]
  %v7087 = vld [vmem:[%s7052 + $0x110] sm:$0xff]
  %v7088 = vld [vmem:[%s7052 + $0x118] sm:$0xff]
  %v7089 = vld [vmem:[%s7052 + $0x120] sm:$0xff]
  %v7090 = vld [vmem:[%s7052 + $0x128] sm:$0xff]
  %v7091 = vld [vmem:[%s7052 + $0x130] sm:$0xff]
  %v7092 = vld [vmem:[%s7052 + $0x138] sm:$0xff]
  %v7093 = vld [vmem:[%s7052 + $0x140] sm:$0xff]
  %v7094 = vld [vmem:[%s7052 + $0x148] sm:$0xff]
  %v7095 = vld [vmem:[%s7052 + $0x150] sm:$0xff]
  %v7096 = vld [vmem:[%s7052 + $0x158] sm:$0xff]
  %v7097 = vld [vmem:[%s7052 + $0x160] sm:$0xff]
  %v7098 = vld [vmem:[%s7052 + $0x168] sm:$0xff]
  %v7099 = vld [vmem:[%s7052 + $0x170] sm:$0xff]
  %v7100 = vld [vmem:[%s7052 + $0x178] sm:$0xff]
  %s7101 = scalar_lea.vmem %s4, 320
  %v7102 = vld [vmem:[%s7101] sm:$0xff]
  %v7103 = vld [vmem:[%s7101 + $0x8] sm:$0xff]
  %v7104 = vld [vmem:[%s7101 + $0x10] sm:$0xff]
  %v7105 = vld [vmem:[%s7101 + $0x18] sm:$0xff]
  %v7106 = vld [vmem:[%s7101 + $0x20] sm:$0xff]
  %v7107 = vld [vmem:[%s7101 + $0x28] sm:$0xff]
  %v7108 = vld [vmem:[%s7101 + $0x30] sm:$0xff]
  %v7109 = vld [vmem:[%s7101 + $0x38] sm:$0xff]
  %v7110 = vld [vmem:[%s7101 + $0x40] sm:$0xff]
  %v7111 = vld [vmem:[%s7101 + $0x48] sm:$0xff]
  %v7112 = vld [vmem:[%s7101 + $0x50] sm:$0xff]
  %v7113 = vld [vmem:[%s7101 + $0x58] sm:$0xff]
  %v7114 = vld [vmem:[%s7101 + $0x60] sm:$0xff]
  %v7115 = vld [vmem:[%s7101 + $0x68] sm:$0xff]
  %v7116 = vld [vmem:[%s7101 + $0x70] sm:$0xff]
  %v7117 = vld [vmem:[%s7101 + $0x78] sm:$0xff]
  %v7118 = vld [vmem:[%s7101 + $0x80] sm:$0xff]
  %v7119 = vld [vmem:[%s7101 + $0x88] sm:$0xff]
  %v7120 = vld [vmem:[%s7101 + $0x90] sm:$0xff]
  %v7121 = vld [vmem:[%s7101 + $0x98] sm:$0xff]
  %v7122 = vunpack.c.l.bf16 %v7102
  %v7123 = vunpack.c.h.bf16 %v7102
  %v7124 = vunpack.c.l.bf16 %v7103
  %v7125 = vunpack.c.h.bf16 %v7103
  %v7126 = vunpack.c.l.bf16 %v7104
  %v7127 = vunpack.c.h.bf16 %v7104
  %v7128 = vunpack.c.l.bf16 %v7105
  %v7129 = vunpack.c.h.bf16 %v7105
  %v7130 = vunpack.c.l.bf16 %v7106
  %v7131 = vunpack.c.h.bf16 %v7106
  %v7132 = vunpack.c.l.bf16 %v7107
  %v7133 = vunpack.c.h.bf16 %v7107
  %v7134 = vunpack.c.l.bf16 %v7108
  %v7135 = vunpack.c.h.bf16 %v7108
  %v7136 = vunpack.c.l.bf16 %v7109
  %v7137 = vunpack.c.h.bf16 %v7109
  %v7138 = vunpack.c.l.bf16 %v7110
  %v7139 = vunpack.c.h.bf16 %v7110
  %v7140 = vunpack.c.l.bf16 %v7111
  %v7141 = vunpack.c.h.bf16 %v7111
  %v7142 = vunpack.c.l.bf16 %v7112
  %v7143 = vunpack.c.h.bf16 %v7112
  %v7144 = vunpack.c.l.bf16 %v7113
  %v7145 = vunpack.c.h.bf16 %v7113
  %v7146 = vunpack.c.l.bf16 %v7114
  %v7147 = vunpack.c.h.bf16 %v7114
  %v7148 = vunpack.c.l.bf16 %v7115
  %v7149 = vunpack.c.h.bf16 %v7115
  %v7150 = vunpack.c.l.bf16 %v7116
  %v7151 = vunpack.c.h.bf16 %v7116
  %v7152 = vunpack.c.l.bf16 %v7117
  %v7153 = vunpack.c.h.bf16 %v7117
  %v7154 = vunpack.c.l.bf16 %v7118
  %v7155 = vunpack.c.h.bf16 %v7118
  %v7156 = vunpack.c.l.bf16 %v7119
  %v7157 = vunpack.c.h.bf16 %v7119
  %v7158 = vunpack.c.l.bf16 %v7120
  %v7159 = vunpack.c.h.bf16 %v7120
  %v7160 = vunpack.c.l.bf16 %v7121
  %v7161 = vunpack.c.h.bf16 %v7121
  %v7163 = vsel %vm750, %v7054, 0
  %v7166 = vsel %vm750, %v7056, 0
  %v7169 = vsel %vm750, %v7058, 0
  %v7172 = vsel %vm750, %v7060, 0
  %v7175 = vsel %vm750, %v7062, 0
  %v7178 = vsel %vm750, %v7064, 0
  %v7181 = vsel %vm750, %v7066, 0
  %v7184 = vsel %vm750, %v7068, 0
  %v7187 = vsel %vm750, %v7070, 0
  %v7190 = vsel %vm750, %v7072, 0
  %v7193 = vsel %vm750, %v7074, 0
  %v7196 = vsel %vm750, %v7076, 0
  %v7199 = vsel %vm750, %v7078, 0
  %v7202 = vsel %vm750, %v7080, 0
  %v7205 = vsel %vm750, %v7082, 0
  %v7208 = vsel %vm750, %v7084, 0
  %v7211 = vsel %vm750, %v7086, 0
  %v7214 = vsel %vm750, %v7088, 0
  %v7217 = vsel %vm750, %v7090, 0
  %v7220 = vsel %vm750, %v7092, 0
  %v7223 = vsel %vm750, %v7094, 0
  %v7226 = vsel %vm750, %v7096, 0
  %v7229 = vsel %vm750, %v7098, 0
  %v7232 = vsel %vm750, %v7100, 0
  %7234 = vmatprep.subr.mxu0 %v7123
  %7235 = vmatpush1.msra.mxu0 %v7122
  %7236 = vmatprep.subr.mxu0 %v7125
  %7237 = vmatpush1.msra.mxu0 %v7124
  %7238 = vmatprep.subr.mxu0 %v7127
  %7239 = vmatpush1.msra.mxu0 %v7126
  %7240 = vmatprep.subr.mxu0 %v7129
  %7241 = vmatpush1.msra.mxu0 %v7128
  %7242 = vmatprep.subr.mxu0 %v7131
  %7243 = vmatpush1.msra.mxu0 %v7130
  %7244 = vmatprep.subr.mxu0 %v7133
  %7245 = vmatpush1.msra.mxu0 %v7132
  %7246 = vmatprep.subr.mxu0 %v7135
  %7247 = vmatpush1.msra.mxu0 %v7134
  %7248 = vmatprep.subr.mxu0 %v7137
  %7249 = vmatpush1.msra.mxu0 %v7136
  %7250 = vmatprep.subr.mxu0 %v7139
  %7251 = vmatpush1.msra.mxu0 %v7138
  %7252 = vmatprep.subr.mxu0 %v7141
  %7253 = vmatpush1.msra.mxu0 %v7140
  %7254 = vmatprep.subr.mxu0 %v7143
  %7255 = vmatpush1.msra.mxu0 %v7142
  %7256 = vmatprep.subr.mxu0 %v7145
  %7257 = vmatpush1.msra.mxu0 %v7144
  %7258 = vmatprep.subr.mxu0 %v7147
  %7259 = vmatpush1.msra.mxu0 %v7146
  %7260 = vmatprep.subr.mxu0 %v7149
  %7261 = vmatpush1.msra.mxu0 %v7148
  %7262 = vmatprep.subr.mxu0 %v7151
  %7263 = vmatpush1.msra.mxu0 %v7150
  %7264 = vmatprep.subr.mxu0 %v7153
  %7265 = vmatpush1.msra.mxu0 %v7152
  %7266 = vmatprep.subr.mxu0 %v7155
  %7267 = vmatpush1.msra.mxu0 %v7154
  %7268 = vmatprep.subr.mxu0 %v7157
  %7269 = vmatpush1.msra.mxu0 %v7156
  %7270 = vmatprep.subr.mxu0 %v7159
  %7271 = vmatpush1.msra.mxu0 %v7158
  %7272 = vmatprep.subr.mxu0 %v7161
  %7273 = vmatpush1.msra.mxu0 %v7160
  %7274 = vmatprep.subr.mxu0 0.0
  %7275 = vmatpush1.msra.mxu0 0.0
  %7276 = vmatprep.subr.mxu0 0.0
  %7277 = vmatpush1.msra.mxu0 0.0
  %7278 = vmatprep.subr.mxu0 0.0
  %7279 = vmatpush1.msra.mxu0 0.0
  %7280 = vmatprep.subr.mxu0 0.0
  %7281 = vmatpush1.msra.mxu0 0.0
  %7282 = vmatprep.subr.mxu0 0.0
  %7283 = vmatpush1.msra.mxu0 0.0
  %7284 = vmatprep.subr.mxu0 0.0
  %7285 = vmatpush1.msra.mxu0 0.0
  %7286 = vmatprep.subr.mxu0 0.0
  %7287 = vmatpush1.msra.mxu0 0.0
  %7288 = vmatprep.subr.mxu0 0.0
  %7289 = vmatpush1.msra.mxu0 0.0
  %7290 = vmatprep.subr.mxu0 0.0
  %7291 = vmatpush1.msra.mxu0 0.0
  %7292 = vmatprep.subr.mxu0 0.0
  %7293 = vmatpush1.msra.mxu0 0.0
  %7294 = vmatprep.subr.mxu0 0.0
  %7295 = vmatpush1.msra.mxu0 0.0
  %7296 = vmatprep.subr.mxu0 0.0
  %7297 = vmatpush1.msra.mxu0 0.0
  %7298 = vmatprep.mubr.f32.mxu0 %v7163
  %7299 = vmatmul.mubr.f32.gmra.mrb[0].mxu0 %v7053
  %v7300 = vpop.f32.mrb[0].mxu0
  %v7301 = vadd.f32 0.0, %v7300
  %v7302 = vpop.f32.mrb[0].mxu0
  %v7303 = vadd.f32 0.0, %v7302
  %7304 = vmatprep.mubr.f32.mxu0 %v7166
  %7305 = vmatmul.mubr.f32.gmra.mrb[0].mxu0 %v7055
  %v7306 = vpop.f32.mrb[0].mxu0
  %v7307 = vadd.f32 0.0, %v7306
  %v7308 = vpop.f32.mrb[0].mxu0
  %v7309 = vadd.f32 0.0, %v7308
  %7310 = vmatprep.mubr.f32.mxu0 %v7169
  %7311 = vmatmul.mubr.f32.gmra.mrb[0].mxu0 %v7057
  %v7312 = vpop.f32.mrb[0].mxu0
  %v7313 = vadd.f32 0.0, %v7312
  %v7314 = vpop.f32.mrb[0].mxu0
  %v7315 = vadd.f32 0.0, %v7314
  %7316 = vmatprep.mubr.f32.mxu0 %v7172
  %7317 = vmatmul.mubr.f32.gmra.mrb[0].mxu0 %v7059
  %v7318 = vpop.f32.mrb[0].mxu0
  %v7319 = vadd.f32 0.0, %v7318
  %v7320 = vpop.f32.mrb[0].mxu0
  %v7321 = vadd.f32 0.0, %v7320
  %7322 = vmatprep.mubr.f32.mxu0 %v7175
  %7323 = vmatmul.mubr.f32.gmra.mrb[0].mxu0 %v7061
  %v7324 = vpop.f32.mrb[0].mxu0
  %v7325 = vadd.f32 0.0, %v7324
  %v7326 = vpop.f32.mrb[0].mxu0
  %v7327 = vadd.f32 0.0, %v7326
  %7328 = vmatprep.mubr.f32.mxu0 %v7178
  %7329 = vmatmul.mubr.f32.gmra.mrb[0].mxu0 %v7063
  %v7330 = vpop.f32.mrb[0].mxu0
  %v7331 = vadd.f32 0.0, %v7330
  %v7332 = vpop.f32.mrb[0].mxu0
  %v7333 = vadd.f32 0.0, %v7332
  %7334 = vmatprep.mubr.f32.mxu0 %v7181
  %7335 = vmatmul.mubr.f32.gmra.mrb[0].mxu0 %v7065
  %v7336 = vpop.f32.mrb[0].mxu0
  %v7337 = vadd.f32 0.0, %v7336
  %v7338 = vpop.f32.mrb[0].mxu0
  %v7339 = vadd.f32 0.0, %v7338
  %7340 = vmatprep.mubr.f32.mxu0 %v7184
  %7341 = vmatmul.mubr.f32.gmra.mrb[0].mxu0 %v7067
  %v7342 = vpop.f32.mrb[0].mxu0
  %v7343 = vadd.f32 0.0, %v7342
  %v7344 = vpop.f32.mrb[0].mxu0
  %v7345 = vadd.f32 0.0, %v7344
  %7346 = vmatprep.mubr.f32.mxu0 %v7187
  %7347 = vmatmul.mubr.f32.gmra.mrb[0].mxu0 %v7069
  %v7348 = vpop.f32.mrb[0].mxu0
  %v7349 = vadd.f32 0.0, %v7348
  %v7350 = vpop.f32.mrb[0].mxu0
  %v7351 = vadd.f32 0.0, %v7350
  %7352 = vmatprep.mubr.f32.mxu0 %v7190
  %7353 = vmatmul.mubr.f32.gmra.mrb[0].mxu0 %v7071
  %v7354 = vpop.f32.mrb[0].mxu0
  %v7355 = vadd.f32 0.0, %v7354
  %v7356 = vpop.f32.mrb[0].mxu0
  %v7357 = vadd.f32 0.0, %v7356
  %7358 = vmatprep.mubr.f32.mxu0 %v7193
  %7359 = vmatmul.mubr.f32.gmra.mrb[0].mxu0 %v7073
  %v7360 = vpop.f32.mrb[0].mxu0
  %v7361 = vadd.f32 0.0, %v7360
  %v7362 = vpop.f32.mrb[0].mxu0
  %v7363 = vadd.f32 0.0, %v7362
  %7364 = vmatprep.mubr.f32.mxu0 %v7196
  %7365 = vmatmul.mubr.f32.gmra.mrb[0].mxu0 %v7075
  %v7366 = vpop.f32.mrb[0].mxu0
  %v7367 = vadd.f32 0.0, %v7366
  %v7368 = vpop.f32.mrb[0].mxu0
  %v7369 = vadd.f32 0.0, %v7368
  %7370 = vmatprep.mubr.f32.mxu0 %v7199
  %7371 = vmatmul.mubr.f32.gmra.mrb[0].mxu0 %v7077
  %v7372 = vpop.f32.mrb[0].mxu0
  %v7373 = vadd.f32 0.0, %v7372
  %v7374 = vpop.f32.mrb[0].mxu0
  %v7375 = vadd.f32 0.0, %v7374
  %7376 = vmatprep.mubr.f32.mxu0 %v7202
  %7377 = vmatmul.mubr.f32.gmra.mrb[0].mxu0 %v7079
  %v7378 = vpop.f32.mrb[0].mxu0
  %v7379 = vadd.f32 0.0, %v7378
  %v7380 = vpop.f32.mrb[0].mxu0
  %v7381 = vadd.f32 0.0, %v7380
  %7382 = vmatprep.mubr.f32.mxu0 %v7205
  %7383 = vmatmul.mubr.f32.gmra.mrb[0].mxu0 %v7081
  %v7384 = vpop.f32.mrb[0].mxu0
  %v7385 = vadd.f32 0.0, %v7384
  %v7386 = vpop.f32.mrb[0].mxu0
  %v7387 = vadd.f32 0.0, %v7386
  %7388 = vmatprep.mubr.f32.mxu0 %v7208
  %7389 = vmatmul.mubr.f32.gmra.mrb[0].mxu0 %v7083
  %v7390 = vpop.f32.mrb[0].mxu0
  %v7391 = vadd.f32 0.0, %v7390
  %v7392 = vpop.f32.mrb[0].mxu0
  %v7393 = vadd.f32 0.0, %v7392
  %7394 = vmatprep.mubr.f32.mxu0 %v7211
  %7395 = vmatmul.mubr.f32.gmra.mrb[0].mxu0 %v7085
  %v7396 = vpop.f32.mrb[0].mxu0
  %v7397 = vadd.f32 0.0, %v7396
  %v7398 = vpop.f32.mrb[0].mxu0
  %v7399 = vadd.f32 0.0, %v7398
  %7400 = vmatprep.mubr.f32.mxu0 %v7214
  %7401 = vmatmul.mubr.f32.gmra.mrb[0].mxu0 %v7087
  %v7402 = vpop.f32.mrb[0].mxu0
  %v7403 = vadd.f32 0.0, %v7402
  %v7404 = vpop.f32.mrb[0].mxu0
  %v7405 = vadd.f32 0.0, %v7404
  %7406 = vmatprep.mubr.f32.mxu0 %v7217
  %7407 = vmatmul.mubr.f32.gmra.mrb[0].mxu0 %v7089
  %v7408 = vpop.f32.mrb[0].mxu0
  %v7409 = vadd.f32 0.0, %v7408
  %v7410 = vpop.f32.mrb[0].mxu0
  %v7411 = vadd.f32 0.0, %v7410
  %7412 = vmatprep.mubr.f32.mxu0 %v7220
  %7413 = vmatmul.mubr.f32.gmra.mrb[0].mxu0 %v7091
  %v7414 = vpop.f32.mrb[0].mxu0
  %v7415 = vadd.f32 0.0, %v7414
  %v7416 = vpop.f32.mrb[0].mxu0
  %v7417 = vadd.f32 0.0, %v7416
  %7418 = vmatprep.mubr.f32.mxu0 %v7223
  %7419 = vmatmul.mubr.f32.gmra.mrb[0].mxu0 %v7093
  %v7420 = vpop.f32.mrb[0].mxu0
  %v7421 = vadd.f32 0.0, %v7420
  %v7422 = vpop.f32.mrb[0].mxu0
  %v7423 = vadd.f32 0.0, %v7422
  %7424 = vmatprep.mubr.f32.mxu0 %v7226
  %7425 = vmatmul.mubr.f32.gmra.mrb[0].mxu0 %v7095
  %v7426 = vpop.f32.mrb[0].mxu0
  %v7427 = vadd.f32 0.0, %v7426
  %v7428 = vpop.f32.mrb[0].mxu0
  %v7429 = vadd.f32 0.0, %v7428
  %7430 = vmatprep.mubr.f32.mxu0 %v7229
  %7431 = vmatmul.mubr.f32.gmra.mrb[0].mxu0 %v7097
  %v7432 = vpop.f32.mrb[0].mxu0
  %v7433 = vadd.f32 0.0, %v7432
  %v7434 = vpop.f32.mrb[0].mxu0
  %v7435 = vadd.f32 0.0, %v7434
  %7436 = vmatprep.mubr.f32.mxu0 %v7232
  %7437 = vmatmul.mubr.f32.gmra.mrb[0].mxu0 %v7099
  %v7438 = vpop.f32.mrb[0].mxu0
  %v7439 = vadd.f32 0.0, %v7438
  %v7440 = vpop.f32.mrb[0].mxu0
  %v7441 = vadd.f32 0.0, %v7440
  %7442 = vdwg.mxu0
  %v7443 = vadd.f32 %v6910, %v7301
  %v7444 = vadd.f32 %v6912, %v7303
  %v7445 = vadd.f32 %v6916, %v7307
  %v7446 = vadd.f32 %v6918, %v7309
  %v7447 = vadd.f32 %v6922, %v7313
  %v7448 = vadd.f32 %v6924, %v7315
  %v7449 = vadd.f32 %v6928, %v7319
  %v7450 = vadd.f32 %v6930, %v7321
  %v7451 = vadd.f32 %v6934, %v7325
  %v7452 = vadd.f32 %v6936, %v7327
  %v7453 = vadd.f32 %v6940, %v7331
  %v7454 = vadd.f32 %v6942, %v7333
  %v7455 = vadd.f32 %v6946, %v7337
  %v7456 = vadd.f32 %v6948, %v7339
  %v7457 = vadd.f32 %v6952, %v7343
  %v7458 = vadd.f32 %v6954, %v7345
  %v7459 = vadd.f32 %v6958, %v7349
  %v7460 = vadd.f32 %v6960, %v7351
  %v7461 = vadd.f32 %v6964, %v7355
  %v7462 = vadd.f32 %v6966, %v7357
  %v7463 = vadd.f32 %v6970, %v7361
  %v7464 = vadd.f32 %v6972, %v7363
  %v7465 = vadd.f32 %v6976, %v7367
  %v7466 = vadd.f32 %v6978, %v7369
  %v7467 = vadd.f32 %v6982, %v7373
  %v7468 = vadd.f32 %v6984, %v7375
  %v7469 = vadd.f32 %v6988, %v7379
  %v7470 = vadd.f32 %v6990, %v7381
  %v7471 = vadd.f32 %v6994, %v7385
  %v7472 = vadd.f32 %v6996, %v7387
  %v7473 = vadd.f32 %v7000, %v7391
  %v7474 = vadd.f32 %v7002, %v7393
  %v7475 = vadd.f32 %v7006, %v7397
  %v7476 = vadd.f32 %v7008, %v7399
  %v7477 = vadd.f32 %v7012, %v7403
  %v7478 = vadd.f32 %v7014, %v7405
  %v7479 = vadd.f32 %v7018, %v7409
  %v7480 = vadd.f32 %v7020, %v7411
  %v7481 = vadd.f32 %v7024, %v7415
  %v7482 = vadd.f32 %v7026, %v7417
  %v7483 = vadd.f32 %v7030, %v7421
  %v7484 = vadd.f32 %v7032, %v7423
  %v7485 = vadd.f32 %v7036, %v7427
  %v7486 = vadd.f32 %v7038, %v7429
  %v7487 = vadd.f32 %v7042, %v7433
  %v7488 = vadd.f32 %v7044, %v7435
  %v7489 = vadd.f32 %v7048, %v7439
  %v7490 = vadd.f32 %v7050, %v7441
  %v7491 = vld [vmem:[%s6210] sm:$0xff]
  %v7492 = vld [vmem:[%s6210 + $0x8] sm:$0xff]
  %v7493 = vld [vmem:[%s6210 + $0x10] sm:$0xff]
  %v7494 = vld [vmem:[%s6210 + $0x18] sm:$0xff]
  %v7495 = vld [vmem:[%s6210 + $0x20] sm:$0xff]
  %v7496 = vld [vmem:[%s6210 + $0x28] sm:$0xff]
  %v7497 = vld [vmem:[%s6210 + $0x30] sm:$0xff]
  %v7498 = vld [vmem:[%s6210 + $0x38] sm:$0xff]
  %v7499 = vld [vmem:[%s6210 + $0x40] sm:$0xff]
  %v7500 = vld [vmem:[%s6210 + $0x48] sm:$0xff]
  %v7501 = vld [vmem:[%s6210 + $0x50] sm:$0xff]
  %v7502 = vld [vmem:[%s6210 + $0x58] sm:$0xff]
  %v7503 = vld [vmem:[%s6210 + $0x60] sm:$0xff]
  %v7504 = vld [vmem:[%s6210 + $0x68] sm:$0xff]
  %v7505 = vld [vmem:[%s6210 + $0x70] sm:$0xff]
  %v7506 = vld [vmem:[%s6210 + $0x78] sm:$0xff]
  %v7507 = vld [vmem:[%s6210 + $0x80] sm:$0xff]
  %v7508 = vld [vmem:[%s6210 + $0x88] sm:$0xff]
  %v7509 = vld [vmem:[%s6210 + $0x90] sm:$0xff]
  %v7510 = vld [vmem:[%s6210 + $0x98] sm:$0xff]
  %v7511 = vld [vmem:[%s6210 + $0xa0] sm:$0xff]
  %v7512 = vld [vmem:[%s6210 + $0xa8] sm:$0xff]
  %v7513 = vld [vmem:[%s6210 + $0xb0] sm:$0xff]
  %v7514 = vld [vmem:[%s6210 + $0xb8] sm:$0xff]
  %v7515 = vld [vmem:[%s6210 + $0xc0] sm:$0xff]
  %v7516 = vld [vmem:[%s6210 + $0xc8] sm:$0xff]
  %v7517 = vld [vmem:[%s6210 + $0xd0] sm:$0xff]
  %v7518 = vld [vmem:[%s6210 + $0xd8] sm:$0xff]
  %v7519 = vld [vmem:[%s6210 + $0xe0] sm:$0xff]
  %v7520 = vld [vmem:[%s6210 + $0xe8] sm:$0xff]
  %v7521 = vld [vmem:[%s6210 + $0xf0] sm:$0xff]
  %v7522 = vld [vmem:[%s6210 + $0xf8] sm:$0xff]
  %v7523 = vld [vmem:[%s6210 + $0x100] sm:$0xff]
  %v7524 = vld [vmem:[%s6210 + $0x108] sm:$0xff]
  %v7525 = vld [vmem:[%s6210 + $0x110] sm:$0xff]
  %v7526 = vld [vmem:[%s6210 + $0x118] sm:$0xff]
  %v7527 = vld [vmem:[%s6210 + $0x120] sm:$0xff]
  %v7528 = vld [vmem:[%s6210 + $0x128] sm:$0xff]
  %v7529 = vld [vmem:[%s6210 + $0x130] sm:$0xff]
  %v7530 = vld [vmem:[%s6210 + $0x138] sm:$0xff]
  %v7531 = vld [vmem:[%s6210 + $0x140] sm:$0xff]
  %v7532 = vld [vmem:[%s6210 + $0x148] sm:$0xff]
  %v7533 = vld [vmem:[%s6210 + $0x150] sm:$0xff]
  %v7534 = vld [vmem:[%s6210 + $0x158] sm:$0xff]
  %v7535 = vld [vmem:[%s6210 + $0x160] sm:$0xff]
  %v7536 = vld [vmem:[%s6210 + $0x168] sm:$0xff]
  %v7537 = vld [vmem:[%s6210 + $0x170] sm:$0xff]
  %v7538 = vld [vmem:[%s6210 + $0x178] sm:$0xff]
  %s7539 = scalar_lea.vmem %s4, 480
  %v7540 = vld [vmem:[%s7539] sm:$0xff]
  %v7541 = vld [vmem:[%s7539 + $0x8] sm:$0xff]
  %v7542 = vld [vmem:[%s7539 + $0x10] sm:$0xff]
  %v7543 = vld [vmem:[%s7539 + $0x18] sm:$0xff]
  %v7544 = vld [vmem:[%s7539 + $0x20] sm:$0xff]
  %v7545 = vld [vmem:[%s7539 + $0x28] sm:$0xff]
  %v7546 = vld [vmem:[%s7539 + $0x30] sm:$0xff]
  %v7547 = vld [vmem:[%s7539 + $0x38] sm:$0xff]
  %v7548 = vld [vmem:[%s7539 + $0x40] sm:$0xff]
  %v7549 = vld [vmem:[%s7539 + $0x48] sm:$0xff]
  %v7550 = vld [vmem:[%s7539 + $0x50] sm:$0xff]
  %v7551 = vld [vmem:[%s7539 + $0x58] sm:$0xff]
  %v7552 = vld [vmem:[%s7539 + $0x60] sm:$0xff]
  %v7553 = vld [vmem:[%s7539 + $0x68] sm:$0xff]
  %v7554 = vld [vmem:[%s7539 + $0x70] sm:$0xff]
  %v7555 = vld [vmem:[%s7539 + $0x78] sm:$0xff]
  %v7556 = vld [vmem:[%s7539 + $0x80] sm:$0xff]
  %v7557 = vld [vmem:[%s7539 + $0x88] sm:$0xff]
  %v7558 = vld [vmem:[%s7539 + $0x90] sm:$0xff]
  %v7559 = vld [vmem:[%s7539 + $0x98] sm:$0xff]
  %v7560 = vunpack.c.l.bf16 %v7540
  %v7561 = vunpack.c.h.bf16 %v7540
  %v7562 = vunpack.c.l.bf16 %v7541
  %v7563 = vunpack.c.h.bf16 %v7541
  %v7564 = vunpack.c.l.bf16 %v7542
  %v7565 = vunpack.c.h.bf16 %v7542
  %v7566 = vunpack.c.l.bf16 %v7543
  %v7567 = vunpack.c.h.bf16 %v7543
  %v7568 = vunpack.c.l.bf16 %v7544
  %v7569 = vunpack.c.h.bf16 %v7544
  %v7570 = vunpack.c.l.bf16 %v7545
  %v7571 = vunpack.c.h.bf16 %v7545
  %v7572 = vunpack.c.l.bf16 %v7546
  %v7573 = vunpack.c.h.bf16 %v7546
  %v7574 = vunpack.c.l.bf16 %v7547
  %v7575 = vunpack.c.h.bf16 %v7547
  %v7576 = vunpack.c.l.bf16 %v7548
  %v7577 = vunpack.c.h.bf16 %v7548
  %v7578 = vunpack.c.l.bf16 %v7549
  %v7579 = vunpack.c.h.bf16 %v7549
  %v7580 = vunpack.c.l.bf16 %v7550
  %v7581 = vunpack.c.h.bf16 %v7550
  %v7582 = vunpack.c.l.bf16 %v7551
  %v7583 = vunpack.c.h.bf16 %v7551
  %v7584 = vunpack.c.l.bf16 %v7552
  %v7585 = vunpack.c.h.bf16 %v7552
  %v7586 = vunpack.c.l.bf16 %v7553
  %v7587 = vunpack.c.h.bf16 %v7553
  %v7588 = vunpack.c.l.bf16 %v7554
  %v7589 = vunpack.c.h.bf16 %v7554
  %v7590 = vunpack.c.l.bf16 %v7555
  %v7591 = vunpack.c.h.bf16 %v7555
  %v7592 = vunpack.c.l.bf16 %v7556
  %v7593 = vunpack.c.h.bf16 %v7556
  %v7594 = vunpack.c.l.bf16 %v7557
  %v7595 = vunpack.c.h.bf16 %v7557
  %v7596 = vunpack.c.l.bf16 %v7558
  %v7597 = vunpack.c.h.bf16 %v7558
  %v7598 = vunpack.c.l.bf16 %v7559
  %v7599 = vunpack.c.h.bf16 %v7559
  %v7601 = vsel %vm750, %v7492, 0
  %v7604 = vsel %vm750, %v7494, 0
  %v7607 = vsel %vm750, %v7496, 0
  %v7610 = vsel %vm750, %v7498, 0
  %v7613 = vsel %vm750, %v7500, 0
  %v7616 = vsel %vm750, %v7502, 0
  %v7619 = vsel %vm750, %v7504, 0
  %v7622 = vsel %vm750, %v7506, 0
  %v7625 = vsel %vm750, %v7508, 0
  %v7628 = vsel %vm750, %v7510, 0
  %v7631 = vsel %vm750, %v7512, 0
  %v7634 = vsel %vm750, %v7514, 0
  %v7637 = vsel %vm750, %v7516, 0
  %v7640 = vsel %vm750, %v7518, 0
  %v7643 = vsel %vm750, %v7520, 0
  %v7646 = vsel %vm750, %v7522, 0
  %v7649 = vsel %vm750, %v7524, 0
  %v7652 = vsel %vm750, %v7526, 0
  %v7655 = vsel %vm750, %v7528, 0
  %v7658 = vsel %vm750, %v7530, 0
  %v7661 = vsel %vm750, %v7532, 0
  %v7664 = vsel %vm750, %v7534, 0
  %v7667 = vsel %vm750, %v7536, 0
  %v7670 = vsel %vm750, %v7538, 0
  %7672 = vmatprep.subr.mxu0 %v7561
  %7673 = vmatpush1.msra.mxu0 %v7560
  %7674 = vmatprep.subr.mxu0 %v7563
  %7675 = vmatpush1.msra.mxu0 %v7562
  %7676 = vmatprep.subr.mxu0 %v7565
  %7677 = vmatpush1.msra.mxu0 %v7564
  %7678 = vmatprep.subr.mxu0 %v7567
  %7679 = vmatpush1.msra.mxu0 %v7566
  %7680 = vmatprep.subr.mxu0 %v7569
  %7681 = vmatpush1.msra.mxu0 %v7568
  %7682 = vmatprep.subr.mxu0 %v7571
  %7683 = vmatpush1.msra.mxu0 %v7570
  %7684 = vmatprep.subr.mxu0 %v7573
  %7685 = vmatpush1.msra.mxu0 %v7572
  %7686 = vmatprep.subr.mxu0 %v7575
  %7687 = vmatpush1.msra.mxu0 %v7574
  %7688 = vmatprep.subr.mxu0 %v7577
  %7689 = vmatpush1.msra.mxu0 %v7576
  %7690 = vmatprep.subr.mxu0 %v7579
  %7691 = vmatpush1.msra.mxu0 %v7578
  %7692 = vmatprep.subr.mxu0 %v7581
  %7693 = vmatpush1.msra.mxu0 %v7580
  %7694 = vmatprep.subr.mxu0 %v7583
  %7695 = vmatpush1.msra.mxu0 %v7582
  %7696 = vmatprep.subr.mxu0 %v7585
  %7697 = vmatpush1.msra.mxu0 %v7584
  %7698 = vmatprep.subr.mxu0 %v7587
  %7699 = vmatpush1.msra.mxu0 %v7586
  %7700 = vmatprep.subr.mxu0 %v7589
  %7701 = vmatpush1.msra.mxu0 %v7588
  %7702 = vmatprep.subr.mxu0 %v7591
  %7703 = vmatpush1.msra.mxu0 %v7590
  %7704 = vmatprep.subr.mxu0 %v7593
  %7705 = vmatpush1.msra.mxu0 %v7592
  %7706 = vmatprep.subr.mxu0 %v7595
  %7707 = vmatpush1.msra.mxu0 %v7594
  %7708 = vmatprep.subr.mxu0 %v7597
  %7709 = vmatpush1.msra.mxu0 %v7596
  %7710 = vmatprep.subr.mxu0 %v7599
  %7711 = vmatpush1.msra.mxu0 %v7598
  %7712 = vmatprep.subr.mxu0 0.0
  %7713 = vmatpush1.msra.mxu0 0.0
  %7714 = vmatprep.subr.mxu0 0.0
  %7715 = vmatpush1.msra.mxu0 0.0
  %7716 = vmatprep.subr.mxu0 0.0
  %7717 = vmatpush1.msra.mxu0 0.0
  %7718 = vmatprep.subr.mxu0 0.0
  %7719 = vmatpush1.msra.mxu0 0.0
  %7720 = vmatprep.subr.mxu0 0.0
  %7721 = vmatpush1.msra.mxu0 0.0
  %7722 = vmatprep.subr.mxu0 0.0
  %7723 = vmatpush1.msra.mxu0 0.0
  %7724 = vmatprep.subr.mxu0 0.0
  %7725 = vmatpush1.msra.mxu0 0.0
  %7726 = vmatprep.subr.mxu0 0.0
  %7727 = vmatpush1.msra.mxu0 0.0
  %7728 = vmatprep.subr.mxu0 0.0
  %7729 = vmatpush1.msra.mxu0 0.0
  %7730 = vmatprep.subr.mxu0 0.0
  %7731 = vmatpush1.msra.mxu0 0.0
  %7732 = vmatprep.subr.mxu0 0.0
  %7733 = vmatpush1.msra.mxu0 0.0
  %7734 = vmatprep.subr.mxu0 0.0
  %7735 = vmatpush1.msra.mxu0 0.0
  %7736 = vmatprep.mubr.f32.mxu0 %v7601
  %7737 = vmatmul.mubr.f32.gmra.mrb[0].mxu0 %v7491
  %v7738 = vpop.f32.mrb[0].mxu0
  %v7739 = vadd.f32 0.0, %v7738
  %v7740 = vpop.f32.mrb[0].mxu0
  %v7741 = vadd.f32 0.0, %v7740
  %7742 = vmatprep.mubr.f32.mxu0 %v7604
  %7743 = vmatmul.mubr.f32.gmra.mrb[0].mxu0 %v7493
  %v7744 = vpop.f32.mrb[0].mxu0
  %v7745 = vadd.f32 0.0, %v7744
  %v7746 = vpop.f32.mrb[0].mxu0
  %v7747 = vadd.f32 0.0, %v7746
  %7748 = vmatprep.mubr.f32.mxu0 %v7607
  %7749 = vmatmul.mubr.f32.gmra.mrb[0].mxu0 %v7495
  %v7750 = vpop.f32.mrb[0].mxu0
  %v7751 = vadd.f32 0.0, %v7750
  %v7752 = vpop.f32.mrb[0].mxu0
  %v7753 = vadd.f32 0.0, %v7752
  %7754 = vmatprep.mubr.f32.mxu0 %v7610
  %7755 = vmatmul.mubr.f32.gmra.mrb[0].mxu0 %v7497
  %v7756 = vpop.f32.mrb[0].mxu0
  %v7757 = vadd.f32 0.0, %v7756
  %v7758 = vpop.f32.mrb[0].mxu0
  %v7759 = vadd.f32 0.0, %v7758
  %7760 = vmatprep.mubr.f32.mxu0 %v7613
  %7761 = vmatmul.mubr.f32.gmra.mrb[0].mxu0 %v7499
  %v7762 = vpop.f32.mrb[0].mxu0
  %v7763 = vadd.f32 0.0, %v7762
  %v7764 = vpop.f32.mrb[0].mxu0
  %v7765 = vadd.f32 0.0, %v7764
  %7766 = vmatprep.mubr.f32.mxu0 %v7616
  %7767 = vmatmul.mubr.f32.gmra.mrb[0].mxu0 %v7501
  %v7768 = vpop.f32.mrb[0].mxu0
  %v7769 = vadd.f32 0.0, %v7768
  %v7770 = vpop.f32.mrb[0].mxu0
  %v7771 = vadd.f32 0.0, %v7770
  %7772 = vmatprep.mubr.f32.mxu0 %v7619
  %7773 = vmatmul.mubr.f32.gmra.mrb[0].mxu0 %v7503
  %v7774 = vpop.f32.mrb[0].mxu0
  %v7775 = vadd.f32 0.0, %v7774
  %v7776 = vpop.f32.mrb[0].mxu0
  %v7777 = vadd.f32 0.0, %v7776
  %7778 = vmatprep.mubr.f32.mxu0 %v7622
  %7779 = vmatmul.mubr.f32.gmra.mrb[0].mxu0 %v7505
  %v7780 = vpop.f32.mrb[0].mxu0
  %v7781 = vadd.f32 0.0, %v7780
  %v7782 = vpop.f32.mrb[0].mxu0
  %v7783 = vadd.f32 0.0, %v7782
  %7784 = vmatprep.mubr.f32.mxu0 %v7625
  %7785 = vmatmul.mubr.f32.gmra.mrb[0].mxu0 %v7507
  %v7786 = vpop.f32.mrb[0].mxu0
  %v7787 = vadd.f32 0.0, %v7786
  %v7788 = vpop.f32.mrb[0].mxu0
  %v7789 = vadd.f32 0.0, %v7788
  %7790 = vmatprep.mubr.f32.mxu0 %v7628
  %7791 = vmatmul.mubr.f32.gmra.mrb[0].mxu0 %v7509
  %v7792 = vpop.f32.mrb[0].mxu0
  %v7793 = vadd.f32 0.0, %v7792
  %v7794 = vpop.f32.mrb[0].mxu0
  %v7795 = vadd.f32 0.0, %v7794
  %7796 = vmatprep.mubr.f32.mxu0 %v7631
  %7797 = vmatmul.mubr.f32.gmra.mrb[0].mxu0 %v7511
  %v7798 = vpop.f32.mrb[0].mxu0
  %v7799 = vadd.f32 0.0, %v7798
  %v7800 = vpop.f32.mrb[0].mxu0
  %v7801 = vadd.f32 0.0, %v7800
  %7802 = vmatprep.mubr.f32.mxu0 %v7634
  %7803 = vmatmul.mubr.f32.gmra.mrb[0].mxu0 %v7513
  %v7804 = vpop.f32.mrb[0].mxu0
  %v7805 = vadd.f32 0.0, %v7804
  %v7806 = vpop.f32.mrb[0].mxu0
  %v7807 = vadd.f32 0.0, %v7806
  %7808 = vmatprep.mubr.f32.mxu0 %v7637
  %7809 = vmatmul.mubr.f32.gmra.mrb[0].mxu0 %v7515
  %v7810 = vpop.f32.mrb[0].mxu0
  %v7811 = vadd.f32 0.0, %v7810
  %v7812 = vpop.f32.mrb[0].mxu0
  %v7813 = vadd.f32 0.0, %v7812
  %7814 = vmatprep.mubr.f32.mxu0 %v7640
  %7815 = vmatmul.mubr.f32.gmra.mrb[0].mxu0 %v7517
  %v7816 = vpop.f32.mrb[0].mxu0
  %v7817 = vadd.f32 0.0, %v7816
  %v7818 = vpop.f32.mrb[0].mxu0
  %v7819 = vadd.f32 0.0, %v7818
  %7820 = vmatprep.mubr.f32.mxu0 %v7643
  %7821 = vmatmul.mubr.f32.gmra.mrb[0].mxu0 %v7519
  %v7822 = vpop.f32.mrb[0].mxu0
  %v7823 = vadd.f32 0.0, %v7822
  %v7824 = vpop.f32.mrb[0].mxu0
  %v7825 = vadd.f32 0.0, %v7824
  %7826 = vmatprep.mubr.f32.mxu0 %v7646
  %7827 = vmatmul.mubr.f32.gmra.mrb[0].mxu0 %v7521
  %v7828 = vpop.f32.mrb[0].mxu0
  %v7829 = vadd.f32 0.0, %v7828
  %v7830 = vpop.f32.mrb[0].mxu0
  %v7831 = vadd.f32 0.0, %v7830
  %7832 = vmatprep.mubr.f32.mxu0 %v7649
  %7833 = vmatmul.mubr.f32.gmra.mrb[0].mxu0 %v7523
  %v7834 = vpop.f32.mrb[0].mxu0
  %v7835 = vadd.f32 0.0, %v7834
  %v7836 = vpop.f32.mrb[0].mxu0
  %v7837 = vadd.f32 0.0, %v7836
  %7838 = vmatprep.mubr.f32.mxu0 %v7652
  %7839 = vmatmul.mubr.f32.gmra.mrb[0].mxu0 %v7525
  %v7840 = vpop.f32.mrb[0].mxu0
  %v7841 = vadd.f32 0.0, %v7840
  %v7842 = vpop.f32.mrb[0].mxu0
  %v7843 = vadd.f32 0.0, %v7842
  %7844 = vmatprep.mubr.f32.mxu0 %v7655
  %7845 = vmatmul.mubr.f32.gmra.mrb[0].mxu0 %v7527
  %v7846 = vpop.f32.mrb[0].mxu0
  %v7847 = vadd.f32 0.0, %v7846
  %v7848 = vpop.f32.mrb[0].mxu0
  %v7849 = vadd.f32 0.0, %v7848
  %7850 = vmatprep.mubr.f32.mxu0 %v7658
  %7851 = vmatmul.mubr.f32.gmra.mrb[0].mxu0 %v7529
  %v7852 = vpop.f32.mrb[0].mxu0
  %v7853 = vadd.f32 0.0, %v7852
  %v7854 = vpop.f32.mrb[0].mxu0
  %v7855 = vadd.f32 0.0, %v7854
  %7856 = vmatprep.mubr.f32.mxu0 %v7661
  %7857 = vmatmul.mubr.f32.gmra.mrb[0].mxu0 %v7531
  %v7858 = vpop.f32.mrb[0].mxu0
  %v7859 = vadd.f32 0.0, %v7858
  %v7860 = vpop.f32.mrb[0].mxu0
  %v7861 = vadd.f32 0.0, %v7860
  %7862 = vmatprep.mubr.f32.mxu0 %v7664
  %7863 = vmatmul.mubr.f32.gmra.mrb[0].mxu0 %v7533
  %v7864 = vpop.f32.mrb[0].mxu0
  %v7865 = vadd.f32 0.0, %v7864
  %v7866 = vpop.f32.mrb[0].mxu0
  %v7867 = vadd.f32 0.0, %v7866
  %7868 = vmatprep.mubr.f32.mxu0 %v7667
  %7869 = vmatmul.mubr.f32.gmra.mrb[0].mxu0 %v7535
  %v7870 = vpop.f32.mrb[0].mxu0
  %v7871 = vadd.f32 0.0, %v7870
  %v7872 = vpop.f32.mrb[0].mxu0
  %v7873 = vadd.f32 0.0, %v7872
  %7874 = vmatprep.mubr.f32.mxu0 %v7670
  %7875 = vmatmul.mubr.f32.gmra.mrb[0].mxu0 %v7537
  %v7876 = vpop.f32.mrb[0].mxu0
  %v7877 = vadd.f32 0.0, %v7876
  %v7878 = vpop.f32.mrb[0].mxu0
  %v7879 = vadd.f32 0.0, %v7878
  %7880 = vdwg.mxu0
  %v7881 = vadd.f32 %v7443, %v7739
  %v7882 = vadd.f32 %v7444, %v7741
  %v7883 = vadd.f32 %v7445, %v7745
  %v7884 = vadd.f32 %v7446, %v7747
  %v7885 = vadd.f32 %v7447, %v7751
  %v7886 = vadd.f32 %v7448, %v7753
  %v7887 = vadd.f32 %v7449, %v7757
  %v7888 = vadd.f32 %v7450, %v7759
  %v7889 = vadd.f32 %v7451, %v7763
  %v7890 = vadd.f32 %v7452, %v7765
  %v7891 = vadd.f32 %v7453, %v7769
  %v7892 = vadd.f32 %v7454, %v7771
  %v7893 = vadd.f32 %v7455, %v7775
  %v7894 = vadd.f32 %v7456, %v7777
  %v7895 = vadd.f32 %v7457, %v7781
  %v7896 = vadd.f32 %v7458, %v7783
  %v7897 = vadd.f32 %v7459, %v7787
  %v7898 = vadd.f32 %v7460, %v7789
  %v7899 = vadd.f32 %v7461, %v7793
  %v7900 = vadd.f32 %v7462, %v7795
  %v7901 = vadd.f32 %v7463, %v7799
  %v7902 = vadd.f32 %v7464, %v7801
  %v7903 = vadd.f32 %v7465, %v7805
  %v7904 = vadd.f32 %v7466, %v7807
  %v7905 = vadd.f32 %v7467, %v7811
  %v7906 = vadd.f32 %v7468, %v7813
  %v7907 = vadd.f32 %v7469, %v7817
  %v7908 = vadd.f32 %v7470, %v7819
  %v7909 = vadd.f32 %v7471, %v7823
  %v7910 = vadd.f32 %v7472, %v7825
  %v7911 = vadd.f32 %v7473, %v7829
  %v7912 = vadd.f32 %v7474, %v7831
  %v7913 = vadd.f32 %v7475, %v7835
  %v7914 = vadd.f32 %v7476, %v7837
  %v7915 = vadd.f32 %v7477, %v7841
  %v7916 = vadd.f32 %v7478, %v7843
  %v7917 = vadd.f32 %v7479, %v7847
  %v7918 = vadd.f32 %v7480, %v7849
  %v7919 = vadd.f32 %v7481, %v7853
  %v7920 = vadd.f32 %v7482, %v7855
  %v7921 = vadd.f32 %v7483, %v7859
  %v7922 = vadd.f32 %v7484, %v7861
  %v7923 = vadd.f32 %v7485, %v7865
  %v7924 = vadd.f32 %v7486, %v7867
  %v7925 = vadd.f32 %v7487, %v7871
  %v7926 = vadd.f32 %v7488, %v7873
  %v7927 = vadd.f32 %v7489, %v7877
  %v7928 = vadd.f32 %v7490, %v7879
  %s7929 = scalar_lea.vmem [#allocation2], 128
  %v7930 = vld [vmem:[%s7929] sm:$0xff]
  %v7931 = vld [vmem:[%s7929 + $0x8] sm:$0xff]
  %v7932 = vld [vmem:[%s7929 + $0x10] sm:$0xff]
  %v7933 = vld [vmem:[%s7929 + $0x18] sm:$0xff]
  %v7934 = vld [vmem:[%s7929 + $0x20] sm:$0xff]
  %v7935 = vld [vmem:[%s7929 + $0x28] sm:$0xff]
  %v7936 = vld [vmem:[%s7929 + $0x30] sm:$0xff]
  %v7937 = vld [vmem:[%s7929 + $0x38] sm:$0xff]
  %v7938 = vld [vmem:[%s7929 + $0x40] sm:$0xff]
  %v7939 = vld [vmem:[%s7929 + $0x48] sm:$0xff]
  %v7940 = vld [vmem:[%s7929 + $0x50] sm:$0xff]
  %v7941 = vld [vmem:[%s7929 + $0x58] sm:$0xff]
  %v7942 = vld [vmem:[%s7929 + $0x60] sm:$0xff]
  %v7943 = vld [vmem:[%s7929 + $0x68] sm:$0xff]
  %v7944 = vld [vmem:[%s7929 + $0x70] sm:$0xff]
  %v7945 = vld [vmem:[%s7929 + $0x78] sm:$0xff]
  %v7946 = vld [vmem:[%s7929 + $0x80] sm:$0xff]
  %v7947 = vld [vmem:[%s7929 + $0x88] sm:$0xff]
  %v7948 = vld [vmem:[%s7929 + $0x90] sm:$0xff]
  %v7949 = vld [vmem:[%s7929 + $0x98] sm:$0xff]
  %v7950 = vld [vmem:[%s7929 + $0xa0] sm:$0xff]
  %v7951 = vld [vmem:[%s7929 + $0xa8] sm:$0xff]
  %v7952 = vld [vmem:[%s7929 + $0xb0] sm:$0xff]
  %v7953 = vld [vmem:[%s7929 + $0xb8] sm:$0xff]
  %v7954 = vld [vmem:[%s7929 + $0xc0] sm:$0xff]
  %v7955 = vld [vmem:[%s7929 + $0xc8] sm:$0xff]
  %v7956 = vld [vmem:[%s7929 + $0xd0] sm:$0xff]
  %v7957 = vld [vmem:[%s7929 + $0xd8] sm:$0xff]
  %v7958 = vld [vmem:[%s7929 + $0xe0] sm:$0xff]
  %v7959 = vld [vmem:[%s7929 + $0xe8] sm:$0xff]
  %v7960 = vld [vmem:[%s7929 + $0xf0] sm:$0xff]
  %v7961 = vld [vmem:[%s7929 + $0xf8] sm:$0xff]
  %v7962 = vld [vmem:[%s7929 + $0x100] sm:$0xff]
  %v7963 = vld [vmem:[%s7929 + $0x108] sm:$0xff]
  %v7964 = vld [vmem:[%s7929 + $0x110] sm:$0xff]
  %v7965 = vld [vmem:[%s7929 + $0x118] sm:$0xff]
  %v7966 = vld [vmem:[%s7929 + $0x120] sm:$0xff]
  %v7967 = vld [vmem:[%s7929 + $0x128] sm:$0xff]
  %v7968 = vld [vmem:[%s7929 + $0x130] sm:$0xff]
  %v7969 = vld [vmem:[%s7929 + $0x138] sm:$0xff]
  %v7970 = vld [vmem:[%s7929 + $0x140] sm:$0xff]
  %v7971 = vld [vmem:[%s7929 + $0x148] sm:$0xff]
  %v7972 = vld [vmem:[%s7929 + $0x150] sm:$0xff]
  %v7973 = vld [vmem:[%s7929 + $0x158] sm:$0xff]
  %v7974 = vld [vmem:[%s7929 + $0x160] sm:$0xff]
  %v7975 = vld [vmem:[%s7929 + $0x168] sm:$0xff]
  %v7976 = vld [vmem:[%s7929 + $0x170] sm:$0xff]
  %v7977 = vld [vmem:[%s7929 + $0x178] sm:$0xff]
  %s7978 = scalar_lea.vmem %s4, 640
  %v7979 = vld [vmem:[%s7978] sm:$0xff]
  %v7980 = vld [vmem:[%s7978 + $0x8] sm:$0xff]
  %v7981 = vld [vmem:[%s7978 + $0x10] sm:$0xff]
  %v7982 = vld [vmem:[%s7978 + $0x18] sm:$0xff]
  %v7983 = vld [vmem:[%s7978 + $0x20] sm:$0xff]
  %v7984 = vld [vmem:[%s7978 + $0x28] sm:$0xff]
  %v7985 = vld [vmem:[%s7978 + $0x30] sm:$0xff]
  %v7986 = vld [vmem:[%s7978 + $0x38] sm:$0xff]
  %v7987 = vld [vmem:[%s7978 + $0x40] sm:$0xff]
  %v7988 = vld [vmem:[%s7978 + $0x48] sm:$0xff]
  %v7989 = vld [vmem:[%s7978 + $0x50] sm:$0xff]
  %v7990 = vld [vmem:[%s7978 + $0x58] sm:$0xff]
  %v7991 = vld [vmem:[%s7978 + $0x60] sm:$0xff]
  %v7992 = vld [vmem:[%s7978 + $0x68] sm:$0xff]
  %v7993 = vld [vmem:[%s7978 + $0x70] sm:$0xff]
  %v7994 = vld [vmem:[%s7978 + $0x78] sm:$0xff]
  %v7995 = vld [vmem:[%s7978 + $0x80] sm:$0xff]
  %v7996 = vld [vmem:[%s7978 + $0x88] sm:$0xff]
  %v7997 = vld [vmem:[%s7978 + $0x90] sm:$0xff]
  %v7998 = vld [vmem:[%s7978 + $0x98] sm:$0xff]
  %v7999 = vunpack.c.l.bf16 %v7979
  %v8000 = vunpack.c.h.bf16 %v7979
  %v8001 = vunpack.c.l.bf16 %v7980
  %v8002 = vunpack.c.h.bf16 %v7980
  %v8003 = vunpack.c.l.bf16 %v7981
  %v8004 = vunpack.c.h.bf16 %v7981
  %v8005 = vunpack.c.l.bf16 %v7982
  %v8006 = vunpack.c.h.bf16 %v7982
  %v8007 = vunpack.c.l.bf16 %v7983
  %v8008 = vunpack.c.h.bf16 %v7983
  %v8009 = vunpack.c.l.bf16 %v7984
  %v8010 = vunpack.c.h.bf16 %v7984
  %v8011 = vunpack.c.l.bf16 %v7985
  %v8012 = vunpack.c.h.bf16 %v7985
  %v8013 = vunpack.c.l.bf16 %v7986
  %v8014 = vunpack.c.h.bf16 %v7986
  %v8015 = vunpack.c.l.bf16 %v7987
  %v8016 = vunpack.c.h.bf16 %v7987
  %v8017 = vunpack.c.l.bf16 %v7988
  %v8018 = vunpack.c.h.bf16 %v7988
  %v8019 = vunpack.c.l.bf16 %v7989
  %v8020 = vunpack.c.h.bf16 %v7989
  %v8021 = vunpack.c.l.bf16 %v7990
  %v8022 = vunpack.c.h.bf16 %v7990
  %v8023 = vunpack.c.l.bf16 %v7991
  %v8024 = vunpack.c.h.bf16 %v7991
  %v8025 = vunpack.c.l.bf16 %v7992
  %v8026 = vunpack.c.h.bf16 %v7992
  %v8027 = vunpack.c.l.bf16 %v7993
  %v8028 = vunpack.c.h.bf16 %v7993
  %v8029 = vunpack.c.l.bf16 %v7994
  %v8030 = vunpack.c.h.bf16 %v7994
  %v8031 = vunpack.c.l.bf16 %v7995
  %v8032 = vunpack.c.h.bf16 %v7995
  %v8033 = vunpack.c.l.bf16 %v7996
  %v8034 = vunpack.c.h.bf16 %v7996
  %v8035 = vunpack.c.l.bf16 %v7997
  %v8036 = vunpack.c.h.bf16 %v7997
  %v8037 = vunpack.c.l.bf16 %v7998
  %v8038 = vunpack.c.h.bf16 %v7998
  %v8040 = vsel %vm750, %v7931, 0
  %v8043 = vsel %vm750, %v7933, 0
  %v8046 = vsel %vm750, %v7935, 0
  %v8049 = vsel %vm750, %v7937, 0
  %v8052 = vsel %vm750, %v7939, 0
  %v8055 = vsel %vm750, %v7941, 0
  %v8058 = vsel %vm750, %v7943, 0
  %v8061 = vsel %vm750, %v7945, 0
  %v8064 = vsel %vm750, %v7947, 0
  %v8067 = vsel %vm750, %v7949, 0
  %v8070 = vsel %vm750, %v7951, 0
  %v8073 = vsel %vm750, %v7953, 0
  %v8076 = vsel %vm750, %v7955, 0
  %v8079 = vsel %vm750, %v7957, 0
  %v8082 = vsel %vm750, %v7959, 0
  %v8085 = vsel %vm750, %v7961, 0
  %v8088 = vsel %vm750, %v7963, 0
  %v8091 = vsel %vm750, %v7965, 0
  %v8094 = vsel %vm750, %v7967, 0
  %v8097 = vsel %vm750, %v7969, 0
  %v8100 = vsel %vm750, %v7971, 0
  %v8103 = vsel %vm750, %v7973, 0
  %v8106 = vsel %vm750, %v7975, 0
  %v8109 = vsel %vm750, %v7977, 0
  %8111 = vmatprep.subr.mxu0 %v8000
  %8112 = vmatpush1.msra.mxu0 %v7999
  %8113 = vmatprep.subr.mxu0 %v8002
  %8114 = vmatpush1.msra.mxu0 %v8001
  %8115 = vmatprep.subr.mxu0 %v8004
  %8116 = vmatpush1.msra.mxu0 %v8003
  %8117 = vmatprep.subr.mxu0 %v8006
  %8118 = vmatpush1.msra.mxu0 %v8005
  %8119 = vmatprep.subr.mxu0 %v8008
  %8120 = vmatpush1.msra.mxu0 %v8007
  %8121 = vmatprep.subr.mxu0 %v8010
  %8122 = vmatpush1.msra.mxu0 %v8009
  %8123 = vmatprep.subr.mxu0 %v8012
  %8124 = vmatpush1.msra.mxu0 %v8011
  %8125 = vmatprep.subr.mxu0 %v8014
  %8126 = vmatpush1.msra.mxu0 %v8013
  %8127 = vmatprep.subr.mxu0 %v8016
  %8128 = vmatpush1.msra.mxu0 %v8015
  %8129 = vmatprep.subr.mxu0 %v8018
  %8130 = vmatpush1.msra.mxu0 %v8017
  %8131 = vmatprep.subr.mxu0 %v8020
  %8132 = vmatpush1.msra.mxu0 %v8019
  %8133 = vmatprep.subr.mxu0 %v8022
  %8134 = vmatpush1.msra.mxu0 %v8021
  %8135 = vmatprep.subr.mxu0 %v8024
  %8136 = vmatpush1.msra.mxu0 %v8023
  %8137 = vmatprep.subr.mxu0 %v8026
  %8138 = vmatpush1.msra.mxu0 %v8025
  %8139 = vmatprep.subr.mxu0 %v8028
  %8140 = vmatpush1.msra.mxu0 %v8027
  %8141 = vmatprep.subr.mxu0 %v8030
  %8142 = vmatpush1.msra.mxu0 %v8029
  %8143 = vmatprep.subr.mxu0 %v8032
  %8144 = vmatpush1.msra.mxu0 %v8031
  %8145 = vmatprep.subr.mxu0 %v8034
  %8146 = vmatpush1.msra.mxu0 %v8033
  %8147 = vmatprep.subr.mxu0 %v8036
  %8148 = vmatpush1.msra.mxu0 %v8035
  %8149 = vmatprep.subr.mxu0 %v8038
  %8150 = vmatpush1.msra.mxu0 %v8037
  %8151 = vmatprep.subr.mxu0 0.0
  %8152 = vmatpush1.msra.mxu0 0.0
  %8153 = vmatprep.subr.mxu0 0.0
  %8154 = vmatpush1.msra.mxu0 0.0
  %8155 = vmatprep.subr.mxu0 0.0
  %8156 = vmatpush1.msra.mxu0 0.0
  %8157 = vmatprep.subr.mxu0 0.0
  %8158 = vmatpush1.msra.mxu0 0.0
  %8159 = vmatprep.subr.mxu0 0.0
  %8160 = vmatpush1.msra.mxu0 0.0
  %8161 = vmatprep.subr.mxu0 0.0
  %8162 = vmatpush1.msra.mxu0 0.0
  %8163 = vmatprep.subr.mxu0 0.0
  %8164 = vmatpush1.msra.mxu0 0.0
  %8165 = vmatprep.subr.mxu0 0.0
  %8166 = vmatpush1.msra.mxu0 0.0
  %8167 = vmatprep.subr.mxu0 0.0
  %8168 = vmatpush1.msra.mxu0 0.0
  %8169 = vmatprep.subr.mxu0 0.0
  %8170 = vmatpush1.msra.mxu0 0.0
  %8171 = vmatprep.subr.mxu0 0.0
  %8172 = vmatpush1.msra.mxu0 0.0
  %8173 = vmatprep.subr.mxu0 0.0
  %8174 = vmatpush1.msra.mxu0 0.0
  %8175 = vmatprep.mubr.f32.mxu0 %v8040
  %8176 = vmatmul.mubr.f32.gmra.mrb[0].mxu0 %v7930
  %v8177 = vpop.f32.mrb[0].mxu0
  %v8178 = vadd.f32 0.0, %v8177
  %v8179 = vpop.f32.mrb[0].mxu0
  %v8180 = vadd.f32 0.0, %v8179
  %8181 = vmatprep.mubr.f32.mxu0 %v8043
  %8182 = vmatmul.mubr.f32.gmra.mrb[0].mxu0 %v7932
  %v8183 = vpop.f32.mrb[0].mxu0
  %v8184 = vadd.f32 0.0, %v8183
  %v8185 = vpop.f32.mrb[0].mxu0
  %v8186 = vadd.f32 0.0, %v8185
  %8187 = vmatprep.mubr.f32.mxu0 %v8046
  %8188 = vmatmul.mubr.f32.gmra.mrb[0].mxu0 %v7934
  %v8189 = vpop.f32.mrb[0].mxu0
  %v8190 = vadd.f32 0.0, %v8189
  %v8191 = vpop.f32.mrb[0].mxu0
  %v8192 = vadd.f32 0.0, %v8191
  %8193 = vmatprep.mubr.f32.mxu0 %v8049
  %8194 = vmatmul.mubr.f32.gmra.mrb[0].mxu0 %v7936
  %v8195 = vpop.f32.mrb[0].mxu0
  %v8196 = vadd.f32 0.0, %v8195
  %v8197 = vpop.f32.mrb[0].mxu0
  %v8198 = vadd.f32 0.0, %v8197
  %8199 = vmatprep.mubr.f32.mxu0 %v8052
  %8200 = vmatmul.mubr.f32.gmra.mrb[0].mxu0 %v7938
  %v8201 = vpop.f32.mrb[0].mxu0
  %v8202 = vadd.f32 0.0, %v8201
  %v8203 = vpop.f32.mrb[0].mxu0
  %v8204 = vadd.f32 0.0, %v8203
  %8205 = vmatprep.mubr.f32.mxu0 %v8055
  %8206 = vmatmul.mubr.f32.gmra.mrb[0].mxu0 %v7940
  %v8207 = vpop.f32.mrb[0].mxu0
  %v8208 = vadd.f32 0.0, %v8207
  %v8209 = vpop.f32.mrb[0].mxu0
  %v8210 = vadd.f32 0.0, %v8209
  %8211 = vmatprep.mubr.f32.mxu0 %v8058
  %8212 = vmatmul.mubr.f32.gmra.mrb[0].mxu0 %v7942
  %v8213 = vpop.f32.mrb[0].mxu0
  %v8214 = vadd.f32 0.0, %v8213
  %v8215 = vpop.f32.mrb[0].mxu0
  %v8216 = vadd.f32 0.0, %v8215
  %8217 = vmatprep.mubr.f32.mxu0 %v8061
  %8218 = vmatmul.mubr.f32.gmra.mrb[0].mxu0 %v7944
  %v8219 = vpop.f32.mrb[0].mxu0
  %v8220 = vadd.f32 0.0, %v8219
  %v8221 = vpop.f32.mrb[0].mxu0
  %v8222 = vadd.f32 0.0, %v8221
  %8223 = vmatprep.mubr.f32.mxu0 %v8064
  %8224 = vmatmul.mubr.f32.gmra.mrb[0].mxu0 %v7946
  %v8225 = vpop.f32.mrb[0].mxu0
  %v8226 = vadd.f32 0.0, %v8225
  %v8227 = vpop.f32.mrb[0].mxu0
  %v8228 = vadd.f32 0.0, %v8227
  %8229 = vmatprep.mubr.f32.mxu0 %v8067
  %8230 = vmatmul.mubr.f32.gmra.mrb[0].mxu0 %v7948
  %v8231 = vpop.f32.mrb[0].mxu0
  %v8232 = vadd.f32 0.0, %v8231
  %v8233 = vpop.f32.mrb[0].mxu0
  %v8234 = vadd.f32 0.0, %v8233
  %8235 = vmatprep.mubr.f32.mxu0 %v8070
  %8236 = vmatmul.mubr.f32.gmra.mrb[0].mxu0 %v7950
  %v8237 = vpop.f32.mrb[0].mxu0
  %v8238 = vadd.f32 0.0, %v8237
  %v8239 = vpop.f32.mrb[0].mxu0
  %v8240 = vadd.f32 0.0, %v8239
  %8241 = vmatprep.mubr.f32.mxu0 %v8073
  %8242 = vmatmul.mubr.f32.gmra.mrb[0].mxu0 %v7952
  %v8243 = vpop.f32.mrb[0].mxu0
  %v8244 = vadd.f32 0.0, %v8243
  %v8245 = vpop.f32.mrb[0].mxu0
  %v8246 = vadd.f32 0.0, %v8245
  %8247 = vmatprep.mubr.f32.mxu0 %v8076
  %8248 = vmatmul.mubr.f32.gmra.mrb[0].mxu0 %v7954
  %v8249 = vpop.f32.mrb[0].mxu0
  %v8250 = vadd.f32 0.0, %v8249
  %v8251 = vpop.f32.mrb[0].mxu0
  %v8252 = vadd.f32 0.0, %v8251
  %8253 = vmatprep.mubr.f32.mxu0 %v8079
  %8254 = vmatmul.mubr.f32.gmra.mrb[0].mxu0 %v7956
  %v8255 = vpop.f32.mrb[0].mxu0
  %v8256 = vadd.f32 0.0, %v8255
  %v8257 = vpop.f32.mrb[0].mxu0
  %v8258 = vadd.f32 0.0, %v8257
  %8259 = vmatprep.mubr.f32.mxu0 %v8082
  %8260 = vmatmul.mubr.f32.gmra.mrb[0].mxu0 %v7958
  %v8261 = vpop.f32.mrb[0].mxu0
  %v8262 = vadd.f32 0.0, %v8261
  %v8263 = vpop.f32.mrb[0].mxu0
  %v8264 = vadd.f32 0.0, %v8263
  %8265 = vmatprep.mubr.f32.mxu0 %v8085
  %8266 = vmatmul.mubr.f32.gmra.mrb[0].mxu0 %v7960
  %v8267 = vpop.f32.mrb[0].mxu0
  %v8268 = vadd.f32 0.0, %v8267
  %v8269 = vpop.f32.mrb[0].mxu0
  %v8270 = vadd.f32 0.0, %v8269
  %8271 = vmatprep.mubr.f32.mxu0 %v8088
  %8272 = vmatmul.mubr.f32.gmra.mrb[0].mxu0 %v7962
  %v8273 = vpop.f32.mrb[0].mxu0
  %v8274 = vadd.f32 0.0, %v8273
  %v8275 = vpop.f32.mrb[0].mxu0
  %v8276 = vadd.f32 0.0, %v8275
  %8277 = vmatprep.mubr.f32.mxu0 %v8091
  %8278 = vmatmul.mubr.f32.gmra.mrb[0].mxu0 %v7964
  %v8279 = vpop.f32.mrb[0].mxu0
  %v8280 = vadd.f32 0.0, %v8279
  %v8281 = vpop.f32.mrb[0].mxu0
  %v8282 = vadd.f32 0.0, %v8281
  %8283 = vmatprep.mubr.f32.mxu0 %v8094
  %8284 = vmatmul.mubr.f32.gmra.mrb[0].mxu0 %v7966
  %v8285 = vpop.f32.mrb[0].mxu0
  %v8286 = vadd.f32 0.0, %v8285
  %v8287 = vpop.f32.mrb[0].mxu0
  %v8288 = vadd.f32 0.0, %v8287
  %8289 = vmatprep.mubr.f32.mxu0 %v8097
  %8290 = vmatmul.mubr.f32.gmra.mrb[0].mxu0 %v7968
  %v8291 = vpop.f32.mrb[0].mxu0
  %v8292 = vadd.f32 0.0, %v8291
  %v8293 = vpop.f32.mrb[0].mxu0
  %v8294 = vadd.f32 0.0, %v8293
  %8295 = vmatprep.mubr.f32.mxu0 %v8100
  %8296 = vmatmul.mubr.f32.gmra.mrb[0].mxu0 %v7970
  %v8297 = vpop.f32.mrb[0].mxu0
  %v8298 = vadd.f32 0.0, %v8297
  %v8299 = vpop.f32.mrb[0].mxu0
  %v8300 = vadd.f32 0.0, %v8299
  %8301 = vmatprep.mubr.f32.mxu0 %v8103
  %8302 = vmatmul.mubr.f32.gmra.mrb[0].mxu0 %v7972
  %v8303 = vpop.f32.mrb[0].mxu0
  %v8304 = vadd.f32 0.0, %v8303
  %v8305 = vpop.f32.mrb[0].mxu0
  %v8306 = vadd.f32 0.0, %v8305
  %8307 = vmatprep.mubr.f32.mxu0 %v8106
  %8308 = vmatmul.mubr.f32.gmra.mrb[0].mxu0 %v7974
  %v8309 = vpop.f32.mrb[0].mxu0
  %v8310 = vadd.f32 0.0, %v8309
  %v8311 = vpop.f32.mrb[0].mxu0
  %v8312 = vadd.f32 0.0, %v8311
  %8313 = vmatprep.mubr.f32.mxu0 %v8109
  %8314 = vmatmul.mubr.f32.gmra.mrb[0].mxu0 %v7976
  %v8315 = vpop.f32.mrb[0].mxu0
  %v8316 = vadd.f32 0.0, %v8315
  %v8317 = vpop.f32.mrb[0].mxu0
  %v8318 = vadd.f32 0.0, %v8317
  %8319 = vdwg.mxu0
  %v8320 = vadd.f32 %v7881, %v8178
  %v8321 = vadd.f32 %v7882, %v8180
  %v8322 = vadd.f32 %v7883, %v8184
  %v8323 = vadd.f32 %v7884, %v8186
  %v8324 = vadd.f32 %v7885, %v8190
  %v8325 = vadd.f32 %v7886, %v8192
  %v8326 = vadd.f32 %v7887, %v8196
  %v8327 = vadd.f32 %v7888, %v8198
  %v8328 = vadd.f32 %v7889, %v8202
  %v8329 = vadd.f32 %v7890, %v8204
  %v8330 = vadd.f32 %v7891, %v8208
  %v8331 = vadd.f32 %v7892, %v8210
  %v8332 = vadd.f32 %v7893, %v8214
  %v8333 = vadd.f32 %v7894, %v8216
  %v8334 = vadd.f32 %v7895, %v8220
  %v8335 = vadd.f32 %v7896, %v8222
  %v8336 = vadd.f32 %v7897, %v8226
  %v8337 = vadd.f32 %v7898, %v8228
  %v8338 = vadd.f32 %v7899, %v8232
  %v8339 = vadd.f32 %v7900, %v8234
  %v8340 = vadd.f32 %v7901, %v8238
  %v8341 = vadd.f32 %v7902, %v8240
  %v8342 = vadd.f32 %v7903, %v8244
  %v8343 = vadd.f32 %v7904, %v8246
  %v8344 = vadd.f32 %v7905, %v8250
  %v8345 = vadd.f32 %v7906, %v8252
  %v8346 = vadd.f32 %v7907, %v8256
  %v8347 = vadd.f32 %v7908, %v8258
  %v8348 = vadd.f32 %v7909, %v8262
  %v8349 = vadd.f32 %v7910, %v8264
  %v8350 = vadd.f32 %v7911, %v8268
  %v8351 = vadd.f32 %v7912, %v8270
  %v8352 = vadd.f32 %v7913, %v8274
  %v8353 = vadd.f32 %v7914, %v8276
  %v8354 = vadd.f32 %v7915, %v8280
  %v8355 = vadd.f32 %v7916, %v8282
  %v8356 = vadd.f32 %v7917, %v8286
  %v8357 = vadd.f32 %v7918, %v8288
  %v8358 = vadd.f32 %v7919, %v8292
  %v8359 = vadd.f32 %v7920, %v8294
  %v8360 = vadd.f32 %v7921, %v8298
  %v8361 = vadd.f32 %v7922, %v8300
  %v8362 = vadd.f32 %v7923, %v8304
  %v8363 = vadd.f32 %v7924, %v8306
  %v8364 = vadd.f32 %v7925, %v8310
  %v8365 = vadd.f32 %v7926, %v8312
  %v8366 = vadd.f32 %v7927, %v8316
  %v8367 = vadd.f32 %v7928, %v8318
  %s8368 = scalar_lea.vmem [#allocation2], 160
  %v8369 = vld [vmem:[%s8368] sm:$0xff]
  %v8370 = vld [vmem:[%s8368 + $0x8] sm:$0xff]
  %v8371 = vld [vmem:[%s8368 + $0x10] sm:$0xff]
  %v8372 = vld [vmem:[%s8368 + $0x18] sm:$0xff]
  %v8373 = vld [vmem:[%s8368 + $0x20] sm:$0xff]
  %v8374 = vld [vmem:[%s8368 + $0x28] sm:$0xff]
  %v8375 = vld [vmem:[%s8368 + $0x30] sm:$0xff]
  %v8376 = vld [vmem:[%s8368 + $0x38] sm:$0xff]
  %v8377 = vld [vmem:[%s8368 + $0x40] sm:$0xff]
  %v8378 = vld [vmem:[%s8368 + $0x48] sm:$0xff]
  %v8379 = vld [vmem:[%s8368 + $0x50] sm:$0xff]
  %v8380 = vld [vmem:[%s8368 + $0x58] sm:$0xff]
  %v8381 = vld [vmem:[%s8368 + $0x60] sm:$0xff]
  %v8382 = vld [vmem:[%s8368 + $0x68] sm:$0xff]
  %v8383 = vld [vmem:[%s8368 + $0x70] sm:$0xff]
  %v8384 = vld [vmem:[%s8368 + $0x78] sm:$0xff]
  %v8385 = vld [vmem:[%s8368 + $0x80] sm:$0xff]
  %v8386 = vld [vmem:[%s8368 + $0x88] sm:$0xff]
  %v8387 = vld [vmem:[%s8368 + $0x90] sm:$0xff]
  %v8388 = vld [vmem:[%s8368 + $0x98] sm:$0xff]
  %v8389 = vld [vmem:[%s8368 + $0xa0] sm:$0xff]
  %v8390 = vld [vmem:[%s8368 + $0xa8] sm:$0xff]
  %v8391 = vld [vmem:[%s8368 + $0xb0] sm:$0xff]
  %v8392 = vld [vmem:[%s8368 + $0xb8] sm:$0xff]
  %v8393 = vld [vmem:[%s8368 + $0xc0] sm:$0xff]
  %v8394 = vld [vmem:[%s8368 + $0xc8] sm:$0xff]
  %v8395 = vld [vmem:[%s8368 + $0xd0] sm:$0xff]
  %v8396 = vld [vmem:[%s8368 + $0xd8] sm:$0xff]
  %v8397 = vld [vmem:[%s8368 + $0xe0] sm:$0xff]
  %v8398 = vld [vmem:[%s8368 + $0xe8] sm:$0xff]
  %v8399 = vld [vmem:[%s8368 + $0xf0] sm:$0xff]
  %v8400 = vld [vmem:[%s8368 + $0xf8] sm:$0xff]
  %v8401 = vld [vmem:[%s8368 + $0x100] sm:$0xff]
  %v8402 = vld [vmem:[%s8368 + $0x108] sm:$0xff]
  %v8403 = vld [vmem:[%s8368 + $0x110] sm:$0xff]
  %v8404 = vld [vmem:[%s8368 + $0x118] sm:$0xff]
  %v8405 = vld [vmem:[%s8368 + $0x120] sm:$0xff]
  %v8406 = vld [vmem:[%s8368 + $0x128] sm:$0xff]
  %v8407 = vld [vmem:[%s8368 + $0x130] sm:$0xff]
  %v8408 = vld [vmem:[%s8368 + $0x138] sm:$0xff]
  %v8409 = vld [vmem:[%s8368 + $0x140] sm:$0xff]
  %v8410 = vld [vmem:[%s8368 + $0x148] sm:$0xff]
  %v8411 = vld [vmem:[%s8368 + $0x150] sm:$0xff]
  %v8412 = vld [vmem:[%s8368 + $0x158] sm:$0xff]
  %v8413 = vld [vmem:[%s8368 + $0x160] sm:$0xff]
  %v8414 = vld [vmem:[%s8368 + $0x168] sm:$0xff]
  %v8415 = vld [vmem:[%s8368 + $0x170] sm:$0xff]
  %v8416 = vld [vmem:[%s8368 + $0x178] sm:$0xff]
  %s8417 = scalar_lea.vmem %s4, 800
  %v8418 = vld [vmem:[%s8417] sm:$0xff]
  %v8419 = vld [vmem:[%s8417 + $0x8] sm:$0xff]
  %v8420 = vld [vmem:[%s8417 + $0x10] sm:$0xff]
  %v8421 = vld [vmem:[%s8417 + $0x18] sm:$0xff]
  %v8422 = vld [vmem:[%s8417 + $0x20] sm:$0xff]
  %v8423 = vld [vmem:[%s8417 + $0x28] sm:$0xff]
  %v8424 = vld [vmem:[%s8417 + $0x30] sm:$0xff]
  %v8425 = vld [vmem:[%s8417 + $0x38] sm:$0xff]
  %v8426 = vld [vmem:[%s8417 + $0x40] sm:$0xff]
  %v8427 = vld [vmem:[%s8417 + $0x48] sm:$0xff]
  %v8428 = vld [vmem:[%s8417 + $0x50] sm:$0xff]
  %v8429 = vld [vmem:[%s8417 + $0x58] sm:$0xff]
  %v8430 = vld [vmem:[%s8417 + $0x60] sm:$0xff]
  %v8431 = vld [vmem:[%s8417 + $0x68] sm:$0xff]
  %v8432 = vld [vmem:[%s8417 + $0x70] sm:$0xff]
  %v8433 = vld [vmem:[%s8417 + $0x78] sm:$0xff]
  %v8434 = vld [vmem:[%s8417 + $0x80] sm:$0xff]
  %v8435 = vld [vmem:[%s8417 + $0x88] sm:$0xff]
  %v8436 = vld [vmem:[%s8417 + $0x90] sm:$0xff]
  %v8437 = vld [vmem:[%s8417 + $0x98] sm:$0xff]
  %v8438 = vunpack.c.l.bf16 %v8418
  %v8439 = vunpack.c.h.bf16 %v8418
  %v8440 = vunpack.c.l.bf16 %v8419
  %v8441 = vunpack.c.h.bf16 %v8419
  %v8442 = vunpack.c.l.bf16 %v8420
  %v8443 = vunpack.c.h.bf16 %v8420
  %v8444 = vunpack.c.l.bf16 %v8421
  %v8445 = vunpack.c.h.bf16 %v8421
  %v8446 = vunpack.c.l.bf16 %v8422
  %v8447 = vunpack.c.h.bf16 %v8422
  %v8448 = vunpack.c.l.bf16 %v8423
  %v8449 = vunpack.c.h.bf16 %v8423
  %v8450 = vunpack.c.l.bf16 %v8424
  %v8451 = vunpack.c.h.bf16 %v8424
  %v8452 = vunpack.c.l.bf16 %v8425
  %v8453 = vunpack.c.h.bf16 %v8425
  %v8454 = vunpack.c.l.bf16 %v8426
  %v8455 = vunpack.c.h.bf16 %v8426
  %v8456 = vunpack.c.l.bf16 %v8427
  %v8457 = vunpack.c.h.bf16 %v8427
  %v8458 = vunpack.c.l.bf16 %v8428
  %v8459 = vunpack.c.h.bf16 %v8428
  %v8460 = vunpack.c.l.bf16 %v8429
  %v8461 = vunpack.c.h.bf16 %v8429
  %v8462 = vunpack.c.l.bf16 %v8430
  %v8463 = vunpack.c.h.bf16 %v8430
  %v8464 = vunpack.c.l.bf16 %v8431
  %v8465 = vunpack.c.h.bf16 %v8431
  %v8466 = vunpack.c.l.bf16 %v8432
  %v8467 = vunpack.c.h.bf16 %v8432
  %v8468 = vunpack.c.l.bf16 %v8433
  %v8469 = vunpack.c.h.bf16 %v8433
  %v8470 = vunpack.c.l.bf16 %v8434
  %v8471 = vunpack.c.h.bf16 %v8434
  %v8472 = vunpack.c.l.bf16 %v8435
  %v8473 = vunpack.c.h.bf16 %v8435
  %v8474 = vunpack.c.l.bf16 %v8436
  %v8475 = vunpack.c.h.bf16 %v8436
  %v8476 = vunpack.c.l.bf16 %v8437
  %v8477 = vunpack.c.h.bf16 %v8437
  %v8479 = vsel %vm750, %v8370, 0
  %v8482 = vsel %vm750, %v8372, 0
  %v8485 = vsel %vm750, %v8374, 0
  %v8488 = vsel %vm750, %v8376, 0
  %v8491 = vsel %vm750, %v8378, 0
  %v8494 = vsel %vm750, %v8380, 0
  %v8497 = vsel %vm750, %v8382, 0
  %v8500 = vsel %vm750, %v8384, 0
  %v8503 = vsel %vm750, %v8386, 0
  %v8506 = vsel %vm750, %v8388, 0
  %v8509 = vsel %vm750, %v8390, 0
  %v8512 = vsel %vm750, %v8392, 0
  %v8515 = vsel %vm750, %v8394, 0
  %v8518 = vsel %vm750, %v8396, 0
  %v8521 = vsel %vm750, %v8398, 0
  %v8524 = vsel %vm750, %v8400, 0
  %v8527 = vsel %vm750, %v8402, 0
  %v8530 = vsel %vm750, %v8404, 0
  %v8533 = vsel %vm750, %v8406, 0
  %v8536 = vsel %vm750, %v8408, 0
  %v8539 = vsel %vm750, %v8410, 0
  %v8542 = vsel %vm750, %v8412, 0
  %v8545 = vsel %vm750, %v8414, 0
  %v8548 = vsel %vm750, %v8416, 0
  %8550 = vmatprep.subr.mxu0 %v8439
  %8551 = vmatpush1.msra.mxu0 %v8438
  %8552 = vmatprep.subr.mxu0 %v8441
  %8553 = vmatpush1.msra.mxu0 %v8440
  %8554 = vmatprep.subr.mxu0 %v8443
  %8555 = vmatpush1.msra.mxu0 %v8442
  %8556 = vmatprep.subr.mxu0 %v8445
  %8557 = vmatpush1.msra.mxu0 %v8444
  %8558 = vmatprep.subr.mxu0 %v8447
  %8559 = vmatpush1.msra.mxu0 %v8446
  %8560 = vmatprep.subr.mxu0 %v8449
  %8561 = vmatpush1.msra.mxu0 %v8448
  %8562 = vmatprep.subr.mxu0 %v8451
  %8563 = vmatpush1.msra.mxu0 %v8450
  %8564 = vmatprep.subr.mxu0 %v8453
  %8565 = vmatpush1.msra.mxu0 %v8452
  %8566 = vmatprep.subr.mxu0 %v8455
  %8567 = vmatpush1.msra.mxu0 %v8454
  %8568 = vmatprep.subr.mxu0 %v8457
  %8569 = vmatpush1.msra.mxu0 %v8456
  %8570 = vmatprep.subr.mxu0 %v8459
  %8571 = vmatpush1.msra.mxu0 %v8458
  %8572 = vmatprep.subr.mxu0 %v8461
  %8573 = vmatpush1.msra.mxu0 %v8460
  %8574 = vmatprep.subr.mxu0 %v8463
  %8575 = vmatpush1.msra.mxu0 %v8462
  %8576 = vmatprep.subr.mxu0 %v8465
  %8577 = vmatpush1.msra.mxu0 %v8464
  %8578 = vmatprep.subr.mxu0 %v8467
  %8579 = vmatpush1.msra.mxu0 %v8466
  %8580 = vmatprep.subr.mxu0 %v8469
  %8581 = vmatpush1.msra.mxu0 %v8468
  %8582 = vmatprep.subr.mxu0 %v8471
  %8583 = vmatpush1.msra.mxu0 %v8470
  %8584 = vmatprep.subr.mxu0 %v8473
  %8585 = vmatpush1.msra.mxu0 %v8472
  %8586 = vmatprep.subr.mxu0 %v8475
  %8587 = vmatpush1.msra.mxu0 %v8474
  %8588 = vmatprep.subr.mxu0 %v8477
  %8589 = vmatpush1.msra.mxu0 %v8476
  %8590 = vmatprep.subr.mxu0 0.0
  %8591 = vmatpush1.msra.mxu0 0.0
  %8592 = vmatprep.subr.mxu0 0.0
  %8593 = vmatpush1.msra.mxu0 0.0
  %8594 = vmatprep.subr.mxu0 0.0
  %8595 = vmatpush1.msra.mxu0 0.0
  %8596 = vmatprep.subr.mxu0 0.0
  %8597 = vmatpush1.msra.mxu0 0.0
  %8598 = vmatprep.subr.mxu0 0.0
  %8599 = vmatpush1.msra.mxu0 0.0
  %8600 = vmatprep.subr.mxu0 0.0
  %8601 = vmatpush1.msra.mxu0 0.0
  %8602 = vmatprep.subr.mxu0 0.0
  %8603 = vmatpush1.msra.mxu0 0.0
  %8604 = vmatprep.subr.mxu0 0.0
  %8605 = vmatpush1.msra.mxu0 0.0
  %8606 = vmatprep.subr.mxu0 0.0
  %8607 = vmatpush1.msra.mxu0 0.0
  %8608 = vmatprep.subr.mxu0 0.0
  %8609 = vmatpush1.msra.mxu0 0.0
  %8610 = vmatprep.subr.mxu0 0.0
  %8611 = vmatpush1.msra.mxu0 0.0
  %8612 = vmatprep.subr.mxu0 0.0
  %8613 = vmatpush1.msra.mxu0 0.0
  %8614 = vmatprep.mubr.f32.mxu0 %v8479
  %8615 = vmatmul.mubr.f32.gmra.mrb[0].mxu0 %v8369
  %v8616 = vpop.f32.mrb[0].mxu0
  %v8617 = vadd.f32 0.0, %v8616
  %v8618 = vpop.f32.mrb[0].mxu0
  %v8619 = vadd.f32 0.0, %v8618
  %8620 = vmatprep.mubr.f32.mxu0 %v8482
  %8621 = vmatmul.mubr.f32.gmra.mrb[0].mxu0 %v8371
  %v8622 = vpop.f32.mrb[0].mxu0
  %v8623 = vadd.f32 0.0, %v8622
  %v8624 = vpop.f32.mrb[0].mxu0
  %v8625 = vadd.f32 0.0, %v8624
  %8626 = vmatprep.mubr.f32.mxu0 %v8485
  %8627 = vmatmul.mubr.f32.gmra.mrb[0].mxu0 %v8373
  %v8628 = vpop.f32.mrb[0].mxu0
  %v8629 = vadd.f32 0.0, %v8628
  %v8630 = vpop.f32.mrb[0].mxu0
  %v8631 = vadd.f32 0.0, %v8630
  %8632 = vmatprep.mubr.f32.mxu0 %v8488
  %8633 = vmatmul.mubr.f32.gmra.mrb[0].mxu0 %v8375
  %v8634 = vpop.f32.mrb[0].mxu0
  %v8635 = vadd.f32 0.0, %v8634
  %v8636 = vpop.f32.mrb[0].mxu0
  %v8637 = vadd.f32 0.0, %v8636
  %8638 = vmatprep.mubr.f32.mxu0 %v8491
  %8639 = vmatmul.mubr.f32.gmra.mrb[0].mxu0 %v8377
  %v8640 = vpop.f32.mrb[0].mxu0
  %v8641 = vadd.f32 0.0, %v8640
  %v8642 = vpop.f32.mrb[0].mxu0
  %v8643 = vadd.f32 0.0, %v8642
  %8644 = vmatprep.mubr.f32.mxu0 %v8494
  %8645 = vmatmul.mubr.f32.gmra.mrb[0].mxu0 %v8379
  %v8646 = vpop.f32.mrb[0].mxu0
  %v8647 = vadd.f32 0.0, %v8646
  %v8648 = vpop.f32.mrb[0].mxu0
  %v8649 = vadd.f32 0.0, %v8648
  %8650 = vmatprep.mubr.f32.mxu0 %v8497
  %8651 = vmatmul.mubr.f32.gmra.mrb[0].mxu0 %v8381
  %v8652 = vpop.f32.mrb[0].mxu0
  %v8653 = vadd.f32 0.0, %v8652
  %v8654 = vpop.f32.mrb[0].mxu0
  %v8655 = vadd.f32 0.0, %v8654
  %8656 = vmatprep.mubr.f32.mxu0 %v8500
  %8657 = vmatmul.mubr.f32.gmra.mrb[0].mxu0 %v8383
  %v8658 = vpop.f32.mrb[0].mxu0
  %v8659 = vadd.f32 0.0, %v8658
  %v8660 = vpop.f32.mrb[0].mxu0
  %v8661 = vadd.f32 0.0, %v8660
  %8662 = vmatprep.mubr.f32.mxu0 %v8503
  %8663 = vmatmul.mubr.f32.gmra.mrb[0].mxu0 %v8385
  %v8664 = vpop.f32.mrb[0].mxu0
  %v8665 = vadd.f32 0.0, %v8664
  %v8666 = vpop.f32.mrb[0].mxu0
  %v8667 = vadd.f32 0.0, %v8666
  %8668 = vmatprep.mubr.f32.mxu0 %v8506
  %8669 = vmatmul.mubr.f32.gmra.mrb[0].mxu0 %v8387
  %v8670 = vpop.f32.mrb[0].mxu0
  %v8671 = vadd.f32 0.0, %v8670
  %v8672 = vpop.f32.mrb[0].mxu0
  %v8673 = vadd.f32 0.0, %v8672
  %8674 = vmatprep.mubr.f32.mxu0 %v8509
  %8675 = vmatmul.mubr.f32.gmra.mrb[0].mxu0 %v8389
  %v8676 = vpop.f32.mrb[0].mxu0
  %v8677 = vadd.f32 0.0, %v8676
  %v8678 = vpop.f32.mrb[0].mxu0
  %v8679 = vadd.f32 0.0, %v8678
  %8680 = vmatprep.mubr.f32.mxu0 %v8512
  %8681 = vmatmul.mubr.f32.gmra.mrb[0].mxu0 %v8391
  %v8682 = vpop.f32.mrb[0].mxu0
  %v8683 = vadd.f32 0.0, %v8682
  %v8684 = vpop.f32.mrb[0].mxu0
  %v8685 = vadd.f32 0.0, %v8684
  %8686 = vmatprep.mubr.f32.mxu0 %v8515
  %8687 = vmatmul.mubr.f32.gmra.mrb[0].mxu0 %v8393
  %v8688 = vpop.f32.mrb[0].mxu0
  %v8689 = vadd.f32 0.0, %v8688
  %v8690 = vpop.f32.mrb[0].mxu0
  %v8691 = vadd.f32 0.0, %v8690
  %8692 = vmatprep.mubr.f32.mxu0 %v8518
  %8693 = vmatmul.mubr.f32.gmra.mrb[0].mxu0 %v8395
  %v8694 = vpop.f32.mrb[0].mxu0
  %v8695 = vadd.f32 0.0, %v8694
  %v8696 = vpop.f32.mrb[0].mxu0
  %v8697 = vadd.f32 0.0, %v8696
  %8698 = vmatprep.mubr.f32.mxu0 %v8521
  %8699 = vmatmul.mubr.f32.gmra.mrb[0].mxu0 %v8397
  %v8700 = vpop.f32.mrb[0].mxu0
  %v8701 = vadd.f32 0.0, %v8700
  %v8702 = vpop.f32.mrb[0].mxu0
  %v8703 = vadd.f32 0.0, %v8702
  %8704 = vmatprep.mubr.f32.mxu0 %v8524
  %8705 = vmatmul.mubr.f32.gmra.mrb[0].mxu0 %v8399
  %v8706 = vpop.f32.mrb[0].mxu0
  %v8707 = vadd.f32 0.0, %v8706
  %v8708 = vpop.f32.mrb[0].mxu0
  %v8709 = vadd.f32 0.0, %v8708
  %8710 = vmatprep.mubr.f32.mxu0 %v8527
  %8711 = vmatmul.mubr.f32.gmra.mrb[0].mxu0 %v8401
  %v8712 = vpop.f32.mrb[0].mxu0
  %v8713 = vadd.f32 0.0, %v8712
  %v8714 = vpop.f32.mrb[0].mxu0
  %v8715 = vadd.f32 0.0, %v8714
  %8716 = vmatprep.mubr.f32.mxu0 %v8530
  %8717 = vmatmul.mubr.f32.gmra.mrb[0].mxu0 %v8403
  %v8718 = vpop.f32.mrb[0].mxu0
  %v8719 = vadd.f32 0.0, %v8718
  %v8720 = vpop.f32.mrb[0].mxu0
  %v8721 = vadd.f32 0.0, %v8720
  %8722 = vmatprep.mubr.f32.mxu0 %v8533
  %8723 = vmatmul.mubr.f32.gmra.mrb[0].mxu0 %v8405
  %v8724 = vpop.f32.mrb[0].mxu0
  %v8725 = vadd.f32 0.0, %v8724
  %v8726 = vpop.f32.mrb[0].mxu0
  %v8727 = vadd.f32 0.0, %v8726
  %8728 = vmatprep.mubr.f32.mxu0 %v8536
  %8729 = vmatmul.mubr.f32.gmra.mrb[0].mxu0 %v8407
  %v8730 = vpop.f32.mrb[0].mxu0
  %v8731 = vadd.f32 0.0, %v8730
  %v8732 = vpop.f32.mrb[0].mxu0
  %v8733 = vadd.f32 0.0, %v8732
  %8734 = vmatprep.mubr.f32.mxu0 %v8539
  %8735 = vmatmul.mubr.f32.gmra.mrb[0].mxu0 %v8409
  %v8736 = vpop.f32.mrb[0].mxu0
  %v8737 = vadd.f32 0.0, %v8736
  %v8738 = vpop.f32.mrb[0].mxu0
  %v8739 = vadd.f32 0.0, %v8738
  %8740 = vmatprep.mubr.f32.mxu0 %v8542
  %8741 = vmatmul.mubr.f32.gmra.mrb[0].mxu0 %v8411
  %v8742 = vpop.f32.mrb[0].mxu0
  %v8743 = vadd.f32 0.0, %v8742
  %v8744 = vpop.f32.mrb[0].mxu0
  %v8745 = vadd.f32 0.0, %v8744
  %8746 = vmatprep.mubr.f32.mxu0 %v8545
  %8747 = vmatmul.mubr.f32.gmra.mrb[0].mxu0 %v8413
  %v8748 = vpop.f32.mrb[0].mxu0
  %v8749 = vadd.f32 0.0, %v8748
  %v8750 = vpop.f32.mrb[0].mxu0
  %v8751 = vadd.f32 0.0, %v8750
  %8752 = vmatprep.mubr.f32.mxu0 %v8548
  %8753 = vmatmul.mubr.f32.gmra.mrb[0].mxu0 %v8415
  %v8754 = vpop.f32.mrb[0].mxu0
  %v8755 = vadd.f32 0.0, %v8754
  %v8756 = vpop.f32.mrb[0].mxu0
  %v8757 = vadd.f32 0.0, %v8756
  %8758 = vdwg.mxu0
  %v8759 = vadd.f32 %v8320, %v8617
  %v8760 = vadd.f32 %v8321, %v8619
  %v8761 = vadd.f32 %v8322, %v8623
  %v8762 = vadd.f32 %v8323, %v8625
  %v8763 = vadd.f32 %v8324, %v8629
  %v8764 = vadd.f32 %v8325, %v8631
  %v8765 = vadd.f32 %v8326, %v8635
  %v8766 = vadd.f32 %v8327, %v8637
  %v8767 = vadd.f32 %v8328, %v8641
  %v8768 = vadd.f32 %v8329, %v8643
  %v8769 = vadd.f32 %v8330, %v8647
  %v8770 = vadd.f32 %v8331, %v8649
  %v8771 = vadd.f32 %v8332, %v8653
  %v8772 = vadd.f32 %v8333, %v8655
  %v8773 = vadd.f32 %v8334, %v8659
  %v8774 = vadd.f32 %v8335, %v8661
  %v8775 = vadd.f32 %v8336, %v8665
  %v8776 = vadd.f32 %v8337, %v8667
  %v8777 = vadd.f32 %v8338, %v8671
  %v8778 = vadd.f32 %v8339, %v8673
  %v8779 = vadd.f32 %v8340, %v8677
  %v8780 = vadd.f32 %v8341, %v8679
  %v8781 = vadd.f32 %v8342, %v8683
  %v8782 = vadd.f32 %v8343, %v8685
  %v8783 = vadd.f32 %v8344, %v8689
  %v8784 = vadd.f32 %v8345, %v8691
  %v8785 = vadd.f32 %v8346, %v8695
  %v8786 = vadd.f32 %v8347, %v8697
  %v8787 = vadd.f32 %v8348, %v8701
  %v8788 = vadd.f32 %v8349, %v8703
  %v8789 = vadd.f32 %v8350, %v8707
  %v8790 = vadd.f32 %v8351, %v8709
  %v8791 = vadd.f32 %v8352, %v8713
  %v8792 = vadd.f32 %v8353, %v8715
  %v8793 = vadd.f32 %v8354, %v8719
  %v8794 = vadd.f32 %v8355, %v8721
  %v8795 = vadd.f32 %v8356, %v8725
  %v8796 = vadd.f32 %v8357, %v8727
  %v8797 = vadd.f32 %v8358, %v8731
  %v8798 = vadd.f32 %v8359, %v8733
  %v8799 = vadd.f32 %v8360, %v8737
  %v8800 = vadd.f32 %v8361, %v8739
  %v8801 = vadd.f32 %v8362, %v8743
  %v8802 = vadd.f32 %v8363, %v8745
  %v8803 = vadd.f32 %v8364, %v8749
  %v8804 = vadd.f32 %v8365, %v8751
  %v8805 = vadd.f32 %v8366, %v8755
  %v8806 = vadd.f32 %v8367, %v8757
  %s8807 = scalar_lea.vmem [#allocation2], 192
  %v8808 = vld [vmem:[%s8807] sm:$0xff]
  %v8809 = vld [vmem:[%s8807 + $0x8] sm:$0xff]
  %v8810 = vld [vmem:[%s8807 + $0x10] sm:$0xff]
  %v8811 = vld [vmem:[%s8807 + $0x18] sm:$0xff]
  %v8812 = vld [vmem:[%s8807 + $0x20] sm:$0xff]
  %v8813 = vld [vmem:[%s8807 + $0x28] sm:$0xff]
  %v8814 = vld [vmem:[%s8807 + $0x30] sm:$0xff]
  %v8815 = vld [vmem:[%s8807 + $0x38] sm:$0xff]
  %v8816 = vld [vmem:[%s8807 + $0x40] sm:$0xff]
  %v8817 = vld [vmem:[%s8807 + $0x48] sm:$0xff]
  %v8818 = vld [vmem:[%s8807 + $0x50] sm:$0xff]
  %v8819 = vld [vmem:[%s8807 + $0x58] sm:$0xff]
  %v8820 = vld [vmem:[%s8807 + $0x60] sm:$0xff]
  %v8821 = vld [vmem:[%s8807 + $0x68] sm:$0xff]
  %v8822 = vld [vmem:[%s8807 + $0x70] sm:$0xff]
  %v8823 = vld [vmem:[%s8807 + $0x78] sm:$0xff]
  %v8824 = vld [vmem:[%s8807 + $0x80] sm:$0xff]
  %v8825 = vld [vmem:[%s8807 + $0x88] sm:$0xff]
  %v8826 = vld [vmem:[%s8807 + $0x90] sm:$0xff]
  %v8827 = vld [vmem:[%s8807 + $0x98] sm:$0xff]
  %v8828 = vld [vmem:[%s8807 + $0xa0] sm:$0xff]
  %v8829 = vld [vmem:[%s8807 + $0xa8] sm:$0xff]
  %v8830 = vld [vmem:[%s8807 + $0xb0] sm:$0xff]
  %v8831 = vld [vmem:[%s8807 + $0xb8] sm:$0xff]
  %v8832 = vld [vmem:[%s8807 + $0xc0] sm:$0xff]
  %v8833 = vld [vmem:[%s8807 + $0xc8] sm:$0xff]
  %v8834 = vld [vmem:[%s8807 + $0xd0] sm:$0xff]
  %v8835 = vld [vmem:[%s8807 + $0xd8] sm:$0xff]
  %v8836 = vld [vmem:[%s8807 + $0xe0] sm:$0xff]
  %v8837 = vld [vmem:[%s8807 + $0xe8] sm:$0xff]
  %v8838 = vld [vmem:[%s8807 + $0xf0] sm:$0xff]
  %v8839 = vld [vmem:[%s8807 + $0xf8] sm:$0xff]
  %v8840 = vld [vmem:[%s8807 + $0x100] sm:$0xff]
  %v8841 = vld [vmem:[%s8807 + $0x108] sm:$0xff]
  %v8842 = vld [vmem:[%s8807 + $0x110] sm:$0xff]
  %v8843 = vld [vmem:[%s8807 + $0x118] sm:$0xff]
  %v8844 = vld [vmem:[%s8807 + $0x120] sm:$0xff]
  %v8845 = vld [vmem:[%s8807 + $0x128] sm:$0xff]
  %v8846 = vld [vmem:[%s8807 + $0x130] sm:$0xff]
  %v8847 = vld [vmem:[%s8807 + $0x138] sm:$0xff]
  %v8848 = vld [vmem:[%s8807 + $0x140] sm:$0xff]
  %v8849 = vld [vmem:[%s8807 + $0x148] sm:$0xff]
  %v8850 = vld [vmem:[%s8807 + $0x150] sm:$0xff]
  %v8851 = vld [vmem:[%s8807 + $0x158] sm:$0xff]
  %v8852 = vld [vmem:[%s8807 + $0x160] sm:$0xff]
  %v8853 = vld [vmem:[%s8807 + $0x168] sm:$0xff]
  %v8854 = vld [vmem:[%s8807 + $0x170] sm:$0xff]
  %v8855 = vld [vmem:[%s8807 + $0x178] sm:$0xff]
  %s8856 = scalar_lea.vmem %s4, 960
  %v8857 = vld [vmem:[%s8856] sm:$0xff]
  %v8858 = vld [vmem:[%s8856 + $0x8] sm:$0xff]
  %v8859 = vld [vmem:[%s8856 + $0x10] sm:$0xff]
  %v8860 = vld [vmem:[%s8856 + $0x18] sm:$0xff]
  %v8861 = vld [vmem:[%s8856 + $0x20] sm:$0xff]
  %v8862 = vld [vmem:[%s8856 + $0x28] sm:$0xff]
  %v8863 = vld [vmem:[%s8856 + $0x30] sm:$0xff]
  %v8864 = vld [vmem:[%s8856 + $0x38] sm:$0xff]
  %v8865 = vld [vmem:[%s8856 + $0x40] sm:$0xff]
  %v8866 = vld [vmem:[%s8856 + $0x48] sm:$0xff]
  %v8867 = vld [vmem:[%s8856 + $0x50] sm:$0xff]
  %v8868 = vld [vmem:[%s8856 + $0x58] sm:$0xff]
  %v8869 = vld [vmem:[%s8856 + $0x60] sm:$0xff]
  %v8870 = vld [vmem:[%s8856 + $0x68] sm:$0xff]
  %v8871 = vld [vmem:[%s8856 + $0x70] sm:$0xff]
  %v8872 = vld [vmem:[%s8856 + $0x78] sm:$0xff]
  %v8873 = vld [vmem:[%s8856 + $0x80] sm:$0xff]
  %v8874 = vld [vmem:[%s8856 + $0x88] sm:$0xff]
  %v8875 = vld [vmem:[%s8856 + $0x90] sm:$0xff]
  %v8876 = vld [vmem:[%s8856 + $0x98] sm:$0xff]
  %v8877 = vunpack.c.l.bf16 %v8857
  %v8878 = vunpack.c.h.bf16 %v8857
  %v8879 = vunpack.c.l.bf16 %v8858
  %v8880 = vunpack.c.h.bf16 %v8858
  %v8881 = vunpack.c.l.bf16 %v8859
  %v8882 = vunpack.c.h.bf16 %v8859
  %v8883 = vunpack.c.l.bf16 %v8860
  %v8884 = vunpack.c.h.bf16 %v8860
  %v8885 = vunpack.c.l.bf16 %v8861
  %v8886 = vunpack.c.h.bf16 %v8861
  %v8887 = vunpack.c.l.bf16 %v8862
  %v8888 = vunpack.c.h.bf16 %v8862
  %v8889 = vunpack.c.l.bf16 %v8863
  %v8890 = vunpack.c.h.bf16 %v8863
  %v8891 = vunpack.c.l.bf16 %v8864
  %v8892 = vunpack.c.h.bf16 %v8864
  %v8893 = vunpack.c.l.bf16 %v8865
  %v8894 = vunpack.c.h.bf16 %v8865
  %v8895 = vunpack.c.l.bf16 %v8866
  %v8896 = vunpack.c.h.bf16 %v8866
  %v8897 = vunpack.c.l.bf16 %v8867
  %v8898 = vunpack.c.h.bf16 %v8867
  %v8899 = vunpack.c.l.bf16 %v8868
  %v8900 = vunpack.c.h.bf16 %v8868
  %v8901 = vunpack.c.l.bf16 %v8869
  %v8902 = vunpack.c.h.bf16 %v8869
  %v8903 = vunpack.c.l.bf16 %v8870
  %v8904 = vunpack.c.h.bf16 %v8870
  %v8905 = vunpack.c.l.bf16 %v8871
  %v8906 = vunpack.c.h.bf16 %v8871
  %v8907 = vunpack.c.l.bf16 %v8872
  %v8908 = vunpack.c.h.bf16 %v8872
  %v8909 = vunpack.c.l.bf16 %v8873
  %v8910 = vunpack.c.h.bf16 %v8873
  %v8911 = vunpack.c.l.bf16 %v8874
  %v8912 = vunpack.c.h.bf16 %v8874
  %v8913 = vunpack.c.l.bf16 %v8875
  %v8914 = vunpack.c.h.bf16 %v8875
  %v8915 = vunpack.c.l.bf16 %v8876
  %v8916 = vunpack.c.h.bf16 %v8876
  %v8918 = vsel %vm750, %v8809, 0
  %v8921 = vsel %vm750, %v8811, 0
  %v8924 = vsel %vm750, %v8813, 0
  %v8927 = vsel %vm750, %v8815, 0
  %v8930 = vsel %vm750, %v8817, 0
  %v8933 = vsel %vm750, %v8819, 0
  %v8936 = vsel %vm750, %v8821, 0
  %v8939 = vsel %vm750, %v8823, 0
  %v8942 = vsel %vm750, %v8825, 0
  %v8945 = vsel %vm750, %v8827, 0
  %v8948 = vsel %vm750, %v8829, 0
  %v8951 = vsel %vm750, %v8831, 0
  %v8954 = vsel %vm750, %v8833, 0
  %v8957 = vsel %vm750, %v8835, 0
  %v8960 = vsel %vm750, %v8837, 0
  %v8963 = vsel %vm750, %v8839, 0
  %v8966 = vsel %vm750, %v8841, 0
  %v8969 = vsel %vm750, %v8843, 0
  %v8972 = vsel %vm750, %v8845, 0
  %v8975 = vsel %vm750, %v8847, 0
  %v8978 = vsel %vm750, %v8849, 0
  %v8981 = vsel %vm750, %v8851, 0
  %v8984 = vsel %vm750, %v8853, 0
  %v8987 = vsel %vm750, %v8855, 0
  %8989 = vmatprep.subr.mxu0 %v8878
  %8990 = vmatpush1.msra.mxu0 %v8877
  %8991 = vmatprep.subr.mxu0 %v8880
  %8992 = vmatpush1.msra.mxu0 %v8879
  %8993 = vmatprep.subr.mxu0 %v8882
  %8994 = vmatpush1.msra.mxu0 %v8881
  %8995 = vmatprep.subr.mxu0 %v8884
  %8996 = vmatpush1.msra.mxu0 %v8883
  %8997 = vmatprep.subr.mxu0 %v8886
  %8998 = vmatpush1.msra.mxu0 %v8885
  %8999 = vmatprep.subr.mxu0 %v8888
  %9000 = vmatpush1.msra.mxu0 %v8887
  %9001 = vmatprep.subr.mxu0 %v8890
  %9002 = vmatpush1.msra.mxu0 %v8889
  %9003 = vmatprep.subr.mxu0 %v8892
  %9004 = vmatpush1.msra.mxu0 %v8891
  %9005 = vmatprep.subr.mxu0 %v8894
  %9006 = vmatpush1.msra.mxu0 %v8893
  %9007 = vmatprep.subr.mxu0 %v8896
  %9008 = vmatpush1.msra.mxu0 %v8895
  %9009 = vmatprep.subr.mxu0 %v8898
  %9010 = vmatpush1.msra.mxu0 %v8897
  %9011 = vmatprep.subr.mxu0 %v8900
  %9012 = vmatpush1.msra.mxu0 %v8899
  %9013 = vmatprep.subr.mxu0 %v8902
  %9014 = vmatpush1.msra.mxu0 %v8901
  %9015 = vmatprep.subr.mxu0 %v8904
  %9016 = vmatpush1.msra.mxu0 %v8903
  %9017 = vmatprep.subr.mxu0 %v8906
  %9018 = vmatpush1.msra.mxu0 %v8905
  %9019 = vmatprep.subr.mxu0 %v8908
  %9020 = vmatpush1.msra.mxu0 %v8907
  %9021 = vmatprep.subr.mxu0 %v8910
  %9022 = vmatpush1.msra.mxu0 %v8909
  %9023 = vmatprep.subr.mxu0 %v8912
  %9024 = vmatpush1.msra.mxu0 %v8911
  %9025 = vmatprep.subr.mxu0 %v8914
  %9026 = vmatpush1.msra.mxu0 %v8913
  %9027 = vmatprep.subr.mxu0 %v8916
  %9028 = vmatpush1.msra.mxu0 %v8915
  %9029 = vmatprep.subr.mxu0 0.0
  %9030 = vmatpush1.msra.mxu0 0.0
  %9031 = vmatprep.subr.mxu0 0.0
  %9032 = vmatpush1.msra.mxu0 0.0
  %9033 = vmatprep.subr.mxu0 0.0
  %9034 = vmatpush1.msra.mxu0 0.0
  %9035 = vmatprep.subr.mxu0 0.0
  %9036 = vmatpush1.msra.mxu0 0.0
  %9037 = vmatprep.subr.mxu0 0.0
  %9038 = vmatpush1.msra.mxu0 0.0
  %9039 = vmatprep.subr.mxu0 0.0
  %9040 = vmatpush1.msra.mxu0 0.0
  %9041 = vmatprep.subr.mxu0 0.0
  %9042 = vmatpush1.msra.mxu0 0.0
  %9043 = vmatprep.subr.mxu0 0.0
  %9044 = vmatpush1.msra.mxu0 0.0
  %9045 = vmatprep.subr.mxu0 0.0
  %9046 = vmatpush1.msra.mxu0 0.0
  %9047 = vmatprep.subr.mxu0 0.0
  %9048 = vmatpush1.msra.mxu0 0.0
  %9049 = vmatprep.subr.mxu0 0.0
  %9050 = vmatpush1.msra.mxu0 0.0
  %9051 = vmatprep.subr.mxu0 0.0
  %9052 = vmatpush1.msra.mxu0 0.0
  %9053 = vmatprep.mubr.f32.mxu0 %v8918
  %9054 = vmatmul.mubr.f32.gmra.mrb[0].mxu0 %v8808
  %v9055 = vpop.f32.mrb[0].mxu0
  %v9056 = vadd.f32 0.0, %v9055
  %v9057 = vpop.f32.mrb[0].mxu0
  %v9058 = vadd.f32 0.0, %v9057
  %9059 = vmatprep.mubr.f32.mxu0 %v8921
  %9060 = vmatmul.mubr.f32.gmra.mrb[0].mxu0 %v8810
  %v9061 = vpop.f32.mrb[0].mxu0
  %v9062 = vadd.f32 0.0, %v9061
  %v9063 = vpop.f32.mrb[0].mxu0
  %v9064 = vadd.f32 0.0, %v9063
  %9065 = vmatprep.mubr.f32.mxu0 %v8924
  %9066 = vmatmul.mubr.f32.gmra.mrb[0].mxu0 %v8812
  %v9067 = vpop.f32.mrb[0].mxu0
  %v9068 = vadd.f32 0.0, %v9067
  %v9069 = vpop.f32.mrb[0].mxu0
  %v9070 = vadd.f32 0.0, %v9069
  %9071 = vmatprep.mubr.f32.mxu0 %v8927
  %9072 = vmatmul.mubr.f32.gmra.mrb[0].mxu0 %v8814
  %v9073 = vpop.f32.mrb[0].mxu0
  %v9074 = vadd.f32 0.0, %v9073
  %v9075 = vpop.f32.mrb[0].mxu0
  %v9076 = vadd.f32 0.0, %v9075
  %9077 = vmatprep.mubr.f32.mxu0 %v8930
  %9078 = vmatmul.mubr.f32.gmra.mrb[0].mxu0 %v8816
  %v9079 = vpop.f32.mrb[0].mxu0
  %v9080 = vadd.f32 0.0, %v9079
  %v9081 = vpop.f32.mrb[0].mxu0
  %v9082 = vadd.f32 0.0, %v9081
  %9083 = vmatprep.mubr.f32.mxu0 %v8933
  %9084 = vmatmul.mubr.f32.gmra.mrb[0].mxu0 %v8818
  %v9085 = vpop.f32.mrb[0].mxu0
  %v9086 = vadd.f32 0.0, %v9085
  %v9087 = vpop.f32.mrb[0].mxu0
  %v9088 = vadd.f32 0.0, %v9087
  %9089 = vmatprep.mubr.f32.mxu0 %v8936
  %9090 = vmatmul.mubr.f32.gmra.mrb[0].mxu0 %v8820
  %v9091 = vpop.f32.mrb[0].mxu0
  %v9092 = vadd.f32 0.0, %v9091
  %v9093 = vpop.f32.mrb[0].mxu0
  %v9094 = vadd.f32 0.0, %v9093
  %9095 = vmatprep.mubr.f32.mxu0 %v8939
  %9096 = vmatmul.mubr.f32.gmra.mrb[0].mxu0 %v8822
  %v9097 = vpop.f32.mrb[0].mxu0
  %v9098 = vadd.f32 0.0, %v9097
  %v9099 = vpop.f32.mrb[0].mxu0
  %v9100 = vadd.f32 0.0, %v9099
  %9101 = vmatprep.mubr.f32.mxu0 %v8942
  %9102 = vmatmul.mubr.f32.gmra.mrb[0].mxu0 %v8824
  %v9103 = vpop.f32.mrb[0].mxu0
  %v9104 = vadd.f32 0.0, %v9103
  %v9105 = vpop.f32.mrb[0].mxu0
  %v9106 = vadd.f32 0.0, %v9105
  %9107 = vmatprep.mubr.f32.mxu0 %v8945
  %9108 = vmatmul.mubr.f32.gmra.mrb[0].mxu0 %v8826
  %v9109 = vpop.f32.mrb[0].mxu0
  %v9110 = vadd.f32 0.0, %v9109
  %v9111 = vpop.f32.mrb[0].mxu0
  %v9112 = vadd.f32 0.0, %v9111
  %9113 = vmatprep.mubr.f32.mxu0 %v8948
  %9114 = vmatmul.mubr.f32.gmra.mrb[0].mxu0 %v8828
  %v9115 = vpop.f32.mrb[0].mxu0
  %v9116 = vadd.f32 0.0, %v9115
  %v9117 = vpop.f32.mrb[0].mxu0
  %v9118 = vadd.f32 0.0, %v9117
  %9119 = vmatprep.mubr.f32.mxu0 %v8951
  %9120 = vmatmul.mubr.f32.gmra.mrb[0].mxu0 %v8830
  %v9121 = vpop.f32.mrb[0].mxu0
  %v9122 = vadd.f32 0.0, %v9121
  %v9123 = vpop.f32.mrb[0].mxu0
  %v9124 = vadd.f32 0.0, %v9123
  %9125 = vmatprep.mubr.f32.mxu0 %v8954
  %9126 = vmatmul.mubr.f32.gmra.mrb[0].mxu0 %v8832
  %v9127 = vpop.f32.mrb[0].mxu0
  %v9128 = vadd.f32 0.0, %v9127
  %v9129 = vpop.f32.mrb[0].mxu0
  %v9130 = vadd.f32 0.0, %v9129
  %9131 = vmatprep.mubr.f32.mxu0 %v8957
  %9132 = vmatmul.mubr.f32.gmra.mrb[0].mxu0 %v8834
  %v9133 = vpop.f32.mrb[0].mxu0
  %v9134 = vadd.f32 0.0, %v9133
  %v9135 = vpop.f32.mrb[0].mxu0
  %v9136 = vadd.f32 0.0, %v9135
  %9137 = vmatprep.mubr.f32.mxu0 %v8960
  %9138 = vmatmul.mubr.f32.gmra.mrb[0].mxu0 %v8836
  %v9139 = vpop.f32.mrb[0].mxu0
  %v9140 = vadd.f32 0.0, %v9139
  %v9141 = vpop.f32.mrb[0].mxu0
  %v9142 = vadd.f32 0.0, %v9141
  %9143 = vmatprep.mubr.f32.mxu0 %v8963
  %9144 = vmatmul.mubr.f32.gmra.mrb[0].mxu0 %v8838
  %v9145 = vpop.f32.mrb[0].mxu0
  %v9146 = vadd.f32 0.0, %v9145
  %v9147 = vpop.f32.mrb[0].mxu0
  %v9148 = vadd.f32 0.0, %v9147
  %9149 = vmatprep.mubr.f32.mxu0 %v8966
  %9150 = vmatmul.mubr.f32.gmra.mrb[0].mxu0 %v8840
  %v9151 = vpop.f32.mrb[0].mxu0
  %v9152 = vadd.f32 0.0, %v9151
  %v9153 = vpop.f32.mrb[0].mxu0
  %v9154 = vadd.f32 0.0, %v9153
  %9155 = vmatprep.mubr.f32.mxu0 %v8969
  %9156 = vmatmul.mubr.f32.gmra.mrb[0].mxu0 %v8842
  %v9157 = vpop.f32.mrb[0].mxu0
  %v9158 = vadd.f32 0.0, %v9157
  %v9159 = vpop.f32.mrb[0].mxu0
  %v9160 = vadd.f32 0.0, %v9159
  %9161 = vmatprep.mubr.f32.mxu0 %v8972
  %9162 = vmatmul.mubr.f32.gmra.mrb[0].mxu0 %v8844
  %v9163 = vpop.f32.mrb[0].mxu0
  %v9164 = vadd.f32 0.0, %v9163
  %v9165 = vpop.f32.mrb[0].mxu0
  %v9166 = vadd.f32 0.0, %v9165
  %9167 = vmatprep.mubr.f32.mxu0 %v8975
  %9168 = vmatmul.mubr.f32.gmra.mrb[0].mxu0 %v8846
  %v9169 = vpop.f32.mrb[0].mxu0
  %v9170 = vadd.f32 0.0, %v9169
  %v9171 = vpop.f32.mrb[0].mxu0
  %v9172 = vadd.f32 0.0, %v9171
  %9173 = vmatprep.mubr.f32.mxu0 %v8978
  %9174 = vmatmul.mubr.f32.gmra.mrb[0].mxu0 %v8848
  %v9175 = vpop.f32.mrb[0].mxu0
  %v9176 = vadd.f32 0.0, %v9175
  %v9177 = vpop.f32.mrb[0].mxu0
  %v9178 = vadd.f32 0.0, %v9177
  %9179 = vmatprep.mubr.f32.mxu0 %v8981
  %9180 = vmatmul.mubr.f32.gmra.mrb[0].mxu0 %v8850
  %v9181 = vpop.f32.mrb[0].mxu0
  %v9182 = vadd.f32 0.0, %v9181
  %v9183 = vpop.f32.mrb[0].mxu0
  %v9184 = vadd.f32 0.0, %v9183
  %9185 = vmatprep.mubr.f32.mxu0 %v8984
  %9186 = vmatmul.mubr.f32.gmra.mrb[0].mxu0 %v8852
  %v9187 = vpop.f32.mrb[0].mxu0
  %v9188 = vadd.f32 0.0, %v9187
  %v9189 = vpop.f32.mrb[0].mxu0
  %v9190 = vadd.f32 0.0, %v9189
  %9191 = vmatprep.mubr.f32.mxu0 %v8987
  %9192 = vmatmul.mubr.f32.gmra.mrb[0].mxu0 %v8854
  %v9193 = vpop.f32.mrb[0].mxu0
  %v9194 = vadd.f32 0.0, %v9193
  %v9195 = vpop.f32.mrb[0].mxu0
  %v9196 = vadd.f32 0.0, %v9195
  %9197 = vdwg.mxu0
  %v9198 = vadd.f32 %v8759, %v9056
  %v9199 = vadd.f32 %v8760, %v9058
  %v9200 = vadd.f32 %v8761, %v9062
  %v9201 = vadd.f32 %v8762, %v9064
  %v9202 = vadd.f32 %v8763, %v9068
  %v9203 = vadd.f32 %v8764, %v9070
  %v9204 = vadd.f32 %v8765, %v9074
  %v9205 = vadd.f32 %v8766, %v9076
  %v9206 = vadd.f32 %v8767, %v9080
  %v9207 = vadd.f32 %v8768, %v9082
  %v9208 = vadd.f32 %v8769, %v9086
  %v9209 = vadd.f32 %v8770, %v9088
  %v9210 = vadd.f32 %v8771, %v9092
  %v9211 = vadd.f32 %v8772, %v9094
  %v9212 = vadd.f32 %v8773, %v9098
  %v9213 = vadd.f32 %v8774, %v9100
  %v9214 = vadd.f32 %v8775, %v9104
  %v9215 = vadd.f32 %v8776, %v9106
  %v9216 = vadd.f32 %v8777, %v9110
  %v9217 = vadd.f32 %v8778, %v9112
  %v9218 = vadd.f32 %v8779, %v9116
  %v9219 = vadd.f32 %v8780, %v9118
  %v9220 = vadd.f32 %v8781, %v9122
  %v9221 = vadd.f32 %v8782, %v9124
  %v9222 = vadd.f32 %v8783, %v9128
  %v9223 = vadd.f32 %v8784, %v9130
  %v9224 = vadd.f32 %v8785, %v9134
  %v9225 = vadd.f32 %v8786, %v9136
  %v9226 = vadd.f32 %v8787, %v9140
  %v9227 = vadd.f32 %v8788, %v9142
  %v9228 = vadd.f32 %v8789, %v9146
  %v9229 = vadd.f32 %v8790, %v9148
  %v9230 = vadd.f32 %v8791, %v9152
  %v9231 = vadd.f32 %v8792, %v9154
  %v9232 = vadd.f32 %v8793, %v9158
  %v9233 = vadd.f32 %v8794, %v9160
  %v9234 = vadd.f32 %v8795, %v9164
  %v9235 = vadd.f32 %v8796, %v9166
  %v9236 = vadd.f32 %v8797, %v9170
  %v9237 = vadd.f32 %v8798, %v9172
  %v9238 = vadd.f32 %v8799, %v9176
  %v9239 = vadd.f32 %v8800, %v9178
  %v9240 = vadd.f32 %v8801, %v9182
  %v9241 = vadd.f32 %v8802, %v9184
  %v9242 = vadd.f32 %v8803, %v9188
  %v9243 = vadd.f32 %v8804, %v9190
  %v9244 = vadd.f32 %v8805, %v9194
  %v9245 = vadd.f32 %v8806, %v9196
  %v9246 = vadd.f32 %v9198, %v9200
  %v9247 = vadd.f32 %v9246, %v9202
  %v9248 = vadd.f32 %v9247, %v9204
  %v9249 = vadd.f32 %v9248, %v9206
  %v9250 = vadd.f32 %v9249, %v9208
  %v9251 = vadd.f32 %v9250, %v9210
  %v9252 = vadd.f32 %v9251, %v9212
  %v9253 = vadd.f32 %v9252, %v9214
  %v9254 = vadd.f32 %v9253, %v9216
  %v9255 = vadd.f32 %v9254, %v9218
  %v9256 = vadd.f32 %v9255, %v9220
  %v9257 = vadd.f32 %v9256, %v9222
  %v9258 = vadd.f32 %v9257, %v9224
  %v9259 = vadd.f32 %v9258, %v9226
  %v9260 = vadd.f32 %v9259, %v9228
  %v9261 = vadd.f32 %v9260, %v9230
  %v9262 = vadd.f32 %v9261, %v9232
  %v9263 = vadd.f32 %v9262, %v9234
  %v9264 = vadd.f32 %v9263, %v9236
  %v9265 = vadd.f32 %v9264, %v9238
  %v9266 = vadd.f32 %v9265, %v9240
  %v9267 = vadd.f32 %v9266, %v9242
  %v9268 = vadd.f32 %v9267, %v9244
  %v9269 = vrot.slane %v9268, 4
  %v9270 = vadd.f32 %v9268, %v9269
  %v9271 = vrot.slane %v9270, 2
  %v9272 = vadd.f32 %v9270, %v9271
  %v9273 = vrot.slane %v9272, 1
  %v9274 = vadd.f32 %v9272, %v9273
  %vm9275 = vcmask 523264
  %v9276 = vsel %vm9275, %v9199, 0.0
  %v9277 = vsel %vm9275, %v9201, 0.0
  %v9278 = vadd.f32 %v9276, %v9277
  %v9279 = vsel %vm9275, %v9203, 0.0
  %v9280 = vadd.f32 %v9278, %v9279
  %v9281 = vsel %vm9275, %v9205, 0.0
  %v9282 = vadd.f32 %v9280, %v9281
  %v9283 = vsel %vm9275, %v9207, 0.0
  %v9284 = vadd.f32 %v9282, %v9283
  %v9285 = vsel %vm9275, %v9209, 0.0
  %v9286 = vadd.f32 %v9284, %v9285
  %v9287 = vsel %vm9275, %v9211, 0.0
  %v9288 = vadd.f32 %v9286, %v9287
  %v9289 = vsel %vm9275, %v9213, 0.0
  %v9290 = vadd.f32 %v9288, %v9289
  %v9291 = vsel %vm9275, %v9215, 0.0
  %v9292 = vadd.f32 %v9290, %v9291
  %v9293 = vsel %vm9275, %v9217, 0.0
  %v9294 = vadd.f32 %v9292, %v9293
  %v9295 = vsel %vm9275, %v9219, 0.0
  %v9296 = vadd.f32 %v9294, %v9295
  %v9297 = vsel %vm9275, %v9221, 0.0
  %v9298 = vadd.f32 %v9296, %v9297
  %v9299 = vsel %vm9275, %v9223, 0.0
  %v9300 = vadd.f32 %v9298, %v9299
  %v9301 = vsel %vm9275, %v9225, 0.0
  %v9302 = vadd.f32 %v9300, %v9301
  %v9303 = vsel %vm9275, %v9227, 0.0
  %v9304 = vadd.f32 %v9302, %v9303
  %v9305 = vsel %vm9275, %v9229, 0.0
  %v9306 = vadd.f32 %v9304, %v9305
  %v9307 = vsel %vm9275, %v9231, 0.0
  %v9308 = vadd.f32 %v9306, %v9307
  %v9309 = vsel %vm9275, %v9233, 0.0
  %v9310 = vadd.f32 %v9308, %v9309
  %v9311 = vsel %vm9275, %v9235, 0.0
  %v9312 = vadd.f32 %v9310, %v9311
  %v9313 = vsel %vm9275, %v9237, 0.0
  %v9314 = vadd.f32 %v9312, %v9313
  %v9315 = vsel %vm9275, %v9239, 0.0
  %v9316 = vadd.f32 %v9314, %v9315
  %v9317 = vsel %vm9275, %v9241, 0.0
  %v9318 = vadd.f32 %v9316, %v9317
  %v9319 = vsel %vm9275, %v9243, 0.0
  %v9320 = vadd.f32 %v9318, %v9319
  %v9321 = vsel %vm9275, %v9245, 0.0
  %v9322 = vadd.f32 %v9320, %v9321
  %v9323 = vrot.slane %v9322, 4
  %v9324 = vadd.f32 %v9322, %v9323
  %v9325 = vrot.slane %v9324, 2
  %v9326 = vadd.f32 %v9324, %v9325
  %v9327 = vrot.slane %v9326, 1
  %v9328 = vadd.f32 %v9326, %v9327
  %v9329 = vmul.f32 %v9198, %v9198
  %v9330 = vmul.f32 %v9199, %v9199
  %v9331 = vmul.f32 %v9200, %v9200
  %v9332 = vmul.f32 %v9201, %v9201
  %v9333 = vmul.f32 %v9202, %v9202
  %v9334 = vmul.f32 %v9203, %v9203
  %v9335 = vmul.f32 %v9204, %v9204
  %v9336 = vmul.f32 %v9205, %v9205
  %v9337 = vmul.f32 %v9206, %v9206
  %v9338 = vmul.f32 %v9207, %v9207
  %v9339 = vmul.f32 %v9208, %v9208
  %v9340 = vmul.f32 %v9209, %v9209
  %v9341 = vmul.f32 %v9210, %v9210
  %v9342 = vmul.f32 %v9211, %v9211
  %v9343 = vmul.f32 %v9212, %v9212
  %v9344 = vmul.f32 %v9213, %v9213
  %v9345 = vmul.f32 %v9214, %v9214
  %v9346 = vmul.f32 %v9215, %v9215
  %v9347 = vmul.f32 %v9216, %v9216
  %v9348 = vmul.f32 %v9217, %v9217
  %v9349 = vmul.f32 %v9218, %v9218
  %v9350 = vmul.f32 %v9219, %v9219
  %v9351 = vmul.f32 %v9220, %v9220
  %v9352 = vmul.f32 %v9221, %v9221
  %v9353 = vmul.f32 %v9222, %v9222
  %v9354 = vmul.f32 %v9223, %v9223
  %v9355 = vmul.f32 %v9224, %v9224
  %v9356 = vmul.f32 %v9225, %v9225
  %v9357 = vmul.f32 %v9226, %v9226
  %v9358 = vmul.f32 %v9227, %v9227
  %v9359 = vmul.f32 %v9228, %v9228
  %v9360 = vmul.f32 %v9229, %v9229
  %v9361 = vmul.f32 %v9230, %v9230
  %v9362 = vmul.f32 %v9231, %v9231
  %v9363 = vmul.f32 %v9232, %v9232
  %v9364 = vmul.f32 %v9233, %v9233
  %v9365 = vmul.f32 %v9234, %v9234
  %v9366 = vmul.f32 %v9235, %v9235
  %v9367 = vmul.f32 %v9236, %v9236
  %v9368 = vmul.f32 %v9237, %v9237
  %v9369 = vmul.f32 %v9238, %v9238
  %v9370 = vmul.f32 %v9239, %v9239
  %v9371 = vmul.f32 %v9240, %v9240
  %v9372 = vmul.f32 %v9241, %v9241
  %v9373 = vmul.f32 %v9242, %v9242
  %v9374 = vmul.f32 %v9243, %v9243
  %v9375 = vmul.f32 %v9244, %v9244
  %v9376 = vmul.f32 %v9245, %v9245
  %v9377 = vadd.f32 %v9329, %v9331
  %v9378 = vadd.f32 %v9377, %v9333
  %v9379 = vadd.f32 %v9378, %v9335
  %v9380 = vadd.f32 %v9379, %v9337
  %v9381 = vadd.f32 %v9380, %v9339
  %v9382 = vadd.f32 %v9381, %v9341
  %v9383 = vadd.f32 %v9382, %v9343
  %v9384 = vadd.f32 %v9383, %v9345
  %v9385 = vadd.f32 %v9384, %v9347
  %v9386 = vadd.f32 %v9385, %v9349
  %v9387 = vadd.f32 %v9386, %v9351
  %v9388 = vadd.f32 %v9387, %v9353
  %v9389 = vadd.f32 %v9388, %v9355
  %v9390 = vadd.f32 %v9389, %v9357
  %v9391 = vadd.f32 %v9390, %v9359
  %v9392 = vadd.f32 %v9391, %v9361
  %v9393 = vadd.f32 %v9392, %v9363
  %v9394 = vadd.f32 %v9393, %v9365
  %v9395 = vadd.f32 %v9394, %v9367
  %v9396 = vadd.f32 %v9395, %v9369
  %v9397 = vadd.f32 %v9396, %v9371
  %v9398 = vadd.f32 %v9397, %v9373
  %v9399 = vadd.f32 %v9398, %v9375
  %v9400 = vrot.slane %v9399, 4
  %v9401 = vadd.f32 %v9399, %v9400
  %v9402 = vrot.slane %v9401, 2
  %v9403 = vadd.f32 %v9401, %v9402
  %v9404 = vrot.slane %v9403, 1
  %v9405 = vadd.f32 %v9403, %v9404
  %v9406 = vsel %vm9275, %v9330, 0.0
  %v9407 = vsel %vm9275, %v9332, 0.0
  %v9408 = vadd.f32 %v9406, %v9407
  %v9409 = vsel %vm9275, %v9334, 0.0
  %v9410 = vadd.f32 %v9408, %v9409
  %v9411 = vsel %vm9275, %v9336, 0.0
  %v9412 = vadd.f32 %v9410, %v9411
  %v9413 = vsel %vm9275, %v9338, 0.0
  %v9414 = vadd.f32 %v9412, %v9413
  %v9415 = vsel %vm9275, %v9340, 0.0
  %v9416 = vadd.f32 %v9414, %v9415
  %v9417 = vsel %vm9275, %v9342, 0.0
  %v9418 = vadd.f32 %v9416, %v9417
  %v9419 = vsel %vm9275, %v9344, 0.0
  %v9420 = vadd.f32 %v9418, %v9419
  %v9421 = vsel %vm9275, %v9346, 0.0
  %v9422 = vadd.f32 %v9420, %v9421
  %v9423 = vsel %vm9275, %v9348, 0.0
  %v9424 = vadd.f32 %v9422, %v9423
  %v9425 = vsel %vm9275, %v9350, 0.0
  %v9426 = vadd.f32 %v9424, %v9425
  %v9427 = vsel %vm9275, %v9352, 0.0
  %v9428 = vadd.f32 %v9426, %v9427
  %v9429 = vsel %vm9275, %v9354, 0.0
  %v9430 = vadd.f32 %v9428, %v9429
  %v9431 = vsel %vm9275, %v9356, 0.0
  %v9432 = vadd.f32 %v9430, %v9431
  %v9433 = vsel %vm9275, %v9358, 0.0
  %v9434 = vadd.f32 %v9432, %v9433
  %v9435 = vsel %vm9275, %v9360, 0.0
  %v9436 = vadd.f32 %v9434, %v9435
  %v9437 = vsel %vm9275, %v9362, 0.0
  %v9438 = vadd.f32 %v9436, %v9437
  %v9439 = vsel %vm9275, %v9364, 0.0
  %v9440 = vadd.f32 %v9438, %v9439
  %v9441 = vsel %vm9275, %v9366, 0.0
  %v9442 = vadd.f32 %v9440, %v9441
  %v9443 = vsel %vm9275, %v9368, 0.0
  %v9444 = vadd.f32 %v9442, %v9443
  %v9445 = vsel %vm9275, %v9370, 0.0
  %v9446 = vadd.f32 %v9444, %v9445
  %v9447 = vsel %vm9275, %v9372, 0.0
  %v9448 = vadd.f32 %v9446, %v9447
  %v9449 = vsel %vm9275, %v9374, 0.0
  %v9450 = vadd.f32 %v9448, %v9449
  %v9451 = vsel %vm9275, %v9376, 0.0
  %v9452 = vadd.f32 %v9450, %v9451
  %v9453 = vrot.slane %v9452, 4
  %v9454 = vadd.f32 %v9452, %v9453
  %v9455 = vrot.slane %v9454, 2
  %v9456 = vadd.f32 %v9454, %v9455
  %v9457 = vrot.slane %v9456, 1
  %v9458 = vadd.f32 %v9456, %v9457
  %v9459 = vmul.f32 %v9274, 0.0069444445
  %v9460 = vmul.f32 %v9328, 0.0069444445
  %v9461 = vmul.f32 %v9405, 0.0069444445
  %v9462 = vmul.f32 %v9458, 0.0069444445
  %v9463 = vmul.f32 %v9459, %v9459
  %v9464 = vmul.f32 %v9460, %v9460
  %v9465 = vsub.f32 %v9461, %v9463
  %v9466 = vsub.f32 %v9462, %v9464
  %v9467 = vld [vmem:[%s5] sm:$0x3]
  %v9468 = vadd.f32 %v9465, 0.001
  %v9469 = vadd.f32 %v9466, 0.001
  %v9470 = vrsqrt.pop %v9468
  %v9471 = vrsqrt.pop %v9469
  %v9474 = vcombine.low %v9470, %v9471
  %v9476 = vunpack.c.l.s4 1966171168
  %v9477 = vunpack.c.0.s8 %v9476
  %v9478 = vlaneseq
  %v9479 = vshrl.u32 %v9478, 7
  %v9480 = vsub.s32 %v9477, %v9479
  %v9481 = vrot.slane %v9474, %v9480
  %v9483 = vunpack.c.l.s4 1966171168
  %v9484 = vunpack.c.0.s8 %v9483
  %v9485 = vlaneseq
  %v9486 = vshrl.u32 %v9485, 7
  %v9487 = vsub.s32 %v9484, %v9486
  %v9488 = vrot.slane %v9481, %v9487
  %v9490 = vmul.f32 %v9467, %v9488
  %v9491 = vld [vmem:[%s6] sm:$0x3]
  %v9493 = vlaneseq
  %v9494 = vshrl.u32 %v9493, 7
  %v9495 = vsub.s32 0, %v9494
  %v9496 = vrot.slane %v9490, %v9495
  %v9497 = vlaneseq
  %v9498 = vshrl.u32 %v9497, 7
  %v9499 = vsub.s32 1, %v9498
  %v9500 = vrot.slane %v9490, %v9499
  %v9503 = vmul.f32 %v9459, %v9496
  %v9504 = vmul.f32 %v9460, %v9500
  %v9507 = vcombine.low %v9503, %v9504
  %v9509 = vunpack.c.l.s4 1966171168
  %v9510 = vunpack.c.0.s8 %v9509
  %v9511 = vlaneseq
  %v9512 = vshrl.u32 %v9511, 7
  %v9513 = vsub.s32 %v9510, %v9512
  %v9514 = vrot.slane %v9507, %v9513
  %v9516 = vunpack.c.l.s4 1966171168
  %v9517 = vunpack.c.0.s8 %v9516
  %v9518 = vlaneseq
  %v9519 = vshrl.u32 %v9518, 7
  %v9520 = vsub.s32 %v9517, %v9519
  %v9521 = vrot.slane %v9514, %v9520
  %v9523 = vsub.f32 %v9491, %v9521
  %v9524 = vmul.f32 %v9198, %v9496
  %v9525 = vmul.f32 %v9199, %v9500
  %v9526 = vmul.f32 %v9200, %v9496
  %v9527 = vmul.f32 %v9201, %v9500
  %v9528 = vmul.f32 %v9202, %v9496
  %v9529 = vmul.f32 %v9203, %v9500
  %v9530 = vmul.f32 %v9204, %v9496
  %v9531 = vmul.f32 %v9205, %v9500
  %v9532 = vmul.f32 %v9206, %v9496
  %v9533 = vmul.f32 %v9207, %v9500
  %v9534 = vmul.f32 %v9208, %v9496
  %v9535 = vmul.f32 %v9209, %v9500
  %v9536 = vmul.f32 %v9210, %v9496
  %v9537 = vmul.f32 %v9211, %v9500
  %v9538 = vmul.f32 %v9212, %v9496
  %v9539 = vmul.f32 %v9213, %v9500
  %v9540 = vmul.f32 %v9214, %v9496
  %v9541 = vmul.f32 %v9215, %v9500
  %v9542 = vmul.f32 %v9216, %v9496
  %v9543 = vmul.f32 %v9217, %v9500
  %v9544 = vmul.f32 %v9218, %v9496
  %v9545 = vmul.f32 %v9219, %v9500
  %v9546 = vmul.f32 %v9220, %v9496
  %v9547 = vmul.f32 %v9221, %v9500
  %v9548 = vmul.f32 %v9222, %v9496
  %v9549 = vmul.f32 %v9223, %v9500
  %v9550 = vmul.f32 %v9224, %v9496
  %v9551 = vmul.f32 %v9225, %v9500
  %v9552 = vmul.f32 %v9226, %v9496
  %v9553 = vmul.f32 %v9227, %v9500
  %v9554 = vmul.f32 %v9228, %v9496
  %v9555 = vmul.f32 %v9229, %v9500
  %v9556 = vmul.f32 %v9230, %v9496
  %v9557 = vmul.f32 %v9231, %v9500
  %v9558 = vmul.f32 %v9232, %v9496
  %v9559 = vmul.f32 %v9233, %v9500
  %v9560 = vmul.f32 %v9234, %v9496
  %v9561 = vmul.f32 %v9235, %v9500
  %v9562 = vmul.f32 %v9236, %v9496
  %v9563 = vmul.f32 %v9237, %v9500
  %v9564 = vmul.f32 %v9238, %v9496
  %v9565 = vmul.f32 %v9239, %v9500
  %v9566 = vmul.f32 %v9240, %v9496
  %v9567 = vmul.f32 %v9241, %v9500
  %v9568 = vmul.f32 %v9242, %v9496
  %v9569 = vmul.f32 %v9243, %v9500
  %v9570 = vmul.f32 %v9244, %v9496
  %v9571 = vmul.f32 %v9245, %v9500
  %v9573 = vlaneseq
  %v9574 = vshrl.u32 %v9573, 7
  %v9575 = vsub.s32 0, %v9574
  %v9576 = vrot.slane %v9523, %v9575
  %v9577 = vlaneseq
  %v9578 = vshrl.u32 %v9577, 7
  %v9579 = vsub.s32 1, %v9578
  %v9580 = vrot.slane %v9523, %v9579
  %v9583 = vadd.f32 %v9524, %v9576
  %v9584 = vadd.f32 %v9525, %v9580
  %v9585 = vadd.f32 %v9526, %v9576
  %v9586 = vadd.f32 %v9527, %v9580
  %v9587 = vadd.f32 %v9528, %v9576
  %v9588 = vadd.f32 %v9529, %v9580
  %v9589 = vadd.f32 %v9530, %v9576
  %v9590 = vadd.f32 %v9531, %v9580
  %v9591 = vadd.f32 %v9532, %v9576
  %v9592 = vadd.f32 %v9533, %v9580
  %v9593 = vadd.f32 %v9534, %v9576
  %v9594 = vadd.f32 %v9535, %v9580
  %v9595 = vadd.f32 %v9536, %v9576
  %v9596 = vadd.f32 %v9537, %v9580
  %v9597 = vadd.f32 %v9538, %v9576
  %v9598 = vadd.f32 %v9539, %v9580
  %v9599 = vadd.f32 %v9540, %v9576
  %v9600 = vadd.f32 %v9541, %v9580
  %v9601 = vadd.f32 %v9542, %v9576
  %v9602 = vadd.f32 %v9543, %v9580
  %v9603 = vadd.f32 %v9544, %v9576
  %v9604 = vadd.f32 %v9545, %v9580
  %v9605 = vadd.f32 %v9546, %v9576
  %v9606 = vadd.f32 %v9547, %v9580
  %v9607 = vadd.f32 %v9548, %v9576
  %v9608 = vadd.f32 %v9549, %v9580
  %v9609 = vadd.f32 %v9550, %v9576
  %v9610 = vadd.f32 %v9551, %v9580
  %v9611 = vadd.f32 %v9552, %v9576
  %v9612 = vadd.f32 %v9553, %v9580
  %v9613 = vadd.f32 %v9554, %v9576
  %v9614 = vadd.f32 %v9555, %v9580
  %v9615 = vadd.f32 %v9556, %v9576
  %v9616 = vadd.f32 %v9557, %v9580
  %v9617 = vadd.f32 %v9558, %v9576
  %v9618 = vadd.f32 %v9559, %v9580
  %v9619 = vadd.f32 %v9560, %v9576
  %v9620 = vadd.f32 %v9561, %v9580
  %v9621 = vadd.f32 %v9562, %v9576
  %v9622 = vadd.f32 %v9563, %v9580
  %v9623 = vadd.f32 %v9564, %v9576
  %v9624 = vadd.f32 %v9565, %v9580
  %v9625 = vadd.f32 %v9566, %v9576
  %v9626 = vadd.f32 %v9567, %v9580
  %v9627 = vadd.f32 %v9568, %v9576
  %v9628 = vadd.f32 %v9569, %v9580
  %v9629 = vadd.f32 %v9570, %v9576
  %v9630 = vadd.f32 %v9571, %v9580
  %v9631 = vmax.f32 %v9583, 0.0
  %v9632 = vmax.f32 %v9584, 0.0
  %v9633 = vmax.f32 %v9585, 0.0
  %v9634 = vmax.f32 %v9586, 0.0
  %v9635 = vmax.f32 %v9587, 0.0
  %v9636 = vmax.f32 %v9588, 0.0
  %v9637 = vmax.f32 %v9589, 0.0
  %v9638 = vmax.f32 %v9590, 0.0
  %v9639 = vmax.f32 %v9591, 0.0
  %v9640 = vmax.f32 %v9592, 0.0
  %v9641 = vmax.f32 %v9593, 0.0
  %v9642 = vmax.f32 %v9594, 0.0
  %v9643 = vmax.f32 %v9595, 0.0
  %v9644 = vmax.f32 %v9596, 0.0
  %v9645 = vmax.f32 %v9597, 0.0
  %v9646 = vmax.f32 %v9598, 0.0
  %v9647 = vmax.f32 %v9599, 0.0
  %v9648 = vmax.f32 %v9600, 0.0
  %v9649 = vmax.f32 %v9601, 0.0
  %v9650 = vmax.f32 %v9602, 0.0
  %v9651 = vmax.f32 %v9603, 0.0
  %v9652 = vmax.f32 %v9604, 0.0
  %v9653 = vmax.f32 %v9605, 0.0
  %v9654 = vmax.f32 %v9606, 0.0
  %v9655 = vmax.f32 %v9607, 0.0
  %v9656 = vmax.f32 %v9608, 0.0
  %v9657 = vmax.f32 %v9609, 0.0
  %v9658 = vmax.f32 %v9610, 0.0
  %v9659 = vmax.f32 %v9611, 0.0
  %v9660 = vmax.f32 %v9612, 0.0
  %v9661 = vmax.f32 %v9613, 0.0
  %v9662 = vmax.f32 %v9614, 0.0
  %v9663 = vmax.f32 %v9615, 0.0
  %v9664 = vmax.f32 %v9616, 0.0
  %v9665 = vmax.f32 %v9617, 0.0
  %v9666 = vmax.f32 %v9618, 0.0
  %v9667 = vmax.f32 %v9619, 0.0
  %v9668 = vmax.f32 %v9620, 0.0
  %v9669 = vmax.f32 %v9621, 0.0
  %v9670 = vmax.f32 %v9622, 0.0
  %v9671 = vmax.f32 %v9623, 0.0
  %v9672 = vmax.f32 %v9624, 0.0
  %v9673 = vmax.f32 %v9625, 0.0
  %v9674 = vmax.f32 %v9626, 0.0
  %v9675 = vmax.f32 %v9627, 0.0
  %v9676 = vmax.f32 %v9628, 0.0
  %v9677 = vmax.f32 %v9629, 0.0
  %v9678 = vmax.f32 %v9630, 0.0
  %9679 = vst [vmem:[%s8] sm:$0xff] %v9631
  %9680 = vst.msk [vmem:[%s8 + $0x8] sm:$0xff] %vm9275, %v9632
  %9681 = vst [vmem:[%s8 + $0x10] sm:$0xff] %v9633
  %9682 = vst.msk [vmem:[%s8 + $0x18] sm:$0xff] %vm9275, %v9634
  %9683 = vst [vmem:[%s8 + $0x20] sm:$0xff] %v9635
  %9684 = vst.msk [vmem:[%s8 + $0x28] sm:$0xff] %vm9275, %v9636
  %9685 = vst [vmem:[%s8 + $0x30] sm:$0xff] %v9637
  %9686 = vst.msk [vmem:[%s8 + $0x38] sm:$0xff] %vm9275, %v9638
  %9687 = vst [vmem:[%s8 + $0x40] sm:$0xff] %v9639
  %9688 = vst.msk [vmem:[%s8 + $0x48] sm:$0xff] %vm9275, %v9640
  %9689 = vst [vmem:[%s8 + $0x50] sm:$0xff] %v9641
  %9690 = vst.msk [vmem:[%s8 + $0x58] sm:$0xff] %vm9275, %v9642
  %9691 = vst [vmem:[%s8 + $0x60] sm:$0xff] %v9643
  %9692 = vst.msk [vmem:[%s8 + $0x68] sm:$0xff] %vm9275, %v9644
  %9693 = vst [vmem:[%s8 + $0x70] sm:$0xff] %v9645
  %9694 = vst.msk [vmem:[%s8 + $0x78] sm:$0xff] %vm9275, %v9646
  %9695 = vst [vmem:[%s8 + $0x80] sm:$0xff] %v9647
  %9696 = vst.msk [vmem:[%s8 + $0x88] sm:$0xff] %vm9275, %v9648
  %9697 = vst [vmem:[%s8 + $0x90] sm:$0xff] %v9649
  %9698 = vst.msk [vmem:[%s8 + $0x98] sm:$0xff] %vm9275, %v9650
  %9699 = vst [vmem:[%s8 + $0xa0] sm:$0xff] %v9651
  %9700 = vst.msk [vmem:[%s8 + $0xa8] sm:$0xff] %vm9275, %v9652
  %9701 = vst [vmem:[%s8 + $0xb0] sm:$0xff] %v9653
  %9702 = vst.msk [vmem:[%s8 + $0xb8] sm:$0xff] %vm9275, %v9654
  %9703 = vst [vmem:[%s8 + $0xc0] sm:$0xff] %v9655
  %9704 = vst.msk [vmem:[%s8 + $0xc8] sm:$0xff] %vm9275, %v9656
  %9705 = vst [vmem:[%s8 + $0xd0] sm:$0xff] %v9657
  %9706 = vst.msk [vmem:[%s8 + $0xd8] sm:$0xff] %vm9275, %v9658
  %9707 = vst [vmem:[%s8 + $0xe0] sm:$0xff] %v9659
  %9708 = vst.msk [vmem:[%s8 + $0xe8] sm:$0xff] %vm9275, %v9660
  %9709 = vst [vmem:[%s8 + $0xf0] sm:$0xff] %v9661
  %9710 = vst.msk [vmem:[%s8 + $0xf8] sm:$0xff] %vm9275, %v9662
  %9711 = vst [vmem:[%s8 + $0x100] sm:$0xff] %v9663
  %9712 = vst.msk [vmem:[%s8 + $0x108] sm:$0xff] %vm9275, %v9664
  %9713 = vst [vmem:[%s8 + $0x110] sm:$0xff] %v9665
  %9714 = vst.msk [vmem:[%s8 + $0x118] sm:$0xff] %vm9275, %v9666
  %9715 = vst [vmem:[%s8 + $0x120] sm:$0xff] %v9667
  %9716 = vst.msk [vmem:[%s8 + $0x128] sm:$0xff] %vm9275, %v9668
  %9717 = vst [vmem:[%s8 + $0x130] sm:$0xff] %v9669
  %9718 = vst.msk [vmem:[%s8 + $0x138] sm:$0xff] %vm9275, %v9670
  %9719 = vst [vmem:[%s8 + $0x140] sm:$0xff] %v9671
  %9720 = vst.msk [vmem:[%s8 + $0x148] sm:$0xff] %vm9275, %v9672
  %9721 = vst [vmem:[%s8 + $0x150] sm:$0xff] %v9673
  %9722 = vst.msk [vmem:[%s8 + $0x158] sm:$0xff] %vm9275, %v9674
  %9723 = vst [vmem:[%s8 + $0x160] sm:$0xff] %v9675
  %9724 = vst.msk [vmem:[%s8 + $0x168] sm:$0xff] %vm9275, %v9676
  %9725 = vst [vmem:[%s8 + $0x170] sm:$0xff] %v9677
  %9726 = vst.msk [vmem:[%s8 + $0x178] sm:$0xff] %vm9275, %v9678
  // Predicated region
  $region34: #{conv_bn_relu_x2.1} parent=0 // pred_check
    _
  $region35: #{conv_bn_relu_x2.1} parent=0 // pred_check_branch
    %9728 = sbr.rel (0) target = $region37
  $region36: #{conv_bn_relu_x2.1} parent=0 // pred_region
    _
  $region37: #{conv_bn_relu_x2.1} parent=0 // pred_fallthru
    _
  // Predicated region
  $region38: #{conv_bn_relu_x2.1} parent=0 // pred_check
    _
  $region39: #{conv_bn_relu_x2.1} parent=0 // pred_check_branch
    %9730 = sbr.rel (0) target = $region41
  $region40: #{conv_bn_relu_x2.1} parent=0 // pred_region
    _
  $region41: #{conv_bn_relu_x2.1} parent=0 // pred_fallthru
    _

</llo_original>
